<compile_context>
chip_gen: v7x
topology: tpu7x:2x2x1
jax: 0.10.0
libtpu: 0.0.40
codegen_flags: <defaults>
</compile_context>

<pallas_src>
import functools

import jax
import jax.numpy as jnp
from jax.experimental import pallas as pl
from jax.experimental.pallas import tpu as pltpu

LEAKY_SLOPE = 0.2
BN_EPS = 1e-5
ZPAD = 128                      # lane-dense width of each FC head
VMEM_LIMIT = 32 * 1024 * 1024   # explicit scoped-VMEM budget (fits v5e/v6e/v7x)


# ---------------------------------------------------------------------------
# Small helpers
# ---------------------------------------------------------------------------

def _round_up(x, m):
    return (x + m - 1) // m * m


def _pick_tile(total, cap, align):
    """Largest divisor of `total` that is <= cap and a multiple of `align`;
    if total already fits the cap, use the full extent (always block-legal)."""
    if total <= cap:
        return total
    start = cap - (cap % align)
    for d in range(start, 0, -align):
        if total % d == 0:
            return d
    return total


# ---------------------------------------------------------------------------
# Pallas kernels
# ---------------------------------------------------------------------------

def _conv_act_kernel(x_ref, w_ref, b_ref, o_ref, acc_ref, *, slope):
    """Tiled im2col matmul for the no-BN layer: bf16 operands, f32 accumulate,
    fused bias + LeakyReLU, bf16 writeback."""
    k = pl.program_id(2)

    @pl.when(k == 0)
    def _init():
        acc_ref[...] = jnp.zeros_like(acc_ref)

    acc_ref[...] += jnp.dot(x_ref[...], w_ref[...],
                            preferred_element_type=jnp.float32)

    @pl.when(k == pl.num_programs(2) - 1)
    def _finalize():
        y = acc_ref[...] + b_ref[...]                         # (TM, TCo) f32
        o_ref[...] = jnp.where(y > 0, y, slope * y).astype(o_ref.dtype)


def _conv_bn_stats_kernel(x_ref, w_ref, b_ref, o_ref, sum_ref, sq_ref, acc_ref):
    """Tiled im2col matmul for BN layers: bf16 operands, f32 accumulate,
    bias add, raw f32 output plus per-tile channel sum / sum-of-squares
    partials for the batch-statistics reduction."""
    k = pl.program_id(2)

    @pl.when(k == 0)
    def _init():
        acc_ref[...] = jnp.zeros_like(acc_ref)

    acc_ref[...] += jnp.dot(x_ref[...], w_ref[...],
                            preferred_element_type=jnp.float32)

    @pl.when(k == pl.num_programs(2) - 1)
    def _finalize():
        y = acc_ref[...] + b_ref[...]                         # (TM, TCo) f32
        cw = y.shape[1]
        o_ref[...] = y
        sum_ref[...] = jnp.sum(y, axis=0, keepdims=True).reshape(1, 1, cw)
        sq_ref[...] = jnp.sum(y * y, axis=0, keepdims=True).reshape(1, 1, cw)


def _bn_act_kernel(y_ref, scale_ref, shift_ref, o_ref, *, slope):
    """Fused BatchNorm (precomputed per-channel scale/shift) + LeakyReLU,
    bf16 writeback."""
    y = y_ref[...] * scale_ref[...] + shift_ref[...]
    o_ref[...] = jnp.where(y > 0, y, slope * y).astype(o_ref.dtype)


def _fc_heads_kernel(x_ref, w_ref, b_ref, mean_ref, ls_ref, acc_ref):
    """Both VAE heads as one matmul; tanh applied to the logsigma half."""
    k = pl.program_id(0)

    @pl.when(k == 0)
    def _init():
        acc_ref[...] = jnp.zeros_like(acc_ref)

    acc_ref[...] += jnp.dot(x_ref[...], w_ref[...],
                            preferred_element_type=jnp.float32)

    @pl.when(k == pl.num_programs(0) - 1)
    def _finalize():
        r = acc_ref[...] + b_ref[...]
        mean_ref[...] = r[:, :ZPAD]
        ls_ref[...] = jnp.tanh(r[:, ZPAD:])


# ---------------------------------------------------------------------------
# pallas_call wrappers
# ---------------------------------------------------------------------------

def conv_matmul(cols, w_mat, bias_row, *, with_bn_stats):
    """cols: (M, K) bf16, w_mat: (K, Cp) bf16, bias_row: (1, Cp) f32."""
    m, k = cols.shape
    cp = w_mat.shape[1]
    tm_align = 16 if m % 16 == 0 else 8
    tm = _pick_tile(m, 512, tm_align)   # MXU/sublane friendly M tile
    tk = _pick_tile(k, 4096, 128)       # reduction chunk (K = 25*Cin)
    tc = _pick_tile(cp, 256, 128)       # lane-dense Cout tile
    grid = (m // tm, cp // tc, k // tk)
    m_tiles = grid[0]

    in_specs = [
        pl.BlockSpec((tm, tk), lambda i, j, l: (i, l)),
        pl.BlockSpec((tk, tc), lambda i, j, l: (l, j)),
        pl.BlockSpec((1, tc), lambda i, j, l: (0, j)),
    ]
    if with_bn_stats:
        kernel = _conv_bn_stats_kernel
        out_shape = (jax.ShapeDtypeStruct((m, cp), jnp.float32),
                     jax.ShapeDtypeStruct((m_tiles, 1, cp), jnp.float32),
                     jax.ShapeDtypeStruct((m_tiles, 1, cp), jnp.float32))
        out_specs = (
            pl.BlockSpec((tm, tc), lambda i, j, l: (i, j)),
            pl.BlockSpec((1, 1, tc), lambda i, j, l: (i, 0, j)),
            pl.BlockSpec((1, 1, tc), lambda i, j, l: (i, 0, j)),
        )
    else:
        kernel = functools.partial(_conv_act_kernel, slope=LEAKY_SLOPE)
        out_shape = jax.ShapeDtypeStruct((m, cp), jnp.bfloat16)
        out_specs = pl.BlockSpec((tm, tc), lambda i, j, l: (i, j))

    return pl.pallas_call(
        kernel,
        out_shape=out_shape,
        grid_spec=pltpu.PrefetchScalarGridSpec(
            num_scalar_prefetch=0,
            grid=grid,
            in_specs=in_specs,
            out_specs=out_specs,
            scratch_shapes=[pltpu.VMEM((tm, tc), jnp.float32)]),
        compiler_params=pltpu.CompilerParams(
            dimension_semantics=("parallel", "parallel", "arbitrary"),
            vmem_limit_bytes=VMEM_LIMIT),
    )(cols, w_mat, bias_row)


def bn_leaky_relu(y, scale_row, shift_row):
    """y: (M, Cp) f32; scale/shift: (1, Cp) f32. Streaming elementwise pass;
    bf16 output feeds the next layer's patch extraction / FC heads."""
    m, cp = y.shape
    tm_align = 16 if m % 16 == 0 else 8
    tm = _pick_tile(m, 1024, tm_align)
    grid = (m // tm,)
    return pl.pallas_call(
        functools.partial(_bn_act_kernel, slope=LEAKY_SLOPE),
        out_shape=jax.ShapeDtypeStruct((m, cp), jnp.bfloat16),
        grid_spec=pltpu.PrefetchScalarGridSpec(
            num_scalar_prefetch=0,
            grid=grid,
            in_specs=[
                pl.BlockSpec((tm, cp), lambda i: (i, 0)),
                pl.BlockSpec((1, cp), lambda i: (0, 0)),
                pl.BlockSpec((1, cp), lambda i: (0, 0)),
            ],
            out_specs=pl.BlockSpec((tm, cp), lambda i: (i, 0))),
        compiler_params=pltpu.CompilerParams(
            dimension_semantics=("parallel",),
            vmem_limit_bytes=VMEM_LIMIT),
    )(y, scale_row, shift_row)


def fc_heads(feat, w_all, b_all, z_dim):
    """feat: (N, F) bf16, w_all: (F, 256) bf16, b_all: (1, 256) f32."""
    n, f = feat.shape
    tk = _pick_tile(f, 2048, 128)
    grid = (f // tk,)
    mean_p, ls_p = pl.pallas_call(
        _fc_heads_kernel,
        out_shape=(jax.ShapeDtypeStruct((n, ZPAD), jnp.float32),
                   jax.ShapeDtypeStruct((n, ZPAD), jnp.float32)),
        grid_spec=pltpu.PrefetchScalarGridSpec(
            num_scalar_prefetch=0,
            grid=grid,
            in_specs=[
                pl.BlockSpec((n, tk), lambda l: (0, l)),
                pl.BlockSpec((tk, 2 * ZPAD), lambda l: (l, 0)),
                pl.BlockSpec((1, 2 * ZPAD), lambda l: (0, 0)),
            ],
            out_specs=(
                pl.BlockSpec((n, ZPAD), lambda l: (0, 0)),
                pl.BlockSpec((n, ZPAD), lambda l: (0, 0)),
            ),
            scratch_shapes=[pltpu.VMEM((n, 2 * ZPAD), jnp.float32)]),
        compiler_params=pltpu.CompilerParams(
            dimension_semantics=("arbitrary",),
            vmem_limit_bytes=VMEM_LIMIT),
    )(feat, w_all, b_all)
    return mean_p[:, :z_dim], ls_p[:, :z_dim]


# ---------------------------------------------------------------------------
# Host glue: patch extraction + one-time parameter preparation
# ---------------------------------------------------------------------------

def _im2col_nhwc(x, k=5, stride=2, pad=2):
    """(kh, kw, cin)-ordered patches for a k=5, s=2, p=2 conv (bf16 in/out)."""
    n, h, w, c = x.shape
    xp = jnp.pad(x, ((0, 0), (pad, pad), (pad, pad), (0, 0)))
    oh = (h + 2 * pad - k) // stride + 1
    ow = (w + 2 * pad - k) // stride + 1
    cols = []
    for i in range(k):
        for j in range(k):
            cols.append(xp[:, i:i + stride * oh:stride,
                           j:j + stride * ow:stride, :])
    xc = jnp.concatenate(cols, axis=-1)                 # (n, oh, ow, 25*c)
    return xc.reshape(n * oh * ow, k * k * c), n, oh, ow


def init_torch_params(key, df_dim, ch, z_dim, fc_in):
    """Synthetic parameters in the PyTorch module's native layouts."""
    chans = [ch, df_dim, df_dim * 2, df_dim * 4, df_dim * 8]
    use_bn = [False, True, True, True]
    keys = jax.random.split(key, 12)
    conv = []
    for li in range(4):
        cin, cout = chans[li], chans[li + 1]
        w = 0.05 * jax.random.normal(keys[2 * li], (cout, cin, 5, 5), jnp.float32)
        b = 0.01 * jax.random.normal(keys[2 * li + 1], (cout,), jnp.float32)
        gamma = jnp.ones((cout,), jnp.float32)    # fresh BatchNorm2d weight
        beta = jnp.zeros((cout,), jnp.float32)    # fresh BatchNorm2d bias
        conv.append(dict(w=w, b=b, gamma=gamma, beta=beta, bn=use_bn[li]))
    w_mean = 0.05 * jax.random.normal(keys[8], (z_dim, fc_in), jnp.float32)
    b_mean = 0.01 * jax.random.normal(keys[9], (z_dim,), jnp.float32)
    w_ls = 0.05 * jax.random.normal(keys[10], (z_dim, fc_in), jnp.float32)
    b_ls = 0.01 * jax.random.normal(keys[11], (z_dim,), jnp.float32)
    return dict(conv=conv, fc_mean=(w_mean, b_mean), fc_logsigma=(w_ls, b_ls))


def prepare_params(torch_params, ch, out_hw, z_dim):
    """One-time conversion: pad channels to 128 lanes, transpose conv weights
    to im2col layout (bf16), permute FC weights to NHWC-flatten order and
    fuse the two heads into one lane-dense (F, 256) bf16 matrix."""
    conv = []
    cin_p = ch                           # raw image channels stay unpadded
    for layer in torch_params["conv"]:
        w, b = layer["w"], layer["b"]
        cout, cin = w.shape[0], w.shape[1]
        cout_p = _round_up(cout, 128)
        wk = jnp.transpose(w, (2, 3, 1, 0))                 # (5,5,Cin,Cout)
        wk = jnp.pad(wk, ((0, 0), (0, 0), (0, cin_p - cin), (0, cout_p - cout)))
        w_mat = wk.reshape(25 * cin_p, cout_p).astype(jnp.bfloat16)
        b_row = jnp.pad(b, (0, cout_p - cout)).reshape(1, cout_p)
        gamma = jnp.pad(layer["gamma"], (0, cout_p - cout))  # pad=0 -> padded ch stay 0
        beta = jnp.pad(layer["beta"], (0, cout_p - cout))
        conv.append(dict(w=w_mat, b=b_row, gamma=gamma, beta=beta,
                         bn=layer["bn"], cout_p=cout_p))
        cin_p = cout_p

    c4 = torch_params["conv"][-1]["w"].shape[0]       # real layer-4 channels
    c4_p = conv[-1]["cout_p"]
    oh, ow = out_hw

    def head(w_t):                                    # (Z, C4*OH*OW), NCHW order
        wz = w_t.reshape(z_dim, c4, oh, ow)
        wz = jnp.transpose(wz, (0, 2, 3, 1))          # -> NHWC feature order
        wz = jnp.pad(wz, ((0, 0), (0, 0), (0, 0), (0, c4_p - c4)))
        return wz.reshape(z_dim, oh * ow * c4_p).T    # (F_pad, Z)

    w_mean, b_mean = torch_params["fc_mean"]
    w_ls, b_ls = torch_params["fc_logsigma"]
    wm, wl = head(w_mean), head(w_ls)
    f_pad = wm.shape[0]
    w_all = jnp.zeros((f_pad, 2 * ZPAD), jnp.float32)
    w_all = w_all.at[:, :z_dim].set(wm).at[:, ZPAD:ZPAD + z_dim].set(wl)
    b_all = jnp.zeros((1, 2 * ZPAD), jnp.float32)
    b_all = b_all.at[0, :z_dim].set(b_mean).at[0, ZPAD:ZPAD + z_dim].set(b_ls)
    return dict(conv=conv, w_fc=w_all.astype(jnp.bfloat16), b_fc=b_all)


# ---------------------------------------------------------------------------
# Forward pass
# ---------------------------------------------------------------------------

def encoder_forward(x_nchw, prep, z_dim):
    x = jnp.transpose(x_nchw, (0, 2, 3, 1)).astype(jnp.bfloat16)   # NHWC, bf16

    for layer in prep["conv"]:
        cols, n, oh, ow = _im2col_nhwc(x)
        if layer["bn"]:
            y, s_part, sq_part = conv_matmul(cols, layer["w"], layer["b"],
                                             with_bn_stats=True)
            m_rows = cols.shape[0]
            ch_sum = jnp.sum(s_part, axis=(0, 1))
            ch_sq = jnp.sum(sq_part, axis=(0, 1))
            mean = ch_sum / m_rows
            var = jnp.maximum(ch_sq / m_rows - mean * mean, 0.0)  # biased var
            scale = layer["gamma"] * jax.lax.rsqrt(var + BN_EPS)
            shift = layer["beta"] - mean * scale
            act = bn_leaky_relu(y, scale.reshape(1, -1), shift.reshape(1, -1))
        else:
            act = conv_matmul(cols, layer["w"], layer["b"], with_bn_stats=False)
        x = act.reshape(n, oh, ow, layer["cout_p"])

    # nn.Flatten(): pure reshape — FC weights were permuted to NHWC order.
    feat = x.reshape(x.shape[0], -1)                   # already bf16
    return fc_heads(feat, prep["w_fc"], prep["b_fc"], z_dim)


# ---------------------------------------------------------------------------
# Main
# ---------------------------------------------------------------------------

if __name__ == "__main__":
    df_dim, ch, rows, cols_, z_dim, batch = 8, 3, 32, 32, 16, 2

    h = rows
    for _ in range(4):
        h = (h + 2 * 2 - 5) // 2 + 1          # four stride-2, k=5, p=2 convs
    fc_in = (df_dim * 8) * h * h              # == 25600 at the module's real size

    key = jax.random.PRNGKey(0)
    k_param, k_x = jax.random.split(key)
    torch_params = init_torch_params(k_param, df_dim, ch, z_dim, fc_in)
    prep = prepare_params(torch_params, ch, (h, h), z_dim)
    x = jax.random.normal(k_x, (batch, ch, rows, cols_), jnp.float32)

    fwd = jax.jit(lambda inp: encoder_forward(inp, prep, z_dim))
    mean, logsigma = fwd(x)
    jax.block_until_ready((mean, logsigma))

    assert mean.shape == (batch, z_dim) and logsigma.shape == (batch, z_dim)
    assert bool(jnp.all(jnp.isfinite(mean)))
    assert bool(jnp.all(jnp.isfinite(logsigma)))
    assert bool(jnp.all(jnp.abs(logsigma) <= 1.0))
    print("KERNEL_OK")
</pallas_src>

<mosaic_0001>
module attributes {stable_mosaic.version = 11 : i64} {
  func.func @_conv_act_kernel(%arg0: i32, %arg1: i32, %arg2: i32, %arg3: memref<512x75xbf16, #tpu.memory_space<vmem>>, %arg4: memref<75x128xbf16, #tpu.memory_space<vmem>>, %arg5: memref<1x128xf32, #tpu.memory_space<vmem>>, %arg6: memref<512x128xbf16, #tpu.memory_space<vmem>>, %arg7: memref<512x128xf32, #tpu.memory_space<vmem>>) attributes {dimension_semantics = [#tpu.dimension_semantics<parallel>, #tpu.dimension_semantics<parallel>, #tpu.dimension_semantics<arbitrary>], iteration_bounds = array<i64: 1, 1, 1>, scalar_prefetch = 0 : i64, scratch_operands = 1 : i64, tpu.core_type = #tpu.core_type<tc>, window_params = [{transform_indices = @transform_0, window_bounds = array<i64: 512, 75>}, {transform_indices = @transform_1, window_bounds = array<i64: 75, 128>}, {transform_indices = @transform_2, window_bounds = array<i64: 1, 128>}, {transform_indices = @transform_3, window_bounds = array<i64: 512, 128>}]} {
    %c0_i32 = arith.constant 0 : i32
    %0 = arith.cmpi eq, %arg2, %c0_i32 : i32
    %1 = arith.extui %0 : i1 to i32
    %c0_i32_0 = arith.constant 0 : i32
    %2 = arith.cmpi ne, %1, %c0_i32_0 : i32
    scf.if %2 {
      %cst_10 = arith.constant 0.000000e+00 : f32
      %12 = vector.broadcast %cst_10 : f32 to vector<512x128xf32>
      %c0_11 = arith.constant 0 : index
      %c0_12 = arith.constant 0 : index
      %13 = vector.load %arg7[%c0_11, %c0_12] : memref<512x128xf32, #tpu.memory_space<vmem>>, vector<512x128xf32>
      tpu.vector_store %arg7[%c0_11, %c0_12], %12 {strides = array<i32>} : memref<512x128xf32, #tpu.memory_space<vmem>>, vector<512x128xf32>,
    } else {
    }
    %c0 = arith.constant 0 : index
    %c0_1 = arith.constant 0 : index
    %3 = vector.load %arg7[%c0, %c0_1] : memref<512x128xf32, #tpu.memory_space<vmem>>, vector<512x128xf32>
    %c0_2 = arith.constant 0 : index
    %c0_3 = arith.constant 0 : index
    %4 = vector.load %arg3[%c0_2, %c0_3] : memref<512x75xbf16, #tpu.memory_space<vmem>>, vector<512x75xbf16>
    %c0_4 = arith.constant 0 : index
    %c0_5 = arith.constant 0 : index
    %5 = vector.load %arg4[%c0_4, %c0_5] : memref<75x128xbf16, #tpu.memory_space<vmem>>, vector<75x128xbf16>
    %cst = arith.constant dense<0.000000e+00> : vector<512x128xf32>
    %6 = tpu.matmul %4, %5, %cst {dimension_numbers = #tpu.dot_dimension_numbers<[1], [0], [0], [1], [0, 0, 1, 1], [], []>} : vector<512x75xbf16>, vector<75x128xbf16>, vector<512x128xf32> -> vector<512x128xf32>
    %7 = arith.addf %3, %6 : vector<512x128xf32>
    %c0_6 = arith.constant 0 : index
    %c0_7 = arith.constant 0 : index
    %8 = vector.load %arg7[%c0_6, %c0_7] : memref<512x128xf32, #tpu.memory_space<vmem>>, vector<512x128xf32>
    tpu.vector_store %arg7[%c0_6, %c0_7], %7 {strides = array<i32>} : memref<512x128xf32, #tpu.memory_space<vmem>>, vector<512x128xf32>,
    %c0_i32_8 = arith.constant 0 : i32
    %9 = arith.cmpi eq, %arg2, %c0_i32_8 : i32
    %10 = arith.extui %9 : i1 to i32
    %c0_i32_9 = arith.constant 0 : i32
    %11 = arith.cmpi ne, %10, %c0_i32_9 : i32
    scf.if %11 {
      %c0_10 = arith.constant 0 : index
      %c0_11 = arith.constant 0 : index
      %12 = vector.load %arg7[%c0_10, %c0_11] : memref<512x128xf32, #tpu.memory_space<vmem>>, vector<512x128xf32>
      %c0_12 = arith.constant 0 : index
      %c0_13 = arith.constant 0 : index
      %13 = vector.load %arg5[%c0_12, %c0_13] : memref<1x128xf32, #tpu.memory_space<vmem>>, vector<1x128xf32>
      %14 = vector.broadcast %13 : vector<1x128xf32> to vector<512x128xf32>
      %15 = arith.addf %12, %14 : vector<512x128xf32>
      %cst_14 = arith.constant 0.000000e+00 : f32
      %16 = vector.broadcast %cst_14 : f32 to vector<512x128xf32>
      %17 = arith.cmpf ogt, %15, %16 : vector<512x128xf32>
      %cst_15 = arith.constant 2.000000e-01 : f32
      %18 = vector.broadcast %cst_15 : f32 to vector<512x128xf32>
      %19 = arith.mulf %18, %15 : vector<512x128xf32>
      %20 = arith.select %17, %15, %19 : vector<512x128xi1>, vector<512x128xf32>
      %21 = arith.truncf %20 : vector<512x128xf32> to vector<512x128xbf16>
      %c0_16 = arith.constant 0 : index
      %c0_17 = arith.constant 0 : index
      %22 = vector.load %arg6[%c0_16, %c0_17] : memref<512x128xbf16, #tpu.memory_space<vmem>>, vector<512x128xbf16>
      tpu.vector_store %arg6[%c0_16, %c0_17], %21 {strides = array<i32>} : memref<512x128xbf16, #tpu.memory_space<vmem>>, vector<512x128xbf16>,
    } else {
    }
    return
  }
  func.func @transform_0(%arg0: i32, %arg1: i32, %arg2: i32) -> (i32, i32) {
    %c0_i32 = arith.constant 0 : i32
    return %arg0, %arg2 : i32, i32
  }
  func.func @transform_1(%arg0: i32, %arg1: i32, %arg2: i32) -> (i32, i32) {
    %c0_i32 = arith.constant 0 : i32
    return %arg2, %arg1 : i32, i32
  }
  func.func @transform_2(%arg0: i32, %arg1: i32, %arg2: i32) -> (i32, i32) {
    %c0_i32 = arith.constant 0 : i32
    %c0_i32_0 = arith.constant 0 : i32
    return %c0_i32, %arg1 : i32, i32
  }
  func.func @transform_3(%arg0: i32, %arg1: i32, %arg2: i32) -> (i32, i32) {
    %c0_i32 = arith.constant 0 : i32
    return %arg0, %arg1 : i32, i32
  }
}

module attributes {stable_mosaic.version = 11 : i64} {
  func.func @_conv_bn_stats_kernel(%arg0: i32, %arg1: i32, %arg2: i32, %arg3: memref<128x3200xbf16, #tpu.memory_space<vmem>>, %arg4: memref<3200x128xbf16, #tpu.memory_space<vmem>>, %arg5: memref<1x128xf32, #tpu.memory_space<vmem>>, %arg6: memref<128x128xf32, #tpu.memory_space<vmem>>, %arg7: memref<1x1x128xf32, #tpu.memory_space<vmem>>, %arg8: memref<1x1x128xf32, #tpu.memory_space<vmem>>, %arg9: memref<128x128xf32, #tpu.memory_space<vmem>>) attributes {dimension_semantics = [#tpu.dimension_semantics<parallel>, #tpu.dimension_semantics<parallel>, #tpu.dimension_semantics<arbitrary>], iteration_bounds = array<i64: 1, 1, 1>, scalar_prefetch = 0 : i64, scratch_operands = 1 : i64, tpu.core_type = #tpu.core_type<tc>, window_params = [{transform_indices = @transform_0, window_bounds = array<i64: 128, 3200>}, {transform_indices = @transform_1, window_bounds = array<i64: 3200, 128>}, {transform_indices = @transform_2, window_bounds = array<i64: 1, 128>}, {transform_indices = @transform_3, window_bounds = array<i64: 128, 128>}, {transform_indices = @transform_4, window_bounds = array<i64: 1, 1, 128>}, {transform_indices = @transform_5, window_bounds = array<i64: 1, 1, 128>}]} {
    %c0_i32 = arith.constant 0 : i32
    %0 = arith.cmpi eq, %arg2, %c0_i32 : i32
    %1 = arith.extui %0 : i1 to i32
    %c0_i32_0 = arith.constant 0 : i32
    %2 = arith.cmpi ne, %1, %c0_i32_0 : i32
    scf.if %2 {
      %cst_10 = arith.constant 0.000000e+00 : f32
      %12 = vector.broadcast %cst_10 : f32 to vector<128x128xf32>
      %c0_11 = arith.constant 0 : index
      %c0_12 = arith.constant 0 : index
      %13 = vector.load %arg9[%c0_11, %c0_12] : memref<128x128xf32, #tpu.memory_space<vmem>>, vector<128x128xf32>
      tpu.vector_store %arg9[%c0_11, %c0_12], %12 {strides = array<i32>} : memref<128x128xf32, #tpu.memory_space<vmem>>, vector<128x128xf32>,
    } else {
    }
    %c0 = arith.constant 0 : index
    %c0_1 = arith.constant 0 : index
    %3 = vector.load %arg9[%c0, %c0_1] : memref<128x128xf32, #tpu.memory_space<vmem>>, vector<128x128xf32>
    %c0_2 = arith.constant 0 : index
    %c0_3 = arith.constant 0 : index
    %4 = vector.load %arg3[%c0_2, %c0_3] : memref<128x3200xbf16, #tpu.memory_space<vmem>>, vector<128x3200xbf16>
    %c0_4 = arith.constant 0 : index
    %c0_5 = arith.constant 0 : index
    %5 = vector.load %arg4[%c0_4, %c0_5] : memref<3200x128xbf16, #tpu.memory_space<vmem>>, vector<3200x128xbf16>
    %cst = arith.constant dense<0.000000e+00> : vector<128x128xf32>
    %6 = tpu.matmul %4, %5, %cst {dimension_numbers = #tpu.dot_dimension_numbers<[1], [0], [0], [1], [0, 0, 1, 1], [], []>} : vector<128x3200xbf16>, vector<3200x128xbf16>, vector<128x128xf32> -> vector<128x128xf32>
    %7 = arith.addf %3, %6 : vector<128x128xf32>
    %c0_6 = arith.constant 0 : index
    %c0_7 = arith.constant 0 : index
    %8 = vector.load %arg9[%c0_6, %c0_7] : memref<128x128xf32, #tpu.memory_space<vmem>>, vector<128x128xf32>
    tpu.vector_store %arg9[%c0_6, %c0_7], %7 {strides = array<i32>} : memref<128x128xf32, #tpu.memory_space<vmem>>, vector<128x128xf32>,
    %c0_i32_8 = arith.constant 0 : i32
    %9 = arith.cmpi eq, %arg2, %c0_i32_8 : i32
    %10 = arith.extui %9 : i1 to i32
    %c0_i32_9 = arith.constant 0 : i32
    %11 = arith.cmpi ne, %10, %c0_i32_9 : i32
    scf.if %11 {
      %c0_10 = arith.constant 0 : index
      %c0_11 = arith.constant 0 : index
      %12 = vector.load %arg9[%c0_10, %c0_11] : memref<128x128xf32, #tpu.memory_space<vmem>>, vector<128x128xf32>
      %c0_12 = arith.constant 0 : index
      %c0_13 = arith.constant 0 : index
      %13 = vector.load %arg5[%c0_12, %c0_13] : memref<1x128xf32, #tpu.memory_space<vmem>>, vector<1x128xf32>
      %14 = vector.broadcast %13 : vector<1x128xf32> to vector<128x128xf32>
      %15 = arith.addf %12, %14 : vector<128x128xf32>
      %c0_14 = arith.constant 0 : index
      %c0_15 = arith.constant 0 : index
      %16 = vector.load %arg6[%c0_14, %c0_15] : memref<128x128xf32, #tpu.memory_space<vmem>>, vector<128x128xf32>
      tpu.vector_store %arg6[%c0_14, %c0_15], %15 {strides = array<i32>} : memref<128x128xf32, #tpu.memory_space<vmem>>, vector<128x128xf32>,
      %cst_16 = arith.constant dense<0.000000e+00> : vector<128xf32>
      %17 = vector.multi_reduction <add>, %15, %cst_16 [0] : vector<128x128xf32> to vector<128xf32>
      %18 = vector.shape_cast %17 : vector<128xf32> to vector<1x128xf32>
      %19 = vector.shape_cast %18 : vector<1x128xf32> to vector<1x1x128xf32>
      %c0_17 = arith.constant 0 : index
      %c0_18 = arith.constant 0 : index
      %c0_19 = arith.constant 0 : index
      %20 = vector.load %arg7[%c0_17, %c0_18, %c0_19] : memref<1x1x128xf32, #tpu.memory_space<vmem>>, vector<1x1x128xf32>
      tpu.vector_store %arg7[%c0_17, %c0_18, %c0_19], %19 {strides = array<i32>} : memref<1x1x128xf32, #tpu.memory_space<vmem>>, vector<1x1x128xf32>,
      %21 = arith.mulf %15, %15 : vector<128x128xf32>
      %cst_20 = arith.constant dense<0.000000e+00> : vector<128xf32>
      %22 = vector.multi_reduction <add>, %21, %cst_20 [0] : vector<128x128xf32> to vector<128xf32>
      %23 = vector.shape_cast %22 : vector<128xf32> to vector<1x128xf32>
      %24 = vector.shape_cast %23 : vector<1x128xf32> to vector<1x1x128xf32>
      %c0_21 = arith.constant 0 : index
      %c0_22 = arith.constant 0 : index
      %c0_23 = arith.constant 0 : index
      %25 = vector.load %arg8[%c0_21, %c0_22, %c0_23] : memref<1x1x128xf32, #tpu.memory_space<vmem>>, vector<1x1x128xf32>
      tpu.vector_store %arg8[%c0_21, %c0_22, %c0_23], %24 {strides = array<i32>} : memref<1x1x128xf32, #tpu.memory_space<vmem>>, vector<1x1x128xf32>,
    } else {
    }
    return
  }
  func.func @transform_0(%arg0: i32, %arg1: i32, %arg2: i32) -> (i32, i32) {
    %c0_i32 = arith.constant 0 : i32
    return %arg0, %arg2 : i32, i32
  }
  func.func @transform_1(%arg0: i32, %arg1: i32, %arg2: i32) -> (i32, i32) {
    %c0_i32 = arith.constant 0 : i32
    return %arg2, %arg1 : i32, i32
  }
  func.func @transform_2(%arg0: i32, %arg1: i32, %arg2: i32) -> (i32, i32) {
    %c0_i32 = arith.constant 0 : i32
    %c0_i32_0 = arith.constant 0 : i32
    return %c0_i32, %arg1 : i32, i32
  }
  func.func @transform_3(%arg0: i32, %arg1: i32, %arg2: i32) -> (i32, i32) {
    %c0_i32 = arith.constant 0 : i32
    return %arg0, %arg1 : i32, i32
  }
  func.func @transform_4(%arg0: i32, %arg1: i32, %arg2: i32) -> (i32, i32, i32) {
    %c0_i32 = arith.constant 0 : i32
    %c0_i32_0 = arith.constant 0 : i32
    return %arg0, %c0_i32, %arg1 : i32, i32, i32
  }
  func.func @transform_5(%arg0: i32, %arg1: i32, %arg2: i32) -> (i32, i32, i32) {
    %c0_i32 = arith.constant 0 : i32
    %c0_i32_0 = arith.constant 0 : i32
    return %arg0, %c0_i32, %arg1 : i32, i32, i32
  }
}

module attributes {stable_mosaic.version = 11 : i64} {
  func.func @_bn_act_kernel(%arg0: i32, %arg1: memref<128x128xf32, #tpu.memory_space<vmem>>, %arg2: memref<1x128xf32, #tpu.memory_space<vmem>>, %arg3: memref<1x128xf32, #tpu.memory_space<vmem>>, %arg4: memref<128x128xbf16, #tpu.memory_space<vmem>>) attributes {dimension_semantics = [#tpu.dimension_semantics<parallel>], iteration_bounds = array<i64: 1>, scalar_prefetch = 0 : i64, scratch_operands = 0 : i64, tpu.core_type = #tpu.core_type<tc>, window_params = [{transform_indices = @transform_0, window_bounds = array<i64: 128, 128>}, {pipeline_mode = #tpu.pipeline_mode<synchronous>, transform_indices = @transform_1, window_bounds = array<i64: 1, 128>}, {pipeline_mode = #tpu.pipeline_mode<synchronous>, transform_indices = @transform_2, window_bounds = array<i64: 1, 128>}, {transform_indices = @transform_3, window_bounds = array<i64: 128, 128>}]} {
    %c0 = arith.constant 0 : index
    %c0_0 = arith.constant 0 : index
    %0 = vector.load %arg1[%c0, %c0_0] : memref<128x128xf32, #tpu.memory_space<vmem>>, vector<128x128xf32>
    %c0_1 = arith.constant 0 : index
    %c0_2 = arith.constant 0 : index
    %1 = vector.load %arg2[%c0_1, %c0_2] : memref<1x128xf32, #tpu.memory_space<vmem>>, vector<1x128xf32>
    %2 = vector.broadcast %1 : vector<1x128xf32> to vector<128x128xf32>
    %3 = arith.mulf %0, %2 : vector<128x128xf32>
    %c0_3 = arith.constant 0 : index
    %c0_4 = arith.constant 0 : index
    %4 = vector.load %arg3[%c0_3, %c0_4] : memref<1x128xf32, #tpu.memory_space<vmem>>, vector<1x128xf32>
    %5 = vector.broadcast %4 : vector<1x128xf32> to vector<128x128xf32>
    %6 = arith.addf %3, %5 : vector<128x128xf32>
    %cst = arith.constant 0.000000e+00 : f32
    %7 = vector.broadcast %cst : f32 to vector<128x128xf32>
    %8 = arith.cmpf ogt, %6, %7 : vector<128x128xf32>
    %cst_5 = arith.constant 2.000000e-01 : f32
    %9 = vector.broadcast %cst_5 : f32 to vector<128x128xf32>
    %10 = arith.mulf %9, %6 : vector<128x128xf32>
    %11 = arith.select %8, %6, %10 : vector<128x128xi1>, vector<128x128xf32>
    %12 = arith.truncf %11 : vector<128x128xf32> to vector<128x128xbf16>
    %c0_6 = arith.constant 0 : index
    %c0_7 = arith.constant 0 : index
    %13 = vector.load %arg4[%c0_6, %c0_7] : memref<128x128xbf16, #tpu.memory_space<vmem>>, vector<128x128xbf16>
    tpu.vector_store %arg4[%c0_6, %c0_7], %12 {strides = array<i32>} : memref<128x128xbf16, #tpu.memory_space<vmem>>, vector<128x128xbf16>,
    return
  }
  func.func @transform_0(%arg0: i32) -> (i32, i32) {
    %c0_i32 = arith.constant 0 : i32
    %c0_i32_0 = arith.constant 0 : i32
    return %arg0, %c0_i32 : i32, i32
  }
  func.func @transform_1(%arg0: i32) -> (i32, i32) {
    %c0_i32 = arith.constant 0 : i32
    %c0_i32_0 = arith.constant 0 : i32
    %c0_i32_1 = arith.constant 0 : i32
    return %c0_i32, %c0_i32_0 : i32, i32
  }
  func.func @transform_2(%arg0: i32) -> (i32, i32) {
    %c0_i32 = arith.constant 0 : i32
    %c0_i32_0 = arith.constant 0 : i32
    %c0_i32_1 = arith.constant 0 : i32
    return %c0_i32, %c0_i32_0 : i32, i32
  }
  func.func @transform_3(%arg0: i32) -> (i32, i32) {
    %c0_i32 = arith.constant 0 : i32
    %c0_i32_0 = arith.constant 0 : i32
    return %arg0, %c0_i32 : i32, i32
  }
}

module attributes {stable_mosaic.version = 11 : i64} {
  func.func @_bn_act_kernel(%arg0: i32, %arg1: memref<32x128xf32, #tpu.memory_space<vmem>>, %arg2: memref<1x128xf32, #tpu.memory_space<vmem>>, %arg3: memref<1x128xf32, #tpu.memory_space<vmem>>, %arg4: memref<32x128xbf16, #tpu.memory_space<vmem>>) attributes {dimension_semantics = [#tpu.dimension_semantics<parallel>], iteration_bounds = array<i64: 1>, scalar_prefetch = 0 : i64, scratch_operands = 0 : i64, tpu.core_type = #tpu.core_type<tc>, window_params = [{transform_indices = @transform_0, window_bounds = array<i64: 32, 128>}, {pipeline_mode = #tpu.pipeline_mode<synchronous>, transform_indices = @transform_1, window_bounds = array<i64: 1, 128>}, {pipeline_mode = #tpu.pipeline_mode<synchronous>, transform_indices = @transform_2, window_bounds = array<i64: 1, 128>}, {transform_indices = @transform_3, window_bounds = array<i64: 32, 128>}]} {
    %c0 = arith.constant 0 : index
    %c0_0 = arith.constant 0 : index
    %0 = vector.load %arg1[%c0, %c0_0] : memref<32x128xf32, #tpu.memory_space<vmem>>, vector<32x128xf32>
    %c0_1 = arith.constant 0 : index
    %c0_2 = arith.constant 0 : index
    %1 = vector.load %arg2[%c0_1, %c0_2] : memref<1x128xf32, #tpu.memory_space<vmem>>, vector<1x128xf32>
    %2 = vector.broadcast %1 : vector<1x128xf32> to vector<32x128xf32>
    %3 = arith.mulf %0, %2 : vector<32x128xf32>
    %c0_3 = arith.constant 0 : index
    %c0_4 = arith.constant 0 : index
    %4 = vector.load %arg3[%c0_3, %c0_4] : memref<1x128xf32, #tpu.memory_space<vmem>>, vector<1x128xf32>
    %5 = vector.broadcast %4 : vector<1x128xf32> to vector<32x128xf32>
    %6 = arith.addf %3, %5 : vector<32x128xf32>
    %cst = arith.constant 0.000000e+00 : f32
    %7 = vector.broadcast %cst : f32 to vector<32x128xf32>
    %8 = arith.cmpf ogt, %6, %7 : vector<32x128xf32>
    %cst_5 = arith.constant 2.000000e-01 : f32
    %9 = vector.broadcast %cst_5 : f32 to vector<32x128xf32>
    %10 = arith.mulf %9, %6 : vector<32x128xf32>
    %11 = arith.select %8, %6, %10 : vector<32x128xi1>, vector<32x128xf32>
    %12 = arith.truncf %11 : vector<32x128xf32> to vector<32x128xbf16>
    %c0_6 = arith.constant 0 : index
    %c0_7 = arith.constant 0 : index
    %13 = vector.load %arg4[%c0_6, %c0_7] : memref<32x128xbf16, #tpu.memory_space<vmem>>, vector<32x128xbf16>
    tpu.vector_store %arg4[%c0_6, %c0_7], %12 {strides = array<i32>} : memref<32x128xbf16, #tpu.memory_space<vmem>>, vector<32x128xbf16>,
    return
  }
  func.func @transform_0(%arg0: i32) -> (i32, i32) {
    %c0_i32 = arith.constant 0 : i32
    %c0_i32_0 = arith.constant 0 : i32
    return %arg0, %c0_i32 : i32, i32
  }
  func.func @transform_1(%arg0: i32) -> (i32, i32) {
    %c0_i32 = arith.constant 0 : i32
    %c0_i32_0 = arith.constant 0 : i32
    %c0_i32_1 = arith.constant 0 : i32
    return %c0_i32, %c0_i32_0 : i32, i32
  }
  func.func @transform_2(%arg0: i32) -> (i32, i32) {
    %c0_i32 = arith.constant 0 : i32
    %c0_i32_0 = arith.constant 0 : i32
    %c0_i32_1 = arith.constant 0 : i32
    return %c0_i32, %c0_i32_0 : i32, i32
  }
  func.func @transform_3(%arg0: i32) -> (i32, i32) {
    %c0_i32 = arith.constant 0 : i32
    %c0_i32_0 = arith.constant 0 : i32
    return %arg0, %c0_i32 : i32, i32
  }
}

module attributes {stable_mosaic.version = 11 : i64} {
  func.func @_conv_bn_stats_kernel(%arg0: i32, %arg1: i32, %arg2: i32, %arg3: memref<32x3200xbf16, #tpu.memory_space<vmem>>, %arg4: memref<3200x128xbf16, #tpu.memory_space<vmem>>, %arg5: memref<1x128xf32, #tpu.memory_space<vmem>>, %arg6: memref<32x128xf32, #tpu.memory_space<vmem>>, %arg7: memref<1x1x128xf32, #tpu.memory_space<vmem>>, %arg8: memref<1x1x128xf32, #tpu.memory_space<vmem>>, %arg9: memref<32x128xf32, #tpu.memory_space<vmem>>) attributes {dimension_semantics = [#tpu.dimension_semantics<parallel>, #tpu.dimension_semantics<parallel>, #tpu.dimension_semantics<arbitrary>], iteration_bounds = array<i64: 1, 1, 1>, scalar_prefetch = 0 : i64, scratch_operands = 1 : i64, tpu.core_type = #tpu.core_type<tc>, window_params = [{transform_indices = @transform_0, window_bounds = array<i64: 32, 3200>}, {transform_indices = @transform_1, window_bounds = array<i64: 3200, 128>}, {transform_indices = @transform_2, window_bounds = array<i64: 1, 128>}, {transform_indices = @transform_3, window_bounds = array<i64: 32, 128>}, {transform_indices = @transform_4, window_bounds = array<i64: 1, 1, 128>}, {transform_indices = @transform_5, window_bounds = array<i64: 1, 1, 128>}]} {
    %c0_i32 = arith.constant 0 : i32
    %0 = arith.cmpi eq, %arg2, %c0_i32 : i32
    %1 = arith.extui %0 : i1 to i32
    %c0_i32_0 = arith.constant 0 : i32
    %2 = arith.cmpi ne, %1, %c0_i32_0 : i32
    scf.if %2 {
      %cst_10 = arith.constant 0.000000e+00 : f32
      %12 = vector.broadcast %cst_10 : f32 to vector<32x128xf32>
      %c0_11 = arith.constant 0 : index
      %c0_12 = arith.constant 0 : index
      %13 = vector.load %arg9[%c0_11, %c0_12] : memref<32x128xf32, #tpu.memory_space<vmem>>, vector<32x128xf32>
      tpu.vector_store %arg9[%c0_11, %c0_12], %12 {strides = array<i32>} : memref<32x128xf32, #tpu.memory_space<vmem>>, vector<32x128xf32>,
    } else {
    }
    %c0 = arith.constant 0 : index
    %c0_1 = arith.constant 0 : index
    %3 = vector.load %arg9[%c0, %c0_1] : memref<32x128xf32, #tpu.memory_space<vmem>>, vector<32x128xf32>
    %c0_2 = arith.constant 0 : index
    %c0_3 = arith.constant 0 : index
    %4 = vector.load %arg3[%c0_2, %c0_3] : memref<32x3200xbf16, #tpu.memory_space<vmem>>, vector<32x3200xbf16>
    %c0_4 = arith.constant 0 : index
    %c0_5 = arith.constant 0 : index
    %5 = vector.load %arg4[%c0_4, %c0_5] : memref<3200x128xbf16, #tpu.memory_space<vmem>>, vector<3200x128xbf16>
    %cst = arith.constant dense<0.000000e+00> : vector<32x128xf32>
    %6 = tpu.matmul %4, %5, %cst {dimension_numbers = #tpu.dot_dimension_numbers<[1], [0], [0], [1], [0, 0, 1, 1], [], []>} : vector<32x3200xbf16>, vector<3200x128xbf16>, vector<32x128xf32> -> vector<32x128xf32>
    %7 = arith.addf %3, %6 : vector<32x128xf32>
    %c0_6 = arith.constant 0 : index
    %c0_7 = arith.constant 0 : index
    %8 = vector.load %arg9[%c0_6, %c0_7] : memref<32x128xf32, #tpu.memory_space<vmem>>, vector<32x128xf32>
    tpu.vector_store %arg9[%c0_6, %c0_7], %7 {strides = array<i32>} : memref<32x128xf32, #tpu.memory_space<vmem>>, vector<32x128xf32>,
    %c0_i32_8 = arith.constant 0 : i32
    %9 = arith.cmpi eq, %arg2, %c0_i32_8 : i32
    %10 = arith.extui %9 : i1 to i32
    %c0_i32_9 = arith.constant 0 : i32
    %11 = arith.cmpi ne, %10, %c0_i32_9 : i32
    scf.if %11 {
      %c0_10 = arith.constant 0 : index
      %c0_11 = arith.constant 0 : index
      %12 = vector.load %arg9[%c0_10, %c0_11] : memref<32x128xf32, #tpu.memory_space<vmem>>, vector<32x128xf32>
      %c0_12 = arith.constant 0 : index
      %c0_13 = arith.constant 0 : index
      %13 = vector.load %arg5[%c0_12, %c0_13] : memref<1x128xf32, #tpu.memory_space<vmem>>, vector<1x128xf32>
      %14 = vector.broadcast %13 : vector<1x128xf32> to vector<32x128xf32>
      %15 = arith.addf %12, %14 : vector<32x128xf32>
      %c0_14 = arith.constant 0 : index
      %c0_15 = arith.constant 0 : index
      %16 = vector.load %arg6[%c0_14, %c0_15] : memref<32x128xf32, #tpu.memory_space<vmem>>, vector<32x128xf32>
      tpu.vector_store %arg6[%c0_14, %c0_15], %15 {strides = array<i32>} : memref<32x128xf32, #tpu.memory_space<vmem>>, vector<32x128xf32>,
      %cst_16 = arith.constant dense<0.000000e+00> : vector<128xf32>
      %17 = vector.multi_reduction <add>, %15, %cst_16 [0] : vector<32x128xf32> to vector<128xf32>
      %18 = vector.shape_cast %17 : vector<128xf32> to vector<1x128xf32>
      %19 = vector.shape_cast %18 : vector<1x128xf32> to vector<1x1x128xf32>
      %c0_17 = arith.constant 0 : index
      %c0_18 = arith.constant 0 : index
      %c0_19 = arith.constant 0 : index
      %20 = vector.load %arg7[%c0_17, %c0_18, %c0_19] : memref<1x1x128xf32, #tpu.memory_space<vmem>>, vector<1x1x128xf32>
      tpu.vector_store %arg7[%c0_17, %c0_18, %c0_19], %19 {strides = array<i32>} : memref<1x1x128xf32, #tpu.memory_space<vmem>>, vector<1x1x128xf32>,
      %21 = arith.mulf %15, %15 : vector<32x128xf32>
      %cst_20 = arith.constant dense<0.000000e+00> : vector<128xf32>
      %22 = vector.multi_reduction <add>, %21, %cst_20 [0] : vector<32x128xf32> to vector<128xf32>
      %23 = vector.shape_cast %22 : vector<128xf32> to vector<1x128xf32>
      %24 = vector.shape_cast %23 : vector<1x128xf32> to vector<1x1x128xf32>
      %c0_21 = arith.constant 0 : index
      %c0_22 = arith.constant 0 : index
      %c0_23 = arith.constant 0 : index
      %25 = vector.load %arg8[%c0_21, %c0_22, %c0_23] : memref<1x1x128xf32, #tpu.memory_space<vmem>>, vector<1x1x128xf32>
      tpu.vector_store %arg8[%c0_21, %c0_22, %c0_23], %24 {strides = array<i32>} : memref<1x1x128xf32, #tpu.memory_space<vmem>>, vector<1x1x128xf32>,
    } else {
    }
    return
  }
  func.func @transform_0(%arg0: i32, %arg1: i32, %arg2: i32) -> (i32, i32) {
    %c0_i32 = arith.constant 0 : i32
    return %arg0, %arg2 : i32, i32
  }
  func.func @transform_1(%arg0: i32, %arg1: i32, %arg2: i32) -> (i32, i32) {
    %c0_i32 = arith.constant 0 : i32
    return %arg2, %arg1 : i32, i32
  }
  func.func @transform_2(%arg0: i32, %arg1: i32, %arg2: i32) -> (i32, i32) {
    %c0_i32 = arith.constant 0 : i32
    %c0_i32_0 = arith.constant 0 : i32
    return %c0_i32, %arg1 : i32, i32
  }
  func.func @transform_3(%arg0: i32, %arg1: i32, %arg2: i32) -> (i32, i32) {
    %c0_i32 = arith.constant 0 : i32
    return %arg0, %arg1 : i32, i32
  }
  func.func @transform_4(%arg0: i32, %arg1: i32, %arg2: i32) -> (i32, i32, i32) {
    %c0_i32 = arith.constant 0 : i32
    %c0_i32_0 = arith.constant 0 : i32
    return %arg0, %c0_i32, %arg1 : i32, i32, i32
  }
  func.func @transform_5(%arg0: i32, %arg1: i32, %arg2: i32) -> (i32, i32, i32) {
    %c0_i32 = arith.constant 0 : i32
    %c0_i32_0 = arith.constant 0 : i32
    return %arg0, %c0_i32, %arg1 : i32, i32, i32
  }
}

module attributes {stable_mosaic.version = 11 : i64} {
  func.func @_bn_act_kernel(%arg0: i32, %arg1: memref<8x128xf32, #tpu.memory_space<vmem>>, %arg2: memref<1x128xf32, #tpu.memory_space<vmem>>, %arg3: memref<1x128xf32, #tpu.memory_space<vmem>>, %arg4: memref<8x128xbf16, #tpu.memory_space<vmem>>) attributes {dimension_semantics = [#tpu.dimension_semantics<parallel>], iteration_bounds = array<i64: 1>, scalar_prefetch = 0 : i64, scratch_operands = 0 : i64, tpu.core_type = #tpu.core_type<tc>, window_params = [{transform_indices = @transform_0, window_bounds = array<i64: 8, 128>}, {pipeline_mode = #tpu.pipeline_mode<synchronous>, transform_indices = @transform_1, window_bounds = array<i64: 1, 128>}, {pipeline_mode = #tpu.pipeline_mode<synchronous>, transform_indices = @transform_2, window_bounds = array<i64: 1, 128>}, {transform_indices = @transform_3, window_bounds = array<i64: 8, 128>}]} {
    %c0 = arith.constant 0 : index
    %c0_0 = arith.constant 0 : index
    %0 = vector.load %arg1[%c0, %c0_0] : memref<8x128xf32, #tpu.memory_space<vmem>>, vector<8x128xf32>
    %c0_1 = arith.constant 0 : index
    %c0_2 = arith.constant 0 : index
    %1 = vector.load %arg2[%c0_1, %c0_2] : memref<1x128xf32, #tpu.memory_space<vmem>>, vector<1x128xf32>
    %2 = vector.broadcast %1 : vector<1x128xf32> to vector<8x128xf32>
    %3 = arith.mulf %0, %2 : vector<8x128xf32>
    %c0_3 = arith.constant 0 : index
    %c0_4 = arith.constant 0 : index
    %4 = vector.load %arg3[%c0_3, %c0_4] : memref<1x128xf32, #tpu.memory_space<vmem>>, vector<1x128xf32>
    %5 = vector.broadcast %4 : vector<1x128xf32> to vector<8x128xf32>
    %6 = arith.addf %3, %5 : vector<8x128xf32>
    %cst = arith.constant 0.000000e+00 : f32
    %7 = vector.broadcast %cst : f32 to vector<8x128xf32>
    %8 = arith.cmpf ogt, %6, %7 : vector<8x128xf32>
    %cst_5 = arith.constant 2.000000e-01 : f32
    %9 = vector.broadcast %cst_5 : f32 to vector<8x128xf32>
    %10 = arith.mulf %9, %6 : vector<8x128xf32>
    %11 = arith.select %8, %6, %10 : vector<8x128xi1>, vector<8x128xf32>
    %12 = arith.truncf %11 : vector<8x128xf32> to vector<8x128xbf16>
    %c0_6 = arith.constant 0 : index
    %c0_7 = arith.constant 0 : index
    %13 = vector.load %arg4[%c0_6, %c0_7] : memref<8x128xbf16, #tpu.memory_space<vmem>>, vector<8x128xbf16>
    tpu.vector_store %arg4[%c0_6, %c0_7], %12 {strides = array<i32>} : memref<8x128xbf16, #tpu.memory_space<vmem>>, vector<8x128xbf16>,
    return
  }
  func.func @transform_0(%arg0: i32) -> (i32, i32) {
    %c0_i32 = arith.constant 0 : i32
    %c0_i32_0 = arith.constant 0 : i32
    return %arg0, %c0_i32 : i32, i32
  }
  func.func @transform_1(%arg0: i32) -> (i32, i32) {
    %c0_i32 = arith.constant 0 : i32
    %c0_i32_0 = arith.constant 0 : i32
    %c0_i32_1 = arith.constant 0 : i32
    return %c0_i32, %c0_i32_0 : i32, i32
  }
  func.func @transform_2(%arg0: i32) -> (i32, i32) {
    %c0_i32 = arith.constant 0 : i32
    %c0_i32_0 = arith.constant 0 : i32
    %c0_i32_1 = arith.constant 0 : i32
    return %c0_i32, %c0_i32_0 : i32, i32
  }
  func.func @transform_3(%arg0: i32) -> (i32, i32) {
    %c0_i32 = arith.constant 0 : i32
    %c0_i32_0 = arith.constant 0 : i32
    return %arg0, %c0_i32 : i32, i32
  }
}

module attributes {stable_mosaic.version = 11 : i64} {
  func.func @_conv_bn_stats_kernel(%arg0: i32, %arg1: i32, %arg2: i32, %arg3: memref<8x3200xbf16, #tpu.memory_space<vmem>>, %arg4: memref<3200x128xbf16, #tpu.memory_space<vmem>>, %arg5: memref<1x128xf32, #tpu.memory_space<vmem>>, %arg6: memref<8x128xf32, #tpu.memory_space<vmem>>, %arg7: memref<1x1x128xf32, #tpu.memory_space<vmem>>, %arg8: memref<1x1x128xf32, #tpu.memory_space<vmem>>, %arg9: memref<8x128xf32, #tpu.memory_space<vmem>>) attributes {dimension_semantics = [#tpu.dimension_semantics<parallel>, #tpu.dimension_semantics<parallel>, #tpu.dimension_semantics<arbitrary>], iteration_bounds = array<i64: 1, 1, 1>, scalar_prefetch = 0 : i64, scratch_operands = 1 : i64, tpu.core_type = #tpu.core_type<tc>, window_params = [{transform_indices = @transform_0, window_bounds = array<i64: 8, 3200>}, {transform_indices = @transform_1, window_bounds = array<i64: 3200, 128>}, {transform_indices = @transform_2, window_bounds = array<i64: 1, 128>}, {transform_indices = @transform_3, window_bounds = array<i64: 8, 128>}, {transform_indices = @transform_4, window_bounds = array<i64: 1, 1, 128>}, {transform_indices = @transform_5, window_bounds = array<i64: 1, 1, 128>}]} {
    %c0_i32 = arith.constant 0 : i32
    %0 = arith.cmpi eq, %arg2, %c0_i32 : i32
    %1 = arith.extui %0 : i1 to i32
    %c0_i32_0 = arith.constant 0 : i32
    %2 = arith.cmpi ne, %1, %c0_i32_0 : i32
    scf.if %2 {
      %cst_10 = arith.constant 0.000000e+00 : f32
      %12 = vector.broadcast %cst_10 : f32 to vector<8x128xf32>
      %c0_11 = arith.constant 0 : index
      %c0_12 = arith.constant 0 : index
      %13 = vector.load %arg9[%c0_11, %c0_12] : memref<8x128xf32, #tpu.memory_space<vmem>>, vector<8x128xf32>
      tpu.vector_store %arg9[%c0_11, %c0_12], %12 {strides = array<i32>} : memref<8x128xf32, #tpu.memory_space<vmem>>, vector<8x128xf32>,
    } else {
    }
    %c0 = arith.constant 0 : index
    %c0_1 = arith.constant 0 : index
    %3 = vector.load %arg9[%c0, %c0_1] : memref<8x128xf32, #tpu.memory_space<vmem>>, vector<8x128xf32>
    %c0_2 = arith.constant 0 : index
    %c0_3 = arith.constant 0 : index
    %4 = vector.load %arg3[%c0_2, %c0_3] : memref<8x3200xbf16, #tpu.memory_space<vmem>>, vector<8x3200xbf16>
    %c0_4 = arith.constant 0 : index
    %c0_5 = arith.constant 0 : index
    %5 = vector.load %arg4[%c0_4, %c0_5] : memref<3200x128xbf16, #tpu.memory_space<vmem>>, vector<3200x128xbf16>
    %cst = arith.constant dense<0.000000e+00> : vector<8x128xf32>
    %6 = tpu.matmul %4, %5, %cst {dimension_numbers = #tpu.dot_dimension_numbers<[1], [0], [0], [1], [0, 0, 1, 1], [], []>} : vector<8x3200xbf16>, vector<3200x128xbf16>, vector<8x128xf32> -> vector<8x128xf32>
    %7 = arith.addf %3, %6 : vector<8x128xf32>
    %c0_6 = arith.constant 0 : index
    %c0_7 = arith.constant 0 : index
    %8 = vector.load %arg9[%c0_6, %c0_7] : memref<8x128xf32, #tpu.memory_space<vmem>>, vector<8x128xf32>
    tpu.vector_store %arg9[%c0_6, %c0_7], %7 {strides = array<i32>} : memref<8x128xf32, #tpu.memory_space<vmem>>, vector<8x128xf32>,
    %c0_i32_8 = arith.constant 0 : i32
    %9 = arith.cmpi eq, %arg2, %c0_i32_8 : i32
    %10 = arith.extui %9 : i1 to i32
    %c0_i32_9 = arith.constant 0 : i32
    %11 = arith.cmpi ne, %10, %c0_i32_9 : i32
    scf.if %11 {
      %c0_10 = arith.constant 0 : index
      %c0_11 = arith.constant 0 : index
      %12 = vector.load %arg9[%c0_10, %c0_11] : memref<8x128xf32, #tpu.memory_space<vmem>>, vector<8x128xf32>
      %c0_12 = arith.constant 0 : index
      %c0_13 = arith.constant 0 : index
      %13 = vector.load %arg5[%c0_12, %c0_13] : memref<1x128xf32, #tpu.memory_space<vmem>>, vector<1x128xf32>
      %14 = vector.broadcast %13 : vector<1x128xf32> to vector<8x128xf32>
      %15 = arith.addf %12, %14 : vector<8x128xf32>
      %c0_14 = arith.constant 0 : index
      %c0_15 = arith.constant 0 : index
      %16 = vector.load %arg6[%c0_14, %c0_15] : memref<8x128xf32, #tpu.memory_space<vmem>>, vector<8x128xf32>
      tpu.vector_store %arg6[%c0_14, %c0_15], %15 {strides = array<i32>} : memref<8x128xf32, #tpu.memory_space<vmem>>, vector<8x128xf32>,
      %cst_16 = arith.constant dense<0.000000e+00> : vector<128xf32>
      %17 = vector.multi_reduction <add>, %15, %cst_16 [0] : vector<8x128xf32> to vector<128xf32>
      %18 = vector.shape_cast %17 : vector<128xf32> to vector<1x128xf32>
      %19 = vector.shape_cast %18 : vector<1x128xf32> to vector<1x1x128xf32>
      %c0_17 = arith.constant 0 : index
      %c0_18 = arith.constant 0 : index
      %c0_19 = arith.constant 0 : index
      %20 = vector.load %arg7[%c0_17, %c0_18, %c0_19] : memref<1x1x128xf32, #tpu.memory_space<vmem>>, vector<1x1x128xf32>
      tpu.vector_store %arg7[%c0_17, %c0_18, %c0_19], %19 {strides = array<i32>} : memref<1x1x128xf32, #tpu.memory_space<vmem>>, vector<1x1x128xf32>,
      %21 = arith.mulf %15, %15 : vector<8x128xf32>
      %cst_20 = arith.constant dense<0.000000e+00> : vector<128xf32>
      %22 = vector.multi_reduction <add>, %21, %cst_20 [0] : vector<8x128xf32> to vector<128xf32>
      %23 = vector.shape_cast %22 : vector<128xf32> to vector<1x128xf32>
      %24 = vector.shape_cast %23 : vector<1x128xf32> to vector<1x1x128xf32>
      %c0_21 = arith.constant 0 : index
      %c0_22 = arith.constant 0 : index
      %c0_23 = arith.constant 0 : index
      %25 = vector.load %arg8[%c0_21, %c0_22, %c0_23] : memref<1x1x128xf32, #tpu.memory_space<vmem>>, vector<1x1x128xf32>
      tpu.vector_store %arg8[%c0_21, %c0_22, %c0_23], %24 {strides = array<i32>} : memref<1x1x128xf32, #tpu.memory_space<vmem>>, vector<1x1x128xf32>,
    } else {
    }
    return
  }
  func.func @transform_0(%arg0: i32, %arg1: i32, %arg2: i32) -> (i32, i32) {
    %c0_i32 = arith.constant 0 : i32
    return %arg0, %arg2 : i32, i32
  }
  func.func @transform_1(%arg0: i32, %arg1: i32, %arg2: i32) -> (i32, i32) {
    %c0_i32 = arith.constant 0 : i32
    return %arg2, %arg1 : i32, i32
  }
  func.func @transform_2(%arg0: i32, %arg1: i32, %arg2: i32) -> (i32, i32) {
    %c0_i32 = arith.constant 0 : i32
    %c0_i32_0 = arith.constant 0 : i32
    return %c0_i32, %arg1 : i32, i32
  }
  func.func @transform_3(%arg0: i32, %arg1: i32, %arg2: i32) -> (i32, i32) {
    %c0_i32 = arith.constant 0 : i32
    return %arg0, %arg1 : i32, i32
  }
  func.func @transform_4(%arg0: i32, %arg1: i32, %arg2: i32) -> (i32, i32, i32) {
    %c0_i32 = arith.constant 0 : i32
    %c0_i32_0 = arith.constant 0 : i32
    return %arg0, %c0_i32, %arg1 : i32, i32, i32
  }
  func.func @transform_5(%arg0: i32, %arg1: i32, %arg2: i32) -> (i32, i32, i32) {
    %c0_i32 = arith.constant 0 : i32
    %c0_i32_0 = arith.constant 0 : i32
    return %arg0, %c0_i32, %arg1 : i32, i32, i32
  }
}

module attributes {stable_mosaic.version = 11 : i64} {
  func.func @_fc_heads_kernel(%arg0: i32, %arg1: memref<2x512xbf16, #tpu.memory_space<vmem>>, %arg2: memref<512x256xbf16, #tpu.memory_space<vmem>>, %arg3: memref<1x256xf32, #tpu.memory_space<vmem>>, %arg4: memref<2x128xf32, #tpu.memory_space<vmem>>, %arg5: memref<2x128xf32, #tpu.memory_space<vmem>>, %arg6: memref<2x256xf32, #tpu.memory_space<vmem>>) attributes {dimension_semantics = [#tpu.dimension_semantics<arbitrary>], iteration_bounds = array<i64: 1>, scalar_prefetch = 0 : i64, scratch_operands = 1 : i64, tpu.core_type = #tpu.core_type<tc>, window_params = [{transform_indices = @transform_0, window_bounds = array<i64: 2, 512>}, {transform_indices = @transform_1, window_bounds = array<i64: 512, 256>}, {pipeline_mode = #tpu.pipeline_mode<synchronous>, transform_indices = @transform_2, window_bounds = array<i64: 1, 256>}, {pipeline_mode = #tpu.pipeline_mode<synchronous>, transform_indices = @transform_3, window_bounds = array<i64: 2, 128>}, {pipeline_mode = #tpu.pipeline_mode<synchronous>, transform_indices = @transform_4, window_bounds = array<i64: 2, 128>}]} {
    %c0_i32 = arith.constant 0 : i32
    %0 = arith.cmpi eq, %arg0, %c0_i32 : i32
    %1 = arith.extui %0 : i1 to i32
    %c0_i32_0 = arith.constant 0 : i32
    %2 = arith.cmpi ne, %1, %c0_i32_0 : i32
    scf.if %2 {
      %cst_10 = arith.constant 0.000000e+00 : f32
      %12 = vector.broadcast %cst_10 : f32 to vector<2x256xf32>
      %c0_11 = arith.constant 0 : index
      %c0_12 = arith.constant 0 : index
      %13 = vector.load %arg6[%c0_11, %c0_12] : memref<2x256xf32, #tpu.memory_space<vmem>>, vector<2x256xf32>
      tpu.vector_store %arg6[%c0_11, %c0_12], %12 {strides = array<i32>} : memref<2x256xf32, #tpu.memory_space<vmem>>, vector<2x256xf32>,
    } else {
    }
    %c0 = arith.constant 0 : index
    %c0_1 = arith.constant 0 : index
    %3 = vector.load %arg6[%c0, %c0_1] : memref<2x256xf32, #tpu.memory_space<vmem>>, vector<2x256xf32>
    %c0_2 = arith.constant 0 : index
    %c0_3 = arith.constant 0 : index
    %4 = vector.load %arg1[%c0_2, %c0_3] : memref<2x512xbf16, #tpu.memory_space<vmem>>, vector<2x512xbf16>
    %c0_4 = arith.constant 0 : index
    %c0_5 = arith.constant 0 : index
    %5 = vector.load %arg2[%c0_4, %c0_5] : memref<512x256xbf16, #tpu.memory_space<vmem>>, vector<512x256xbf16>
    %cst = arith.constant dense<0.000000e+00> : vector<2x256xf32>
    %6 = tpu.matmul %4, %5, %cst {dimension_numbers = #tpu.dot_dimension_numbers<[1], [0], [0], [1], [0, 0, 1, 1], [], []>} : vector<2x512xbf16>, vector<512x256xbf16>, vector<2x256xf32> -> vector<2x256xf32>
    %7 = arith.addf %3, %6 : vector<2x256xf32>
    %c0_6 = arith.constant 0 : index
    %c0_7 = arith.constant 0 : index
    %8 = vector.load %arg6[%c0_6, %c0_7] : memref<2x256xf32, #tpu.memory_space<vmem>>, vector<2x256xf32>
    tpu.vector_store %arg6[%c0_6, %c0_7], %7 {strides = array<i32>} : memref<2x256xf32, #tpu.memory_space<vmem>>, vector<2x256xf32>,
    %c0_i32_8 = arith.constant 0 : i32
    %9 = arith.cmpi eq, %arg0, %c0_i32_8 : i32
    %10 = arith.extui %9 : i1 to i32
    %c0_i32_9 = arith.constant 0 : i32
    %11 = arith.cmpi ne, %10, %c0_i32_9 : i32
    scf.if %11 {
      %c0_10 = arith.constant 0 : index
      %c0_11 = arith.constant 0 : index
      %12 = vector.load %arg6[%c0_10, %c0_11] : memref<2x256xf32, #tpu.memory_space<vmem>>, vector<2x256xf32>
      %c0_12 = arith.constant 0 : index
      %c0_13 = arith.constant 0 : index
      %13 = vector.load %arg3[%c0_12, %c0_13] : memref<1x256xf32, #tpu.memory_space<vmem>>, vector<1x256xf32>
      %14 = vector.broadcast %13 : vector<1x256xf32> to vector<2x256xf32>
      %15 = arith.addf %12, %14 : vector<2x256xf32>
      %16 = vector.extract_strided_slice %15 {offsets = [0, 0], sizes = [2, 128], strides = [1, 1]} : vector<2x256xf32> to vector<2x128xf32>
      %c0_14 = arith.constant 0 : index
      %c0_15 = arith.constant 0 : index
      %17 = vector.load %arg4[%c0_14, %c0_15] : memref<2x128xf32, #tpu.memory_space<vmem>>, vector<2x128xf32>
      tpu.vector_store %arg4[%c0_14, %c0_15], %16 {strides = array<i32>} : memref<2x128xf32, #tpu.memory_space<vmem>>, vector<2x128xf32>,
      %18 = vector.extract_strided_slice %15 {offsets = [0, 128], sizes = [2, 128], strides = [1, 1]} : vector<2x256xf32> to vector<2x128xf32>
      %19 = math.tanh %18 : vector<2x128xf32>
      %c0_16 = arith.constant 0 : index
      %c0_17 = arith.constant 0 : index
      %20 = vector.load %arg5[%c0_16, %c0_17] : memref<2x128xf32, #tpu.memory_space<vmem>>, vector<2x128xf32>
      tpu.vector_store %arg5[%c0_16, %c0_17], %19 {strides = array<i32>} : memref<2x128xf32, #tpu.memory_space<vmem>>, vector<2x128xf32>,
    } else {
    }
    return
  }
  func.func @transform_0(%arg0: i32) -> (i32, i32) {
    %c0_i32 = arith.constant 0 : i32
    %c0_i32_0 = arith.constant 0 : i32
    return %c0_i32, %arg0 : i32, i32
  }
  func.func @transform_1(%arg0: i32) -> (i32, i32) {
    %c0_i32 = arith.constant 0 : i32
    %c0_i32_0 = arith.constant 0 : i32
    return %arg0, %c0_i32 : i32, i32
  }
  func.func @transform_2(%arg0: i32) -> (i32, i32) {
    %c0_i32 = arith.constant 0 : i32
    %c0_i32_0 = arith.constant 0 : i32
    %c0_i32_1 = arith.constant 0 : i32
    return %c0_i32, %c0_i32_0 : i32, i32
  }
  func.func @transform_3(%arg0: i32) -> (i32, i32) {
    %c0_i32 = arith.constant 0 : i32
    %c0_i32_0 = arith.constant 0 : i32
    %c0_i32_1 = arith.constant 0 : i32
    return %c0_i32, %c0_i32_0 : i32, i32
  }
  func.func @transform_4(%arg0: i32) -> (i32, i32) {
    %c0_i32 = arith.constant 0 : i32
    %c0_i32_0 = arith.constant 0 : i32
    %c0_i32_1 = arith.constant 0 : i32
    return %c0_i32, %c0_i32_0 : i32, i32
  }
}

</mosaic_0001>

<llo_original>
// kernel: _lambda_.8
$region0: #{_lambda_.8}
  #allocation0 [shape = 'u32[]', space=smem, size = 0x4, offset = 0x4, fixed_abs, tag = 'smem constant byte address 0x4 - core index']
  #allocation1 [shape = 'u32[144,128]{1,0:T(1,128)}', space=vmem, size = 0x12000, scoped, tag = 'internal scratch']
  #allocation2 [shape = 'f32[512,128]{1,0:T(8,128)}', space=vmem, size = 0x40000, scoped, tag = 'scratch operand']
  %s0 = inlined_call_operand.vmem [shape: bf16[512,75], index: 0, kind: input, shape index: {}]
  %s1 = inlined_call_operand.vmem [shape: bf16[75,128], index: 1, kind: input, shape index: {}]
  %s2 = inlined_call_operand.vmem [shape: f32[1,128], index: 2, kind: input, shape index: {}]
  %s3 = inlined_call_operand.vmem [shape: bf16[512,128], index: 3, kind: output, shape index: {}]
  %s4 = sld [smem:[#allocation0]]
  $region30: #{_lambda_.8} parent=0
    _
  %s6 = ssub.s32 1, %s4
  %s7 = scalar_select 0, %s6, %s4
  // Predicated region
  $region2: #{_lambda_.8} parent=0 // pred_check
    _
  $region3: #{_lambda_.8} parent=0 // pred_check_branch
    %9 = sbr.rel (0) target = $region5
  $region4: #{_lambda_.8} parent=0 // pred_region
    _
  $region5: #{_lambda_.8} parent=0 // pred_fallthru
    _
  // Predicated region
  $region6: #{_lambda_.8} parent=0 // pred_check
    _
  $region7: #{_lambda_.8} parent=0 // pred_check_branch
    %11 = sbr.rel (0) target = $region9
  $region8: #{_lambda_.8} parent=0 // pred_region
    _
  $region9: #{_lambda_.8} parent=0 // pred_fallthru
    _
  // Predicated region
  $region10: #{_lambda_.8} parent=0 // pred_check
    _
  $region11: #{_lambda_.8} parent=0 // pred_check_branch
    %13 = sbr.rel (0) target = $region13
  $region12: #{_lambda_.8} parent=0 // pred_region
    _
  $region13: #{_lambda_.8} parent=0 // pred_fallthru
    _
  %p15 = scmp.eq.s32.totalorder 0, 0
  // Predicated region
  $region14: #{_lambda_.8} parent=0 // pred_check
    %p16 = pneg %p15
  $region15: #{_lambda_.8} parent=0 // pred_check_branch
    %18 = sbr.rel (%p16) target = $region17
  $region16: #{_lambda_.8} parent=0 // pred_region
    %19 = vst [vmem:[#allocation2] sm:$0xff] 0.0
    %20 = vst [vmem:[#allocation2 + $0x8] sm:$0xff] 0.0
    %21 = vst [vmem:[#allocation2 + $0x10] sm:$0xff] 0.0
    %22 = vst [vmem:[#allocation2 + $0x18] sm:$0xff] 0.0
    %23 = vst [vmem:[#allocation2 + $0x20] sm:$0xff] 0.0
    %24 = vst [vmem:[#allocation2 + $0x28] sm:$0xff] 0.0
    %25 = vst [vmem:[#allocation2 + $0x30] sm:$0xff] 0.0
    %26 = vst [vmem:[#allocation2 + $0x38] sm:$0xff] 0.0
    %27 = vst [vmem:[#allocation2 + $0x40] sm:$0xff] 0.0
    %28 = vst [vmem:[#allocation2 + $0x48] sm:$0xff] 0.0
    %29 = vst [vmem:[#allocation2 + $0x50] sm:$0xff] 0.0
    %30 = vst [vmem:[#allocation2 + $0x58] sm:$0xff] 0.0
    %31 = vst [vmem:[#allocation2 + $0x60] sm:$0xff] 0.0
    %32 = vst [vmem:[#allocation2 + $0x68] sm:$0xff] 0.0
    %33 = vst [vmem:[#allocation2 + $0x70] sm:$0xff] 0.0
    %34 = vst [vmem:[#allocation2 + $0x78] sm:$0xff] 0.0
    %35 = vst [vmem:[#allocation2 + $0x80] sm:$0xff] 0.0
    %36 = vst [vmem:[#allocation2 + $0x88] sm:$0xff] 0.0
    %37 = vst [vmem:[#allocation2 + $0x90] sm:$0xff] 0.0
    %38 = vst [vmem:[#allocation2 + $0x98] sm:$0xff] 0.0
    %39 = vst [vmem:[#allocation2 + $0xa0] sm:$0xff] 0.0
    %40 = vst [vmem:[#allocation2 + $0xa8] sm:$0xff] 0.0
    %41 = vst [vmem:[#allocation2 + $0xb0] sm:$0xff] 0.0
    %42 = vst [vmem:[#allocation2 + $0xb8] sm:$0xff] 0.0
    %43 = vst [vmem:[#allocation2 + $0xc0] sm:$0xff] 0.0
    %44 = vst [vmem:[#allocation2 + $0xc8] sm:$0xff] 0.0
    %45 = vst [vmem:[#allocation2 + $0xd0] sm:$0xff] 0.0
    %46 = vst [vmem:[#allocation2 + $0xd8] sm:$0xff] 0.0
    %47 = vst [vmem:[#allocation2 + $0xe0] sm:$0xff] 0.0
    %48 = vst [vmem:[#allocation2 + $0xe8] sm:$0xff] 0.0
    %49 = vst [vmem:[#allocation2 + $0xf0] sm:$0xff] 0.0
    %50 = vst [vmem:[#allocation2 + $0xf8] sm:$0xff] 0.0
    %51 = vst [vmem:[#allocation2 + $0x100] sm:$0xff] 0.0
    %52 = vst [vmem:[#allocation2 + $0x108] sm:$0xff] 0.0
    %53 = vst [vmem:[#allocation2 + $0x110] sm:$0xff] 0.0
    %54 = vst [vmem:[#allocation2 + $0x118] sm:$0xff] 0.0
    %55 = vst [vmem:[#allocation2 + $0x120] sm:$0xff] 0.0
    %56 = vst [vmem:[#allocation2 + $0x128] sm:$0xff] 0.0
    %57 = vst [vmem:[#allocation2 + $0x130] sm:$0xff] 0.0
    %58 = vst [vmem:[#allocation2 + $0x138] sm:$0xff] 0.0
    %59 = vst [vmem:[#allocation2 + $0x140] sm:$0xff] 0.0
    %60 = vst [vmem:[#allocation2 + $0x148] sm:$0xff] 0.0
    %61 = vst [vmem:[#allocation2 + $0x150] sm:$0xff] 0.0
    %62 = vst [vmem:[#allocation2 + $0x158] sm:$0xff] 0.0
    %63 = vst [vmem:[#allocation2 + $0x160] sm:$0xff] 0.0
    %64 = vst [vmem:[#allocation2 + $0x168] sm:$0xff] 0.0
    %65 = vst [vmem:[#allocation2 + $0x170] sm:$0xff] 0.0
    %66 = vst [vmem:[#allocation2 + $0x178] sm:$0xff] 0.0
    %67 = vst [vmem:[#allocation2 + $0x180] sm:$0xff] 0.0
    %68 = vst [vmem:[#allocation2 + $0x188] sm:$0xff] 0.0
    %69 = vst [vmem:[#allocation2 + $0x190] sm:$0xff] 0.0
    %70 = vst [vmem:[#allocation2 + $0x198] sm:$0xff] 0.0
    %71 = vst [vmem:[#allocation2 + $0x1a0] sm:$0xff] 0.0
    %72 = vst [vmem:[#allocation2 + $0x1a8] sm:$0xff] 0.0
    %73 = vst [vmem:[#allocation2 + $0x1b0] sm:$0xff] 0.0
    %74 = vst [vmem:[#allocation2 + $0x1b8] sm:$0xff] 0.0
    %75 = vst [vmem:[#allocation2 + $0x1c0] sm:$0xff] 0.0
    %76 = vst [vmem:[#allocation2 + $0x1c8] sm:$0xff] 0.0
    %77 = vst [vmem:[#allocation2 + $0x1d0] sm:$0xff] 0.0
    %78 = vst [vmem:[#allocation2 + $0x1d8] sm:$0xff] 0.0
    %79 = vst [vmem:[#allocation2 + $0x1e0] sm:$0xff] 0.0
    %80 = vst [vmem:[#allocation2 + $0x1e8] sm:$0xff] 0.0
    %81 = vst [vmem:[#allocation2 + $0x1f0] sm:$0xff] 0.0
    %82 = vst [vmem:[#allocation2 + $0x1f8] sm:$0xff] 0.0
  $region17: #{_lambda_.8} parent=0 // pred_fallthru
    _
  %v83 = vld [vmem:[#allocation2] sm:$0xff]
  %v84 = vld [vmem:[#allocation2 + $0x8] sm:$0xff]
  %v85 = vld [vmem:[#allocation2 + $0x10] sm:$0xff]
  %v86 = vld [vmem:[#allocation2 + $0x18] sm:$0xff]
  %v87 = vld [vmem:[#allocation2 + $0x20] sm:$0xff]
  %v88 = vld [vmem:[#allocation2 + $0x28] sm:$0xff]
  %v89 = vld [vmem:[#allocation2 + $0x30] sm:$0xff]
  %v90 = vld [vmem:[#allocation2 + $0x38] sm:$0xff]
  %v91 = vld [vmem:[#allocation2 + $0x40] sm:$0xff]
  %v92 = vld [vmem:[#allocation2 + $0x48] sm:$0xff]
  %v93 = vld [vmem:[#allocation2 + $0x50] sm:$0xff]
  %v94 = vld [vmem:[#allocation2 + $0x58] sm:$0xff]
  %v95 = vld [vmem:[#allocation2 + $0x60] sm:$0xff]
  %v96 = vld [vmem:[#allocation2 + $0x68] sm:$0xff]
  %v97 = vld [vmem:[#allocation2 + $0x70] sm:$0xff]
  %v98 = vld [vmem:[#allocation2 + $0x78] sm:$0xff]
  %v99 = vld [vmem:[#allocation2 + $0x80] sm:$0xff]
  %v100 = vld [vmem:[#allocation2 + $0x88] sm:$0xff]
  %v101 = vld [vmem:[#allocation2 + $0x90] sm:$0xff]
  %v102 = vld [vmem:[#allocation2 + $0x98] sm:$0xff]
  %v103 = vld [vmem:[#allocation2 + $0xa0] sm:$0xff]
  %v104 = vld [vmem:[#allocation2 + $0xa8] sm:$0xff]
  %v105 = vld [vmem:[#allocation2 + $0xb0] sm:$0xff]
  %v106 = vld [vmem:[#allocation2 + $0xb8] sm:$0xff]
  %v107 = vld [vmem:[#allocation2 + $0xc0] sm:$0xff]
  %v108 = vld [vmem:[#allocation2 + $0xc8] sm:$0xff]
  %v109 = vld [vmem:[#allocation2 + $0xd0] sm:$0xff]
  %v110 = vld [vmem:[#allocation2 + $0xd8] sm:$0xff]
  %v111 = vld [vmem:[#allocation2 + $0xe0] sm:$0xff]
  %v112 = vld [vmem:[#allocation2 + $0xe8] sm:$0xff]
  %v113 = vld [vmem:[#allocation2 + $0xf0] sm:$0xff]
  %v114 = vld [vmem:[#allocation2 + $0xf8] sm:$0xff]
  %v115 = vld [vmem:[#allocation2 + $0x100] sm:$0xff]
  %v116 = vld [vmem:[#allocation2 + $0x108] sm:$0xff]
  %v117 = vld [vmem:[#allocation2 + $0x110] sm:$0xff]
  %v118 = vld [vmem:[#allocation2 + $0x118] sm:$0xff]
  %v119 = vld [vmem:[#allocation2 + $0x120] sm:$0xff]
  %v120 = vld [vmem:[#allocation2 + $0x128] sm:$0xff]
  %v121 = vld [vmem:[#allocation2 + $0x130] sm:$0xff]
  %v122 = vld [vmem:[#allocation2 + $0x138] sm:$0xff]
  %v123 = vld [vmem:[#allocation2 + $0x140] sm:$0xff]
  %v124 = vld [vmem:[#allocation2 + $0x148] sm:$0xff]
  %v125 = vld [vmem:[#allocation2 + $0x150] sm:$0xff]
  %v126 = vld [vmem:[#allocation2 + $0x158] sm:$0xff]
  %v127 = vld [vmem:[#allocation2 + $0x160] sm:$0xff]
  %v128 = vld [vmem:[#allocation2 + $0x168] sm:$0xff]
  %v129 = vld [vmem:[#allocation2 + $0x170] sm:$0xff]
  %v130 = vld [vmem:[#allocation2 + $0x178] sm:$0xff]
  %v131 = vld [vmem:[#allocation2 + $0x180] sm:$0xff]
  %v132 = vld [vmem:[#allocation2 + $0x188] sm:$0xff]
  %v133 = vld [vmem:[#allocation2 + $0x190] sm:$0xff]
  %v134 = vld [vmem:[#allocation2 + $0x198] sm:$0xff]
  %v135 = vld [vmem:[#allocation2 + $0x1a0] sm:$0xff]
  %v136 = vld [vmem:[#allocation2 + $0x1a8] sm:$0xff]
  %v137 = vld [vmem:[#allocation2 + $0x1b0] sm:$0xff]
  %v138 = vld [vmem:[#allocation2 + $0x1b8] sm:$0xff]
  %v139 = vld [vmem:[#allocation2 + $0x1c0] sm:$0xff]
  %v140 = vld [vmem:[#allocation2 + $0x1c8] sm:$0xff]
  %v141 = vld [vmem:[#allocation2 + $0x1d0] sm:$0xff]
  %v142 = vld [vmem:[#allocation2 + $0x1d8] sm:$0xff]
  %v143 = vld [vmem:[#allocation2 + $0x1e0] sm:$0xff]
  %v144 = vld [vmem:[#allocation2 + $0x1e8] sm:$0xff]
  %v145 = vld [vmem:[#allocation2 + $0x1f0] sm:$0xff]
  %v146 = vld [vmem:[#allocation2 + $0x1f8] sm:$0xff]
  %v147 = vld [vmem:[%s0] sm:$0xf]
  %v148 = vld [vmem:[%s0 + $0x4] sm:$0xf]
  %v149 = vld [vmem:[%s0 + $0x8] sm:$0xf]
  %v150 = vld [vmem:[%s0 + $0xc] sm:$0xf]
  %v151 = vld [vmem:[%s0 + $0x10] sm:$0xf]
  %v152 = vld [vmem:[%s0 + $0x14] sm:$0xf]
  %v153 = vld [vmem:[%s0 + $0x18] sm:$0xf]
  %v154 = vld [vmem:[%s0 + $0x1c] sm:$0xf]
  %v155 = vld [vmem:[%s0 + $0x20] sm:$0xf]
  %v156 = vld [vmem:[%s0 + $0x24] sm:$0xf]
  %v157 = vld [vmem:[%s0 + $0x28] sm:$0xf]
  %v158 = vld [vmem:[%s0 + $0x2c] sm:$0xf]
  %v159 = vld [vmem:[%s0 + $0x30] sm:$0xf]
  %v160 = vld [vmem:[%s0 + $0x34] sm:$0xf]
  %v161 = vld [vmem:[%s0 + $0x38] sm:$0xf]
  %v162 = vld [vmem:[%s0 + $0x3c] sm:$0xf]
  %v163 = vld [vmem:[%s0 + $0x40] sm:$0xf]
  %v164 = vld [vmem:[%s0 + $0x44] sm:$0xf]
  %v165 = vld [vmem:[%s0 + $0x48] sm:$0xf]
  %v166 = vld [vmem:[%s0 + $0x4c] sm:$0xf]
  %v167 = vld [vmem:[%s0 + $0x50] sm:$0xf]
  %v168 = vld [vmem:[%s0 + $0x54] sm:$0xf]
  %v169 = vld [vmem:[%s0 + $0x58] sm:$0xf]
  %v170 = vld [vmem:[%s0 + $0x5c] sm:$0xf]
  %v171 = vld [vmem:[%s0 + $0x60] sm:$0xf]
  %v172 = vld [vmem:[%s0 + $0x64] sm:$0xf]
  %v173 = vld [vmem:[%s0 + $0x68] sm:$0xf]
  %v174 = vld [vmem:[%s0 + $0x6c] sm:$0xf]
  %v175 = vld [vmem:[%s0 + $0x70] sm:$0xf]
  %v176 = vld [vmem:[%s0 + $0x74] sm:$0xf]
  %v177 = vld [vmem:[%s0 + $0x78] sm:$0xf]
  %v178 = vld [vmem:[%s0 + $0x7c] sm:$0xf]
  %v179 = vld [vmem:[%s0 + $0x80] sm:$0xf]
  %v180 = vld [vmem:[%s0 + $0x84] sm:$0xf]
  %v181 = vld [vmem:[%s0 + $0x88] sm:$0xf]
  %v182 = vld [vmem:[%s0 + $0x8c] sm:$0xf]
  %v183 = vld [vmem:[%s0 + $0x90] sm:$0xf]
  %v184 = vld [vmem:[%s0 + $0x94] sm:$0xf]
  %v185 = vld [vmem:[%s0 + $0x98] sm:$0xf]
  %v186 = vld [vmem:[%s0 + $0x9c] sm:$0xf]
  %v187 = vld [vmem:[%s0 + $0xa0] sm:$0xf]
  %v188 = vld [vmem:[%s0 + $0xa4] sm:$0xf]
  %v189 = vld [vmem:[%s0 + $0xa8] sm:$0xf]
  %v190 = vld [vmem:[%s0 + $0xac] sm:$0xf]
  %v191 = vld [vmem:[%s0 + $0xb0] sm:$0xf]
  %v192 = vld [vmem:[%s0 + $0xb4] sm:$0xf]
  %v193 = vld [vmem:[%s0 + $0xb8] sm:$0xf]
  %v194 = vld [vmem:[%s0 + $0xbc] sm:$0xf]
  %v195 = vld [vmem:[%s0 + $0xc0] sm:$0xf]
  %v196 = vld [vmem:[%s0 + $0xc4] sm:$0xf]
  %v197 = vld [vmem:[%s0 + $0xc8] sm:$0xf]
  %v198 = vld [vmem:[%s0 + $0xcc] sm:$0xf]
  %v199 = vld [vmem:[%s0 + $0xd0] sm:$0xf]
  %v200 = vld [vmem:[%s0 + $0xd4] sm:$0xf]
  %v201 = vld [vmem:[%s0 + $0xd8] sm:$0xf]
  %v202 = vld [vmem:[%s0 + $0xdc] sm:$0xf]
  %v203 = vld [vmem:[%s0 + $0xe0] sm:$0xf]
  %v204 = vld [vmem:[%s0 + $0xe4] sm:$0xf]
  %v205 = vld [vmem:[%s0 + $0xe8] sm:$0xf]
  %v206 = vld [vmem:[%s0 + $0xec] sm:$0xf]
  %v207 = vld [vmem:[%s0 + $0xf0] sm:$0xf]
  %v208 = vld [vmem:[%s0 + $0xf4] sm:$0xf]
  %v209 = vld [vmem:[%s0 + $0xf8] sm:$0xf]
  %v210 = vld [vmem:[%s0 + $0xfc] sm:$0xf]
  %v211 = vld [vmem:[%s1] sm:$0xf]
  %v212 = vld [vmem:[%s1 + $0x4] sm:$0xf]
  %v213 = vld [vmem:[%s1 + $0x8] sm:$0xf]
  %v214 = vld [vmem:[%s1 + $0xc] sm:$0xf]
  %v215 = vld [vmem:[%s1 + $0x10] sm:$0xf]
  %v216 = vld [vmem:[%s1 + $0x14] sm:$0xf]
  %v217 = vld [vmem:[%s1 + $0x18] sm:$0xf]
  %v218 = vld [vmem:[%s1 + $0x1c] sm:$0xf]
  %v219 = vld [vmem:[%s1 + $0x20] sm:$0xf]
  %v220 = vld [vmem:[%s1 + $0x24] sm:$0x3]
  %v285 = vunpack.c.l.b16 %v147
  %v286 = vunpack.c.l.b16 %v148
  %v287 = vunpack.c.l.b16 %v149
  %v288 = vunpack.c.l.b16 %v150
  %v289 = vunpack.c.l.b16 %v151
  %v290 = vunpack.c.l.b16 %v152
  %v291 = vunpack.c.l.b16 %v153
  %v292 = vunpack.c.l.b16 %v154
  %v293 = vunpack.c.l.b16 %v155
  %v294 = vunpack.c.l.b16 %v156
  %v295 = vunpack.c.l.b16 %v157
  %v296 = vunpack.c.l.b16 %v158
  %v297 = vunpack.c.l.b16 %v159
  %v298 = vunpack.c.l.b16 %v160
  %v299 = vunpack.c.l.b16 %v161
  %v300 = vunpack.c.l.b16 %v162
  %v301 = vunpack.c.l.b16 %v163
  %v302 = vunpack.c.l.b16 %v164
  %v303 = vunpack.c.l.b16 %v165
  %v304 = vunpack.c.l.b16 %v166
  %v305 = vunpack.c.l.b16 %v167
  %v306 = vunpack.c.l.b16 %v168
  %v307 = vunpack.c.l.b16 %v169
  %v308 = vunpack.c.l.b16 %v170
  %v309 = vunpack.c.l.b16 %v171
  %v310 = vunpack.c.l.b16 %v172
  %v311 = vunpack.c.l.b16 %v173
  %v312 = vunpack.c.l.b16 %v174
  %v313 = vunpack.c.l.b16 %v175
  %v314 = vunpack.c.l.b16 %v176
  %v315 = vunpack.c.l.b16 %v177
  %v316 = vunpack.c.l.b16 %v178
  %v317 = vunpack.c.l.b16 %v179
  %v318 = vunpack.c.l.b16 %v180
  %v319 = vunpack.c.l.b16 %v181
  %v320 = vunpack.c.l.b16 %v182
  %v321 = vunpack.c.l.b16 %v183
  %v322 = vunpack.c.l.b16 %v184
  %v323 = vunpack.c.l.b16 %v185
  %v324 = vunpack.c.l.b16 %v186
  %v325 = vunpack.c.l.b16 %v187
  %v326 = vunpack.c.l.b16 %v188
  %v327 = vunpack.c.l.b16 %v189
  %v328 = vunpack.c.l.b16 %v190
  %v329 = vunpack.c.l.b16 %v191
  %v330 = vunpack.c.l.b16 %v192
  %v331 = vunpack.c.l.b16 %v193
  %v332 = vunpack.c.l.b16 %v194
  %v333 = vunpack.c.l.b16 %v195
  %v334 = vunpack.c.l.b16 %v196
  %v335 = vunpack.c.l.b16 %v197
  %v336 = vunpack.c.l.b16 %v198
  %v337 = vunpack.c.l.b16 %v199
  %v338 = vunpack.c.l.b16 %v200
  %v339 = vunpack.c.l.b16 %v201
  %v340 = vunpack.c.l.b16 %v202
  %v341 = vunpack.c.l.b16 %v203
  %v342 = vunpack.c.l.b16 %v204
  %v343 = vunpack.c.l.b16 %v205
  %v344 = vunpack.c.l.b16 %v206
  %v345 = vunpack.c.l.b16 %v207
  %v346 = vunpack.c.l.b16 %v208
  %v347 = vunpack.c.l.b16 %v209
  %v348 = vunpack.c.l.b16 %v210
  %v349 = vpack.c.b16 %v286, %v285
  %v350 = vpack.c.b16 %v288, %v287
  %v351 = vpack.c.b16 %v290, %v289
  %v352 = vpack.c.b16 %v292, %v291
  %v353 = vpack.c.b16 %v294, %v293
  %v354 = vpack.c.b16 %v296, %v295
  %v355 = vpack.c.b16 %v298, %v297
  %v356 = vpack.c.b16 %v300, %v299
  %v357 = vpack.c.b16 %v302, %v301
  %v358 = vpack.c.b16 %v304, %v303
  %v359 = vpack.c.b16 %v306, %v305
  %v360 = vpack.c.b16 %v308, %v307
  %v361 = vpack.c.b16 %v310, %v309
  %v362 = vpack.c.b16 %v312, %v311
  %v363 = vpack.c.b16 %v314, %v313
  %v364 = vpack.c.b16 %v316, %v315
  %v365 = vpack.c.b16 %v318, %v317
  %v366 = vpack.c.b16 %v320, %v319
  %v367 = vpack.c.b16 %v322, %v321
  %v368 = vpack.c.b16 %v324, %v323
  %v369 = vpack.c.b16 %v326, %v325
  %v370 = vpack.c.b16 %v328, %v327
  %v371 = vpack.c.b16 %v330, %v329
  %v372 = vpack.c.b16 %v332, %v331
  %v373 = vpack.c.b16 %v334, %v333
  %v374 = vpack.c.b16 %v336, %v335
  %v375 = vpack.c.b16 %v338, %v337
  %v376 = vpack.c.b16 %v340, %v339
  %v377 = vpack.c.b16 %v342, %v341
  %v378 = vpack.c.b16 %v344, %v343
  %v379 = vpack.c.b16 %v346, %v345
  %v380 = vpack.c.b16 %v348, %v347
  %v391 = vunpack.c.l.b16 %v211
  %v392 = vunpack.c.l.b16 %v212
  %v393 = vunpack.c.l.b16 %v213
  %v394 = vunpack.c.l.b16 %v214
  %v395 = vunpack.c.l.b16 %v215
  %v396 = vunpack.c.l.b16 %v216
  %v397 = vunpack.c.l.b16 %v217
  %v398 = vunpack.c.l.b16 %v218
  %v399 = vunpack.c.l.b16 %v219
  %v400 = vunpack.c.l.b16 %v220
  %v401 = vpack.c.b16 %v392, %v391
  %v402 = vpack.c.b16 %v394, %v393
  %v403 = vpack.c.b16 %v396, %v395
  %v404 = vpack.c.b16 %v398, %v397
  %v405 = vpack.c.b16 %v400, %v399
  %vm410 = vcmask 613376
  %v412 = vsel %vm410, %v349, 0
  %v415 = vsel %vm410, %v350, 0
  %v418 = vsel %vm410, %v351, 0
  %v421 = vsel %vm410, %v352, 0
  %v424 = vsel %vm410, %v353, 0
  %v427 = vsel %vm410, %v354, 0
  %v430 = vsel %vm410, %v355, 0
  %v433 = vsel %vm410, %v356, 0
  %v436 = vsel %vm410, %v357, 0
  %v439 = vsel %vm410, %v358, 0
  %v442 = vsel %vm410, %v359, 0
  %v445 = vsel %vm410, %v360, 0
  %v448 = vsel %vm410, %v361, 0
  %v451 = vsel %vm410, %v362, 0
  %v454 = vsel %vm410, %v363, 0
  %v457 = vsel %vm410, %v364, 0
  %v460 = vsel %vm410, %v365, 0
  %v463 = vsel %vm410, %v366, 0
  %v466 = vsel %vm410, %v367, 0
  %v469 = vsel %vm410, %v368, 0
  %v472 = vsel %vm410, %v369, 0
  %v475 = vsel %vm410, %v370, 0
  %v478 = vsel %vm410, %v371, 0
  %v481 = vsel %vm410, %v372, 0
  %v484 = vsel %vm410, %v373, 0
  %v487 = vsel %vm410, %v374, 0
  %v490 = vsel %vm410, %v375, 0
  %v493 = vsel %vm410, %v376, 0
  %v496 = vsel %vm410, %v377, 0
  %v499 = vsel %vm410, %v378, 0
  %v502 = vsel %vm410, %v379, 0
  %v505 = vsel %vm410, %v380, 0
  %vm507 = vcmask 1044480
  %vm508 = vcmask 1045504
  %v509 = vsel %vm507, 4294967295, 65535
  %v510 = vsel %vm508, %v509, 0
  %v512 = vand.u32 %v405, %v510
  %514 = vmatprep.subr.bf16.mxu0 0
  %515 = vmatpush1.bf16.msra.mxu0 %v401
  %516 = vmatprep.subr.bf16.mxu0 0
  %517 = vmatpush1.bf16.msra.mxu0 %v402
  %518 = vmatprep.subr.bf16.mxu0 0
  %519 = vmatpush1.bf16.msra.mxu0 %v403
  %520 = vmatprep.subr.bf16.mxu0 0
  %521 = vmatpush1.bf16.msra.mxu0 %v404
  %522 = vmatprep.subr.bf16.mxu0 0
  %523 = vmatpush1.bf16.msra.mxu0 %v512
  %524 = vmatprep.subr.bf16.mxu0 0
  %525 = vmatpush1.bf16.msra.mxu0 0
  %526 = vmatprep.subr.bf16.mxu0 0
  %527 = vmatpush1.bf16.msra.mxu0 0
  %528 = vmatprep.subr.bf16.mxu0 0
  %529 = vmatpush1.bf16.msra.mxu0 0
  %530 = vmatprep.subr.bf16.mxu0 0
  %531 = vmatpush1.bf16.msra.mxu0 0
  %532 = vmatprep.subr.bf16.mxu0 0
  %533 = vmatpush1.bf16.msra.mxu0 0
  %534 = vmatprep.subr.bf16.mxu0 0
  %535 = vmatpush1.bf16.msra.mxu0 0
  %536 = vmatprep.subr.bf16.mxu0 0
  %537 = vmatpush1.bf16.msra.mxu0 0
  %538 = vmatprep.subr.bf16.mxu0 0
  %539 = vmatpush1.bf16.msra.mxu0 0
  %540 = vmatprep.subr.bf16.mxu0 0
  %541 = vmatpush1.bf16.msra.mxu0 0
  %542 = vmatprep.subr.bf16.mxu0 0
  %543 = vmatpush1.bf16.msra.mxu0 0
  %544 = vmatprep.subr.bf16.mxu0 0
  %545 = vmatpush1.bf16.msra.mxu0 0
  %546 = vmatprep.mubr.bf16.mxu0 0
  %547 = vmatmul.mubr.bf16.gmra.mrb[0].mxu0 %v412
  %v548 = vpop.f32.mrb[0].mxu0
  %v549 = vadd.f32 0.0, %v548
  %v550 = vpop.f32.mrb[0].mxu0
  %v551 = vpop.f32.mrb[0].mxu0
  %v552 = vadd.f32 0.0, %v551
  %v553 = vpop.f32.mrb[0].mxu0
  %554 = vmatprep.mubr.bf16.mxu0 0
  %555 = vmatmul.mubr.bf16.gmra.mrb[0].mxu0 %v415
  %v556 = vpop.f32.mrb[0].mxu0
  %v557 = vadd.f32 0.0, %v556
  %v558 = vpop.f32.mrb[0].mxu0
  %v559 = vpop.f32.mrb[0].mxu0
  %v560 = vadd.f32 0.0, %v559
  %v561 = vpop.f32.mrb[0].mxu0
  %562 = vmatprep.mubr.bf16.mxu0 0
  %563 = vmatmul.mubr.bf16.gmra.mrb[0].mxu0 %v418
  %v564 = vpop.f32.mrb[0].mxu0
  %v565 = vadd.f32 0.0, %v564
  %v566 = vpop.f32.mrb[0].mxu0
  %v567 = vpop.f32.mrb[0].mxu0
  %v568 = vadd.f32 0.0, %v567
  %v569 = vpop.f32.mrb[0].mxu0
  %570 = vmatprep.mubr.bf16.mxu0 0
  %571 = vmatmul.mubr.bf16.gmra.mrb[0].mxu0 %v421
  %v572 = vpop.f32.mrb[0].mxu0
  %v573 = vadd.f32 0.0, %v572
  %v574 = vpop.f32.mrb[0].mxu0
  %v575 = vpop.f32.mrb[0].mxu0
  %v576 = vadd.f32 0.0, %v575
  %v577 = vpop.f32.mrb[0].mxu0
  %578 = vmatprep.mubr.bf16.mxu0 0
  %579 = vmatmul.mubr.bf16.gmra.mrb[0].mxu0 %v424
  %v580 = vpop.f32.mrb[0].mxu0
  %v581 = vadd.f32 0.0, %v580
  %v582 = vpop.f32.mrb[0].mxu0
  %v583 = vpop.f32.mrb[0].mxu0
  %v584 = vadd.f32 0.0, %v583
  %v585 = vpop.f32.mrb[0].mxu0
  %586 = vmatprep.mubr.bf16.mxu0 0
  %587 = vmatmul.mubr.bf16.gmra.mrb[0].mxu0 %v427
  %v588 = vpop.f32.mrb[0].mxu0
  %v589 = vadd.f32 0.0, %v588
  %v590 = vpop.f32.mrb[0].mxu0
  %v591 = vpop.f32.mrb[0].mxu0
  %v592 = vadd.f32 0.0, %v591
  %v593 = vpop.f32.mrb[0].mxu0
  %594 = vmatprep.mubr.bf16.mxu0 0
  %595 = vmatmul.mubr.bf16.gmra.mrb[0].mxu0 %v430
  %v596 = vpop.f32.mrb[0].mxu0
  %v597 = vadd.f32 0.0, %v596
  %v598 = vpop.f32.mrb[0].mxu0
  %v599 = vpop.f32.mrb[0].mxu0
  %v600 = vadd.f32 0.0, %v599
  %v601 = vpop.f32.mrb[0].mxu0
  %602 = vmatprep.mubr.bf16.mxu0 0
  %603 = vmatmul.mubr.bf16.gmra.mrb[0].mxu0 %v433
  %v604 = vpop.f32.mrb[0].mxu0
  %v605 = vadd.f32 0.0, %v604
  %v606 = vpop.f32.mrb[0].mxu0
  %v607 = vpop.f32.mrb[0].mxu0
  %v608 = vadd.f32 0.0, %v607
  %v609 = vpop.f32.mrb[0].mxu0
  %610 = vmatprep.mubr.bf16.mxu0 0
  %611 = vmatmul.mubr.bf16.gmra.mrb[0].mxu0 %v436
  %v612 = vpop.f32.mrb[0].mxu0
  %v613 = vadd.f32 0.0, %v612
  %v614 = vpop.f32.mrb[0].mxu0
  %v615 = vpop.f32.mrb[0].mxu0
  %v616 = vadd.f32 0.0, %v615
  %v617 = vpop.f32.mrb[0].mxu0
  %618 = vmatprep.mubr.bf16.mxu0 0
  %619 = vmatmul.mubr.bf16.gmra.mrb[0].mxu0 %v439
  %v620 = vpop.f32.mrb[0].mxu0
  %v621 = vadd.f32 0.0, %v620
  %v622 = vpop.f32.mrb[0].mxu0
  %v623 = vpop.f32.mrb[0].mxu0
  %v624 = vadd.f32 0.0, %v623
  %v625 = vpop.f32.mrb[0].mxu0
  %626 = vmatprep.mubr.bf16.mxu0 0
  %627 = vmatmul.mubr.bf16.gmra.mrb[0].mxu0 %v442
  %v628 = vpop.f32.mrb[0].mxu0
  %v629 = vadd.f32 0.0, %v628
  %v630 = vpop.f32.mrb[0].mxu0
  %v631 = vpop.f32.mrb[0].mxu0
  %v632 = vadd.f32 0.0, %v631
  %v633 = vpop.f32.mrb[0].mxu0
  %634 = vmatprep.mubr.bf16.mxu0 0
  %635 = vmatmul.mubr.bf16.gmra.mrb[0].mxu0 %v445
  %v636 = vpop.f32.mrb[0].mxu0
  %v637 = vadd.f32 0.0, %v636
  %v638 = vpop.f32.mrb[0].mxu0
  %v639 = vpop.f32.mrb[0].mxu0
  %v640 = vadd.f32 0.0, %v639
  %v641 = vpop.f32.mrb[0].mxu0
  %642 = vmatprep.mubr.bf16.mxu0 0
  %643 = vmatmul.mubr.bf16.gmra.mrb[0].mxu0 %v448
  %v644 = vpop.f32.mrb[0].mxu0
  %v645 = vadd.f32 0.0, %v644
  %v646 = vpop.f32.mrb[0].mxu0
  %v647 = vpop.f32.mrb[0].mxu0
  %v648 = vadd.f32 0.0, %v647
  %v649 = vpop.f32.mrb[0].mxu0
  %650 = vmatprep.mubr.bf16.mxu0 0
  %651 = vmatmul.mubr.bf16.gmra.mrb[0].mxu0 %v451
  %v652 = vpop.f32.mrb[0].mxu0
  %v653 = vadd.f32 0.0, %v652
  %v654 = vpop.f32.mrb[0].mxu0
  %v655 = vpop.f32.mrb[0].mxu0
  %v656 = vadd.f32 0.0, %v655
  %v657 = vpop.f32.mrb[0].mxu0
  %658 = vmatprep.mubr.bf16.mxu0 0
  %659 = vmatmul.mubr.bf16.gmra.mrb[0].mxu0 %v454
  %v660 = vpop.f32.mrb[0].mxu0
  %v661 = vadd.f32 0.0, %v660
  %v662 = vpop.f32.mrb[0].mxu0
  %v663 = vpop.f32.mrb[0].mxu0
  %v664 = vadd.f32 0.0, %v663
  %v665 = vpop.f32.mrb[0].mxu0
  %666 = vmatprep.mubr.bf16.mxu0 0
  %667 = vmatmul.mubr.bf16.gmra.mrb[0].mxu0 %v457
  %v668 = vpop.f32.mrb[0].mxu0
  %v669 = vadd.f32 0.0, %v668
  %v670 = vpop.f32.mrb[0].mxu0
  %v671 = vpop.f32.mrb[0].mxu0
  %v672 = vadd.f32 0.0, %v671
  %v673 = vpop.f32.mrb[0].mxu0
  %674 = vmatprep.mubr.bf16.mxu0 0
  %675 = vmatmul.mubr.bf16.gmra.mrb[0].mxu0 %v460
  %v676 = vpop.f32.mrb[0].mxu0
  %v677 = vadd.f32 0.0, %v676
  %v678 = vpop.f32.mrb[0].mxu0
  %v679 = vpop.f32.mrb[0].mxu0
  %v680 = vadd.f32 0.0, %v679
  %v681 = vpop.f32.mrb[0].mxu0
  %682 = vmatprep.mubr.bf16.mxu0 0
  %683 = vmatmul.mubr.bf16.gmra.mrb[0].mxu0 %v463
  %v684 = vpop.f32.mrb[0].mxu0
  %v685 = vadd.f32 0.0, %v684
  %v686 = vpop.f32.mrb[0].mxu0
  %v687 = vpop.f32.mrb[0].mxu0
  %v688 = vadd.f32 0.0, %v687
  %v689 = vpop.f32.mrb[0].mxu0
  %690 = vmatprep.mubr.bf16.mxu0 0
  %691 = vmatmul.mubr.bf16.gmra.mrb[0].mxu0 %v466
  %v692 = vpop.f32.mrb[0].mxu0
  %v693 = vadd.f32 0.0, %v692
  %v694 = vpop.f32.mrb[0].mxu0
  %v695 = vpop.f32.mrb[0].mxu0
  %v696 = vadd.f32 0.0, %v695
  %v697 = vpop.f32.mrb[0].mxu0
  %698 = vmatprep.mubr.bf16.mxu0 0
  %699 = vmatmul.mubr.bf16.gmra.mrb[0].mxu0 %v469
  %v700 = vpop.f32.mrb[0].mxu0
  %v701 = vadd.f32 0.0, %v700
  %v702 = vpop.f32.mrb[0].mxu0
  %v703 = vpop.f32.mrb[0].mxu0
  %v704 = vadd.f32 0.0, %v703
  %v705 = vpop.f32.mrb[0].mxu0
  %706 = vmatprep.mubr.bf16.mxu0 0
  %707 = vmatmul.mubr.bf16.gmra.mrb[0].mxu0 %v472
  %v708 = vpop.f32.mrb[0].mxu0
  %v709 = vadd.f32 0.0, %v708
  %v710 = vpop.f32.mrb[0].mxu0
  %v711 = vpop.f32.mrb[0].mxu0
  %v712 = vadd.f32 0.0, %v711
  %v713 = vpop.f32.mrb[0].mxu0
  %714 = vmatprep.mubr.bf16.mxu0 0
  %715 = vmatmul.mubr.bf16.gmra.mrb[0].mxu0 %v475
  %v716 = vpop.f32.mrb[0].mxu0
  %v717 = vadd.f32 0.0, %v716
  %v718 = vpop.f32.mrb[0].mxu0
  %v719 = vpop.f32.mrb[0].mxu0
  %v720 = vadd.f32 0.0, %v719
  %v721 = vpop.f32.mrb[0].mxu0
  %722 = vmatprep.mubr.bf16.mxu0 0
  %723 = vmatmul.mubr.bf16.gmra.mrb[0].mxu0 %v478
  %v724 = vpop.f32.mrb[0].mxu0
  %v725 = vadd.f32 0.0, %v724
  %v726 = vpop.f32.mrb[0].mxu0
  %v727 = vpop.f32.mrb[0].mxu0
  %v728 = vadd.f32 0.0, %v727
  %v729 = vpop.f32.mrb[0].mxu0
  %730 = vmatprep.mubr.bf16.mxu0 0
  %731 = vmatmul.mubr.bf16.gmra.mrb[0].mxu0 %v481
  %v732 = vpop.f32.mrb[0].mxu0
  %v733 = vadd.f32 0.0, %v732
  %v734 = vpop.f32.mrb[0].mxu0
  %v735 = vpop.f32.mrb[0].mxu0
  %v736 = vadd.f32 0.0, %v735
  %v737 = vpop.f32.mrb[0].mxu0
  %738 = vmatprep.mubr.bf16.mxu0 0
  %739 = vmatmul.mubr.bf16.gmra.mrb[0].mxu0 %v484
  %v740 = vpop.f32.mrb[0].mxu0
  %v741 = vadd.f32 0.0, %v740
  %v742 = vpop.f32.mrb[0].mxu0
  %v743 = vpop.f32.mrb[0].mxu0
  %v744 = vadd.f32 0.0, %v743
  %v745 = vpop.f32.mrb[0].mxu0
  %746 = vmatprep.mubr.bf16.mxu0 0
  %747 = vmatmul.mubr.bf16.gmra.mrb[0].mxu0 %v487
  %v748 = vpop.f32.mrb[0].mxu0
  %v749 = vadd.f32 0.0, %v748
  %v750 = vpop.f32.mrb[0].mxu0
  %v751 = vpop.f32.mrb[0].mxu0
  %v752 = vadd.f32 0.0, %v751
  %v753 = vpop.f32.mrb[0].mxu0
  %754 = vmatprep.mubr.bf16.mxu0 0
  %755 = vmatmul.mubr.bf16.gmra.mrb[0].mxu0 %v490
  %v756 = vpop.f32.mrb[0].mxu0
  %v757 = vadd.f32 0.0, %v756
  %v758 = vpop.f32.mrb[0].mxu0
  %v759 = vpop.f32.mrb[0].mxu0
  %v760 = vadd.f32 0.0, %v759
  %v761 = vpop.f32.mrb[0].mxu0
  %762 = vmatprep.mubr.bf16.mxu0 0
  %763 = vmatmul.mubr.bf16.gmra.mrb[0].mxu0 %v493
  %v764 = vpop.f32.mrb[0].mxu0
  %v765 = vadd.f32 0.0, %v764
  %v766 = vpop.f32.mrb[0].mxu0
  %v767 = vpop.f32.mrb[0].mxu0
  %v768 = vadd.f32 0.0, %v767
  %v769 = vpop.f32.mrb[0].mxu0
  %770 = vmatprep.mubr.bf16.mxu0 0
  %771 = vmatmul.mubr.bf16.gmra.mrb[0].mxu0 %v496
  %v772 = vpop.f32.mrb[0].mxu0
  %v773 = vadd.f32 0.0, %v772
  %v774 = vpop.f32.mrb[0].mxu0
  %v775 = vpop.f32.mrb[0].mxu0
  %v776 = vadd.f32 0.0, %v775
  %v777 = vpop.f32.mrb[0].mxu0
  %778 = vmatprep.mubr.bf16.mxu0 0
  %779 = vmatmul.mubr.bf16.gmra.mrb[0].mxu0 %v499
  %v780 = vpop.f32.mrb[0].mxu0
  %v781 = vadd.f32 0.0, %v780
  %v782 = vpop.f32.mrb[0].mxu0
  %v783 = vpop.f32.mrb[0].mxu0
  %v784 = vadd.f32 0.0, %v783
  %v785 = vpop.f32.mrb[0].mxu0
  %786 = vmatprep.mubr.bf16.mxu0 0
  %787 = vmatmul.mubr.bf16.gmra.mrb[0].mxu0 %v502
  %v788 = vpop.f32.mrb[0].mxu0
  %v789 = vadd.f32 0.0, %v788
  %v790 = vpop.f32.mrb[0].mxu0
  %v791 = vpop.f32.mrb[0].mxu0
  %v792 = vadd.f32 0.0, %v791
  %v793 = vpop.f32.mrb[0].mxu0
  %794 = vmatprep.mubr.bf16.mxu0 0
  %795 = vmatmul.mubr.bf16.gmra.mrb[0].mxu0 %v505
  %v796 = vpop.f32.mrb[0].mxu0
  %v797 = vadd.f32 0.0, %v796
  %v798 = vpop.f32.mrb[0].mxu0
  %v799 = vpop.f32.mrb[0].mxu0
  %v800 = vadd.f32 0.0, %v799
  %v801 = vpop.f32.mrb[0].mxu0
  %802 = vdwg.mxu0
  %v803 = vadd.f32 %v83, %v549
  %v804 = vadd.f32 %v84, %v552
  %v805 = vadd.f32 %v85, %v557
  %v806 = vadd.f32 %v86, %v560
  %v807 = vadd.f32 %v87, %v565
  %v808 = vadd.f32 %v88, %v568
  %v809 = vadd.f32 %v89, %v573
  %v810 = vadd.f32 %v90, %v576
  %v811 = vadd.f32 %v91, %v581
  %v812 = vadd.f32 %v92, %v584
  %v813 = vadd.f32 %v93, %v589
  %v814 = vadd.f32 %v94, %v592
  %v815 = vadd.f32 %v95, %v597
  %v816 = vadd.f32 %v96, %v600
  %v817 = vadd.f32 %v97, %v605
  %v818 = vadd.f32 %v98, %v608
  %v819 = vadd.f32 %v99, %v613
  %v820 = vadd.f32 %v100, %v616
  %v821 = vadd.f32 %v101, %v621
  %v822 = vadd.f32 %v102, %v624
  %v823 = vadd.f32 %v103, %v629
  %v824 = vadd.f32 %v104, %v632
  %v825 = vadd.f32 %v105, %v637
  %v826 = vadd.f32 %v106, %v640
  %v827 = vadd.f32 %v107, %v645
  %v828 = vadd.f32 %v108, %v648
  %v829 = vadd.f32 %v109, %v653
  %v830 = vadd.f32 %v110, %v656
  %v831 = vadd.f32 %v111, %v661
  %v832 = vadd.f32 %v112, %v664
  %v833 = vadd.f32 %v113, %v669
  %v834 = vadd.f32 %v114, %v672
  %v835 = vadd.f32 %v115, %v677
  %v836 = vadd.f32 %v116, %v680
  %v837 = vadd.f32 %v117, %v685
  %v838 = vadd.f32 %v118, %v688
  %v839 = vadd.f32 %v119, %v693
  %v840 = vadd.f32 %v120, %v696
  %v841 = vadd.f32 %v121, %v701
  %v842 = vadd.f32 %v122, %v704
  %v843 = vadd.f32 %v123, %v709
  %v844 = vadd.f32 %v124, %v712
  %v845 = vadd.f32 %v125, %v717
  %v846 = vadd.f32 %v126, %v720
  %v847 = vadd.f32 %v127, %v725
  %v848 = vadd.f32 %v128, %v728
  %v849 = vadd.f32 %v129, %v733
  %v850 = vadd.f32 %v130, %v736
  %v851 = vadd.f32 %v131, %v741
  %v852 = vadd.f32 %v132, %v744
  %v853 = vadd.f32 %v133, %v749
  %v854 = vadd.f32 %v134, %v752
  %v855 = vadd.f32 %v135, %v757
  %v856 = vadd.f32 %v136, %v760
  %v857 = vadd.f32 %v137, %v765
  %v858 = vadd.f32 %v138, %v768
  %v859 = vadd.f32 %v139, %v773
  %v860 = vadd.f32 %v140, %v776
  %v861 = vadd.f32 %v141, %v781
  %v862 = vadd.f32 %v142, %v784
  %v863 = vadd.f32 %v143, %v789
  %v864 = vadd.f32 %v144, %v792
  %v865 = vadd.f32 %v145, %v797
  %v866 = vadd.f32 %v146, %v800
  %867 = vst [vmem:[#allocation2] sm:$0xff] %v803
  %868 = vst [vmem:[#allocation2 + $0x8] sm:$0xff] %v804
  %869 = vst [vmem:[#allocation2 + $0x10] sm:$0xff] %v805
  %870 = vst [vmem:[#allocation2 + $0x18] sm:$0xff] %v806
  %871 = vst [vmem:[#allocation2 + $0x20] sm:$0xff] %v807
  %872 = vst [vmem:[#allocation2 + $0x28] sm:$0xff] %v808
  %873 = vst [vmem:[#allocation2 + $0x30] sm:$0xff] %v809
  %874 = vst [vmem:[#allocation2 + $0x38] sm:$0xff] %v810
  %875 = vst [vmem:[#allocation2 + $0x40] sm:$0xff] %v811
  %876 = vst [vmem:[#allocation2 + $0x48] sm:$0xff] %v812
  %877 = vst [vmem:[#allocation2 + $0x50] sm:$0xff] %v813
  %878 = vst [vmem:[#allocation2 + $0x58] sm:$0xff] %v814
  %879 = vst [vmem:[#allocation2 + $0x60] sm:$0xff] %v815
  %880 = vst [vmem:[#allocation2 + $0x68] sm:$0xff] %v816
  %881 = vst [vmem:[#allocation2 + $0x70] sm:$0xff] %v817
  %882 = vst [vmem:[#allocation2 + $0x78] sm:$0xff] %v818
  %883 = vst [vmem:[#allocation2 + $0x80] sm:$0xff] %v819
  %884 = vst [vmem:[#allocation2 + $0x88] sm:$0xff] %v820
  %885 = vst [vmem:[#allocation2 + $0x90] sm:$0xff] %v821
  %886 = vst [vmem:[#allocation2 + $0x98] sm:$0xff] %v822
  %887 = vst [vmem:[#allocation2 + $0xa0] sm:$0xff] %v823
  %888 = vst [vmem:[#allocation2 + $0xa8] sm:$0xff] %v824
  %889 = vst [vmem:[#allocation2 + $0xb0] sm:$0xff] %v825
  %890 = vst [vmem:[#allocation2 + $0xb8] sm:$0xff] %v826
  %891 = vst [vmem:[#allocation2 + $0xc0] sm:$0xff] %v827
  %892 = vst [vmem:[#allocation2 + $0xc8] sm:$0xff] %v828
  %893 = vst [vmem:[#allocation2 + $0xd0] sm:$0xff] %v829
  %894 = vst [vmem:[#allocation2 + $0xd8] sm:$0xff] %v830
  %895 = vst [vmem:[#allocation2 + $0xe0] sm:$0xff] %v831
  %896 = vst [vmem:[#allocation2 + $0xe8] sm:$0xff] %v832
  %897 = vst [vmem:[#allocation2 + $0xf0] sm:$0xff] %v833
  %898 = vst [vmem:[#allocation2 + $0xf8] sm:$0xff] %v834
  %899 = vst [vmem:[#allocation2 + $0x100] sm:$0xff] %v835
  %900 = vst [vmem:[#allocation2 + $0x108] sm:$0xff] %v836
  %901 = vst [vmem:[#allocation2 + $0x110] sm:$0xff] %v837
  %902 = vst [vmem:[#allocation2 + $0x118] sm:$0xff] %v838
  %903 = vst [vmem:[#allocation2 + $0x120] sm:$0xff] %v839
  %904 = vst [vmem:[#allocation2 + $0x128] sm:$0xff] %v840
  %905 = vst [vmem:[#allocation2 + $0x130] sm:$0xff] %v841
  %906 = vst [vmem:[#allocation2 + $0x138] sm:$0xff] %v842
  %907 = vst [vmem:[#allocation2 + $0x140] sm:$0xff] %v843
  %908 = vst [vmem:[#allocation2 + $0x148] sm:$0xff] %v844
  %909 = vst [vmem:[#allocation2 + $0x150] sm:$0xff] %v845
  %910 = vst [vmem:[#allocation2 + $0x158] sm:$0xff] %v846
  %911 = vst [vmem:[#allocation2 + $0x160] sm:$0xff] %v847
  %912 = vst [vmem:[#allocation2 + $0x168] sm:$0xff] %v848
  %913 = vst [vmem:[#allocation2 + $0x170] sm:$0xff] %v849
  %914 = vst [vmem:[#allocation2 + $0x178] sm:$0xff] %v850
  %915 = vst [vmem:[#allocation2 + $0x180] sm:$0xff] %v851
  %916 = vst [vmem:[#allocation2 + $0x188] sm:$0xff] %v852
  %917 = vst [vmem:[#allocation2 + $0x190] sm:$0xff] %v853
  %918 = vst [vmem:[#allocation2 + $0x198] sm:$0xff] %v854
  %919 = vst [vmem:[#allocation2 + $0x1a0] sm:$0xff] %v855
  %920 = vst [vmem:[#allocation2 + $0x1a8] sm:$0xff] %v856
  %921 = vst [vmem:[#allocation2 + $0x1b0] sm:$0xff] %v857
  %922 = vst [vmem:[#allocation2 + $0x1b8] sm:$0xff] %v858
  %923 = vst [vmem:[#allocation2 + $0x1c0] sm:$0xff] %v859
  %924 = vst [vmem:[#allocation2 + $0x1c8] sm:$0xff] %v860
  %925 = vst [vmem:[#allocation2 + $0x1d0] sm:$0xff] %v861
  %926 = vst [vmem:[#allocation2 + $0x1d8] sm:$0xff] %v862
  %927 = vst [vmem:[#allocation2 + $0x1e0] sm:$0xff] %v863
  %928 = vst [vmem:[#allocation2 + $0x1e8] sm:$0xff] %v864
  %929 = vst [vmem:[#allocation2 + $0x1f0] sm:$0xff] %v865
  %930 = vst [vmem:[#allocation2 + $0x1f8] sm:$0xff] %v866
  // Predicated region
  $region18: #{_lambda_.8} parent=0 // pred_check
    %p931 = pneg %p15
  $region19: #{_lambda_.8} parent=0 // pred_check_branch
    %933 = sbr.rel (%p931) target = $region21
  $region20: #{_lambda_.8} parent=0 // pred_region
    %v934 = vld [vmem:[#allocation2] sm:$0xff]
    %v935 = vld [vmem:[#allocation2 + $0x8] sm:$0xff]
    %v936 = vld [vmem:[#allocation2 + $0x10] sm:$0xff]
    %v937 = vld [vmem:[#allocation2 + $0x18] sm:$0xff]
    %v938 = vld [vmem:[#allocation2 + $0x20] sm:$0xff]
    %v939 = vld [vmem:[#allocation2 + $0x28] sm:$0xff]
    %v940 = vld [vmem:[#allocation2 + $0x30] sm:$0xff]
    %v941 = vld [vmem:[#allocation2 + $0x38] sm:$0xff]
    %v942 = vld [vmem:[#allocation2 + $0x40] sm:$0xff]
    %v943 = vld [vmem:[#allocation2 + $0x48] sm:$0xff]
    %v944 = vld [vmem:[#allocation2 + $0x50] sm:$0xff]
    %v945 = vld [vmem:[#allocation2 + $0x58] sm:$0xff]
    %v946 = vld [vmem:[#allocation2 + $0x60] sm:$0xff]
    %v947 = vld [vmem:[#allocation2 + $0x68] sm:$0xff]
    %v948 = vld [vmem:[#allocation2 + $0x70] sm:$0xff]
    %v949 = vld [vmem:[#allocation2 + $0x78] sm:$0xff]
    %v950 = vld [vmem:[#allocation2 + $0x80] sm:$0xff]
    %v951 = vld [vmem:[#allocation2 + $0x88] sm:$0xff]
    %v952 = vld [vmem:[#allocation2 + $0x90] sm:$0xff]
    %v953 = vld [vmem:[#allocation2 + $0x98] sm:$0xff]
    %v954 = vld [vmem:[#allocation2 + $0xa0] sm:$0xff]
    %v955 = vld [vmem:[#allocation2 + $0xa8] sm:$0xff]
    %v956 = vld [vmem:[#allocation2 + $0xb0] sm:$0xff]
    %v957 = vld [vmem:[#allocation2 + $0xb8] sm:$0xff]
    %v958 = vld [vmem:[#allocation2 + $0xc0] sm:$0xff]
    %v959 = vld [vmem:[#allocation2 + $0xc8] sm:$0xff]
    %v960 = vld [vmem:[#allocation2 + $0xd0] sm:$0xff]
    %v961 = vld [vmem:[#allocation2 + $0xd8] sm:$0xff]
    %v962 = vld [vmem:[#allocation2 + $0xe0] sm:$0xff]
    %v963 = vld [vmem:[#allocation2 + $0xe8] sm:$0xff]
    %v964 = vld [vmem:[#allocation2 + $0xf0] sm:$0xff]
    %v965 = vld [vmem:[#allocation2 + $0xf8] sm:$0xff]
    %v966 = vld [vmem:[#allocation2 + $0x100] sm:$0xff]
    %v967 = vld [vmem:[#allocation2 + $0x108] sm:$0xff]
    %v968 = vld [vmem:[#allocation2 + $0x110] sm:$0xff]
    %v969 = vld [vmem:[#allocation2 + $0x118] sm:$0xff]
    %v970 = vld [vmem:[#allocation2 + $0x120] sm:$0xff]
    %v971 = vld [vmem:[#allocation2 + $0x128] sm:$0xff]
    %v972 = vld [vmem:[#allocation2 + $0x130] sm:$0xff]
    %v973 = vld [vmem:[#allocation2 + $0x138] sm:$0xff]
    %v974 = vld [vmem:[#allocation2 + $0x140] sm:$0xff]
    %v975 = vld [vmem:[#allocation2 + $0x148] sm:$0xff]
    %v976 = vld [vmem:[#allocation2 + $0x150] sm:$0xff]
    %v977 = vld [vmem:[#allocation2 + $0x158] sm:$0xff]
    %v978 = vld [vmem:[#allocation2 + $0x160] sm:$0xff]
    %v979 = vld [vmem:[#allocation2 + $0x168] sm:$0xff]
    %v980 = vld [vmem:[#allocation2 + $0x170] sm:$0xff]
    %v981 = vld [vmem:[#allocation2 + $0x178] sm:$0xff]
    %v982 = vld [vmem:[#allocation2 + $0x180] sm:$0xff]
    %v983 = vld [vmem:[#allocation2 + $0x188] sm:$0xff]
    %v984 = vld [vmem:[#allocation2 + $0x190] sm:$0xff]
    %v985 = vld [vmem:[#allocation2 + $0x198] sm:$0xff]
    %v986 = vld [vmem:[#allocation2 + $0x1a0] sm:$0xff]
    %v987 = vld [vmem:[#allocation2 + $0x1a8] sm:$0xff]
    %v988 = vld [vmem:[#allocation2 + $0x1b0] sm:$0xff]
    %v989 = vld [vmem:[#allocation2 + $0x1b8] sm:$0xff]
    %v990 = vld [vmem:[#allocation2 + $0x1c0] sm:$0xff]
    %v991 = vld [vmem:[#allocation2 + $0x1c8] sm:$0xff]
    %v992 = vld [vmem:[#allocation2 + $0x1d0] sm:$0xff]
    %v993 = vld [vmem:[#allocation2 + $0x1d8] sm:$0xff]
    %v994 = vld [vmem:[#allocation2 + $0x1e0] sm:$0xff]
    %v995 = vld [vmem:[#allocation2 + $0x1e8] sm:$0xff]
    %v996 = vld [vmem:[#allocation2 + $0x1f0] sm:$0xff]
    %v997 = vld [vmem:[#allocation2 + $0x1f8] sm:$0xff]
    %v998 = vld [vmem:[%s2] sm:$0x1]
    %v1000 = vlaneseq
    %v1001 = vshrl.u32 %v1000, 7
    %v1002 = vsub.s32 0, %v1001
    %v1003 = vrot.slane %v998, %v1002
    %v1005 = vadd.f32 %v934, %v1003
    %v1006 = vadd.f32 %v935, %v1003
    %v1007 = vadd.f32 %v936, %v1003
    %v1008 = vadd.f32 %v937, %v1003
    %v1009 = vadd.f32 %v938, %v1003
    %v1010 = vadd.f32 %v939, %v1003
    %v1011 = vadd.f32 %v940, %v1003
    %v1012 = vadd.f32 %v941, %v1003
    %v1013 = vadd.f32 %v942, %v1003
    %v1014 = vadd.f32 %v943, %v1003
    %v1015 = vadd.f32 %v944, %v1003
    %v1016 = vadd.f32 %v945, %v1003
    %v1017 = vadd.f32 %v946, %v1003
    %v1018 = vadd.f32 %v947, %v1003
    %v1019 = vadd.f32 %v948, %v1003
    %v1020 = vadd.f32 %v949, %v1003
    %v1021 = vadd.f32 %v950, %v1003
    %v1022 = vadd.f32 %v951, %v1003
    %v1023 = vadd.f32 %v952, %v1003
    %v1024 = vadd.f32 %v953, %v1003
    %v1025 = vadd.f32 %v954, %v1003
    %v1026 = vadd.f32 %v955, %v1003
    %v1027 = vadd.f32 %v956, %v1003
    %v1028 = vadd.f32 %v957, %v1003
    %v1029 = vadd.f32 %v958, %v1003
    %v1030 = vadd.f32 %v959, %v1003
    %v1031 = vadd.f32 %v960, %v1003
    %v1032 = vadd.f32 %v961, %v1003
    %v1033 = vadd.f32 %v962, %v1003
    %v1034 = vadd.f32 %v963, %v1003
    %v1035 = vadd.f32 %v964, %v1003
    %v1036 = vadd.f32 %v965, %v1003
    %v1037 = vadd.f32 %v966, %v1003
    %v1038 = vadd.f32 %v967, %v1003
    %v1039 = vadd.f32 %v968, %v1003
    %v1040 = vadd.f32 %v969, %v1003
    %v1041 = vadd.f32 %v970, %v1003
    %v1042 = vadd.f32 %v971, %v1003
    %v1043 = vadd.f32 %v972, %v1003
    %v1044 = vadd.f32 %v973, %v1003
    %v1045 = vadd.f32 %v974, %v1003
    %v1046 = vadd.f32 %v975, %v1003
    %v1047 = vadd.f32 %v976, %v1003
    %v1048 = vadd.f32 %v977, %v1003
    %v1049 = vadd.f32 %v978, %v1003
    %v1050 = vadd.f32 %v979, %v1003
    %v1051 = vadd.f32 %v980, %v1003
    %v1052 = vadd.f32 %v981, %v1003
    %v1053 = vadd.f32 %v982, %v1003
    %v1054 = vadd.f32 %v983, %v1003
    %v1055 = vadd.f32 %v984, %v1003
    %v1056 = vadd.f32 %v985, %v1003
    %v1057 = vadd.f32 %v986, %v1003
    %v1058 = vadd.f32 %v987, %v1003
    %v1059 = vadd.f32 %v988, %v1003
    %v1060 = vadd.f32 %v989, %v1003
    %v1061 = vadd.f32 %v990, %v1003
    %v1062 = vadd.f32 %v991, %v1003
    %v1063 = vadd.f32 %v992, %v1003
    %v1064 = vadd.f32 %v993, %v1003
    %v1065 = vadd.f32 %v994, %v1003
    %v1066 = vadd.f32 %v995, %v1003
    %v1067 = vadd.f32 %v996, %v1003
    %v1068 = vadd.f32 %v997, %v1003
    %vm1069 = vcmp.gt.f32.partialorder %v1005, 0.0
    %vm1070 = vcmp.gt.f32.partialorder %v1006, 0.0
    %vm1071 = vcmp.gt.f32.partialorder %v1007, 0.0
    %vm1072 = vcmp.gt.f32.partialorder %v1008, 0.0
    %vm1073 = vcmp.gt.f32.partialorder %v1009, 0.0
    %vm1074 = vcmp.gt.f32.partialorder %v1010, 0.0
    %vm1075 = vcmp.gt.f32.partialorder %v1011, 0.0
    %vm1076 = vcmp.gt.f32.partialorder %v1012, 0.0
    %vm1077 = vcmp.gt.f32.partialorder %v1013, 0.0
    %vm1078 = vcmp.gt.f32.partialorder %v1014, 0.0
    %vm1079 = vcmp.gt.f32.partialorder %v1015, 0.0
    %vm1080 = vcmp.gt.f32.partialorder %v1016, 0.0
    %vm1081 = vcmp.gt.f32.partialorder %v1017, 0.0
    %vm1082 = vcmp.gt.f32.partialorder %v1018, 0.0
    %vm1083 = vcmp.gt.f32.partialorder %v1019, 0.0
    %vm1084 = vcmp.gt.f32.partialorder %v1020, 0.0
    %vm1085 = vcmp.gt.f32.partialorder %v1021, 0.0
    %vm1086 = vcmp.gt.f32.partialorder %v1022, 0.0
    %vm1087 = vcmp.gt.f32.partialorder %v1023, 0.0
    %vm1088 = vcmp.gt.f32.partialorder %v1024, 0.0
    %vm1089 = vcmp.gt.f32.partialorder %v1025, 0.0
    %vm1090 = vcmp.gt.f32.partialorder %v1026, 0.0
    %vm1091 = vcmp.gt.f32.partialorder %v1027, 0.0
    %vm1092 = vcmp.gt.f32.partialorder %v1028, 0.0
    %vm1093 = vcmp.gt.f32.partialorder %v1029, 0.0
    %vm1094 = vcmp.gt.f32.partialorder %v1030, 0.0
    %vm1095 = vcmp.gt.f32.partialorder %v1031, 0.0
    %vm1096 = vcmp.gt.f32.partialorder %v1032, 0.0
    %vm1097 = vcmp.gt.f32.partialorder %v1033, 0.0
    %vm1098 = vcmp.gt.f32.partialorder %v1034, 0.0
    %vm1099 = vcmp.gt.f32.partialorder %v1035, 0.0
    %vm1100 = vcmp.gt.f32.partialorder %v1036, 0.0
    %vm1101 = vcmp.gt.f32.partialorder %v1037, 0.0
    %vm1102 = vcmp.gt.f32.partialorder %v1038, 0.0
    %vm1103 = vcmp.gt.f32.partialorder %v1039, 0.0
    %vm1104 = vcmp.gt.f32.partialorder %v1040, 0.0
    %vm1105 = vcmp.gt.f32.partialorder %v1041, 0.0
    %vm1106 = vcmp.gt.f32.partialorder %v1042, 0.0
    %vm1107 = vcmp.gt.f32.partialorder %v1043, 0.0
    %vm1108 = vcmp.gt.f32.partialorder %v1044, 0.0
    %vm1109 = vcmp.gt.f32.partialorder %v1045, 0.0
    %vm1110 = vcmp.gt.f32.partialorder %v1046, 0.0
    %vm1111 = vcmp.gt.f32.partialorder %v1047, 0.0
    %vm1112 = vcmp.gt.f32.partialorder %v1048, 0.0
    %vm1113 = vcmp.gt.f32.partialorder %v1049, 0.0
    %vm1114 = vcmp.gt.f32.partialorder %v1050, 0.0
    %vm1115 = vcmp.gt.f32.partialorder %v1051, 0.0
    %vm1116 = vcmp.gt.f32.partialorder %v1052, 0.0
    %vm1117 = vcmp.gt.f32.partialorder %v1053, 0.0
    %vm1118 = vcmp.gt.f32.partialorder %v1054, 0.0
    %vm1119 = vcmp.gt.f32.partialorder %v1055, 0.0
    %vm1120 = vcmp.gt.f32.partialorder %v1056, 0.0
    %vm1121 = vcmp.gt.f32.partialorder %v1057, 0.0
    %vm1122 = vcmp.gt.f32.partialorder %v1058, 0.0
    %vm1123 = vcmp.gt.f32.partialorder %v1059, 0.0
    %vm1124 = vcmp.gt.f32.partialorder %v1060, 0.0
    %vm1125 = vcmp.gt.f32.partialorder %v1061, 0.0
    %vm1126 = vcmp.gt.f32.partialorder %v1062, 0.0
    %vm1127 = vcmp.gt.f32.partialorder %v1063, 0.0
    %vm1128 = vcmp.gt.f32.partialorder %v1064, 0.0
    %vm1129 = vcmp.gt.f32.partialorder %v1065, 0.0
    %vm1130 = vcmp.gt.f32.partialorder %v1066, 0.0
    %vm1131 = vcmp.gt.f32.partialorder %v1067, 0.0
    %vm1132 = vcmp.gt.f32.partialorder %v1068, 0.0
    %v1133 = vmul.f32 %v1005, 0.2
    %v1134 = vmul.f32 %v1006, 0.2
    %v1135 = vmul.f32 %v1007, 0.2
    %v1136 = vmul.f32 %v1008, 0.2
    %v1137 = vmul.f32 %v1009, 0.2
    %v1138 = vmul.f32 %v1010, 0.2
    %v1139 = vmul.f32 %v1011, 0.2
    %v1140 = vmul.f32 %v1012, 0.2
    %v1141 = vmul.f32 %v1013, 0.2
    %v1142 = vmul.f32 %v1014, 0.2
    %v1143 = vmul.f32 %v1015, 0.2
    %v1144 = vmul.f32 %v1016, 0.2
    %v1145 = vmul.f32 %v1017, 0.2
    %v1146 = vmul.f32 %v1018, 0.2
    %v1147 = vmul.f32 %v1019, 0.2
    %v1148 = vmul.f32 %v1020, 0.2
    %v1149 = vmul.f32 %v1021, 0.2
    %v1150 = vmul.f32 %v1022, 0.2
    %v1151 = vmul.f32 %v1023, 0.2
    %v1152 = vmul.f32 %v1024, 0.2
    %v1153 = vmul.f32 %v1025, 0.2
    %v1154 = vmul.f32 %v1026, 0.2
    %v1155 = vmul.f32 %v1027, 0.2
    %v1156 = vmul.f32 %v1028, 0.2
    %v1157 = vmul.f32 %v1029, 0.2
    %v1158 = vmul.f32 %v1030, 0.2
    %v1159 = vmul.f32 %v1031, 0.2
    %v1160 = vmul.f32 %v1032, 0.2
    %v1161 = vmul.f32 %v1033, 0.2
    %v1162 = vmul.f32 %v1034, 0.2
    %v1163 = vmul.f32 %v1035, 0.2
    %v1164 = vmul.f32 %v1036, 0.2
    %v1165 = vmul.f32 %v1037, 0.2
    %v1166 = vmul.f32 %v1038, 0.2
    %v1167 = vmul.f32 %v1039, 0.2
    %v1168 = vmul.f32 %v1040, 0.2
    %v1169 = vmul.f32 %v1041, 0.2
    %v1170 = vmul.f32 %v1042, 0.2
    %v1171 = vmul.f32 %v1043, 0.2
    %v1172 = vmul.f32 %v1044, 0.2
    %v1173 = vmul.f32 %v1045, 0.2
    %v1174 = vmul.f32 %v1046, 0.2
    %v1175 = vmul.f32 %v1047, 0.2
    %v1176 = vmul.f32 %v1048, 0.2
    %v1177 = vmul.f32 %v1049, 0.2
    %v1178 = vmul.f32 %v1050, 0.2
    %v1179 = vmul.f32 %v1051, 0.2
    %v1180 = vmul.f32 %v1052, 0.2
    %v1181 = vmul.f32 %v1053, 0.2
    %v1182 = vmul.f32 %v1054, 0.2
    %v1183 = vmul.f32 %v1055, 0.2
    %v1184 = vmul.f32 %v1056, 0.2
    %v1185 = vmul.f32 %v1057, 0.2
    %v1186 = vmul.f32 %v1058, 0.2
    %v1187 = vmul.f32 %v1059, 0.2
    %v1188 = vmul.f32 %v1060, 0.2
    %v1189 = vmul.f32 %v1061, 0.2
    %v1190 = vmul.f32 %v1062, 0.2
    %v1191 = vmul.f32 %v1063, 0.2
    %v1192 = vmul.f32 %v1064, 0.2
    %v1193 = vmul.f32 %v1065, 0.2
    %v1194 = vmul.f32 %v1066, 0.2
    %v1195 = vmul.f32 %v1067, 0.2
    %v1196 = vmul.f32 %v1068, 0.2
    %v1197 = vsel %vm1069, %v1005, %v1133
    %v1198 = vsel %vm1070, %v1006, %v1134
    %v1199 = vsel %vm1071, %v1007, %v1135
    %v1200 = vsel %vm1072, %v1008, %v1136
    %v1201 = vsel %vm1073, %v1009, %v1137
    %v1202 = vsel %vm1074, %v1010, %v1138
    %v1203 = vsel %vm1075, %v1011, %v1139
    %v1204 = vsel %vm1076, %v1012, %v1140
    %v1205 = vsel %vm1077, %v1013, %v1141
    %v1206 = vsel %vm1078, %v1014, %v1142
    %v1207 = vsel %vm1079, %v1015, %v1143
    %v1208 = vsel %vm1080, %v1016, %v1144
    %v1209 = vsel %vm1081, %v1017, %v1145
    %v1210 = vsel %vm1082, %v1018, %v1146
    %v1211 = vsel %vm1083, %v1019, %v1147
    %v1212 = vsel %vm1084, %v1020, %v1148
    %v1213 = vsel %vm1085, %v1021, %v1149
    %v1214 = vsel %vm1086, %v1022, %v1150
    %v1215 = vsel %vm1087, %v1023, %v1151
    %v1216 = vsel %vm1088, %v1024, %v1152
    %v1217 = vsel %vm1089, %v1025, %v1153
    %v1218 = vsel %vm1090, %v1026, %v1154
    %v1219 = vsel %vm1091, %v1027, %v1155
    %v1220 = vsel %vm1092, %v1028, %v1156
    %v1221 = vsel %vm1093, %v1029, %v1157
    %v1222 = vsel %vm1094, %v1030, %v1158
    %v1223 = vsel %vm1095, %v1031, %v1159
    %v1224 = vsel %vm1096, %v1032, %v1160
    %v1225 = vsel %vm1097, %v1033, %v1161
    %v1226 = vsel %vm1098, %v1034, %v1162
    %v1227 = vsel %vm1099, %v1035, %v1163
    %v1228 = vsel %vm1100, %v1036, %v1164
    %v1229 = vsel %vm1101, %v1037, %v1165
    %v1230 = vsel %vm1102, %v1038, %v1166
    %v1231 = vsel %vm1103, %v1039, %v1167
    %v1232 = vsel %vm1104, %v1040, %v1168
    %v1233 = vsel %vm1105, %v1041, %v1169
    %v1234 = vsel %vm1106, %v1042, %v1170
    %v1235 = vsel %vm1107, %v1043, %v1171
    %v1236 = vsel %vm1108, %v1044, %v1172
    %v1237 = vsel %vm1109, %v1045, %v1173
    %v1238 = vsel %vm1110, %v1046, %v1174
    %v1239 = vsel %vm1111, %v1047, %v1175
    %v1240 = vsel %vm1112, %v1048, %v1176
    %v1241 = vsel %vm1113, %v1049, %v1177
    %v1242 = vsel %vm1114, %v1050, %v1178
    %v1243 = vsel %vm1115, %v1051, %v1179
    %v1244 = vsel %vm1116, %v1052, %v1180
    %v1245 = vsel %vm1117, %v1053, %v1181
    %v1246 = vsel %vm1118, %v1054, %v1182
    %v1247 = vsel %vm1119, %v1055, %v1183
    %v1248 = vsel %vm1120, %v1056, %v1184
    %v1249 = vsel %vm1121, %v1057, %v1185
    %v1250 = vsel %vm1122, %v1058, %v1186
    %v1251 = vsel %vm1123, %v1059, %v1187
    %v1252 = vsel %vm1124, %v1060, %v1188
    %v1253 = vsel %vm1125, %v1061, %v1189
    %v1254 = vsel %vm1126, %v1062, %v1190
    %v1255 = vsel %vm1127, %v1063, %v1191
    %v1256 = vsel %vm1128, %v1064, %v1192
    %v1257 = vsel %vm1129, %v1065, %v1193
    %v1258 = vsel %vm1130, %v1066, %v1194
    %v1259 = vsel %vm1131, %v1067, %v1195
    %v1260 = vsel %vm1132, %v1068, %v1196
    %v1261 = vpack.c.bf16 %v1198, %v1197
    %v1262 = vpack.c.bf16 %v1200, %v1199
    %v1263 = vpack.c.bf16 %v1202, %v1201
    %v1264 = vpack.c.bf16 %v1204, %v1203
    %v1265 = vpack.c.bf16 %v1206, %v1205
    %v1266 = vpack.c.bf16 %v1208, %v1207
    %v1267 = vpack.c.bf16 %v1210, %v1209
    %v1268 = vpack.c.bf16 %v1212, %v1211
    %v1269 = vpack.c.bf16 %v1214, %v1213
    %v1270 = vpack.c.bf16 %v1216, %v1215
    %v1271 = vpack.c.bf16 %v1218, %v1217
    %v1272 = vpack.c.bf16 %v1220, %v1219
    %v1273 = vpack.c.bf16 %v1222, %v1221
    %v1274 = vpack.c.bf16 %v1224, %v1223
    %v1275 = vpack.c.bf16 %v1226, %v1225
    %v1276 = vpack.c.bf16 %v1228, %v1227
    %v1277 = vpack.c.bf16 %v1230, %v1229
    %v1278 = vpack.c.bf16 %v1232, %v1231
    %v1279 = vpack.c.bf16 %v1234, %v1233
    %v1280 = vpack.c.bf16 %v1236, %v1235
    %v1281 = vpack.c.bf16 %v1238, %v1237
    %v1282 = vpack.c.bf16 %v1240, %v1239
    %v1283 = vpack.c.bf16 %v1242, %v1241
    %v1284 = vpack.c.bf16 %v1244, %v1243
    %v1285 = vpack.c.bf16 %v1246, %v1245
    %v1286 = vpack.c.bf16 %v1248, %v1247
    %v1287 = vpack.c.bf16 %v1250, %v1249
    %v1288 = vpack.c.bf16 %v1252, %v1251
    %v1289 = vpack.c.bf16 %v1254, %v1253
    %v1290 = vpack.c.bf16 %v1256, %v1255
    %v1291 = vpack.c.bf16 %v1258, %v1257
    %v1292 = vpack.c.bf16 %v1260, %v1259
    %v1325 = vunpack.c.l.b16 %v1261
    %v1326 = vunpack.c.h.b16 %v1261
    %v1327 = vunpack.c.l.b16 %v1262
    %v1328 = vunpack.c.h.b16 %v1262
    %v1329 = vunpack.c.l.b16 %v1263
    %v1330 = vunpack.c.h.b16 %v1263
    %v1331 = vunpack.c.l.b16 %v1264
    %v1332 = vunpack.c.h.b16 %v1264
    %v1333 = vunpack.c.l.b16 %v1265
    %v1334 = vunpack.c.h.b16 %v1265
    %v1335 = vunpack.c.l.b16 %v1266
    %v1336 = vunpack.c.h.b16 %v1266
    %v1337 = vunpack.c.l.b16 %v1267
    %v1338 = vunpack.c.h.b16 %v1267
    %v1339 = vunpack.c.l.b16 %v1268
    %v1340 = vunpack.c.h.b16 %v1268
    %v1341 = vunpack.c.l.b16 %v1269
    %v1342 = vunpack.c.h.b16 %v1269
    %v1343 = vunpack.c.l.b16 %v1270
    %v1344 = vunpack.c.h.b16 %v1270
    %v1345 = vunpack.c.l.b16 %v1271
    %v1346 = vunpack.c.h.b16 %v1271
    %v1347 = vunpack.c.l.b16 %v1272
    %v1348 = vunpack.c.h.b16 %v1272
    %v1349 = vunpack.c.l.b16 %v1273
    %v1350 = vunpack.c.h.b16 %v1273
    %v1351 = vunpack.c.l.b16 %v1274
    %v1352 = vunpack.c.h.b16 %v1274
    %v1353 = vunpack.c.l.b16 %v1275
    %v1354 = vunpack.c.h.b16 %v1275
    %v1355 = vunpack.c.l.b16 %v1276
    %v1356 = vunpack.c.h.b16 %v1276
    %v1357 = vunpack.c.l.b16 %v1277
    %v1358 = vunpack.c.h.b16 %v1277
    %v1359 = vunpack.c.l.b16 %v1278
    %v1360 = vunpack.c.h.b16 %v1278
    %v1361 = vunpack.c.l.b16 %v1279
    %v1362 = vunpack.c.h.b16 %v1279
    %v1363 = vunpack.c.l.b16 %v1280
    %v1364 = vunpack.c.h.b16 %v1280
    %v1365 = vunpack.c.l.b16 %v1281
    %v1366 = vunpack.c.h.b16 %v1281
    %v1367 = vunpack.c.l.b16 %v1282
    %v1368 = vunpack.c.h.b16 %v1282
    %v1369 = vunpack.c.l.b16 %v1283
    %v1370 = vunpack.c.h.b16 %v1283
    %v1371 = vunpack.c.l.b16 %v1284
    %v1372 = vunpack.c.h.b16 %v1284
    %v1373 = vunpack.c.l.b16 %v1285
    %v1374 = vunpack.c.h.b16 %v1285
    %v1375 = vunpack.c.l.b16 %v1286
    %v1376 = vunpack.c.h.b16 %v1286
    %v1377 = vunpack.c.l.b16 %v1287
    %v1378 = vunpack.c.h.b16 %v1287
    %v1379 = vunpack.c.l.b16 %v1288
    %v1380 = vunpack.c.h.b16 %v1288
    %v1381 = vunpack.c.l.b16 %v1289
    %v1382 = vunpack.c.h.b16 %v1289
    %v1383 = vunpack.c.l.b16 %v1290
    %v1384 = vunpack.c.h.b16 %v1290
    %v1385 = vunpack.c.l.b16 %v1291
    %v1386 = vunpack.c.h.b16 %v1291
    %v1387 = vunpack.c.l.b16 %v1292
    %v1388 = vunpack.c.h.b16 %v1292
    %v1389 = vpack.c.b16 %v1325, %v1325
    %v1390 = vpack.c.b16 %v1326, %v1326
    %v1391 = vpack.c.b16 %v1327, %v1327
    %v1392 = vpack.c.b16 %v1328, %v1328
    %v1393 = vpack.c.b16 %v1329, %v1329
    %v1394 = vpack.c.b16 %v1330, %v1330
    %v1395 = vpack.c.b16 %v1331, %v1331
    %v1396 = vpack.c.b16 %v1332, %v1332
    %v1397 = vpack.c.b16 %v1333, %v1333
    %v1398 = vpack.c.b16 %v1334, %v1334
    %v1399 = vpack.c.b16 %v1335, %v1335
    %v1400 = vpack.c.b16 %v1336, %v1336
    %v1401 = vpack.c.b16 %v1337, %v1337
    %v1402 = vpack.c.b16 %v1338, %v1338
    %v1403 = vpack.c.b16 %v1339, %v1339
    %v1404 = vpack.c.b16 %v1340, %v1340
    %v1405 = vpack.c.b16 %v1341, %v1341
    %v1406 = vpack.c.b16 %v1342, %v1342
    %v1407 = vpack.c.b16 %v1343, %v1343
    %v1408 = vpack.c.b16 %v1344, %v1344
    %v1409 = vpack.c.b16 %v1345, %v1345
    %v1410 = vpack.c.b16 %v1346, %v1346
    %v1411 = vpack.c.b16 %v1347, %v1347
    %v1412 = vpack.c.b16 %v1348, %v1348
    %v1413 = vpack.c.b16 %v1349, %v1349
    %v1414 = vpack.c.b16 %v1350, %v1350
    %v1415 = vpack.c.b16 %v1351, %v1351
    %v1416 = vpack.c.b16 %v1352, %v1352
    %v1417 = vpack.c.b16 %v1353, %v1353
    %v1418 = vpack.c.b16 %v1354, %v1354
    %v1419 = vpack.c.b16 %v1355, %v1355
    %v1420 = vpack.c.b16 %v1356, %v1356
    %v1421 = vpack.c.b16 %v1357, %v1357
    %v1422 = vpack.c.b16 %v1358, %v1358
    %v1423 = vpack.c.b16 %v1359, %v1359
    %v1424 = vpack.c.b16 %v1360, %v1360
    %v1425 = vpack.c.b16 %v1361, %v1361
    %v1426 = vpack.c.b16 %v1362, %v1362
    %v1427 = vpack.c.b16 %v1363, %v1363
    %v1428 = vpack.c.b16 %v1364, %v1364
    %v1429 = vpack.c.b16 %v1365, %v1365
    %v1430 = vpack.c.b16 %v1366, %v1366
    %v1431 = vpack.c.b16 %v1367, %v1367
    %v1432 = vpack.c.b16 %v1368, %v1368
    %v1433 = vpack.c.b16 %v1369, %v1369
    %v1434 = vpack.c.b16 %v1370, %v1370
    %v1435 = vpack.c.b16 %v1371, %v1371
    %v1436 = vpack.c.b16 %v1372, %v1372
    %v1437 = vpack.c.b16 %v1373, %v1373
    %v1438 = vpack.c.b16 %v1374, %v1374
    %v1439 = vpack.c.b16 %v1375, %v1375
    %v1440 = vpack.c.b16 %v1376, %v1376
    %v1441 = vpack.c.b16 %v1377, %v1377
    %v1442 = vpack.c.b16 %v1378, %v1378
    %v1443 = vpack.c.b16 %v1379, %v1379
    %v1444 = vpack.c.b16 %v1380, %v1380
    %v1445 = vpack.c.b16 %v1381, %v1381
    %v1446 = vpack.c.b16 %v1382, %v1382
    %v1447 = vpack.c.b16 %v1383, %v1383
    %v1448 = vpack.c.b16 %v1384, %v1384
    %v1449 = vpack.c.b16 %v1385, %v1385
    %v1450 = vpack.c.b16 %v1386, %v1386
    %v1451 = vpack.c.b16 %v1387, %v1387
    %v1452 = vpack.c.b16 %v1388, %v1388
    %1517 = vst [vmem:[%s3] sm:$0xf] %v1389
    %1518 = vst [vmem:[%s3 + $0x4] sm:$0xf] %v1390
    %1519 = vst [vmem:[%s3 + $0x8] sm:$0xf] %v1391
    %1520 = vst [vmem:[%s3 + $0xc] sm:$0xf] %v1392
    %1521 = vst [vmem:[%s3 + $0x10] sm:$0xf] %v1393
    %1522 = vst [vmem:[%s3 + $0x14] sm:$0xf] %v1394
    %1523 = vst [vmem:[%s3 + $0x18] sm:$0xf] %v1395
    %1524 = vst [vmem:[%s3 + $0x1c] sm:$0xf] %v1396
    %1525 = vst [vmem:[%s3 + $0x20] sm:$0xf] %v1397
    %1526 = vst [vmem:[%s3 + $0x24] sm:$0xf] %v1398
    %1527 = vst [vmem:[%s3 + $0x28] sm:$0xf] %v1399
    %1528 = vst [vmem:[%s3 + $0x2c] sm:$0xf] %v1400
    %1529 = vst [vmem:[%s3 + $0x30] sm:$0xf] %v1401
    %1530 = vst [vmem:[%s3 + $0x34] sm:$0xf] %v1402
    %1531 = vst [vmem:[%s3 + $0x38] sm:$0xf] %v1403
    %1532 = vst [vmem:[%s3 + $0x3c] sm:$0xf] %v1404
    %1533 = vst [vmem:[%s3 + $0x40] sm:$0xf] %v1405
    %1534 = vst [vmem:[%s3 + $0x44] sm:$0xf] %v1406
    %1535 = vst [vmem:[%s3 + $0x48] sm:$0xf] %v1407
    %1536 = vst [vmem:[%s3 + $0x4c] sm:$0xf] %v1408
    %1537 = vst [vmem:[%s3 + $0x50] sm:$0xf] %v1409
    %1538 = vst [vmem:[%s3 + $0x54] sm:$0xf] %v1410
    %1539 = vst [vmem:[%s3 + $0x58] sm:$0xf] %v1411
    %1540 = vst [vmem:[%s3 + $0x5c] sm:$0xf] %v1412
    %1541 = vst [vmem:[%s3 + $0x60] sm:$0xf] %v1413
    %1542 = vst [vmem:[%s3 + $0x64] sm:$0xf] %v1414
    %1543 = vst [vmem:[%s3 + $0x68] sm:$0xf] %v1415
    %1544 = vst [vmem:[%s3 + $0x6c] sm:$0xf] %v1416
    %1545 = vst [vmem:[%s3 + $0x70] sm:$0xf] %v1417
    %1546 = vst [vmem:[%s3 + $0x74] sm:$0xf] %v1418
    %1547 = vst [vmem:[%s3 + $0x78] sm:$0xf] %v1419
    %1548 = vst [vmem:[%s3 + $0x7c] sm:$0xf] %v1420
    %1549 = vst [vmem:[%s3 + $0x80] sm:$0xf] %v1421
    %1550 = vst [vmem:[%s3 + $0x84] sm:$0xf] %v1422
    %1551 = vst [vmem:[%s3 + $0x88] sm:$0xf] %v1423
    %1552 = vst [vmem:[%s3 + $0x8c] sm:$0xf] %v1424
    %1553 = vst [vmem:[%s3 + $0x90] sm:$0xf] %v1425
    %1554 = vst [vmem:[%s3 + $0x94] sm:$0xf] %v1426
    %1555 = vst [vmem:[%s3 + $0x98] sm:$0xf] %v1427
    %1556 = vst [vmem:[%s3 + $0x9c] sm:$0xf] %v1428
    %1557 = vst [vmem:[%s3 + $0xa0] sm:$0xf] %v1429
    %1558 = vst [vmem:[%s3 + $0xa4] sm:$0xf] %v1430
    %1559 = vst [vmem:[%s3 + $0xa8] sm:$0xf] %v1431
    %1560 = vst [vmem:[%s3 + $0xac] sm:$0xf] %v1432
    %1561 = vst [vmem:[%s3 + $0xb0] sm:$0xf] %v1433
    %1562 = vst [vmem:[%s3 + $0xb4] sm:$0xf] %v1434
    %1563 = vst [vmem:[%s3 + $0xb8] sm:$0xf] %v1435
    %1564 = vst [vmem:[%s3 + $0xbc] sm:$0xf] %v1436
    %1565 = vst [vmem:[%s3 + $0xc0] sm:$0xf] %v1437
    %1566 = vst [vmem:[%s3 + $0xc4] sm:$0xf] %v1438
    %1567 = vst [vmem:[%s3 + $0xc8] sm:$0xf] %v1439
    %1568 = vst [vmem:[%s3 + $0xcc] sm:$0xf] %v1440
    %1569 = vst [vmem:[%s3 + $0xd0] sm:$0xf] %v1441
    %1570 = vst [vmem:[%s3 + $0xd4] sm:$0xf] %v1442
    %1571 = vst [vmem:[%s3 + $0xd8] sm:$0xf] %v1443
    %1572 = vst [vmem:[%s3 + $0xdc] sm:$0xf] %v1444
    %1573 = vst [vmem:[%s3 + $0xe0] sm:$0xf] %v1445
    %1574 = vst [vmem:[%s3 + $0xe4] sm:$0xf] %v1446
    %1575 = vst [vmem:[%s3 + $0xe8] sm:$0xf] %v1447
    %1576 = vst [vmem:[%s3 + $0xec] sm:$0xf] %v1448
    %1577 = vst [vmem:[%s3 + $0xf0] sm:$0xf] %v1449
    %1578 = vst [vmem:[%s3 + $0xf4] sm:$0xf] %v1450
    %1579 = vst [vmem:[%s3 + $0xf8] sm:$0xf] %v1451
    %1580 = vst [vmem:[%s3 + $0xfc] sm:$0xf] %v1452
  $region21: #{_lambda_.8} parent=0 // pred_fallthru
    _
  // Predicated region
  $region22: #{_lambda_.8} parent=0 // pred_check
    _
  $region23: #{_lambda_.8} parent=0 // pred_check_branch
    %1582 = sbr.rel (0) target = $region25
  $region24: #{_lambda_.8} parent=0 // pred_region
    _
  $region25: #{_lambda_.8} parent=0 // pred_fallthru
    _
  // Predicated region
  $region26: #{_lambda_.8} parent=0 // pred_check
    _
  $region27: #{_lambda_.8} parent=0 // pred_check_branch
    %1584 = sbr.rel (0) target = $region29
  $region28: #{_lambda_.8} parent=0 // pred_region
    _
  $region29: #{_lambda_.8} parent=0 // pred_fallthru
    _

// kernel: _lambda_.10
$region0: #{_lambda_.10}
  #allocation0 [shape = 'u32[]', space=smem, size = 0x4, offset = 0x4, fixed_abs, tag = 'smem constant byte address 0x4 - core index']
  #allocation1 [shape = 'u32[144,128]{1,0:T(1,128)}', space=vmem, size = 0x12000, scoped, tag = 'internal scratch']
  %s0 = inlined_call_operand.vmem [shape: f32[128,128], index: 0, kind: input, shape index: {}]
  %s1 = inlined_call_operand.vmem [shape: f32[1,128], index: 1, kind: input, shape index: {}]
  %s2 = inlined_call_operand.vmem [shape: f32[1,128], index: 2, kind: input, shape index: {}]
  %s3 = inlined_call_operand.vmem [shape: bf16[128,128], index: 3, kind: output, shape index: {}]
  %s4 = sld [smem:[#allocation0]]
  $region22: #{_lambda_.10} parent=0
    _
  %s6 = ssub.s32 1, %s4
  %s7 = scalar_select 0, %s6, %s4
  // Predicated region
  $region2: #{_lambda_.10} parent=0 // pred_check
    _
  $region3: #{_lambda_.10} parent=0 // pred_check_branch
    %9 = sbr.rel (0) target = $region5
  $region4: #{_lambda_.10} parent=0 // pred_region
    _
  $region5: #{_lambda_.10} parent=0 // pred_fallthru
    _
  // Predicated region
  $region6: #{_lambda_.10} parent=0 // pred_check
    _
  $region7: #{_lambda_.10} parent=0 // pred_check_branch
    %11 = sbr.rel (0) target = $region9
  $region8: #{_lambda_.10} parent=0 // pred_region
    _
  $region9: #{_lambda_.10} parent=0 // pred_fallthru
    _
  // Predicated region
  $region10: #{_lambda_.10} parent=0 // pred_check
    _
  $region11: #{_lambda_.10} parent=0 // pred_check_branch
    %13 = sbr.rel (0) target = $region13
  $region12: #{_lambda_.10} parent=0 // pred_region
    _
  $region13: #{_lambda_.10} parent=0 // pred_fallthru
    _
  %v14 = vld [vmem:[%s0] sm:$0xff]
  %v15 = vld [vmem:[%s0 + $0x8] sm:$0xff]
  %v16 = vld [vmem:[%s0 + $0x10] sm:$0xff]
  %v17 = vld [vmem:[%s0 + $0x18] sm:$0xff]
  %v18 = vld [vmem:[%s0 + $0x20] sm:$0xff]
  %v19 = vld [vmem:[%s0 + $0x28] sm:$0xff]
  %v20 = vld [vmem:[%s0 + $0x30] sm:$0xff]
  %v21 = vld [vmem:[%s0 + $0x38] sm:$0xff]
  %v22 = vld [vmem:[%s0 + $0x40] sm:$0xff]
  %v23 = vld [vmem:[%s0 + $0x48] sm:$0xff]
  %v24 = vld [vmem:[%s0 + $0x50] sm:$0xff]
  %v25 = vld [vmem:[%s0 + $0x58] sm:$0xff]
  %v26 = vld [vmem:[%s0 + $0x60] sm:$0xff]
  %v27 = vld [vmem:[%s0 + $0x68] sm:$0xff]
  %v28 = vld [vmem:[%s0 + $0x70] sm:$0xff]
  %v29 = vld [vmem:[%s0 + $0x78] sm:$0xff]
  %v30 = vld [vmem:[%s1] sm:$0x1]
  %v32 = vlaneseq
  %v33 = vshrl.u32 %v32, 7
  %v34 = vsub.s32 0, %v33
  %v35 = vrot.slane %v30, %v34
  %v37 = vmul.f32 %v14, %v35
  %v38 = vmul.f32 %v15, %v35
  %v39 = vmul.f32 %v16, %v35
  %v40 = vmul.f32 %v17, %v35
  %v41 = vmul.f32 %v18, %v35
  %v42 = vmul.f32 %v19, %v35
  %v43 = vmul.f32 %v20, %v35
  %v44 = vmul.f32 %v21, %v35
  %v45 = vmul.f32 %v22, %v35
  %v46 = vmul.f32 %v23, %v35
  %v47 = vmul.f32 %v24, %v35
  %v48 = vmul.f32 %v25, %v35
  %v49 = vmul.f32 %v26, %v35
  %v50 = vmul.f32 %v27, %v35
  %v51 = vmul.f32 %v28, %v35
  %v52 = vmul.f32 %v29, %v35
  %v53 = vld [vmem:[%s2] sm:$0x1]
  %v55 = vlaneseq
  %v56 = vshrl.u32 %v55, 7
  %v57 = vsub.s32 0, %v56
  %v58 = vrot.slane %v53, %v57
  %v60 = vadd.f32 %v37, %v58
  %v61 = vadd.f32 %v38, %v58
  %v62 = vadd.f32 %v39, %v58
  %v63 = vadd.f32 %v40, %v58
  %v64 = vadd.f32 %v41, %v58
  %v65 = vadd.f32 %v42, %v58
  %v66 = vadd.f32 %v43, %v58
  %v67 = vadd.f32 %v44, %v58
  %v68 = vadd.f32 %v45, %v58
  %v69 = vadd.f32 %v46, %v58
  %v70 = vadd.f32 %v47, %v58
  %v71 = vadd.f32 %v48, %v58
  %v72 = vadd.f32 %v49, %v58
  %v73 = vadd.f32 %v50, %v58
  %v74 = vadd.f32 %v51, %v58
  %v75 = vadd.f32 %v52, %v58
  %vm76 = vcmp.gt.f32.partialorder %v60, 0.0
  %vm77 = vcmp.gt.f32.partialorder %v61, 0.0
  %vm78 = vcmp.gt.f32.partialorder %v62, 0.0
  %vm79 = vcmp.gt.f32.partialorder %v63, 0.0
  %vm80 = vcmp.gt.f32.partialorder %v64, 0.0
  %vm81 = vcmp.gt.f32.partialorder %v65, 0.0
  %vm82 = vcmp.gt.f32.partialorder %v66, 0.0
  %vm83 = vcmp.gt.f32.partialorder %v67, 0.0
  %vm84 = vcmp.gt.f32.partialorder %v68, 0.0
  %vm85 = vcmp.gt.f32.partialorder %v69, 0.0
  %vm86 = vcmp.gt.f32.partialorder %v70, 0.0
  %vm87 = vcmp.gt.f32.partialorder %v71, 0.0
  %vm88 = vcmp.gt.f32.partialorder %v72, 0.0
  %vm89 = vcmp.gt.f32.partialorder %v73, 0.0
  %vm90 = vcmp.gt.f32.partialorder %v74, 0.0
  %vm91 = vcmp.gt.f32.partialorder %v75, 0.0
  %v92 = vmul.f32 %v60, 0.2
  %v93 = vmul.f32 %v61, 0.2
  %v94 = vmul.f32 %v62, 0.2
  %v95 = vmul.f32 %v63, 0.2
  %v96 = vmul.f32 %v64, 0.2
  %v97 = vmul.f32 %v65, 0.2
  %v98 = vmul.f32 %v66, 0.2
  %v99 = vmul.f32 %v67, 0.2
  %v100 = vmul.f32 %v68, 0.2
  %v101 = vmul.f32 %v69, 0.2
  %v102 = vmul.f32 %v70, 0.2
  %v103 = vmul.f32 %v71, 0.2
  %v104 = vmul.f32 %v72, 0.2
  %v105 = vmul.f32 %v73, 0.2
  %v106 = vmul.f32 %v74, 0.2
  %v107 = vmul.f32 %v75, 0.2
  %v108 = vsel %vm76, %v60, %v92
  %v109 = vsel %vm77, %v61, %v93
  %v110 = vsel %vm78, %v62, %v94
  %v111 = vsel %vm79, %v63, %v95
  %v112 = vsel %vm80, %v64, %v96
  %v113 = vsel %vm81, %v65, %v97
  %v114 = vsel %vm82, %v66, %v98
  %v115 = vsel %vm83, %v67, %v99
  %v116 = vsel %vm84, %v68, %v100
  %v117 = vsel %vm85, %v69, %v101
  %v118 = vsel %vm86, %v70, %v102
  %v119 = vsel %vm87, %v71, %v103
  %v120 = vsel %vm88, %v72, %v104
  %v121 = vsel %vm89, %v73, %v105
  %v122 = vsel %vm90, %v74, %v106
  %v123 = vsel %vm91, %v75, %v107
  %v124 = vpack.c.bf16 %v109, %v108
  %v125 = vpack.c.bf16 %v111, %v110
  %v126 = vpack.c.bf16 %v113, %v112
  %v127 = vpack.c.bf16 %v115, %v114
  %v128 = vpack.c.bf16 %v117, %v116
  %v129 = vpack.c.bf16 %v119, %v118
  %v130 = vpack.c.bf16 %v121, %v120
  %v131 = vpack.c.bf16 %v123, %v122
  %v140 = vunpack.c.l.b16 %v124
  %v141 = vunpack.c.h.b16 %v124
  %v142 = vunpack.c.l.b16 %v125
  %v143 = vunpack.c.h.b16 %v125
  %v144 = vunpack.c.l.b16 %v126
  %v145 = vunpack.c.h.b16 %v126
  %v146 = vunpack.c.l.b16 %v127
  %v147 = vunpack.c.h.b16 %v127
  %v148 = vunpack.c.l.b16 %v128
  %v149 = vunpack.c.h.b16 %v128
  %v150 = vunpack.c.l.b16 %v129
  %v151 = vunpack.c.h.b16 %v129
  %v152 = vunpack.c.l.b16 %v130
  %v153 = vunpack.c.h.b16 %v130
  %v154 = vunpack.c.l.b16 %v131
  %v155 = vunpack.c.h.b16 %v131
  %v156 = vpack.c.b16 %v140, %v140
  %v157 = vpack.c.b16 %v141, %v141
  %v158 = vpack.c.b16 %v142, %v142
  %v159 = vpack.c.b16 %v143, %v143
  %v160 = vpack.c.b16 %v144, %v144
  %v161 = vpack.c.b16 %v145, %v145
  %v162 = vpack.c.b16 %v146, %v146
  %v163 = vpack.c.b16 %v147, %v147
  %v164 = vpack.c.b16 %v148, %v148
  %v165 = vpack.c.b16 %v149, %v149
  %v166 = vpack.c.b16 %v150, %v150
  %v167 = vpack.c.b16 %v151, %v151
  %v168 = vpack.c.b16 %v152, %v152
  %v169 = vpack.c.b16 %v153, %v153
  %v170 = vpack.c.b16 %v154, %v154
  %v171 = vpack.c.b16 %v155, %v155
  %188 = vst [vmem:[%s3] sm:$0xf] %v156
  %189 = vst [vmem:[%s3 + $0x4] sm:$0xf] %v157
  %190 = vst [vmem:[%s3 + $0x8] sm:$0xf] %v158
  %191 = vst [vmem:[%s3 + $0xc] sm:$0xf] %v159
  %192 = vst [vmem:[%s3 + $0x10] sm:$0xf] %v160
  %193 = vst [vmem:[%s3 + $0x14] sm:$0xf] %v161
  %194 = vst [vmem:[%s3 + $0x18] sm:$0xf] %v162
  %195 = vst [vmem:[%s3 + $0x1c] sm:$0xf] %v163
  %196 = vst [vmem:[%s3 + $0x20] sm:$0xf] %v164
  %197 = vst [vmem:[%s3 + $0x24] sm:$0xf] %v165
  %198 = vst [vmem:[%s3 + $0x28] sm:$0xf] %v166
  %199 = vst [vmem:[%s3 + $0x2c] sm:$0xf] %v167
  %200 = vst [vmem:[%s3 + $0x30] sm:$0xf] %v168
  %201 = vst [vmem:[%s3 + $0x34] sm:$0xf] %v169
  %202 = vst [vmem:[%s3 + $0x38] sm:$0xf] %v170
  %203 = vst [vmem:[%s3 + $0x3c] sm:$0xf] %v171
  // Predicated region
  $region14: #{_lambda_.10} parent=0 // pred_check
    _
  $region15: #{_lambda_.10} parent=0 // pred_check_branch
    %205 = sbr.rel (0) target = $region17
  $region16: #{_lambda_.10} parent=0 // pred_region
    _
  $region17: #{_lambda_.10} parent=0 // pred_fallthru
    _
  // Predicated region
  $region18: #{_lambda_.10} parent=0 // pred_check
    _
  $region19: #{_lambda_.10} parent=0 // pred_check_branch
    %207 = sbr.rel (0) target = $region21
  $region20: #{_lambda_.10} parent=0 // pred_region
    _
  $region21: #{_lambda_.10} parent=0 // pred_fallthru
    _

// kernel: _lambda_.12
$region0: #{_lambda_.12}
  #allocation0 [shape = 'u32[]', space=smem, size = 0x4, offset = 0x4, fixed_abs, tag = 'smem constant byte address 0x4 - core index']
  #allocation1 [shape = 'u32[144,128]{1,0:T(1,128)}', space=vmem, size = 0x12000, scoped, tag = 'internal scratch']
  %s0 = inlined_call_operand.vmem [shape: f32[32,128], index: 0, kind: input, shape index: {}]
  %s1 = inlined_call_operand.vmem [shape: f32[1,128], index: 1, kind: input, shape index: {}]
  %s2 = inlined_call_operand.vmem [shape: f32[1,128], index: 2, kind: input, shape index: {}]
  %s3 = inlined_call_operand.vmem [shape: bf16[32,128], index: 3, kind: output, shape index: {}]
  %s4 = sld [smem:[#allocation0]]
  $region22: #{_lambda_.12} parent=0
    _
  %s6 = ssub.s32 1, %s4
  %s7 = scalar_select 0, %s6, %s4
  // Predicated region
  $region2: #{_lambda_.12} parent=0 // pred_check
    _
  $region3: #{_lambda_.12} parent=0 // pred_check_branch
    %9 = sbr.rel (0) target = $region5
  $region4: #{_lambda_.12} parent=0 // pred_region
    _
  $region5: #{_lambda_.12} parent=0 // pred_fallthru
    _
  // Predicated region
  $region6: #{_lambda_.12} parent=0 // pred_check
    _
  $region7: #{_lambda_.12} parent=0 // pred_check_branch
    %11 = sbr.rel (0) target = $region9
  $region8: #{_lambda_.12} parent=0 // pred_region
    _
  $region9: #{_lambda_.12} parent=0 // pred_fallthru
    _
  // Predicated region
  $region10: #{_lambda_.12} parent=0 // pred_check
    _
  $region11: #{_lambda_.12} parent=0 // pred_check_branch
    %13 = sbr.rel (0) target = $region13
  $region12: #{_lambda_.12} parent=0 // pred_region
    _
  $region13: #{_lambda_.12} parent=0 // pred_fallthru
    _
  %v14 = vld [vmem:[%s0] sm:$0xff]
  %v15 = vld [vmem:[%s0 + $0x8] sm:$0xff]
  %v16 = vld [vmem:[%s0 + $0x10] sm:$0xff]
  %v17 = vld [vmem:[%s0 + $0x18] sm:$0xff]
  %v18 = vld [vmem:[%s1] sm:$0x1]
  %v20 = vlaneseq
  %v21 = vshrl.u32 %v20, 7
  %v22 = vsub.s32 0, %v21
  %v23 = vrot.slane %v18, %v22
  %v25 = vmul.f32 %v14, %v23
  %v26 = vmul.f32 %v15, %v23
  %v27 = vmul.f32 %v16, %v23
  %v28 = vmul.f32 %v17, %v23
  %v29 = vld [vmem:[%s2] sm:$0x1]
  %v31 = vlaneseq
  %v32 = vshrl.u32 %v31, 7
  %v33 = vsub.s32 0, %v32
  %v34 = vrot.slane %v29, %v33
  %v36 = vadd.f32 %v25, %v34
  %v37 = vadd.f32 %v26, %v34
  %v38 = vadd.f32 %v27, %v34
  %v39 = vadd.f32 %v28, %v34
  %vm40 = vcmp.gt.f32.partialorder %v36, 0.0
  %vm41 = vcmp.gt.f32.partialorder %v37, 0.0
  %vm42 = vcmp.gt.f32.partialorder %v38, 0.0
  %vm43 = vcmp.gt.f32.partialorder %v39, 0.0
  %v44 = vmul.f32 %v36, 0.2
  %v45 = vmul.f32 %v37, 0.2
  %v46 = vmul.f32 %v38, 0.2
  %v47 = vmul.f32 %v39, 0.2
  %v48 = vsel %vm40, %v36, %v44
  %v49 = vsel %vm41, %v37, %v45
  %v50 = vsel %vm42, %v38, %v46
  %v51 = vsel %vm43, %v39, %v47
  %v52 = vpack.c.bf16 %v49, %v48
  %v53 = vpack.c.bf16 %v51, %v50
  %v56 = vunpack.c.l.b16 %v52
  %v57 = vunpack.c.h.b16 %v52
  %v58 = vunpack.c.l.b16 %v53
  %v59 = vunpack.c.h.b16 %v53
  %v60 = vpack.c.b16 %v56, %v56
  %v61 = vpack.c.b16 %v57, %v57
  %v62 = vpack.c.b16 %v58, %v58
  %v63 = vpack.c.b16 %v59, %v59
  %68 = vst [vmem:[%s3] sm:$0xf] %v60
  %69 = vst [vmem:[%s3 + $0x4] sm:$0xf] %v61
  %70 = vst [vmem:[%s3 + $0x8] sm:$0xf] %v62
  %71 = vst [vmem:[%s3 + $0xc] sm:$0xf] %v63
  // Predicated region
  $region14: #{_lambda_.12} parent=0 // pred_check
    _
  $region15: #{_lambda_.12} parent=0 // pred_check_branch
    %73 = sbr.rel (0) target = $region17
  $region16: #{_lambda_.12} parent=0 // pred_region
    _
  $region17: #{_lambda_.12} parent=0 // pred_fallthru
    _
  // Predicated region
  $region18: #{_lambda_.12} parent=0 // pred_check
    _
  $region19: #{_lambda_.12} parent=0 // pred_check_branch
    %75 = sbr.rel (0) target = $region21
  $region20: #{_lambda_.12} parent=0 // pred_region
    _
  $region21: #{_lambda_.12} parent=0 // pred_fallthru
    _

// kernel: _lambda_.9
$region0: #{_lambda_.9}
  #allocation0 [shape = 'u32[]', space=smem, size = 0x4, offset = 0x4, fixed_abs, tag = 'smem constant byte address 0x4 - core index']
  #allocation1 [shape = 'u32[144,128]{1,0:T(1,128)}', space=vmem, size = 0x12000, scoped, tag = 'internal scratch']
  #allocation2 [shape = 'f32[128,128]{1,0:T(8,128)}', space=vmem, size = 0x10000, scoped, tag = 'scratch operand']
  %s0 = inlined_call_operand.vmem [shape: bf16[128,3200], index: 0, kind: input, shape index: {}]
  %s1 = inlined_call_operand.vmem [shape: bf16[3200,128], index: 1, kind: input, shape index: {}]
  %s2 = inlined_call_operand.vmem [shape: f32[1,128], index: 2, kind: input, shape index: {}]
  %s3 = inlined_call_operand.vmem [shape: f32[128,128], index: 3, kind: output, shape index: {0}]
  %s4 = inlined_call_operand.vmem [shape: f32[1,1,128], index: 4, kind: output, shape index: {1}]
  %s5 = inlined_call_operand.vmem [shape: f32[1,1,128], index: 5, kind: output, shape index: {2}]
  %6 = xla_tuple %s3, %s4, %s5
  %s7 = sld [smem:[#allocation0]]
  $region46: #{_lambda_.9} parent=0
    _
  %s9 = ssub.s32 1, %s7
  %s10 = scalar_select 0, %s9, %s7
  // Predicated region
  $region2: #{_lambda_.9} parent=0 // pred_check
    _
  $region3: #{_lambda_.9} parent=0 // pred_check_branch
    %12 = sbr.rel (0) target = $region5
  $region4: #{_lambda_.9} parent=0 // pred_region
    _
  $region5: #{_lambda_.9} parent=0 // pred_fallthru
    _
  // Predicated region
  $region6: #{_lambda_.9} parent=0 // pred_check
    _
  $region7: #{_lambda_.9} parent=0 // pred_check_branch
    %14 = sbr.rel (0) target = $region9
  $region8: #{_lambda_.9} parent=0 // pred_region
    _
  $region9: #{_lambda_.9} parent=0 // pred_fallthru
    _
  // Predicated region
  $region10: #{_lambda_.9} parent=0 // pred_check
    _
  $region11: #{_lambda_.9} parent=0 // pred_check_branch
    %16 = sbr.rel (0) target = $region13
  $region12: #{_lambda_.9} parent=0 // pred_region
    _
  $region13: #{_lambda_.9} parent=0 // pred_fallthru
    _
  %p18 = scmp.eq.s32.totalorder 0, 0
  // Predicated region
  $region14: #{_lambda_.9} parent=0 // pred_check
    %p19 = pneg %p18
  $region15: #{_lambda_.9} parent=0 // pred_check_branch
    %21 = sbr.rel (%p19) target = $region17
  $region16: #{_lambda_.9} parent=0 // pred_region
    %22 = vst [vmem:[#allocation2] sm:$0xff] 0.0
    %23 = vst [vmem:[#allocation2 + $0x8] sm:$0xff] 0.0
    %24 = vst [vmem:[#allocation2 + $0x10] sm:$0xff] 0.0
    %25 = vst [vmem:[#allocation2 + $0x18] sm:$0xff] 0.0
    %26 = vst [vmem:[#allocation2 + $0x20] sm:$0xff] 0.0
    %27 = vst [vmem:[#allocation2 + $0x28] sm:$0xff] 0.0
    %28 = vst [vmem:[#allocation2 + $0x30] sm:$0xff] 0.0
    %29 = vst [vmem:[#allocation2 + $0x38] sm:$0xff] 0.0
    %30 = vst [vmem:[#allocation2 + $0x40] sm:$0xff] 0.0
    %31 = vst [vmem:[#allocation2 + $0x48] sm:$0xff] 0.0
    %32 = vst [vmem:[#allocation2 + $0x50] sm:$0xff] 0.0
    %33 = vst [vmem:[#allocation2 + $0x58] sm:$0xff] 0.0
    %34 = vst [vmem:[#allocation2 + $0x60] sm:$0xff] 0.0
    %35 = vst [vmem:[#allocation2 + $0x68] sm:$0xff] 0.0
    %36 = vst [vmem:[#allocation2 + $0x70] sm:$0xff] 0.0
    %37 = vst [vmem:[#allocation2 + $0x78] sm:$0xff] 0.0
  $region17: #{_lambda_.9} parent=0 // pred_fallthru
    _
  %v38 = vld [vmem:[#allocation2] sm:$0xff]
  %v39 = vld [vmem:[#allocation2 + $0x8] sm:$0xff]
  %v40 = vld [vmem:[#allocation2 + $0x10] sm:$0xff]
  %v41 = vld [vmem:[#allocation2 + $0x18] sm:$0xff]
  %v42 = vld [vmem:[#allocation2 + $0x20] sm:$0xff]
  %v43 = vld [vmem:[#allocation2 + $0x28] sm:$0xff]
  %v44 = vld [vmem:[#allocation2 + $0x30] sm:$0xff]
  %v45 = vld [vmem:[#allocation2 + $0x38] sm:$0xff]
  %v46 = vld [vmem:[#allocation2 + $0x40] sm:$0xff]
  %v47 = vld [vmem:[#allocation2 + $0x48] sm:$0xff]
  %v48 = vld [vmem:[#allocation2 + $0x50] sm:$0xff]
  %v49 = vld [vmem:[#allocation2 + $0x58] sm:$0xff]
  %v50 = vld [vmem:[#allocation2 + $0x60] sm:$0xff]
  %v51 = vld [vmem:[#allocation2 + $0x68] sm:$0xff]
  %v52 = vld [vmem:[#allocation2 + $0x70] sm:$0xff]
  %v53 = vld [vmem:[#allocation2 + $0x78] sm:$0xff]
  %v54 = vld [vmem:[%s0] sm:$0xff]
  %v55 = vld [vmem:[%s0 + $0x8] sm:$0xff]
  %v56 = vld [vmem:[%s0 + $0x10] sm:$0xff]
  %v57 = vld [vmem:[%s0 + $0x18] sm:$0xff]
  %v58 = vld [vmem:[%s0 + $0x20] sm:$0xff]
  %v59 = vld [vmem:[%s0 + $0x28] sm:$0xff]
  %v60 = vld [vmem:[%s0 + $0x30] sm:$0xff]
  %v61 = vld [vmem:[%s0 + $0x38] sm:$0xff]
  %v62 = vld [vmem:[%s0 + $0x40] sm:$0xff]
  %v63 = vld [vmem:[%s0 + $0x48] sm:$0xff]
  %v64 = vld [vmem:[%s0 + $0x50] sm:$0xff]
  %v65 = vld [vmem:[%s0 + $0x58] sm:$0xff]
  %v66 = vld [vmem:[%s0 + $0x60] sm:$0xf]
  %v67 = vld [vmem:[%s0 + $0x64] sm:$0xff]
  %v68 = vld [vmem:[%s0 + $0x6c] sm:$0xff]
  %v69 = vld [vmem:[%s0 + $0x74] sm:$0xff]
  %v70 = vld [vmem:[%s0 + $0x7c] sm:$0xff]
  %v71 = vld [vmem:[%s0 + $0x84] sm:$0xff]
  %v72 = vld [vmem:[%s0 + $0x8c] sm:$0xff]
  %v73 = vld [vmem:[%s0 + $0x94] sm:$0xff]
  %v74 = vld [vmem:[%s0 + $0x9c] sm:$0xff]
  %v75 = vld [vmem:[%s0 + $0xa4] sm:$0xff]
  %v76 = vld [vmem:[%s0 + $0xac] sm:$0xff]
  %v77 = vld [vmem:[%s0 + $0xb4] sm:$0xff]
  %v78 = vld [vmem:[%s0 + $0xbc] sm:$0xff]
  %v79 = vld [vmem:[%s0 + $0xc4] sm:$0xf]
  %v80 = vld [vmem:[%s0 + $0xc8] sm:$0xff]
  %v81 = vld [vmem:[%s0 + $0xd0] sm:$0xff]
  %v82 = vld [vmem:[%s0 + $0xd8] sm:$0xff]
  %v83 = vld [vmem:[%s0 + $0xe0] sm:$0xff]
  %v84 = vld [vmem:[%s0 + $0xe8] sm:$0xff]
  %v85 = vld [vmem:[%s0 + $0xf0] sm:$0xff]
  %v86 = vld [vmem:[%s0 + $0xf8] sm:$0xff]
  %v87 = vld [vmem:[%s0 + $0x100] sm:$0xff]
  %v88 = vld [vmem:[%s0 + $0x108] sm:$0xff]
  %v89 = vld [vmem:[%s0 + $0x110] sm:$0xff]
  %v90 = vld [vmem:[%s0 + $0x118] sm:$0xff]
  %v91 = vld [vmem:[%s0 + $0x120] sm:$0xff]
  %v92 = vld [vmem:[%s0 + $0x128] sm:$0xf]
  %v93 = vld [vmem:[%s0 + $0x12c] sm:$0xff]
  %v94 = vld [vmem:[%s0 + $0x134] sm:$0xff]
  %v95 = vld [vmem:[%s0 + $0x13c] sm:$0xff]
  %v96 = vld [vmem:[%s0 + $0x144] sm:$0xff]
  %v97 = vld [vmem:[%s0 + $0x14c] sm:$0xff]
  %v98 = vld [vmem:[%s0 + $0x154] sm:$0xff]
  %v99 = vld [vmem:[%s0 + $0x15c] sm:$0xff]
  %v100 = vld [vmem:[%s0 + $0x164] sm:$0xff]
  %v101 = vld [vmem:[%s0 + $0x16c] sm:$0xff]
  %v102 = vld [vmem:[%s0 + $0x174] sm:$0xff]
  %v103 = vld [vmem:[%s0 + $0x17c] sm:$0xff]
  %v104 = vld [vmem:[%s0 + $0x184] sm:$0xff]
  %v105 = vld [vmem:[%s0 + $0x18c] sm:$0xf]
  %v106 = vld [vmem:[%s0 + $0x190] sm:$0xff]
  %v107 = vld [vmem:[%s0 + $0x198] sm:$0xff]
  %v108 = vld [vmem:[%s0 + $0x1a0] sm:$0xff]
  %v109 = vld [vmem:[%s0 + $0x1a8] sm:$0xff]
  %v110 = vld [vmem:[%s0 + $0x1b0] sm:$0xff]
  %v111 = vld [vmem:[%s0 + $0x1b8] sm:$0xff]
  %v112 = vld [vmem:[%s0 + $0x1c0] sm:$0xff]
  %v113 = vld [vmem:[%s0 + $0x1c8] sm:$0xff]
  %v114 = vld [vmem:[%s0 + $0x1d0] sm:$0xff]
  %v115 = vld [vmem:[%s0 + $0x1d8] sm:$0xff]
  %v116 = vld [vmem:[%s0 + $0x1e0] sm:$0xff]
  %v117 = vld [vmem:[%s0 + $0x1e8] sm:$0xff]
  %v118 = vld [vmem:[%s0 + $0x1f0] sm:$0xf]
  %v119 = vld [vmem:[%s0 + $0x1f4] sm:$0xff]
  %v120 = vld [vmem:[%s0 + $0x1fc] sm:$0xff]
  %v121 = vld [vmem:[%s0 + $0x204] sm:$0xff]
  %v122 = vld [vmem:[%s0 + $0x20c] sm:$0xff]
  %v123 = vld [vmem:[%s0 + $0x214] sm:$0xff]
  %v124 = vld [vmem:[%s0 + $0x21c] sm:$0xff]
  %v125 = vld [vmem:[%s0 + $0x224] sm:$0xff]
  %v126 = vld [vmem:[%s0 + $0x22c] sm:$0xff]
  %v127 = vld [vmem:[%s0 + $0x234] sm:$0xff]
  %v128 = vld [vmem:[%s0 + $0x23c] sm:$0xff]
  %v129 = vld [vmem:[%s0 + $0x244] sm:$0xff]
  %v130 = vld [vmem:[%s0 + $0x24c] sm:$0xff]
  %v131 = vld [vmem:[%s0 + $0x254] sm:$0xf]
  %v132 = vld [vmem:[%s0 + $0x258] sm:$0xff]
  %v133 = vld [vmem:[%s0 + $0x260] sm:$0xff]
  %v134 = vld [vmem:[%s0 + $0x268] sm:$0xff]
  %v135 = vld [vmem:[%s0 + $0x270] sm:$0xff]
  %v136 = vld [vmem:[%s0 + $0x278] sm:$0xff]
  %v137 = vld [vmem:[%s0 + $0x280] sm:$0xff]
  %v138 = vld [vmem:[%s0 + $0x288] sm:$0xff]
  %v139 = vld [vmem:[%s0 + $0x290] sm:$0xff]
  %v140 = vld [vmem:[%s0 + $0x298] sm:$0xff]
  %v141 = vld [vmem:[%s0 + $0x2a0] sm:$0xff]
  %v142 = vld [vmem:[%s0 + $0x2a8] sm:$0xff]
  %v143 = vld [vmem:[%s0 + $0x2b0] sm:$0xff]
  %v144 = vld [vmem:[%s0 + $0x2b8] sm:$0xf]
  %v145 = vld [vmem:[%s0 + $0x2bc] sm:$0xff]
  %v146 = vld [vmem:[%s0 + $0x2c4] sm:$0xff]
  %v147 = vld [vmem:[%s0 + $0x2cc] sm:$0xff]
  %v148 = vld [vmem:[%s0 + $0x2d4] sm:$0xff]
  %v149 = vld [vmem:[%s0 + $0x2dc] sm:$0xff]
  %v150 = vld [vmem:[%s0 + $0x2e4] sm:$0xff]
  %v151 = vld [vmem:[%s0 + $0x2ec] sm:$0xff]
  %v152 = vld [vmem:[%s0 + $0x2f4] sm:$0xff]
  %v153 = vld [vmem:[%s0 + $0x2fc] sm:$0xff]
  %v154 = vld [vmem:[%s0 + $0x304] sm:$0xff]
  %v155 = vld [vmem:[%s0 + $0x30c] sm:$0xff]
  %v156 = vld [vmem:[%s0 + $0x314] sm:$0xff]
  %v157 = vld [vmem:[%s0 + $0x31c] sm:$0xf]
  %v158 = vld [vmem:[%s0 + $0x320] sm:$0xff]
  %v159 = vld [vmem:[%s0 + $0x328] sm:$0xff]
  %v160 = vld [vmem:[%s0 + $0x330] sm:$0xff]
  %v161 = vld [vmem:[%s0 + $0x338] sm:$0xff]
  %v162 = vld [vmem:[%s0 + $0x340] sm:$0xff]
  %v163 = vld [vmem:[%s0 + $0x348] sm:$0xff]
  %v164 = vld [vmem:[%s0 + $0x350] sm:$0xff]
  %v165 = vld [vmem:[%s0 + $0x358] sm:$0xff]
  %v166 = vld [vmem:[%s0 + $0x360] sm:$0xff]
  %v167 = vld [vmem:[%s0 + $0x368] sm:$0xff]
  %v168 = vld [vmem:[%s0 + $0x370] sm:$0xff]
  %v169 = vld [vmem:[%s0 + $0x378] sm:$0xff]
  %v170 = vld [vmem:[%s0 + $0x380] sm:$0xf]
  %v171 = vld [vmem:[%s0 + $0x384] sm:$0xff]
  %v172 = vld [vmem:[%s0 + $0x38c] sm:$0xff]
  %v173 = vld [vmem:[%s0 + $0x394] sm:$0xff]
  %v174 = vld [vmem:[%s0 + $0x39c] sm:$0xff]
  %v175 = vld [vmem:[%s0 + $0x3a4] sm:$0xff]
  %v176 = vld [vmem:[%s0 + $0x3ac] sm:$0xff]
  %v177 = vld [vmem:[%s0 + $0x3b4] sm:$0xff]
  %v178 = vld [vmem:[%s0 + $0x3bc] sm:$0xff]
  %v179 = vld [vmem:[%s0 + $0x3c4] sm:$0xff]
  %v180 = vld [vmem:[%s0 + $0x3cc] sm:$0xff]
  %v181 = vld [vmem:[%s0 + $0x3d4] sm:$0xff]
  %v182 = vld [vmem:[%s0 + $0x3dc] sm:$0xff]
  %v183 = vld [vmem:[%s0 + $0x3e4] sm:$0xf]
  %v184 = vld [vmem:[%s0 + $0x3e8] sm:$0xff]
  %v185 = vld [vmem:[%s0 + $0x3f0] sm:$0xff]
  %v186 = vld [vmem:[%s0 + $0x3f8] sm:$0xff]
  %v187 = vld [vmem:[%s0 + $0x400] sm:$0xff]
  %v188 = vld [vmem:[%s0 + $0x408] sm:$0xff]
  %v189 = vld [vmem:[%s0 + $0x410] sm:$0xff]
  %v190 = vld [vmem:[%s0 + $0x418] sm:$0xff]
  %v191 = vld [vmem:[%s0 + $0x420] sm:$0xff]
  %v192 = vld [vmem:[%s0 + $0x428] sm:$0xff]
  %v193 = vld [vmem:[%s0 + $0x430] sm:$0xff]
  %v194 = vld [vmem:[%s0 + $0x438] sm:$0xff]
  %v195 = vld [vmem:[%s0 + $0x440] sm:$0xff]
  %v196 = vld [vmem:[%s0 + $0x448] sm:$0xf]
  %v197 = vld [vmem:[%s0 + $0x44c] sm:$0xff]
  %v198 = vld [vmem:[%s0 + $0x454] sm:$0xff]
  %v199 = vld [vmem:[%s0 + $0x45c] sm:$0xff]
  %v200 = vld [vmem:[%s0 + $0x464] sm:$0xff]
  %v201 = vld [vmem:[%s0 + $0x46c] sm:$0xff]
  %v202 = vld [vmem:[%s0 + $0x474] sm:$0xff]
  %v203 = vld [vmem:[%s0 + $0x47c] sm:$0xff]
  %v204 = vld [vmem:[%s0 + $0x484] sm:$0xff]
  %v205 = vld [vmem:[%s0 + $0x48c] sm:$0xff]
  %v206 = vld [vmem:[%s0 + $0x494] sm:$0xff]
  %v207 = vld [vmem:[%s0 + $0x49c] sm:$0xff]
  %v208 = vld [vmem:[%s0 + $0x4a4] sm:$0xff]
  %v209 = vld [vmem:[%s0 + $0x4ac] sm:$0xf]
  %v210 = vld [vmem:[%s0 + $0x4b0] sm:$0xff]
  %v211 = vld [vmem:[%s0 + $0x4b8] sm:$0xff]
  %v212 = vld [vmem:[%s0 + $0x4c0] sm:$0xff]
  %v213 = vld [vmem:[%s0 + $0x4c8] sm:$0xff]
  %v214 = vld [vmem:[%s0 + $0x4d0] sm:$0xff]
  %v215 = vld [vmem:[%s0 + $0x4d8] sm:$0xff]
  %v216 = vld [vmem:[%s0 + $0x4e0] sm:$0xff]
  %v217 = vld [vmem:[%s0 + $0x4e8] sm:$0xff]
  %v218 = vld [vmem:[%s0 + $0x4f0] sm:$0xff]
  %v219 = vld [vmem:[%s0 + $0x4f8] sm:$0xff]
  %v220 = vld [vmem:[%s0 + $0x500] sm:$0xff]
  %v221 = vld [vmem:[%s0 + $0x508] sm:$0xff]
  %v222 = vld [vmem:[%s0 + $0x510] sm:$0xf]
  %v223 = vld [vmem:[%s0 + $0x514] sm:$0xff]
  %v224 = vld [vmem:[%s0 + $0x51c] sm:$0xff]
  %v225 = vld [vmem:[%s0 + $0x524] sm:$0xff]
  %v226 = vld [vmem:[%s0 + $0x52c] sm:$0xff]
  %v227 = vld [vmem:[%s0 + $0x534] sm:$0xff]
  %v228 = vld [vmem:[%s0 + $0x53c] sm:$0xff]
  %v229 = vld [vmem:[%s0 + $0x544] sm:$0xff]
  %v230 = vld [vmem:[%s0 + $0x54c] sm:$0xff]
  %v231 = vld [vmem:[%s0 + $0x554] sm:$0xff]
  %v232 = vld [vmem:[%s0 + $0x55c] sm:$0xff]
  %v233 = vld [vmem:[%s0 + $0x564] sm:$0xff]
  %v234 = vld [vmem:[%s0 + $0x56c] sm:$0xff]
  %v235 = vld [vmem:[%s0 + $0x574] sm:$0xf]
  %v236 = vld [vmem:[%s0 + $0x578] sm:$0xff]
  %v237 = vld [vmem:[%s0 + $0x580] sm:$0xff]
  %v238 = vld [vmem:[%s0 + $0x588] sm:$0xff]
  %v239 = vld [vmem:[%s0 + $0x590] sm:$0xff]
  %v240 = vld [vmem:[%s0 + $0x598] sm:$0xff]
  %v241 = vld [vmem:[%s0 + $0x5a0] sm:$0xff]
  %v242 = vld [vmem:[%s0 + $0x5a8] sm:$0xff]
  %v243 = vld [vmem:[%s0 + $0x5b0] sm:$0xff]
  %v244 = vld [vmem:[%s0 + $0x5b8] sm:$0xff]
  %v245 = vld [vmem:[%s0 + $0x5c0] sm:$0xff]
  %v246 = vld [vmem:[%s0 + $0x5c8] sm:$0xff]
  %v247 = vld [vmem:[%s0 + $0x5d0] sm:$0xff]
  %v248 = vld [vmem:[%s0 + $0x5d8] sm:$0xf]
  %v249 = vld [vmem:[%s0 + $0x5dc] sm:$0xff]
  %v250 = vld [vmem:[%s0 + $0x5e4] sm:$0xff]
  %v251 = vld [vmem:[%s0 + $0x5ec] sm:$0xff]
  %v252 = vld [vmem:[%s0 + $0x5f4] sm:$0xff]
  %v253 = vld [vmem:[%s0 + $0x5fc] sm:$0xff]
  %v254 = vld [vmem:[%s0 + $0x604] sm:$0xff]
  %v255 = vld [vmem:[%s0 + $0x60c] sm:$0xff]
  %v256 = vld [vmem:[%s0 + $0x614] sm:$0xff]
  %v257 = vld [vmem:[%s0 + $0x61c] sm:$0xff]
  %v258 = vld [vmem:[%s0 + $0x624] sm:$0xff]
  %v259 = vld [vmem:[%s0 + $0x62c] sm:$0xff]
  %v260 = vld [vmem:[%s0 + $0x634] sm:$0xff]
  %v261 = vld [vmem:[%s0 + $0x63c] sm:$0xf]
  %v262 = vld [vmem:[%s1] sm:$0xf]
  %v263 = vld [vmem:[%s1 + $0x4] sm:$0xf]
  %v264 = vld [vmem:[%s1 + $0x8] sm:$0xf]
  %v265 = vld [vmem:[%s1 + $0xc] sm:$0xf]
  %v266 = vld [vmem:[%s1 + $0x10] sm:$0xf]
  %v267 = vld [vmem:[%s1 + $0x14] sm:$0xf]
  %v268 = vld [vmem:[%s1 + $0x18] sm:$0xf]
  %v269 = vld [vmem:[%s1 + $0x1c] sm:$0xf]
  %v270 = vld [vmem:[%s1 + $0x20] sm:$0xf]
  %v271 = vld [vmem:[%s1 + $0x24] sm:$0xf]
  %v272 = vld [vmem:[%s1 + $0x28] sm:$0xf]
  %v273 = vld [vmem:[%s1 + $0x2c] sm:$0xf]
  %v274 = vld [vmem:[%s1 + $0x30] sm:$0xf]
  %v275 = vld [vmem:[%s1 + $0x34] sm:$0xf]
  %v276 = vld [vmem:[%s1 + $0x38] sm:$0xf]
  %v277 = vld [vmem:[%s1 + $0x3c] sm:$0xf]
  %v278 = vld [vmem:[%s1 + $0x40] sm:$0xf]
  %v279 = vld [vmem:[%s1 + $0x44] sm:$0xf]
  %v280 = vld [vmem:[%s1 + $0x48] sm:$0xf]
  %v281 = vld [vmem:[%s1 + $0x4c] sm:$0xf]
  %v282 = vld [vmem:[%s1 + $0x50] sm:$0xf]
  %v283 = vld [vmem:[%s1 + $0x54] sm:$0xf]
  %v284 = vld [vmem:[%s1 + $0x58] sm:$0xf]
  %v285 = vld [vmem:[%s1 + $0x5c] sm:$0xf]
  %v286 = vld [vmem:[%s1 + $0x60] sm:$0xf]
  %v287 = vld [vmem:[%s1 + $0x64] sm:$0xf]
  %v288 = vld [vmem:[%s1 + $0x68] sm:$0xf]
  %v289 = vld [vmem:[%s1 + $0x6c] sm:$0xf]
  %v290 = vld [vmem:[%s1 + $0x70] sm:$0xf]
  %v291 = vld [vmem:[%s1 + $0x74] sm:$0xf]
  %v292 = vld [vmem:[%s1 + $0x78] sm:$0xf]
  %v293 = vld [vmem:[%s1 + $0x7c] sm:$0xf]
  %v294 = vld [vmem:[%s1 + $0x80] sm:$0xf]
  %v295 = vld [vmem:[%s1 + $0x84] sm:$0xf]
  %v296 = vld [vmem:[%s1 + $0x88] sm:$0xf]
  %v297 = vld [vmem:[%s1 + $0x8c] sm:$0xf]
  %v298 = vld [vmem:[%s1 + $0x90] sm:$0xf]
  %v299 = vld [vmem:[%s1 + $0x94] sm:$0xf]
  %v300 = vld [vmem:[%s1 + $0x98] sm:$0xf]
  %v301 = vld [vmem:[%s1 + $0x9c] sm:$0xf]
  %v302 = vld [vmem:[%s1 + $0xa0] sm:$0xf]
  %v303 = vld [vmem:[%s1 + $0xa4] sm:$0xf]
  %v304 = vld [vmem:[%s1 + $0xa8] sm:$0xf]
  %v305 = vld [vmem:[%s1 + $0xac] sm:$0xf]
  %v306 = vld [vmem:[%s1 + $0xb0] sm:$0xf]
  %v307 = vld [vmem:[%s1 + $0xb4] sm:$0xf]
  %v308 = vld [vmem:[%s1 + $0xb8] sm:$0xf]
  %v309 = vld [vmem:[%s1 + $0xbc] sm:$0xf]
  %v310 = vld [vmem:[%s1 + $0xc0] sm:$0xf]
  %v311 = vld [vmem:[%s1 + $0xc4] sm:$0xf]
  %v312 = vld [vmem:[%s1 + $0xc8] sm:$0xf]
  %v313 = vld [vmem:[%s1 + $0xcc] sm:$0xf]
  %v314 = vld [vmem:[%s1 + $0xd0] sm:$0xf]
  %v315 = vld [vmem:[%s1 + $0xd4] sm:$0xf]
  %v316 = vld [vmem:[%s1 + $0xd8] sm:$0xf]
  %v317 = vld [vmem:[%s1 + $0xdc] sm:$0xf]
  %v318 = vld [vmem:[%s1 + $0xe0] sm:$0xf]
  %v319 = vld [vmem:[%s1 + $0xe4] sm:$0xf]
  %v320 = vld [vmem:[%s1 + $0xe8] sm:$0xf]
  %v321 = vld [vmem:[%s1 + $0xec] sm:$0xf]
  %v322 = vld [vmem:[%s1 + $0xf0] sm:$0xf]
  %v323 = vld [vmem:[%s1 + $0xf4] sm:$0xf]
  %v324 = vld [vmem:[%s1 + $0xf8] sm:$0xf]
  %v325 = vld [vmem:[%s1 + $0xfc] sm:$0xf]
  %v326 = vld [vmem:[%s1 + $0x100] sm:$0xf]
  %v327 = vld [vmem:[%s1 + $0x104] sm:$0xf]
  %v328 = vld [vmem:[%s1 + $0x108] sm:$0xf]
  %v329 = vld [vmem:[%s1 + $0x10c] sm:$0xf]
  %v330 = vld [vmem:[%s1 + $0x110] sm:$0xf]
  %v331 = vld [vmem:[%s1 + $0x114] sm:$0xf]
  %v332 = vld [vmem:[%s1 + $0x118] sm:$0xf]
  %v333 = vld [vmem:[%s1 + $0x11c] sm:$0xf]
  %v334 = vld [vmem:[%s1 + $0x120] sm:$0xf]
  %v335 = vld [vmem:[%s1 + $0x124] sm:$0xf]
  %v336 = vld [vmem:[%s1 + $0x128] sm:$0xf]
  %v337 = vld [vmem:[%s1 + $0x12c] sm:$0xf]
  %v338 = vld [vmem:[%s1 + $0x130] sm:$0xf]
  %v339 = vld [vmem:[%s1 + $0x134] sm:$0xf]
  %v340 = vld [vmem:[%s1 + $0x138] sm:$0xf]
  %v341 = vld [vmem:[%s1 + $0x13c] sm:$0xf]
  %v342 = vld [vmem:[%s1 + $0x140] sm:$0xf]
  %v343 = vld [vmem:[%s1 + $0x144] sm:$0xf]
  %v344 = vld [vmem:[%s1 + $0x148] sm:$0xf]
  %v345 = vld [vmem:[%s1 + $0x14c] sm:$0xf]
  %v346 = vld [vmem:[%s1 + $0x150] sm:$0xf]
  %v347 = vld [vmem:[%s1 + $0x154] sm:$0xf]
  %v348 = vld [vmem:[%s1 + $0x158] sm:$0xf]
  %v349 = vld [vmem:[%s1 + $0x15c] sm:$0xf]
  %v350 = vld [vmem:[%s1 + $0x160] sm:$0xf]
  %v351 = vld [vmem:[%s1 + $0x164] sm:$0xf]
  %v352 = vld [vmem:[%s1 + $0x168] sm:$0xf]
  %v353 = vld [vmem:[%s1 + $0x16c] sm:$0xf]
  %v354 = vld [vmem:[%s1 + $0x170] sm:$0xf]
  %v355 = vld [vmem:[%s1 + $0x174] sm:$0xf]
  %v356 = vld [vmem:[%s1 + $0x178] sm:$0xf]
  %v357 = vld [vmem:[%s1 + $0x17c] sm:$0xf]
  %v358 = vld [vmem:[%s1 + $0x180] sm:$0xf]
  %v359 = vld [vmem:[%s1 + $0x184] sm:$0xf]
  %v360 = vld [vmem:[%s1 + $0x188] sm:$0xf]
  %v361 = vld [vmem:[%s1 + $0x18c] sm:$0xf]
  %v362 = vld [vmem:[%s1 + $0x190] sm:$0xf]
  %v363 = vld [vmem:[%s1 + $0x194] sm:$0xf]
  %v364 = vld [vmem:[%s1 + $0x198] sm:$0xf]
  %v365 = vld [vmem:[%s1 + $0x19c] sm:$0xf]
  %v366 = vld [vmem:[%s1 + $0x1a0] sm:$0xf]
  %v367 = vld [vmem:[%s1 + $0x1a4] sm:$0xf]
  %v368 = vld [vmem:[%s1 + $0x1a8] sm:$0xf]
  %v369 = vld [vmem:[%s1 + $0x1ac] sm:$0xf]
  %v370 = vld [vmem:[%s1 + $0x1b0] sm:$0xf]
  %v371 = vld [vmem:[%s1 + $0x1b4] sm:$0xf]
  %v372 = vld [vmem:[%s1 + $0x1b8] sm:$0xf]
  %v373 = vld [vmem:[%s1 + $0x1bc] sm:$0xf]
  %v374 = vld [vmem:[%s1 + $0x1c0] sm:$0xf]
  %v375 = vld [vmem:[%s1 + $0x1c4] sm:$0xf]
  %v376 = vld [vmem:[%s1 + $0x1c8] sm:$0xf]
  %v377 = vld [vmem:[%s1 + $0x1cc] sm:$0xf]
  %v378 = vld [vmem:[%s1 + $0x1d0] sm:$0xf]
  %v379 = vld [vmem:[%s1 + $0x1d4] sm:$0xf]
  %v380 = vld [vmem:[%s1 + $0x1d8] sm:$0xf]
  %v381 = vld [vmem:[%s1 + $0x1dc] sm:$0xf]
  %v382 = vld [vmem:[%s1 + $0x1e0] sm:$0xf]
  %v383 = vld [vmem:[%s1 + $0x1e4] sm:$0xf]
  %v384 = vld [vmem:[%s1 + $0x1e8] sm:$0xf]
  %v385 = vld [vmem:[%s1 + $0x1ec] sm:$0xf]
  %v386 = vld [vmem:[%s1 + $0x1f0] sm:$0xf]
  %v387 = vld [vmem:[%s1 + $0x1f4] sm:$0xf]
  %v388 = vld [vmem:[%s1 + $0x1f8] sm:$0xf]
  %v389 = vld [vmem:[%s1 + $0x1fc] sm:$0xf]
  %v390 = vld [vmem:[%s1 + $0x200] sm:$0xf]
  %v391 = vld [vmem:[%s1 + $0x204] sm:$0xf]
  %v392 = vld [vmem:[%s1 + $0x208] sm:$0xf]
  %v393 = vld [vmem:[%s1 + $0x20c] sm:$0xf]
  %v394 = vld [vmem:[%s1 + $0x210] sm:$0xf]
  %v395 = vld [vmem:[%s1 + $0x214] sm:$0xf]
  %v396 = vld [vmem:[%s1 + $0x218] sm:$0xf]
  %v397 = vld [vmem:[%s1 + $0x21c] sm:$0xf]
  %v398 = vld [vmem:[%s1 + $0x220] sm:$0xf]
  %v399 = vld [vmem:[%s1 + $0x224] sm:$0xf]
  %v400 = vld [vmem:[%s1 + $0x228] sm:$0xf]
  %v401 = vld [vmem:[%s1 + $0x22c] sm:$0xf]
  %v402 = vld [vmem:[%s1 + $0x230] sm:$0xf]
  %v403 = vld [vmem:[%s1 + $0x234] sm:$0xf]
  %v404 = vld [vmem:[%s1 + $0x238] sm:$0xf]
  %v405 = vld [vmem:[%s1 + $0x23c] sm:$0xf]
  %v406 = vld [vmem:[%s1 + $0x240] sm:$0xf]
  %v407 = vld [vmem:[%s1 + $0x244] sm:$0xf]
  %v408 = vld [vmem:[%s1 + $0x248] sm:$0xf]
  %v409 = vld [vmem:[%s1 + $0x24c] sm:$0xf]
  %v410 = vld [vmem:[%s1 + $0x250] sm:$0xf]
  %v411 = vld [vmem:[%s1 + $0x254] sm:$0xf]
  %v412 = vld [vmem:[%s1 + $0x258] sm:$0xf]
  %v413 = vld [vmem:[%s1 + $0x25c] sm:$0xf]
  %v414 = vld [vmem:[%s1 + $0x260] sm:$0xf]
  %v415 = vld [vmem:[%s1 + $0x264] sm:$0xf]
  %v416 = vld [vmem:[%s1 + $0x268] sm:$0xf]
  %v417 = vld [vmem:[%s1 + $0x26c] sm:$0xf]
  %v418 = vld [vmem:[%s1 + $0x270] sm:$0xf]
  %v419 = vld [vmem:[%s1 + $0x274] sm:$0xf]
  %v420 = vld [vmem:[%s1 + $0x278] sm:$0xf]
  %v421 = vld [vmem:[%s1 + $0x27c] sm:$0xf]
  %v422 = vld [vmem:[%s1 + $0x280] sm:$0xf]
  %v423 = vld [vmem:[%s1 + $0x284] sm:$0xf]
  %v424 = vld [vmem:[%s1 + $0x288] sm:$0xf]
  %v425 = vld [vmem:[%s1 + $0x28c] sm:$0xf]
  %v426 = vld [vmem:[%s1 + $0x290] sm:$0xf]
  %v427 = vld [vmem:[%s1 + $0x294] sm:$0xf]
  %v428 = vld [vmem:[%s1 + $0x298] sm:$0xf]
  %v429 = vld [vmem:[%s1 + $0x29c] sm:$0xf]
  %v430 = vld [vmem:[%s1 + $0x2a0] sm:$0xf]
  %v431 = vld [vmem:[%s1 + $0x2a4] sm:$0xf]
  %v432 = vld [vmem:[%s1 + $0x2a8] sm:$0xf]
  %v433 = vld [vmem:[%s1 + $0x2ac] sm:$0xf]
  %v434 = vld [vmem:[%s1 + $0x2b0] sm:$0xf]
  %v435 = vld [vmem:[%s1 + $0x2b4] sm:$0xf]
  %v436 = vld [vmem:[%s1 + $0x2b8] sm:$0xf]
  %v437 = vld [vmem:[%s1 + $0x2bc] sm:$0xf]
  %v438 = vld [vmem:[%s1 + $0x2c0] sm:$0xf]
  %v439 = vld [vmem:[%s1 + $0x2c4] sm:$0xf]
  %v440 = vld [vmem:[%s1 + $0x2c8] sm:$0xf]
  %v441 = vld [vmem:[%s1 + $0x2cc] sm:$0xf]
  %v442 = vld [vmem:[%s1 + $0x2d0] sm:$0xf]
  %v443 = vld [vmem:[%s1 + $0x2d4] sm:$0xf]
  %v444 = vld [vmem:[%s1 + $0x2d8] sm:$0xf]
  %v445 = vld [vmem:[%s1 + $0x2dc] sm:$0xf]
  %v446 = vld [vmem:[%s1 + $0x2e0] sm:$0xf]
  %v447 = vld [vmem:[%s1 + $0x2e4] sm:$0xf]
  %v448 = vld [vmem:[%s1 + $0x2e8] sm:$0xf]
  %v449 = vld [vmem:[%s1 + $0x2ec] sm:$0xf]
  %v450 = vld [vmem:[%s1 + $0x2f0] sm:$0xf]
  %v451 = vld [vmem:[%s1 + $0x2f4] sm:$0xf]
  %v452 = vld [vmem:[%s1 + $0x2f8] sm:$0xf]
  %v453 = vld [vmem:[%s1 + $0x2fc] sm:$0xf]
  %v454 = vld [vmem:[%s1 + $0x300] sm:$0xf]
  %v455 = vld [vmem:[%s1 + $0x304] sm:$0xf]
  %v456 = vld [vmem:[%s1 + $0x308] sm:$0xf]
  %v457 = vld [vmem:[%s1 + $0x30c] sm:$0xf]
  %v458 = vld [vmem:[%s1 + $0x310] sm:$0xf]
  %v459 = vld [vmem:[%s1 + $0x314] sm:$0xf]
  %v460 = vld [vmem:[%s1 + $0x318] sm:$0xf]
  %v461 = vld [vmem:[%s1 + $0x31c] sm:$0xf]
  %v462 = vld [vmem:[%s1 + $0x320] sm:$0xf]
  %v463 = vld [vmem:[%s1 + $0x324] sm:$0xf]
  %v464 = vld [vmem:[%s1 + $0x328] sm:$0xf]
  %v465 = vld [vmem:[%s1 + $0x32c] sm:$0xf]
  %v466 = vld [vmem:[%s1 + $0x330] sm:$0xf]
  %v467 = vld [vmem:[%s1 + $0x334] sm:$0xf]
  %v468 = vld [vmem:[%s1 + $0x338] sm:$0xf]
  %v469 = vld [vmem:[%s1 + $0x33c] sm:$0xf]
  %v470 = vld [vmem:[%s1 + $0x340] sm:$0xf]
  %v471 = vld [vmem:[%s1 + $0x344] sm:$0xf]
  %v472 = vld [vmem:[%s1 + $0x348] sm:$0xf]
  %v473 = vld [vmem:[%s1 + $0x34c] sm:$0xf]
  %v474 = vld [vmem:[%s1 + $0x350] sm:$0xf]
  %v475 = vld [vmem:[%s1 + $0x354] sm:$0xf]
  %v476 = vld [vmem:[%s1 + $0x358] sm:$0xf]
  %v477 = vld [vmem:[%s1 + $0x35c] sm:$0xf]
  %v478 = vld [vmem:[%s1 + $0x360] sm:$0xf]
  %v479 = vld [vmem:[%s1 + $0x364] sm:$0xf]
  %v480 = vld [vmem:[%s1 + $0x368] sm:$0xf]
  %v481 = vld [vmem:[%s1 + $0x36c] sm:$0xf]
  %v482 = vld [vmem:[%s1 + $0x370] sm:$0xf]
  %v483 = vld [vmem:[%s1 + $0x374] sm:$0xf]
  %v484 = vld [vmem:[%s1 + $0x378] sm:$0xf]
  %v485 = vld [vmem:[%s1 + $0x37c] sm:$0xf]
  %v486 = vld [vmem:[%s1 + $0x380] sm:$0xf]
  %v487 = vld [vmem:[%s1 + $0x384] sm:$0xf]
  %v488 = vld [vmem:[%s1 + $0x388] sm:$0xf]
  %v489 = vld [vmem:[%s1 + $0x38c] sm:$0xf]
  %v490 = vld [vmem:[%s1 + $0x390] sm:$0xf]
  %v491 = vld [vmem:[%s1 + $0x394] sm:$0xf]
  %v492 = vld [vmem:[%s1 + $0x398] sm:$0xf]
  %v493 = vld [vmem:[%s1 + $0x39c] sm:$0xf]
  %v494 = vld [vmem:[%s1 + $0x3a0] sm:$0xf]
  %v495 = vld [vmem:[%s1 + $0x3a4] sm:$0xf]
  %v496 = vld [vmem:[%s1 + $0x3a8] sm:$0xf]
  %v497 = vld [vmem:[%s1 + $0x3ac] sm:$0xf]
  %v498 = vld [vmem:[%s1 + $0x3b0] sm:$0xf]
  %v499 = vld [vmem:[%s1 + $0x3b4] sm:$0xf]
  %v500 = vld [vmem:[%s1 + $0x3b8] sm:$0xf]
  %v501 = vld [vmem:[%s1 + $0x3bc] sm:$0xf]
  %v502 = vld [vmem:[%s1 + $0x3c0] sm:$0xf]
  %v503 = vld [vmem:[%s1 + $0x3c4] sm:$0xf]
  %v504 = vld [vmem:[%s1 + $0x3c8] sm:$0xf]
  %v505 = vld [vmem:[%s1 + $0x3cc] sm:$0xf]
  %v506 = vld [vmem:[%s1 + $0x3d0] sm:$0xf]
  %v507 = vld [vmem:[%s1 + $0x3d4] sm:$0xf]
  %v508 = vld [vmem:[%s1 + $0x3d8] sm:$0xf]
  %v509 = vld [vmem:[%s1 + $0x3dc] sm:$0xf]
  %v510 = vld [vmem:[%s1 + $0x3e0] sm:$0xf]
  %v511 = vld [vmem:[%s1 + $0x3e4] sm:$0xf]
  %v512 = vld [vmem:[%s1 + $0x3e8] sm:$0xf]
  %v513 = vld [vmem:[%s1 + $0x3ec] sm:$0xf]
  %v514 = vld [vmem:[%s1 + $0x3f0] sm:$0xf]
  %v515 = vld [vmem:[%s1 + $0x3f4] sm:$0xf]
  %v516 = vld [vmem:[%s1 + $0x3f8] sm:$0xf]
  %v517 = vld [vmem:[%s1 + $0x3fc] sm:$0xf]
  %v518 = vld [vmem:[%s1 + $0x400] sm:$0xf]
  %v519 = vld [vmem:[%s1 + $0x404] sm:$0xf]
  %v520 = vld [vmem:[%s1 + $0x408] sm:$0xf]
  %v521 = vld [vmem:[%s1 + $0x40c] sm:$0xf]
  %v522 = vld [vmem:[%s1 + $0x410] sm:$0xf]
  %v523 = vld [vmem:[%s1 + $0x414] sm:$0xf]
  %v524 = vld [vmem:[%s1 + $0x418] sm:$0xf]
  %v525 = vld [vmem:[%s1 + $0x41c] sm:$0xf]
  %v526 = vld [vmem:[%s1 + $0x420] sm:$0xf]
  %v527 = vld [vmem:[%s1 + $0x424] sm:$0xf]
  %v528 = vld [vmem:[%s1 + $0x428] sm:$0xf]
  %v529 = vld [vmem:[%s1 + $0x42c] sm:$0xf]
  %v530 = vld [vmem:[%s1 + $0x430] sm:$0xf]
  %v531 = vld [vmem:[%s1 + $0x434] sm:$0xf]
  %v532 = vld [vmem:[%s1 + $0x438] sm:$0xf]
  %v533 = vld [vmem:[%s1 + $0x43c] sm:$0xf]
  %v534 = vld [vmem:[%s1 + $0x440] sm:$0xf]
  %v535 = vld [vmem:[%s1 + $0x444] sm:$0xf]
  %v536 = vld [vmem:[%s1 + $0x448] sm:$0xf]
  %v537 = vld [vmem:[%s1 + $0x44c] sm:$0xf]
  %v538 = vld [vmem:[%s1 + $0x450] sm:$0xf]
  %v539 = vld [vmem:[%s1 + $0x454] sm:$0xf]
  %v540 = vld [vmem:[%s1 + $0x458] sm:$0xf]
  %v541 = vld [vmem:[%s1 + $0x45c] sm:$0xf]
  %v542 = vld [vmem:[%s1 + $0x460] sm:$0xf]
  %v543 = vld [vmem:[%s1 + $0x464] sm:$0xf]
  %v544 = vld [vmem:[%s1 + $0x468] sm:$0xf]
  %v545 = vld [vmem:[%s1 + $0x46c] sm:$0xf]
  %v546 = vld [vmem:[%s1 + $0x470] sm:$0xf]
  %v547 = vld [vmem:[%s1 + $0x474] sm:$0xf]
  %v548 = vld [vmem:[%s1 + $0x478] sm:$0xf]
  %v549 = vld [vmem:[%s1 + $0x47c] sm:$0xf]
  %v550 = vld [vmem:[%s1 + $0x480] sm:$0xf]
  %v551 = vld [vmem:[%s1 + $0x484] sm:$0xf]
  %v552 = vld [vmem:[%s1 + $0x488] sm:$0xf]
  %v553 = vld [vmem:[%s1 + $0x48c] sm:$0xf]
  %v554 = vld [vmem:[%s1 + $0x490] sm:$0xf]
  %v555 = vld [vmem:[%s1 + $0x494] sm:$0xf]
  %v556 = vld [vmem:[%s1 + $0x498] sm:$0xf]
  %v557 = vld [vmem:[%s1 + $0x49c] sm:$0xf]
  %v558 = vld [vmem:[%s1 + $0x4a0] sm:$0xf]
  %v559 = vld [vmem:[%s1 + $0x4a4] sm:$0xf]
  %v560 = vld [vmem:[%s1 + $0x4a8] sm:$0xf]
  %v561 = vld [vmem:[%s1 + $0x4ac] sm:$0xf]
  %v562 = vld [vmem:[%s1 + $0x4b0] sm:$0xf]
  %v563 = vld [vmem:[%s1 + $0x4b4] sm:$0xf]
  %v564 = vld [vmem:[%s1 + $0x4b8] sm:$0xf]
  %v565 = vld [vmem:[%s1 + $0x4bc] sm:$0xf]
  %v566 = vld [vmem:[%s1 + $0x4c0] sm:$0xf]
  %v567 = vld [vmem:[%s1 + $0x4c4] sm:$0xf]
  %v568 = vld [vmem:[%s1 + $0x4c8] sm:$0xf]
  %v569 = vld [vmem:[%s1 + $0x4cc] sm:$0xf]
  %v570 = vld [vmem:[%s1 + $0x4d0] sm:$0xf]
  %v571 = vld [vmem:[%s1 + $0x4d4] sm:$0xf]
  %v572 = vld [vmem:[%s1 + $0x4d8] sm:$0xf]
  %v573 = vld [vmem:[%s1 + $0x4dc] sm:$0xf]
  %v574 = vld [vmem:[%s1 + $0x4e0] sm:$0xf]
  %v575 = vld [vmem:[%s1 + $0x4e4] sm:$0xf]
  %v576 = vld [vmem:[%s1 + $0x4e8] sm:$0xf]
  %v577 = vld [vmem:[%s1 + $0x4ec] sm:$0xf]
  %v578 = vld [vmem:[%s1 + $0x4f0] sm:$0xf]
  %v579 = vld [vmem:[%s1 + $0x4f4] sm:$0xf]
  %v580 = vld [vmem:[%s1 + $0x4f8] sm:$0xf]
  %v581 = vld [vmem:[%s1 + $0x4fc] sm:$0xf]
  %v582 = vld [vmem:[%s1 + $0x500] sm:$0xf]
  %v583 = vld [vmem:[%s1 + $0x504] sm:$0xf]
  %v584 = vld [vmem:[%s1 + $0x508] sm:$0xf]
  %v585 = vld [vmem:[%s1 + $0x50c] sm:$0xf]
  %v586 = vld [vmem:[%s1 + $0x510] sm:$0xf]
  %v587 = vld [vmem:[%s1 + $0x514] sm:$0xf]
  %v588 = vld [vmem:[%s1 + $0x518] sm:$0xf]
  %v589 = vld [vmem:[%s1 + $0x51c] sm:$0xf]
  %v590 = vld [vmem:[%s1 + $0x520] sm:$0xf]
  %v591 = vld [vmem:[%s1 + $0x524] sm:$0xf]
  %v592 = vld [vmem:[%s1 + $0x528] sm:$0xf]
  %v593 = vld [vmem:[%s1 + $0x52c] sm:$0xf]
  %v594 = vld [vmem:[%s1 + $0x530] sm:$0xf]
  %v595 = vld [vmem:[%s1 + $0x534] sm:$0xf]
  %v596 = vld [vmem:[%s1 + $0x538] sm:$0xf]
  %v597 = vld [vmem:[%s1 + $0x53c] sm:$0xf]
  %v598 = vld [vmem:[%s1 + $0x540] sm:$0xf]
  %v599 = vld [vmem:[%s1 + $0x544] sm:$0xf]
  %v600 = vld [vmem:[%s1 + $0x548] sm:$0xf]
  %v601 = vld [vmem:[%s1 + $0x54c] sm:$0xf]
  %v602 = vld [vmem:[%s1 + $0x550] sm:$0xf]
  %v603 = vld [vmem:[%s1 + $0x554] sm:$0xf]
  %v604 = vld [vmem:[%s1 + $0x558] sm:$0xf]
  %v605 = vld [vmem:[%s1 + $0x55c] sm:$0xf]
  %v606 = vld [vmem:[%s1 + $0x560] sm:$0xf]
  %v607 = vld [vmem:[%s1 + $0x564] sm:$0xf]
  %v608 = vld [vmem:[%s1 + $0x568] sm:$0xf]
  %v609 = vld [vmem:[%s1 + $0x56c] sm:$0xf]
  %v610 = vld [vmem:[%s1 + $0x570] sm:$0xf]
  %v611 = vld [vmem:[%s1 + $0x574] sm:$0xf]
  %v612 = vld [vmem:[%s1 + $0x578] sm:$0xf]
  %v613 = vld [vmem:[%s1 + $0x57c] sm:$0xf]
  %v614 = vld [vmem:[%s1 + $0x580] sm:$0xf]
  %v615 = vld [vmem:[%s1 + $0x584] sm:$0xf]
  %v616 = vld [vmem:[%s1 + $0x588] sm:$0xf]
  %v617 = vld [vmem:[%s1 + $0x58c] sm:$0xf]
  %v618 = vld [vmem:[%s1 + $0x590] sm:$0xf]
  %v619 = vld [vmem:[%s1 + $0x594] sm:$0xf]
  %v620 = vld [vmem:[%s1 + $0x598] sm:$0xf]
  %v621 = vld [vmem:[%s1 + $0x59c] sm:$0xf]
  %v622 = vld [vmem:[%s1 + $0x5a0] sm:$0xf]
  %v623 = vld [vmem:[%s1 + $0x5a4] sm:$0xf]
  %v624 = vld [vmem:[%s1 + $0x5a8] sm:$0xf]
  %v625 = vld [vmem:[%s1 + $0x5ac] sm:$0xf]
  %v626 = vld [vmem:[%s1 + $0x5b0] sm:$0xf]
  %v627 = vld [vmem:[%s1 + $0x5b4] sm:$0xf]
  %v628 = vld [vmem:[%s1 + $0x5b8] sm:$0xf]
  %v629 = vld [vmem:[%s1 + $0x5bc] sm:$0xf]
  %v630 = vld [vmem:[%s1 + $0x5c0] sm:$0xf]
  %v631 = vld [vmem:[%s1 + $0x5c4] sm:$0xf]
  %v632 = vld [vmem:[%s1 + $0x5c8] sm:$0xf]
  %v633 = vld [vmem:[%s1 + $0x5cc] sm:$0xf]
  %v634 = vld [vmem:[%s1 + $0x5d0] sm:$0xf]
  %v635 = vld [vmem:[%s1 + $0x5d4] sm:$0xf]
  %v636 = vld [vmem:[%s1 + $0x5d8] sm:$0xf]
  %v637 = vld [vmem:[%s1 + $0x5dc] sm:$0xf]
  %v638 = vld [vmem:[%s1 + $0x5e0] sm:$0xf]
  %v639 = vld [vmem:[%s1 + $0x5e4] sm:$0xf]
  %v640 = vld [vmem:[%s1 + $0x5e8] sm:$0xf]
  %v641 = vld [vmem:[%s1 + $0x5ec] sm:$0xf]
  %v642 = vld [vmem:[%s1 + $0x5f0] sm:$0xf]
  %v643 = vld [vmem:[%s1 + $0x5f4] sm:$0xf]
  %v644 = vld [vmem:[%s1 + $0x5f8] sm:$0xf]
  %v645 = vld [vmem:[%s1 + $0x5fc] sm:$0xf]
  %v646 = vld [vmem:[%s1 + $0x600] sm:$0xf]
  %v647 = vld [vmem:[%s1 + $0x604] sm:$0xf]
  %v648 = vld [vmem:[%s1 + $0x608] sm:$0xf]
  %v649 = vld [vmem:[%s1 + $0x60c] sm:$0xf]
  %v650 = vld [vmem:[%s1 + $0x610] sm:$0xf]
  %v651 = vld [vmem:[%s1 + $0x614] sm:$0xf]
  %v652 = vld [vmem:[%s1 + $0x618] sm:$0xf]
  %v653 = vld [vmem:[%s1 + $0x61c] sm:$0xf]
  %v654 = vld [vmem:[%s1 + $0x620] sm:$0xf]
  %v655 = vld [vmem:[%s1 + $0x624] sm:$0xf]
  %v656 = vld [vmem:[%s1 + $0x628] sm:$0xf]
  %v657 = vld [vmem:[%s1 + $0x62c] sm:$0xf]
  %v658 = vld [vmem:[%s1 + $0x630] sm:$0xf]
  %v659 = vld [vmem:[%s1 + $0x634] sm:$0xf]
  %v660 = vld [vmem:[%s1 + $0x638] sm:$0xf]
  %v661 = vld [vmem:[%s1 + $0x63c] sm:$0xf]
  %v870 = vunpack.c.l.b16 %v54
  %v871 = vunpack.c.h.b16 %v54
  %v872 = vunpack.c.l.b16 %v55
  %v873 = vunpack.c.h.b16 %v55
  %v874 = vunpack.c.l.b16 %v56
  %v875 = vunpack.c.h.b16 %v56
  %v876 = vunpack.c.l.b16 %v57
  %v877 = vunpack.c.h.b16 %v57
  %v878 = vunpack.c.l.b16 %v58
  %v879 = vunpack.c.h.b16 %v58
  %v880 = vunpack.c.l.b16 %v59
  %v881 = vunpack.c.h.b16 %v59
  %v882 = vunpack.c.l.b16 %v60
  %v883 = vunpack.c.h.b16 %v60
  %v884 = vunpack.c.l.b16 %v61
  %v885 = vunpack.c.h.b16 %v61
  %v886 = vunpack.c.l.b16 %v62
  %v887 = vunpack.c.h.b16 %v62
  %v888 = vunpack.c.l.b16 %v63
  %v889 = vunpack.c.h.b16 %v63
  %v890 = vunpack.c.l.b16 %v64
  %v891 = vunpack.c.h.b16 %v64
  %v892 = vunpack.c.l.b16 %v65
  %v893 = vunpack.c.h.b16 %v65
  %v894 = vunpack.c.l.b16 %v66
  %v895 = vunpack.c.l.b16 %v67
  %v896 = vunpack.c.h.b16 %v67
  %v897 = vunpack.c.l.b16 %v68
  %v898 = vunpack.c.h.b16 %v68
  %v899 = vunpack.c.l.b16 %v69
  %v900 = vunpack.c.h.b16 %v69
  %v901 = vunpack.c.l.b16 %v70
  %v902 = vunpack.c.h.b16 %v70
  %v903 = vunpack.c.l.b16 %v71
  %v904 = vunpack.c.h.b16 %v71
  %v905 = vunpack.c.l.b16 %v72
  %v906 = vunpack.c.h.b16 %v72
  %v907 = vunpack.c.l.b16 %v73
  %v908 = vunpack.c.h.b16 %v73
  %v909 = vunpack.c.l.b16 %v74
  %v910 = vunpack.c.h.b16 %v74
  %v911 = vunpack.c.l.b16 %v75
  %v912 = vunpack.c.h.b16 %v75
  %v913 = vunpack.c.l.b16 %v76
  %v914 = vunpack.c.h.b16 %v76
  %v915 = vunpack.c.l.b16 %v77
  %v916 = vunpack.c.h.b16 %v77
  %v917 = vunpack.c.l.b16 %v78
  %v918 = vunpack.c.h.b16 %v78
  %v919 = vunpack.c.l.b16 %v79
  %v920 = vunpack.c.l.b16 %v80
  %v921 = vunpack.c.h.b16 %v80
  %v922 = vunpack.c.l.b16 %v81
  %v923 = vunpack.c.h.b16 %v81
  %v924 = vunpack.c.l.b16 %v82
  %v925 = vunpack.c.h.b16 %v82
  %v926 = vunpack.c.l.b16 %v83
  %v927 = vunpack.c.h.b16 %v83
  %v928 = vunpack.c.l.b16 %v84
  %v929 = vunpack.c.h.b16 %v84
  %v930 = vunpack.c.l.b16 %v85
  %v931 = vunpack.c.h.b16 %v85
  %v932 = vunpack.c.l.b16 %v86
  %v933 = vunpack.c.h.b16 %v86
  %v934 = vunpack.c.l.b16 %v87
  %v935 = vunpack.c.h.b16 %v87
  %v936 = vunpack.c.l.b16 %v88
  %v937 = vunpack.c.h.b16 %v88
  %v938 = vunpack.c.l.b16 %v89
  %v939 = vunpack.c.h.b16 %v89
  %v940 = vunpack.c.l.b16 %v90
  %v941 = vunpack.c.h.b16 %v90
  %v942 = vunpack.c.l.b16 %v91
  %v943 = vunpack.c.h.b16 %v91
  %v944 = vunpack.c.l.b16 %v92
  %v945 = vunpack.c.l.b16 %v93
  %v946 = vunpack.c.h.b16 %v93
  %v947 = vunpack.c.l.b16 %v94
  %v948 = vunpack.c.h.b16 %v94
  %v949 = vunpack.c.l.b16 %v95
  %v950 = vunpack.c.h.b16 %v95
  %v951 = vunpack.c.l.b16 %v96
  %v952 = vunpack.c.h.b16 %v96
  %v953 = vunpack.c.l.b16 %v97
  %v954 = vunpack.c.h.b16 %v97
  %v955 = vunpack.c.l.b16 %v98
  %v956 = vunpack.c.h.b16 %v98
  %v957 = vunpack.c.l.b16 %v99
  %v958 = vunpack.c.h.b16 %v99
  %v959 = vunpack.c.l.b16 %v100
  %v960 = vunpack.c.h.b16 %v100
  %v961 = vunpack.c.l.b16 %v101
  %v962 = vunpack.c.h.b16 %v101
  %v963 = vunpack.c.l.b16 %v102
  %v964 = vunpack.c.h.b16 %v102
  %v965 = vunpack.c.l.b16 %v103
  %v966 = vunpack.c.h.b16 %v103
  %v967 = vunpack.c.l.b16 %v104
  %v968 = vunpack.c.h.b16 %v104
  %v969 = vunpack.c.l.b16 %v105
  %v970 = vunpack.c.l.b16 %v106
  %v971 = vunpack.c.h.b16 %v106
  %v972 = vunpack.c.l.b16 %v107
  %v973 = vunpack.c.h.b16 %v107
  %v974 = vunpack.c.l.b16 %v108
  %v975 = vunpack.c.h.b16 %v108
  %v976 = vunpack.c.l.b16 %v109
  %v977 = vunpack.c.h.b16 %v109
  %v978 = vunpack.c.l.b16 %v110
  %v979 = vunpack.c.h.b16 %v110
  %v980 = vunpack.c.l.b16 %v111
  %v981 = vunpack.c.h.b16 %v111
  %v982 = vunpack.c.l.b16 %v112
  %v983 = vunpack.c.h.b16 %v112
  %v984 = vunpack.c.l.b16 %v113
  %v985 = vunpack.c.h.b16 %v113
  %v986 = vunpack.c.l.b16 %v114
  %v987 = vunpack.c.h.b16 %v114
  %v988 = vunpack.c.l.b16 %v115
  %v989 = vunpack.c.h.b16 %v115
  %v990 = vunpack.c.l.b16 %v116
  %v991 = vunpack.c.h.b16 %v116
  %v992 = vunpack.c.l.b16 %v117
  %v993 = vunpack.c.h.b16 %v117
  %v994 = vunpack.c.l.b16 %v118
  %v995 = vunpack.c.l.b16 %v119
  %v996 = vunpack.c.h.b16 %v119
  %v997 = vunpack.c.l.b16 %v120
  %v998 = vunpack.c.h.b16 %v120
  %v999 = vunpack.c.l.b16 %v121
  %v1000 = vunpack.c.h.b16 %v121
  %v1001 = vunpack.c.l.b16 %v122
  %v1002 = vunpack.c.h.b16 %v122
  %v1003 = vunpack.c.l.b16 %v123
  %v1004 = vunpack.c.h.b16 %v123
  %v1005 = vunpack.c.l.b16 %v124
  %v1006 = vunpack.c.h.b16 %v124
  %v1007 = vunpack.c.l.b16 %v125
  %v1008 = vunpack.c.h.b16 %v125
  %v1009 = vunpack.c.l.b16 %v126
  %v1010 = vunpack.c.h.b16 %v126
  %v1011 = vunpack.c.l.b16 %v127
  %v1012 = vunpack.c.h.b16 %v127
  %v1013 = vunpack.c.l.b16 %v128
  %v1014 = vunpack.c.h.b16 %v128
  %v1015 = vunpack.c.l.b16 %v129
  %v1016 = vunpack.c.h.b16 %v129
  %v1017 = vunpack.c.l.b16 %v130
  %v1018 = vunpack.c.h.b16 %v130
  %v1019 = vunpack.c.l.b16 %v131
  %v1020 = vunpack.c.l.b16 %v132
  %v1021 = vunpack.c.h.b16 %v132
  %v1022 = vunpack.c.l.b16 %v133
  %v1023 = vunpack.c.h.b16 %v133
  %v1024 = vunpack.c.l.b16 %v134
  %v1025 = vunpack.c.h.b16 %v134
  %v1026 = vunpack.c.l.b16 %v135
  %v1027 = vunpack.c.h.b16 %v135
  %v1028 = vunpack.c.l.b16 %v136
  %v1029 = vunpack.c.h.b16 %v136
  %v1030 = vunpack.c.l.b16 %v137
  %v1031 = vunpack.c.h.b16 %v137
  %v1032 = vunpack.c.l.b16 %v138
  %v1033 = vunpack.c.h.b16 %v138
  %v1034 = vunpack.c.l.b16 %v139
  %v1035 = vunpack.c.h.b16 %v139
  %v1036 = vunpack.c.l.b16 %v140
  %v1037 = vunpack.c.h.b16 %v140
  %v1038 = vunpack.c.l.b16 %v141
  %v1039 = vunpack.c.h.b16 %v141
  %v1040 = vunpack.c.l.b16 %v142
  %v1041 = vunpack.c.h.b16 %v142
  %v1042 = vunpack.c.l.b16 %v143
  %v1043 = vunpack.c.h.b16 %v143
  %v1044 = vunpack.c.l.b16 %v144
  %v1045 = vunpack.c.l.b16 %v145
  %v1046 = vunpack.c.h.b16 %v145
  %v1047 = vunpack.c.l.b16 %v146
  %v1048 = vunpack.c.h.b16 %v146
  %v1049 = vunpack.c.l.b16 %v147
  %v1050 = vunpack.c.h.b16 %v147
  %v1051 = vunpack.c.l.b16 %v148
  %v1052 = vunpack.c.h.b16 %v148
  %v1053 = vunpack.c.l.b16 %v149
  %v1054 = vunpack.c.h.b16 %v149
  %v1055 = vunpack.c.l.b16 %v150
  %v1056 = vunpack.c.h.b16 %v150
  %v1057 = vunpack.c.l.b16 %v151
  %v1058 = vunpack.c.h.b16 %v151
  %v1059 = vunpack.c.l.b16 %v152
  %v1060 = vunpack.c.h.b16 %v152
  %v1061 = vunpack.c.l.b16 %v153
  %v1062 = vunpack.c.h.b16 %v153
  %v1063 = vunpack.c.l.b16 %v154
  %v1064 = vunpack.c.h.b16 %v154
  %v1065 = vunpack.c.l.b16 %v155
  %v1066 = vunpack.c.h.b16 %v155
  %v1067 = vunpack.c.l.b16 %v156
  %v1068 = vunpack.c.h.b16 %v156
  %v1069 = vunpack.c.l.b16 %v157
  %v1070 = vunpack.c.l.b16 %v158
  %v1071 = vunpack.c.h.b16 %v158
  %v1072 = vunpack.c.l.b16 %v159
  %v1073 = vunpack.c.h.b16 %v159
  %v1074 = vunpack.c.l.b16 %v160
  %v1075 = vunpack.c.h.b16 %v160
  %v1076 = vunpack.c.l.b16 %v161
  %v1077 = vunpack.c.h.b16 %v161
  %v1078 = vunpack.c.l.b16 %v162
  %v1079 = vunpack.c.h.b16 %v162
  %v1080 = vunpack.c.l.b16 %v163
  %v1081 = vunpack.c.h.b16 %v163
  %v1082 = vunpack.c.l.b16 %v164
  %v1083 = vunpack.c.h.b16 %v164
  %v1084 = vunpack.c.l.b16 %v165
  %v1085 = vunpack.c.h.b16 %v165
  %v1086 = vunpack.c.l.b16 %v166
  %v1087 = vunpack.c.h.b16 %v166
  %v1088 = vunpack.c.l.b16 %v167
  %v1089 = vunpack.c.h.b16 %v167
  %v1090 = vunpack.c.l.b16 %v168
  %v1091 = vunpack.c.h.b16 %v168
  %v1092 = vunpack.c.l.b16 %v169
  %v1093 = vunpack.c.h.b16 %v169
  %v1094 = vunpack.c.l.b16 %v170
  %v1095 = vunpack.c.l.b16 %v171
  %v1096 = vunpack.c.h.b16 %v171
  %v1097 = vunpack.c.l.b16 %v172
  %v1098 = vunpack.c.h.b16 %v172
  %v1099 = vunpack.c.l.b16 %v173
  %v1100 = vunpack.c.h.b16 %v173
  %v1101 = vunpack.c.l.b16 %v174
  %v1102 = vunpack.c.h.b16 %v174
  %v1103 = vunpack.c.l.b16 %v175
  %v1104 = vunpack.c.h.b16 %v175
  %v1105 = vunpack.c.l.b16 %v176
  %v1106 = vunpack.c.h.b16 %v176
  %v1107 = vunpack.c.l.b16 %v177
  %v1108 = vunpack.c.h.b16 %v177
  %v1109 = vunpack.c.l.b16 %v178
  %v1110 = vunpack.c.h.b16 %v178
  %v1111 = vunpack.c.l.b16 %v179
  %v1112 = vunpack.c.h.b16 %v179
  %v1113 = vunpack.c.l.b16 %v180
  %v1114 = vunpack.c.h.b16 %v180
  %v1115 = vunpack.c.l.b16 %v181
  %v1116 = vunpack.c.h.b16 %v181
  %v1117 = vunpack.c.l.b16 %v182
  %v1118 = vunpack.c.h.b16 %v182
  %v1119 = vunpack.c.l.b16 %v183
  %v1120 = vunpack.c.l.b16 %v184
  %v1121 = vunpack.c.h.b16 %v184
  %v1122 = vunpack.c.l.b16 %v185
  %v1123 = vunpack.c.h.b16 %v185
  %v1124 = vunpack.c.l.b16 %v186
  %v1125 = vunpack.c.h.b16 %v186
  %v1126 = vunpack.c.l.b16 %v187
  %v1127 = vunpack.c.h.b16 %v187
  %v1128 = vunpack.c.l.b16 %v188
  %v1129 = vunpack.c.h.b16 %v188
  %v1130 = vunpack.c.l.b16 %v189
  %v1131 = vunpack.c.h.b16 %v189
  %v1132 = vunpack.c.l.b16 %v190
  %v1133 = vunpack.c.h.b16 %v190
  %v1134 = vunpack.c.l.b16 %v191
  %v1135 = vunpack.c.h.b16 %v191
  %v1136 = vunpack.c.l.b16 %v192
  %v1137 = vunpack.c.h.b16 %v192
  %v1138 = vunpack.c.l.b16 %v193
  %v1139 = vunpack.c.h.b16 %v193
  %v1140 = vunpack.c.l.b16 %v194
  %v1141 = vunpack.c.h.b16 %v194
  %v1142 = vunpack.c.l.b16 %v195
  %v1143 = vunpack.c.h.b16 %v195
  %v1144 = vunpack.c.l.b16 %v196
  %v1145 = vunpack.c.l.b16 %v197
  %v1146 = vunpack.c.h.b16 %v197
  %v1147 = vunpack.c.l.b16 %v198
  %v1148 = vunpack.c.h.b16 %v198
  %v1149 = vunpack.c.l.b16 %v199
  %v1150 = vunpack.c.h.b16 %v199
  %v1151 = vunpack.c.l.b16 %v200
  %v1152 = vunpack.c.h.b16 %v200
  %v1153 = vunpack.c.l.b16 %v201
  %v1154 = vunpack.c.h.b16 %v201
  %v1155 = vunpack.c.l.b16 %v202
  %v1156 = vunpack.c.h.b16 %v202
  %v1157 = vunpack.c.l.b16 %v203
  %v1158 = vunpack.c.h.b16 %v203
  %v1159 = vunpack.c.l.b16 %v204
  %v1160 = vunpack.c.h.b16 %v204
  %v1161 = vunpack.c.l.b16 %v205
  %v1162 = vunpack.c.h.b16 %v205
  %v1163 = vunpack.c.l.b16 %v206
  %v1164 = vunpack.c.h.b16 %v206
  %v1165 = vunpack.c.l.b16 %v207
  %v1166 = vunpack.c.h.b16 %v207
  %v1167 = vunpack.c.l.b16 %v208
  %v1168 = vunpack.c.h.b16 %v208
  %v1169 = vunpack.c.l.b16 %v209
  %v1170 = vunpack.c.l.b16 %v210
  %v1171 = vunpack.c.h.b16 %v210
  %v1172 = vunpack.c.l.b16 %v211
  %v1173 = vunpack.c.h.b16 %v211
  %v1174 = vunpack.c.l.b16 %v212
  %v1175 = vunpack.c.h.b16 %v212
  %v1176 = vunpack.c.l.b16 %v213
  %v1177 = vunpack.c.h.b16 %v213
  %v1178 = vunpack.c.l.b16 %v214
  %v1179 = vunpack.c.h.b16 %v214
  %v1180 = vunpack.c.l.b16 %v215
  %v1181 = vunpack.c.h.b16 %v215
  %v1182 = vunpack.c.l.b16 %v216
  %v1183 = vunpack.c.h.b16 %v216
  %v1184 = vunpack.c.l.b16 %v217
  %v1185 = vunpack.c.h.b16 %v217
  %v1186 = vunpack.c.l.b16 %v218
  %v1187 = vunpack.c.h.b16 %v218
  %v1188 = vunpack.c.l.b16 %v219
  %v1189 = vunpack.c.h.b16 %v219
  %v1190 = vunpack.c.l.b16 %v220
  %v1191 = vunpack.c.h.b16 %v220
  %v1192 = vunpack.c.l.b16 %v221
  %v1193 = vunpack.c.h.b16 %v221
  %v1194 = vunpack.c.l.b16 %v222
  %v1195 = vunpack.c.l.b16 %v223
  %v1196 = vunpack.c.h.b16 %v223
  %v1197 = vunpack.c.l.b16 %v224
  %v1198 = vunpack.c.h.b16 %v224
  %v1199 = vunpack.c.l.b16 %v225
  %v1200 = vunpack.c.h.b16 %v225
  %v1201 = vunpack.c.l.b16 %v226
  %v1202 = vunpack.c.h.b16 %v226
  %v1203 = vunpack.c.l.b16 %v227
  %v1204 = vunpack.c.h.b16 %v227
  %v1205 = vunpack.c.l.b16 %v228
  %v1206 = vunpack.c.h.b16 %v228
  %v1207 = vunpack.c.l.b16 %v229
  %v1208 = vunpack.c.h.b16 %v229
  %v1209 = vunpack.c.l.b16 %v230
  %v1210 = vunpack.c.h.b16 %v230
  %v1211 = vunpack.c.l.b16 %v231
  %v1212 = vunpack.c.h.b16 %v231
  %v1213 = vunpack.c.l.b16 %v232
  %v1214 = vunpack.c.h.b16 %v232
  %v1215 = vunpack.c.l.b16 %v233
  %v1216 = vunpack.c.h.b16 %v233
  %v1217 = vunpack.c.l.b16 %v234
  %v1218 = vunpack.c.h.b16 %v234
  %v1219 = vunpack.c.l.b16 %v235
  %v1220 = vunpack.c.l.b16 %v236
  %v1221 = vunpack.c.h.b16 %v236
  %v1222 = vunpack.c.l.b16 %v237
  %v1223 = vunpack.c.h.b16 %v237
  %v1224 = vunpack.c.l.b16 %v238
  %v1225 = vunpack.c.h.b16 %v238
  %v1226 = vunpack.c.l.b16 %v239
  %v1227 = vunpack.c.h.b16 %v239
  %v1228 = vunpack.c.l.b16 %v240
  %v1229 = vunpack.c.h.b16 %v240
  %v1230 = vunpack.c.l.b16 %v241
  %v1231 = vunpack.c.h.b16 %v241
  %v1232 = vunpack.c.l.b16 %v242
  %v1233 = vunpack.c.h.b16 %v242
  %v1234 = vunpack.c.l.b16 %v243
  %v1235 = vunpack.c.h.b16 %v243
  %v1236 = vunpack.c.l.b16 %v244
  %v1237 = vunpack.c.h.b16 %v244
  %v1238 = vunpack.c.l.b16 %v245
  %v1239 = vunpack.c.h.b16 %v245
  %v1240 = vunpack.c.l.b16 %v246
  %v1241 = vunpack.c.h.b16 %v246
  %v1242 = vunpack.c.l.b16 %v247
  %v1243 = vunpack.c.h.b16 %v247
  %v1244 = vunpack.c.l.b16 %v248
  %v1245 = vunpack.c.l.b16 %v249
  %v1246 = vunpack.c.h.b16 %v249
  %v1247 = vunpack.c.l.b16 %v250
  %v1248 = vunpack.c.h.b16 %v250
  %v1249 = vunpack.c.l.b16 %v251
  %v1250 = vunpack.c.h.b16 %v251
  %v1251 = vunpack.c.l.b16 %v252
  %v1252 = vunpack.c.h.b16 %v252
  %v1253 = vunpack.c.l.b16 %v253
  %v1254 = vunpack.c.h.b16 %v253
  %v1255 = vunpack.c.l.b16 %v254
  %v1256 = vunpack.c.h.b16 %v254
  %v1257 = vunpack.c.l.b16 %v255
  %v1258 = vunpack.c.h.b16 %v255
  %v1259 = vunpack.c.l.b16 %v256
  %v1260 = vunpack.c.h.b16 %v256
  %v1261 = vunpack.c.l.b16 %v257
  %v1262 = vunpack.c.h.b16 %v257
  %v1263 = vunpack.c.l.b16 %v258
  %v1264 = vunpack.c.h.b16 %v258
  %v1265 = vunpack.c.l.b16 %v259
  %v1266 = vunpack.c.h.b16 %v259
  %v1267 = vunpack.c.l.b16 %v260
  %v1268 = vunpack.c.h.b16 %v260
  %v1269 = vunpack.c.l.b16 %v261
  %v1270 = vpack.c.b16 %v895, %v870
  %v1271 = vpack.c.b16 %v896, %v871
  %v1272 = vpack.c.b16 %v897, %v872
  %v1273 = vpack.c.b16 %v898, %v873
  %v1274 = vpack.c.b16 %v899, %v874
  %v1275 = vpack.c.b16 %v900, %v875
  %v1276 = vpack.c.b16 %v901, %v876
  %v1277 = vpack.c.b16 %v902, %v877
  %v1278 = vpack.c.b16 %v903, %v878
  %v1279 = vpack.c.b16 %v904, %v879
  %v1280 = vpack.c.b16 %v905, %v880
  %v1281 = vpack.c.b16 %v906, %v881
  %v1282 = vpack.c.b16 %v907, %v882
  %v1283 = vpack.c.b16 %v908, %v883
  %v1284 = vpack.c.b16 %v909, %v884
  %v1285 = vpack.c.b16 %v910, %v885
  %v1286 = vpack.c.b16 %v911, %v886
  %v1287 = vpack.c.b16 %v912, %v887
  %v1288 = vpack.c.b16 %v913, %v888
  %v1289 = vpack.c.b16 %v914, %v889
  %v1290 = vpack.c.b16 %v915, %v890
  %v1291 = vpack.c.b16 %v916, %v891
  %v1292 = vpack.c.b16 %v917, %v892
  %v1293 = vpack.c.b16 %v918, %v893
  %v1294 = vpack.c.b16 %v919, %v894
  %v1295 = vpack.c.b16 %v945, %v920
  %v1296 = vpack.c.b16 %v946, %v921
  %v1297 = vpack.c.b16 %v947, %v922
  %v1298 = vpack.c.b16 %v948, %v923
  %v1299 = vpack.c.b16 %v949, %v924
  %v1300 = vpack.c.b16 %v950, %v925
  %v1301 = vpack.c.b16 %v951, %v926
  %v1302 = vpack.c.b16 %v952, %v927
  %v1303 = vpack.c.b16 %v953, %v928
  %v1304 = vpack.c.b16 %v954, %v929
  %v1305 = vpack.c.b16 %v955, %v930
  %v1306 = vpack.c.b16 %v956, %v931
  %v1307 = vpack.c.b16 %v957, %v932
  %v1308 = vpack.c.b16 %v958, %v933
  %v1309 = vpack.c.b16 %v959, %v934
  %v1310 = vpack.c.b16 %v960, %v935
  %v1311 = vpack.c.b16 %v961, %v936
  %v1312 = vpack.c.b16 %v962, %v937
  %v1313 = vpack.c.b16 %v963, %v938
  %v1314 = vpack.c.b16 %v964, %v939
  %v1315 = vpack.c.b16 %v965, %v940
  %v1316 = vpack.c.b16 %v966, %v941
  %v1317 = vpack.c.b16 %v967, %v942
  %v1318 = vpack.c.b16 %v968, %v943
  %v1319 = vpack.c.b16 %v969, %v944
  %v1320 = vpack.c.b16 %v995, %v970
  %v1321 = vpack.c.b16 %v996, %v971
  %v1322 = vpack.c.b16 %v997, %v972
  %v1323 = vpack.c.b16 %v998, %v973
  %v1324 = vpack.c.b16 %v999, %v974
  %v1325 = vpack.c.b16 %v1000, %v975
  %v1326 = vpack.c.b16 %v1001, %v976
  %v1327 = vpack.c.b16 %v1002, %v977
  %v1328 = vpack.c.b16 %v1003, %v978
  %v1329 = vpack.c.b16 %v1004, %v979
  %v1330 = vpack.c.b16 %v1005, %v980
  %v1331 = vpack.c.b16 %v1006, %v981
  %v1332 = vpack.c.b16 %v1007, %v982
  %v1333 = vpack.c.b16 %v1008, %v983
  %v1334 = vpack.c.b16 %v1009, %v984
  %v1335 = vpack.c.b16 %v1010, %v985
  %v1336 = vpack.c.b16 %v1011, %v986
  %v1337 = vpack.c.b16 %v1012, %v987
  %v1338 = vpack.c.b16 %v1013, %v988
  %v1339 = vpack.c.b16 %v1014, %v989
  %v1340 = vpack.c.b16 %v1015, %v990
  %v1341 = vpack.c.b16 %v1016, %v991
  %v1342 = vpack.c.b16 %v1017, %v992
  %v1343 = vpack.c.b16 %v1018, %v993
  %v1344 = vpack.c.b16 %v1019, %v994
  %v1345 = vpack.c.b16 %v1045, %v1020
  %v1346 = vpack.c.b16 %v1046, %v1021
  %v1347 = vpack.c.b16 %v1047, %v1022
  %v1348 = vpack.c.b16 %v1048, %v1023
  %v1349 = vpack.c.b16 %v1049, %v1024
  %v1350 = vpack.c.b16 %v1050, %v1025
  %v1351 = vpack.c.b16 %v1051, %v1026
  %v1352 = vpack.c.b16 %v1052, %v1027
  %v1353 = vpack.c.b16 %v1053, %v1028
  %v1354 = vpack.c.b16 %v1054, %v1029
  %v1355 = vpack.c.b16 %v1055, %v1030
  %v1356 = vpack.c.b16 %v1056, %v1031
  %v1357 = vpack.c.b16 %v1057, %v1032
  %v1358 = vpack.c.b16 %v1058, %v1033
  %v1359 = vpack.c.b16 %v1059, %v1034
  %v1360 = vpack.c.b16 %v1060, %v1035
  %v1361 = vpack.c.b16 %v1061, %v1036
  %v1362 = vpack.c.b16 %v1062, %v1037
  %v1363 = vpack.c.b16 %v1063, %v1038
  %v1364 = vpack.c.b16 %v1064, %v1039
  %v1365 = vpack.c.b16 %v1065, %v1040
  %v1366 = vpack.c.b16 %v1066, %v1041
  %v1367 = vpack.c.b16 %v1067, %v1042
  %v1368 = vpack.c.b16 %v1068, %v1043
  %v1369 = vpack.c.b16 %v1069, %v1044
  %v1370 = vpack.c.b16 %v1095, %v1070
  %v1371 = vpack.c.b16 %v1096, %v1071
  %v1372 = vpack.c.b16 %v1097, %v1072
  %v1373 = vpack.c.b16 %v1098, %v1073
  %v1374 = vpack.c.b16 %v1099, %v1074
  %v1375 = vpack.c.b16 %v1100, %v1075
  %v1376 = vpack.c.b16 %v1101, %v1076
  %v1377 = vpack.c.b16 %v1102, %v1077
  %v1378 = vpack.c.b16 %v1103, %v1078
  %v1379 = vpack.c.b16 %v1104, %v1079
  %v1380 = vpack.c.b16 %v1105, %v1080
  %v1381 = vpack.c.b16 %v1106, %v1081
  %v1382 = vpack.c.b16 %v1107, %v1082
  %v1383 = vpack.c.b16 %v1108, %v1083
  %v1384 = vpack.c.b16 %v1109, %v1084
  %v1385 = vpack.c.b16 %v1110, %v1085
  %v1386 = vpack.c.b16 %v1111, %v1086
  %v1387 = vpack.c.b16 %v1112, %v1087
  %v1388 = vpack.c.b16 %v1113, %v1088
  %v1389 = vpack.c.b16 %v1114, %v1089
  %v1390 = vpack.c.b16 %v1115, %v1090
  %v1391 = vpack.c.b16 %v1116, %v1091
  %v1392 = vpack.c.b16 %v1117, %v1092
  %v1393 = vpack.c.b16 %v1118, %v1093
  %v1394 = vpack.c.b16 %v1119, %v1094
  %v1395 = vpack.c.b16 %v1145, %v1120
  %v1396 = vpack.c.b16 %v1146, %v1121
  %v1397 = vpack.c.b16 %v1147, %v1122
  %v1398 = vpack.c.b16 %v1148, %v1123
  %v1399 = vpack.c.b16 %v1149, %v1124
  %v1400 = vpack.c.b16 %v1150, %v1125
  %v1401 = vpack.c.b16 %v1151, %v1126
  %v1402 = vpack.c.b16 %v1152, %v1127
  %v1403 = vpack.c.b16 %v1153, %v1128
  %v1404 = vpack.c.b16 %v1154, %v1129
  %v1405 = vpack.c.b16 %v1155, %v1130
  %v1406 = vpack.c.b16 %v1156, %v1131
  %v1407 = vpack.c.b16 %v1157, %v1132
  %v1408 = vpack.c.b16 %v1158, %v1133
  %v1409 = vpack.c.b16 %v1159, %v1134
  %v1410 = vpack.c.b16 %v1160, %v1135
  %v1411 = vpack.c.b16 %v1161, %v1136
  %v1412 = vpack.c.b16 %v1162, %v1137
  %v1413 = vpack.c.b16 %v1163, %v1138
  %v1414 = vpack.c.b16 %v1164, %v1139
  %v1415 = vpack.c.b16 %v1165, %v1140
  %v1416 = vpack.c.b16 %v1166, %v1141
  %v1417 = vpack.c.b16 %v1167, %v1142
  %v1418 = vpack.c.b16 %v1168, %v1143
  %v1419 = vpack.c.b16 %v1169, %v1144
  %v1420 = vpack.c.b16 %v1195, %v1170
  %v1421 = vpack.c.b16 %v1196, %v1171
  %v1422 = vpack.c.b16 %v1197, %v1172
  %v1423 = vpack.c.b16 %v1198, %v1173
  %v1424 = vpack.c.b16 %v1199, %v1174
  %v1425 = vpack.c.b16 %v1200, %v1175
  %v1426 = vpack.c.b16 %v1201, %v1176
  %v1427 = vpack.c.b16 %v1202, %v1177
  %v1428 = vpack.c.b16 %v1203, %v1178
  %v1429 = vpack.c.b16 %v1204, %v1179
  %v1430 = vpack.c.b16 %v1205, %v1180
  %v1431 = vpack.c.b16 %v1206, %v1181
  %v1432 = vpack.c.b16 %v1207, %v1182
  %v1433 = vpack.c.b16 %v1208, %v1183
  %v1434 = vpack.c.b16 %v1209, %v1184
  %v1435 = vpack.c.b16 %v1210, %v1185
  %v1436 = vpack.c.b16 %v1211, %v1186
  %v1437 = vpack.c.b16 %v1212, %v1187
  %v1438 = vpack.c.b16 %v1213, %v1188
  %v1439 = vpack.c.b16 %v1214, %v1189
  %v1440 = vpack.c.b16 %v1215, %v1190
  %v1441 = vpack.c.b16 %v1216, %v1191
  %v1442 = vpack.c.b16 %v1217, %v1192
  %v1443 = vpack.c.b16 %v1218, %v1193
  %v1444 = vpack.c.b16 %v1219, %v1194
  %v1445 = vpack.c.b16 %v1245, %v1220
  %v1446 = vpack.c.b16 %v1246, %v1221
  %v1447 = vpack.c.b16 %v1247, %v1222
  %v1448 = vpack.c.b16 %v1248, %v1223
  %v1449 = vpack.c.b16 %v1249, %v1224
  %v1450 = vpack.c.b16 %v1250, %v1225
  %v1451 = vpack.c.b16 %v1251, %v1226
  %v1452 = vpack.c.b16 %v1252, %v1227
  %v1453 = vpack.c.b16 %v1253, %v1228
  %v1454 = vpack.c.b16 %v1254, %v1229
  %v1455 = vpack.c.b16 %v1255, %v1230
  %v1456 = vpack.c.b16 %v1256, %v1231
  %v1457 = vpack.c.b16 %v1257, %v1232
  %v1458 = vpack.c.b16 %v1258, %v1233
  %v1459 = vpack.c.b16 %v1259, %v1234
  %v1460 = vpack.c.b16 %v1260, %v1235
  %v1461 = vpack.c.b16 %v1261, %v1236
  %v1462 = vpack.c.b16 %v1262, %v1237
  %v1463 = vpack.c.b16 %v1263, %v1238
  %v1464 = vpack.c.b16 %v1264, %v1239
  %v1465 = vpack.c.b16 %v1265, %v1240
  %v1466 = vpack.c.b16 %v1266, %v1241
  %v1467 = vpack.c.b16 %v1267, %v1242
  %v1468 = vpack.c.b16 %v1268, %v1243
  %v1469 = vpack.c.b16 %v1269, %v1244
  %v2070 = vunpack.c.l.b16 %v262
  %v2071 = vunpack.c.l.b16 %v263
  %v2072 = vunpack.c.l.b16 %v264
  %v2073 = vunpack.c.l.b16 %v265
  %v2074 = vunpack.c.l.b16 %v266
  %v2075 = vunpack.c.l.b16 %v267
  %v2076 = vunpack.c.l.b16 %v268
  %v2077 = vunpack.c.l.b16 %v269
  %v2078 = vunpack.c.l.b16 %v270
  %v2079 = vunpack.c.l.b16 %v271
  %v2080 = vunpack.c.l.b16 %v272
  %v2081 = vunpack.c.l.b16 %v273
  %v2082 = vunpack.c.l.b16 %v274
  %v2083 = vunpack.c.l.b16 %v275
  %v2084 = vunpack.c.l.b16 %v276
  %v2085 = vunpack.c.l.b16 %v277
  %v2086 = vunpack.c.l.b16 %v278
  %v2087 = vunpack.c.l.b16 %v279
  %v2088 = vunpack.c.l.b16 %v280
  %v2089 = vunpack.c.l.b16 %v281
  %v2090 = vunpack.c.l.b16 %v282
  %v2091 = vunpack.c.l.b16 %v283
  %v2092 = vunpack.c.l.b16 %v284
  %v2093 = vunpack.c.l.b16 %v285
  %v2094 = vunpack.c.l.b16 %v286
  %v2095 = vunpack.c.l.b16 %v287
  %v2096 = vunpack.c.l.b16 %v288
  %v2097 = vunpack.c.l.b16 %v289
  %v2098 = vunpack.c.l.b16 %v290
  %v2099 = vunpack.c.l.b16 %v291
  %v2100 = vunpack.c.l.b16 %v292
  %v2101 = vunpack.c.l.b16 %v293
  %v2102 = vunpack.c.l.b16 %v294
  %v2103 = vunpack.c.l.b16 %v295
  %v2104 = vunpack.c.l.b16 %v296
  %v2105 = vunpack.c.l.b16 %v297
  %v2106 = vunpack.c.l.b16 %v298
  %v2107 = vunpack.c.l.b16 %v299
  %v2108 = vunpack.c.l.b16 %v300
  %v2109 = vunpack.c.l.b16 %v301
  %v2110 = vunpack.c.l.b16 %v302
  %v2111 = vunpack.c.l.b16 %v303
  %v2112 = vunpack.c.l.b16 %v304
  %v2113 = vunpack.c.l.b16 %v305
  %v2114 = vunpack.c.l.b16 %v306
  %v2115 = vunpack.c.l.b16 %v307
  %v2116 = vunpack.c.l.b16 %v308
  %v2117 = vunpack.c.l.b16 %v309
  %v2118 = vunpack.c.l.b16 %v310
  %v2119 = vunpack.c.l.b16 %v311
  %v2120 = vunpack.c.l.b16 %v312
  %v2121 = vunpack.c.l.b16 %v313
  %v2122 = vunpack.c.l.b16 %v314
  %v2123 = vunpack.c.l.b16 %v315
  %v2124 = vunpack.c.l.b16 %v316
  %v2125 = vunpack.c.l.b16 %v317
  %v2126 = vunpack.c.l.b16 %v318
  %v2127 = vunpack.c.l.b16 %v319
  %v2128 = vunpack.c.l.b16 %v320
  %v2129 = vunpack.c.l.b16 %v321
  %v2130 = vunpack.c.l.b16 %v322
  %v2131 = vunpack.c.l.b16 %v323
  %v2132 = vunpack.c.l.b16 %v324
  %v2133 = vunpack.c.l.b16 %v325
  %v2134 = vunpack.c.l.b16 %v326
  %v2135 = vunpack.c.l.b16 %v327
  %v2136 = vunpack.c.l.b16 %v328
  %v2137 = vunpack.c.l.b16 %v329
  %v2138 = vunpack.c.l.b16 %v330
  %v2139 = vunpack.c.l.b16 %v331
  %v2140 = vunpack.c.l.b16 %v332
  %v2141 = vunpack.c.l.b16 %v333
  %v2142 = vunpack.c.l.b16 %v334
  %v2143 = vunpack.c.l.b16 %v335
  %v2144 = vunpack.c.l.b16 %v336
  %v2145 = vunpack.c.l.b16 %v337
  %v2146 = vunpack.c.l.b16 %v338
  %v2147 = vunpack.c.l.b16 %v339
  %v2148 = vunpack.c.l.b16 %v340
  %v2149 = vunpack.c.l.b16 %v341
  %v2150 = vunpack.c.l.b16 %v342
  %v2151 = vunpack.c.l.b16 %v343
  %v2152 = vunpack.c.l.b16 %v344
  %v2153 = vunpack.c.l.b16 %v345
  %v2154 = vunpack.c.l.b16 %v346
  %v2155 = vunpack.c.l.b16 %v347
  %v2156 = vunpack.c.l.b16 %v348
  %v2157 = vunpack.c.l.b16 %v349
  %v2158 = vunpack.c.l.b16 %v350
  %v2159 = vunpack.c.l.b16 %v351
  %v2160 = vunpack.c.l.b16 %v352
  %v2161 = vunpack.c.l.b16 %v353
  %v2162 = vunpack.c.l.b16 %v354
  %v2163 = vunpack.c.l.b16 %v355
  %v2164 = vunpack.c.l.b16 %v356
  %v2165 = vunpack.c.l.b16 %v357
  %v2166 = vunpack.c.l.b16 %v358
  %v2167 = vunpack.c.l.b16 %v359
  %v2168 = vunpack.c.l.b16 %v360
  %v2169 = vunpack.c.l.b16 %v361
  %v2170 = vunpack.c.l.b16 %v362
  %v2171 = vunpack.c.l.b16 %v363
  %v2172 = vunpack.c.l.b16 %v364
  %v2173 = vunpack.c.l.b16 %v365
  %v2174 = vunpack.c.l.b16 %v366
  %v2175 = vunpack.c.l.b16 %v367
  %v2176 = vunpack.c.l.b16 %v368
  %v2177 = vunpack.c.l.b16 %v369
  %v2178 = vunpack.c.l.b16 %v370
  %v2179 = vunpack.c.l.b16 %v371
  %v2180 = vunpack.c.l.b16 %v372
  %v2181 = vunpack.c.l.b16 %v373
  %v2182 = vunpack.c.l.b16 %v374
  %v2183 = vunpack.c.l.b16 %v375
  %v2184 = vunpack.c.l.b16 %v376
  %v2185 = vunpack.c.l.b16 %v377
  %v2186 = vunpack.c.l.b16 %v378
  %v2187 = vunpack.c.l.b16 %v379
  %v2188 = vunpack.c.l.b16 %v380
  %v2189 = vunpack.c.l.b16 %v381
  %v2190 = vunpack.c.l.b16 %v382
  %v2191 = vunpack.c.l.b16 %v383
  %v2192 = vunpack.c.l.b16 %v384
  %v2193 = vunpack.c.l.b16 %v385
  %v2194 = vunpack.c.l.b16 %v386
  %v2195 = vunpack.c.l.b16 %v387
  %v2196 = vunpack.c.l.b16 %v388
  %v2197 = vunpack.c.l.b16 %v389
  %v2198 = vunpack.c.l.b16 %v390
  %v2199 = vunpack.c.l.b16 %v391
  %v2200 = vunpack.c.l.b16 %v392
  %v2201 = vunpack.c.l.b16 %v393
  %v2202 = vunpack.c.l.b16 %v394
  %v2203 = vunpack.c.l.b16 %v395
  %v2204 = vunpack.c.l.b16 %v396
  %v2205 = vunpack.c.l.b16 %v397
  %v2206 = vunpack.c.l.b16 %v398
  %v2207 = vunpack.c.l.b16 %v399
  %v2208 = vunpack.c.l.b16 %v400
  %v2209 = vunpack.c.l.b16 %v401
  %v2210 = vunpack.c.l.b16 %v402
  %v2211 = vunpack.c.l.b16 %v403
  %v2212 = vunpack.c.l.b16 %v404
  %v2213 = vunpack.c.l.b16 %v405
  %v2214 = vunpack.c.l.b16 %v406
  %v2215 = vunpack.c.l.b16 %v407
  %v2216 = vunpack.c.l.b16 %v408
  %v2217 = vunpack.c.l.b16 %v409
  %v2218 = vunpack.c.l.b16 %v410
  %v2219 = vunpack.c.l.b16 %v411
  %v2220 = vunpack.c.l.b16 %v412
  %v2221 = vunpack.c.l.b16 %v413
  %v2222 = vunpack.c.l.b16 %v414
  %v2223 = vunpack.c.l.b16 %v415
  %v2224 = vunpack.c.l.b16 %v416
  %v2225 = vunpack.c.l.b16 %v417
  %v2226 = vunpack.c.l.b16 %v418
  %v2227 = vunpack.c.l.b16 %v419
  %v2228 = vunpack.c.l.b16 %v420
  %v2229 = vunpack.c.l.b16 %v421
  %v2230 = vunpack.c.l.b16 %v422
  %v2231 = vunpack.c.l.b16 %v423
  %v2232 = vunpack.c.l.b16 %v424
  %v2233 = vunpack.c.l.b16 %v425
  %v2234 = vunpack.c.l.b16 %v426
  %v2235 = vunpack.c.l.b16 %v427
  %v2236 = vunpack.c.l.b16 %v428
  %v2237 = vunpack.c.l.b16 %v429
  %v2238 = vunpack.c.l.b16 %v430
  %v2239 = vunpack.c.l.b16 %v431
  %v2240 = vunpack.c.l.b16 %v432
  %v2241 = vunpack.c.l.b16 %v433
  %v2242 = vunpack.c.l.b16 %v434
  %v2243 = vunpack.c.l.b16 %v435
  %v2244 = vunpack.c.l.b16 %v436
  %v2245 = vunpack.c.l.b16 %v437
  %v2246 = vunpack.c.l.b16 %v438
  %v2247 = vunpack.c.l.b16 %v439
  %v2248 = vunpack.c.l.b16 %v440
  %v2249 = vunpack.c.l.b16 %v441
  %v2250 = vunpack.c.l.b16 %v442
  %v2251 = vunpack.c.l.b16 %v443
  %v2252 = vunpack.c.l.b16 %v444
  %v2253 = vunpack.c.l.b16 %v445
  %v2254 = vunpack.c.l.b16 %v446
  %v2255 = vunpack.c.l.b16 %v447
  %v2256 = vunpack.c.l.b16 %v448
  %v2257 = vunpack.c.l.b16 %v449
  %v2258 = vunpack.c.l.b16 %v450
  %v2259 = vunpack.c.l.b16 %v451
  %v2260 = vunpack.c.l.b16 %v452
  %v2261 = vunpack.c.l.b16 %v453
  %v2262 = vunpack.c.l.b16 %v454
  %v2263 = vunpack.c.l.b16 %v455
  %v2264 = vunpack.c.l.b16 %v456
  %v2265 = vunpack.c.l.b16 %v457
  %v2266 = vunpack.c.l.b16 %v458
  %v2267 = vunpack.c.l.b16 %v459
  %v2268 = vunpack.c.l.b16 %v460
  %v2269 = vunpack.c.l.b16 %v461
  %v2270 = vunpack.c.l.b16 %v462
  %v2271 = vunpack.c.l.b16 %v463
  %v2272 = vunpack.c.l.b16 %v464
  %v2273 = vunpack.c.l.b16 %v465
  %v2274 = vunpack.c.l.b16 %v466
  %v2275 = vunpack.c.l.b16 %v467
  %v2276 = vunpack.c.l.b16 %v468
  %v2277 = vunpack.c.l.b16 %v469
  %v2278 = vunpack.c.l.b16 %v470
  %v2279 = vunpack.c.l.b16 %v471
  %v2280 = vunpack.c.l.b16 %v472
  %v2281 = vunpack.c.l.b16 %v473
  %v2282 = vunpack.c.l.b16 %v474
  %v2283 = vunpack.c.l.b16 %v475
  %v2284 = vunpack.c.l.b16 %v476
  %v2285 = vunpack.c.l.b16 %v477
  %v2286 = vunpack.c.l.b16 %v478
  %v2287 = vunpack.c.l.b16 %v479
  %v2288 = vunpack.c.l.b16 %v480
  %v2289 = vunpack.c.l.b16 %v481
  %v2290 = vunpack.c.l.b16 %v482
  %v2291 = vunpack.c.l.b16 %v483
  %v2292 = vunpack.c.l.b16 %v484
  %v2293 = vunpack.c.l.b16 %v485
  %v2294 = vunpack.c.l.b16 %v486
  %v2295 = vunpack.c.l.b16 %v487
  %v2296 = vunpack.c.l.b16 %v488
  %v2297 = vunpack.c.l.b16 %v489
  %v2298 = vunpack.c.l.b16 %v490
  %v2299 = vunpack.c.l.b16 %v491
  %v2300 = vunpack.c.l.b16 %v492
  %v2301 = vunpack.c.l.b16 %v493
  %v2302 = vunpack.c.l.b16 %v494
  %v2303 = vunpack.c.l.b16 %v495
  %v2304 = vunpack.c.l.b16 %v496
  %v2305 = vunpack.c.l.b16 %v497
  %v2306 = vunpack.c.l.b16 %v498
  %v2307 = vunpack.c.l.b16 %v499
  %v2308 = vunpack.c.l.b16 %v500
  %v2309 = vunpack.c.l.b16 %v501
  %v2310 = vunpack.c.l.b16 %v502
  %v2311 = vunpack.c.l.b16 %v503
  %v2312 = vunpack.c.l.b16 %v504
  %v2313 = vunpack.c.l.b16 %v505
  %v2314 = vunpack.c.l.b16 %v506
  %v2315 = vunpack.c.l.b16 %v507
  %v2316 = vunpack.c.l.b16 %v508
  %v2317 = vunpack.c.l.b16 %v509
  %v2318 = vunpack.c.l.b16 %v510
  %v2319 = vunpack.c.l.b16 %v511
  %v2320 = vunpack.c.l.b16 %v512
  %v2321 = vunpack.c.l.b16 %v513
  %v2322 = vunpack.c.l.b16 %v514
  %v2323 = vunpack.c.l.b16 %v515
  %v2324 = vunpack.c.l.b16 %v516
  %v2325 = vunpack.c.l.b16 %v517
  %v2326 = vunpack.c.l.b16 %v518
  %v2327 = vunpack.c.l.b16 %v519
  %v2328 = vunpack.c.l.b16 %v520
  %v2329 = vunpack.c.l.b16 %v521
  %v2330 = vunpack.c.l.b16 %v522
  %v2331 = vunpack.c.l.b16 %v523
  %v2332 = vunpack.c.l.b16 %v524
  %v2333 = vunpack.c.l.b16 %v525
  %v2334 = vunpack.c.l.b16 %v526
  %v2335 = vunpack.c.l.b16 %v527
  %v2336 = vunpack.c.l.b16 %v528
  %v2337 = vunpack.c.l.b16 %v529
  %v2338 = vunpack.c.l.b16 %v530
  %v2339 = vunpack.c.l.b16 %v531
  %v2340 = vunpack.c.l.b16 %v532
  %v2341 = vunpack.c.l.b16 %v533
  %v2342 = vunpack.c.l.b16 %v534
  %v2343 = vunpack.c.l.b16 %v535
  %v2344 = vunpack.c.l.b16 %v536
  %v2345 = vunpack.c.l.b16 %v537
  %v2346 = vunpack.c.l.b16 %v538
  %v2347 = vunpack.c.l.b16 %v539
  %v2348 = vunpack.c.l.b16 %v540
  %v2349 = vunpack.c.l.b16 %v541
  %v2350 = vunpack.c.l.b16 %v542
  %v2351 = vunpack.c.l.b16 %v543
  %v2352 = vunpack.c.l.b16 %v544
  %v2353 = vunpack.c.l.b16 %v545
  %v2354 = vunpack.c.l.b16 %v546
  %v2355 = vunpack.c.l.b16 %v547
  %v2356 = vunpack.c.l.b16 %v548
  %v2357 = vunpack.c.l.b16 %v549
  %v2358 = vunpack.c.l.b16 %v550
  %v2359 = vunpack.c.l.b16 %v551
  %v2360 = vunpack.c.l.b16 %v552
  %v2361 = vunpack.c.l.b16 %v553
  %v2362 = vunpack.c.l.b16 %v554
  %v2363 = vunpack.c.l.b16 %v555
  %v2364 = vunpack.c.l.b16 %v556
  %v2365 = vunpack.c.l.b16 %v557
  %v2366 = vunpack.c.l.b16 %v558
  %v2367 = vunpack.c.l.b16 %v559
  %v2368 = vunpack.c.l.b16 %v560
  %v2369 = vunpack.c.l.b16 %v561
  %v2370 = vunpack.c.l.b16 %v562
  %v2371 = vunpack.c.l.b16 %v563
  %v2372 = vunpack.c.l.b16 %v564
  %v2373 = vunpack.c.l.b16 %v565
  %v2374 = vunpack.c.l.b16 %v566
  %v2375 = vunpack.c.l.b16 %v567
  %v2376 = vunpack.c.l.b16 %v568
  %v2377 = vunpack.c.l.b16 %v569
  %v2378 = vunpack.c.l.b16 %v570
  %v2379 = vunpack.c.l.b16 %v571
  %v2380 = vunpack.c.l.b16 %v572
  %v2381 = vunpack.c.l.b16 %v573
  %v2382 = vunpack.c.l.b16 %v574
  %v2383 = vunpack.c.l.b16 %v575
  %v2384 = vunpack.c.l.b16 %v576
  %v2385 = vunpack.c.l.b16 %v577
  %v2386 = vunpack.c.l.b16 %v578
  %v2387 = vunpack.c.l.b16 %v579
  %v2388 = vunpack.c.l.b16 %v580
  %v2389 = vunpack.c.l.b16 %v581
  %v2390 = vunpack.c.l.b16 %v582
  %v2391 = vunpack.c.l.b16 %v583
  %v2392 = vunpack.c.l.b16 %v584
  %v2393 = vunpack.c.l.b16 %v585
  %v2394 = vunpack.c.l.b16 %v586
  %v2395 = vunpack.c.l.b16 %v587
  %v2396 = vunpack.c.l.b16 %v588
  %v2397 = vunpack.c.l.b16 %v589
  %v2398 = vunpack.c.l.b16 %v590
  %v2399 = vunpack.c.l.b16 %v591
  %v2400 = vunpack.c.l.b16 %v592
  %v2401 = vunpack.c.l.b16 %v593
  %v2402 = vunpack.c.l.b16 %v594
  %v2403 = vunpack.c.l.b16 %v595
  %v2404 = vunpack.c.l.b16 %v596
  %v2405 = vunpack.c.l.b16 %v597
  %v2406 = vunpack.c.l.b16 %v598
  %v2407 = vunpack.c.l.b16 %v599
  %v2408 = vunpack.c.l.b16 %v600
  %v2409 = vunpack.c.l.b16 %v601
  %v2410 = vunpack.c.l.b16 %v602
  %v2411 = vunpack.c.l.b16 %v603
  %v2412 = vunpack.c.l.b16 %v604
  %v2413 = vunpack.c.l.b16 %v605
  %v2414 = vunpack.c.l.b16 %v606
  %v2415 = vunpack.c.l.b16 %v607
  %v2416 = vunpack.c.l.b16 %v608
  %v2417 = vunpack.c.l.b16 %v609
  %v2418 = vunpack.c.l.b16 %v610
  %v2419 = vunpack.c.l.b16 %v611
  %v2420 = vunpack.c.l.b16 %v612
  %v2421 = vunpack.c.l.b16 %v613
  %v2422 = vunpack.c.l.b16 %v614
  %v2423 = vunpack.c.l.b16 %v615
  %v2424 = vunpack.c.l.b16 %v616
  %v2425 = vunpack.c.l.b16 %v617
  %v2426 = vunpack.c.l.b16 %v618
  %v2427 = vunpack.c.l.b16 %v619
  %v2428 = vunpack.c.l.b16 %v620
  %v2429 = vunpack.c.l.b16 %v621
  %v2430 = vunpack.c.l.b16 %v622
  %v2431 = vunpack.c.l.b16 %v623
  %v2432 = vunpack.c.l.b16 %v624
  %v2433 = vunpack.c.l.b16 %v625
  %v2434 = vunpack.c.l.b16 %v626
  %v2435 = vunpack.c.l.b16 %v627
  %v2436 = vunpack.c.l.b16 %v628
  %v2437 = vunpack.c.l.b16 %v629
  %v2438 = vunpack.c.l.b16 %v630
  %v2439 = vunpack.c.l.b16 %v631
  %v2440 = vunpack.c.l.b16 %v632
  %v2441 = vunpack.c.l.b16 %v633
  %v2442 = vunpack.c.l.b16 %v634
  %v2443 = vunpack.c.l.b16 %v635
  %v2444 = vunpack.c.l.b16 %v636
  %v2445 = vunpack.c.l.b16 %v637
  %v2446 = vunpack.c.l.b16 %v638
  %v2447 = vunpack.c.l.b16 %v639
  %v2448 = vunpack.c.l.b16 %v640
  %v2449 = vunpack.c.l.b16 %v641
  %v2450 = vunpack.c.l.b16 %v642
  %v2451 = vunpack.c.l.b16 %v643
  %v2452 = vunpack.c.l.b16 %v644
  %v2453 = vunpack.c.l.b16 %v645
  %v2454 = vunpack.c.l.b16 %v646
  %v2455 = vunpack.c.l.b16 %v647
  %v2456 = vunpack.c.l.b16 %v648
  %v2457 = vunpack.c.l.b16 %v649
  %v2458 = vunpack.c.l.b16 %v650
  %v2459 = vunpack.c.l.b16 %v651
  %v2460 = vunpack.c.l.b16 %v652
  %v2461 = vunpack.c.l.b16 %v653
  %v2462 = vunpack.c.l.b16 %v654
  %v2463 = vunpack.c.l.b16 %v655
  %v2464 = vunpack.c.l.b16 %v656
  %v2465 = vunpack.c.l.b16 %v657
  %v2466 = vunpack.c.l.b16 %v658
  %v2467 = vunpack.c.l.b16 %v659
  %v2468 = vunpack.c.l.b16 %v660
  %v2469 = vunpack.c.l.b16 %v661
  %v2470 = vpack.c.b16 %v2071, %v2070
  %v2471 = vpack.c.b16 %v2073, %v2072
  %v2472 = vpack.c.b16 %v2075, %v2074
  %v2473 = vpack.c.b16 %v2077, %v2076
  %v2474 = vpack.c.b16 %v2079, %v2078
  %v2475 = vpack.c.b16 %v2081, %v2080
  %v2476 = vpack.c.b16 %v2083, %v2082
  %v2477 = vpack.c.b16 %v2085, %v2084
  %v2478 = vpack.c.b16 %v2087, %v2086
  %v2479 = vpack.c.b16 %v2089, %v2088
  %v2480 = vpack.c.b16 %v2091, %v2090
  %v2481 = vpack.c.b16 %v2093, %v2092
  %v2482 = vpack.c.b16 %v2095, %v2094
  %v2483 = vpack.c.b16 %v2097, %v2096
  %v2484 = vpack.c.b16 %v2099, %v2098
  %v2485 = vpack.c.b16 %v2101, %v2100
  %v2486 = vpack.c.b16 %v2103, %v2102
  %v2487 = vpack.c.b16 %v2105, %v2104
  %v2488 = vpack.c.b16 %v2107, %v2106
  %v2489 = vpack.c.b16 %v2109, %v2108
  %v2490 = vpack.c.b16 %v2111, %v2110
  %v2491 = vpack.c.b16 %v2113, %v2112
  %v2492 = vpack.c.b16 %v2115, %v2114
  %v2493 = vpack.c.b16 %v2117, %v2116
  %v2494 = vpack.c.b16 %v2119, %v2118
  %v2495 = vpack.c.b16 %v2121, %v2120
  %v2496 = vpack.c.b16 %v2123, %v2122
  %v2497 = vpack.c.b16 %v2125, %v2124
  %v2498 = vpack.c.b16 %v2127, %v2126
  %v2499 = vpack.c.b16 %v2129, %v2128
  %v2500 = vpack.c.b16 %v2131, %v2130
  %v2501 = vpack.c.b16 %v2133, %v2132
  %v2502 = vpack.c.b16 %v2135, %v2134
  %v2503 = vpack.c.b16 %v2137, %v2136
  %v2504 = vpack.c.b16 %v2139, %v2138
  %v2505 = vpack.c.b16 %v2141, %v2140
  %v2506 = vpack.c.b16 %v2143, %v2142
  %v2507 = vpack.c.b16 %v2145, %v2144
  %v2508 = vpack.c.b16 %v2147, %v2146
  %v2509 = vpack.c.b16 %v2149, %v2148
  %v2510 = vpack.c.b16 %v2151, %v2150
  %v2511 = vpack.c.b16 %v2153, %v2152
  %v2512 = vpack.c.b16 %v2155, %v2154
  %v2513 = vpack.c.b16 %v2157, %v2156
  %v2514 = vpack.c.b16 %v2159, %v2158
  %v2515 = vpack.c.b16 %v2161, %v2160
  %v2516 = vpack.c.b16 %v2163, %v2162
  %v2517 = vpack.c.b16 %v2165, %v2164
  %v2518 = vpack.c.b16 %v2167, %v2166
  %v2519 = vpack.c.b16 %v2169, %v2168
  %v2520 = vpack.c.b16 %v2171, %v2170
  %v2521 = vpack.c.b16 %v2173, %v2172
  %v2522 = vpack.c.b16 %v2175, %v2174
  %v2523 = vpack.c.b16 %v2177, %v2176
  %v2524 = vpack.c.b16 %v2179, %v2178
  %v2525 = vpack.c.b16 %v2181, %v2180
  %v2526 = vpack.c.b16 %v2183, %v2182
  %v2527 = vpack.c.b16 %v2185, %v2184
  %v2528 = vpack.c.b16 %v2187, %v2186
  %v2529 = vpack.c.b16 %v2189, %v2188
  %v2530 = vpack.c.b16 %v2191, %v2190
  %v2531 = vpack.c.b16 %v2193, %v2192
  %v2532 = vpack.c.b16 %v2195, %v2194
  %v2533 = vpack.c.b16 %v2197, %v2196
  %v2534 = vpack.c.b16 %v2199, %v2198
  %v2535 = vpack.c.b16 %v2201, %v2200
  %v2536 = vpack.c.b16 %v2203, %v2202
  %v2537 = vpack.c.b16 %v2205, %v2204
  %v2538 = vpack.c.b16 %v2207, %v2206
  %v2539 = vpack.c.b16 %v2209, %v2208
  %v2540 = vpack.c.b16 %v2211, %v2210
  %v2541 = vpack.c.b16 %v2213, %v2212
  %v2542 = vpack.c.b16 %v2215, %v2214
  %v2543 = vpack.c.b16 %v2217, %v2216
  %v2544 = vpack.c.b16 %v2219, %v2218
  %v2545 = vpack.c.b16 %v2221, %v2220
  %v2546 = vpack.c.b16 %v2223, %v2222
  %v2547 = vpack.c.b16 %v2225, %v2224
  %v2548 = vpack.c.b16 %v2227, %v2226
  %v2549 = vpack.c.b16 %v2229, %v2228
  %v2550 = vpack.c.b16 %v2231, %v2230
  %v2551 = vpack.c.b16 %v2233, %v2232
  %v2552 = vpack.c.b16 %v2235, %v2234
  %v2553 = vpack.c.b16 %v2237, %v2236
  %v2554 = vpack.c.b16 %v2239, %v2238
  %v2555 = vpack.c.b16 %v2241, %v2240
  %v2556 = vpack.c.b16 %v2243, %v2242
  %v2557 = vpack.c.b16 %v2245, %v2244
  %v2558 = vpack.c.b16 %v2247, %v2246
  %v2559 = vpack.c.b16 %v2249, %v2248
  %v2560 = vpack.c.b16 %v2251, %v2250
  %v2561 = vpack.c.b16 %v2253, %v2252
  %v2562 = vpack.c.b16 %v2255, %v2254
  %v2563 = vpack.c.b16 %v2257, %v2256
  %v2564 = vpack.c.b16 %v2259, %v2258
  %v2565 = vpack.c.b16 %v2261, %v2260
  %v2566 = vpack.c.b16 %v2263, %v2262
  %v2567 = vpack.c.b16 %v2265, %v2264
  %v2568 = vpack.c.b16 %v2267, %v2266
  %v2569 = vpack.c.b16 %v2269, %v2268
  %v2570 = vpack.c.b16 %v2271, %v2270
  %v2571 = vpack.c.b16 %v2273, %v2272
  %v2572 = vpack.c.b16 %v2275, %v2274
  %v2573 = vpack.c.b16 %v2277, %v2276
  %v2574 = vpack.c.b16 %v2279, %v2278
  %v2575 = vpack.c.b16 %v2281, %v2280
  %v2576 = vpack.c.b16 %v2283, %v2282
  %v2577 = vpack.c.b16 %v2285, %v2284
  %v2578 = vpack.c.b16 %v2287, %v2286
  %v2579 = vpack.c.b16 %v2289, %v2288
  %v2580 = vpack.c.b16 %v2291, %v2290
  %v2581 = vpack.c.b16 %v2293, %v2292
  %v2582 = vpack.c.b16 %v2295, %v2294
  %v2583 = vpack.c.b16 %v2297, %v2296
  %v2584 = vpack.c.b16 %v2299, %v2298
  %v2585 = vpack.c.b16 %v2301, %v2300
  %v2586 = vpack.c.b16 %v2303, %v2302
  %v2587 = vpack.c.b16 %v2305, %v2304
  %v2588 = vpack.c.b16 %v2307, %v2306
  %v2589 = vpack.c.b16 %v2309, %v2308
  %v2590 = vpack.c.b16 %v2311, %v2310
  %v2591 = vpack.c.b16 %v2313, %v2312
  %v2592 = vpack.c.b16 %v2315, %v2314
  %v2593 = vpack.c.b16 %v2317, %v2316
  %v2594 = vpack.c.b16 %v2319, %v2318
  %v2595 = vpack.c.b16 %v2321, %v2320
  %v2596 = vpack.c.b16 %v2323, %v2322
  %v2597 = vpack.c.b16 %v2325, %v2324
  %v2598 = vpack.c.b16 %v2327, %v2326
  %v2599 = vpack.c.b16 %v2329, %v2328
  %v2600 = vpack.c.b16 %v2331, %v2330
  %v2601 = vpack.c.b16 %v2333, %v2332
  %v2602 = vpack.c.b16 %v2335, %v2334
  %v2603 = vpack.c.b16 %v2337, %v2336
  %v2604 = vpack.c.b16 %v2339, %v2338
  %v2605 = vpack.c.b16 %v2341, %v2340
  %v2606 = vpack.c.b16 %v2343, %v2342
  %v2607 = vpack.c.b16 %v2345, %v2344
  %v2608 = vpack.c.b16 %v2347, %v2346
  %v2609 = vpack.c.b16 %v2349, %v2348
  %v2610 = vpack.c.b16 %v2351, %v2350
  %v2611 = vpack.c.b16 %v2353, %v2352
  %v2612 = vpack.c.b16 %v2355, %v2354
  %v2613 = vpack.c.b16 %v2357, %v2356
  %v2614 = vpack.c.b16 %v2359, %v2358
  %v2615 = vpack.c.b16 %v2361, %v2360
  %v2616 = vpack.c.b16 %v2363, %v2362
  %v2617 = vpack.c.b16 %v2365, %v2364
  %v2618 = vpack.c.b16 %v2367, %v2366
  %v2619 = vpack.c.b16 %v2369, %v2368
  %v2620 = vpack.c.b16 %v2371, %v2370
  %v2621 = vpack.c.b16 %v2373, %v2372
  %v2622 = vpack.c.b16 %v2375, %v2374
  %v2623 = vpack.c.b16 %v2377, %v2376
  %v2624 = vpack.c.b16 %v2379, %v2378
  %v2625 = vpack.c.b16 %v2381, %v2380
  %v2626 = vpack.c.b16 %v2383, %v2382
  %v2627 = vpack.c.b16 %v2385, %v2384
  %v2628 = vpack.c.b16 %v2387, %v2386
  %v2629 = vpack.c.b16 %v2389, %v2388
  %v2630 = vpack.c.b16 %v2391, %v2390
  %v2631 = vpack.c.b16 %v2393, %v2392
  %v2632 = vpack.c.b16 %v2395, %v2394
  %v2633 = vpack.c.b16 %v2397, %v2396
  %v2634 = vpack.c.b16 %v2399, %v2398
  %v2635 = vpack.c.b16 %v2401, %v2400
  %v2636 = vpack.c.b16 %v2403, %v2402
  %v2637 = vpack.c.b16 %v2405, %v2404
  %v2638 = vpack.c.b16 %v2407, %v2406
  %v2639 = vpack.c.b16 %v2409, %v2408
  %v2640 = vpack.c.b16 %v2411, %v2410
  %v2641 = vpack.c.b16 %v2413, %v2412
  %v2642 = vpack.c.b16 %v2415, %v2414
  %v2643 = vpack.c.b16 %v2417, %v2416
  %v2644 = vpack.c.b16 %v2419, %v2418
  %v2645 = vpack.c.b16 %v2421, %v2420
  %v2646 = vpack.c.b16 %v2423, %v2422
  %v2647 = vpack.c.b16 %v2425, %v2424
  %v2648 = vpack.c.b16 %v2427, %v2426
  %v2649 = vpack.c.b16 %v2429, %v2428
  %v2650 = vpack.c.b16 %v2431, %v2430
  %v2651 = vpack.c.b16 %v2433, %v2432
  %v2652 = vpack.c.b16 %v2435, %v2434
  %v2653 = vpack.c.b16 %v2437, %v2436
  %v2654 = vpack.c.b16 %v2439, %v2438
  %v2655 = vpack.c.b16 %v2441, %v2440
  %v2656 = vpack.c.b16 %v2443, %v2442
  %v2657 = vpack.c.b16 %v2445, %v2444
  %v2658 = vpack.c.b16 %v2447, %v2446
  %v2659 = vpack.c.b16 %v2449, %v2448
  %v2660 = vpack.c.b16 %v2451, %v2450
  %v2661 = vpack.c.b16 %v2453, %v2452
  %v2662 = vpack.c.b16 %v2455, %v2454
  %v2663 = vpack.c.b16 %v2457, %v2456
  %v2664 = vpack.c.b16 %v2459, %v2458
  %v2665 = vpack.c.b16 %v2461, %v2460
  %v2666 = vpack.c.b16 %v2463, %v2462
  %v2667 = vpack.c.b16 %v2465, %v2464
  %v2668 = vpack.c.b16 %v2467, %v2466
  %v2669 = vpack.c.b16 %v2469, %v2468
  %2870 = vmatprep.subr.bf16.mxu0 0
  %2871 = vmatpush1.bf16.msra.mxu0 %v2470
  %2872 = vmatprep.subr.bf16.mxu0 0
  %2873 = vmatpush1.bf16.msra.mxu0 %v2471
  %2874 = vmatprep.subr.bf16.mxu0 0
  %2875 = vmatpush1.bf16.msra.mxu0 %v2472
  %2876 = vmatprep.subr.bf16.mxu0 0
  %2877 = vmatpush1.bf16.msra.mxu0 %v2473
  %2878 = vmatprep.subr.bf16.mxu0 0
  %2879 = vmatpush1.bf16.msra.mxu0 %v2474
  %2880 = vmatprep.subr.bf16.mxu0 0
  %2881 = vmatpush1.bf16.msra.mxu0 %v2475
  %2882 = vmatprep.subr.bf16.mxu0 0
  %2883 = vmatpush1.bf16.msra.mxu0 %v2476
  %2884 = vmatprep.subr.bf16.mxu0 0
  %2885 = vmatpush1.bf16.msra.mxu0 %v2477
  %2886 = vmatprep.subr.bf16.mxu0 0
  %2887 = vmatpush1.bf16.msra.mxu0 %v2478
  %2888 = vmatprep.subr.bf16.mxu0 0
  %2889 = vmatpush1.bf16.msra.mxu0 %v2479
  %2890 = vmatprep.subr.bf16.mxu0 0
  %2891 = vmatpush1.bf16.msra.mxu0 %v2480
  %2892 = vmatprep.subr.bf16.mxu0 0
  %2893 = vmatpush1.bf16.msra.mxu0 %v2481
  %2894 = vmatprep.subr.bf16.mxu0 0
  %2895 = vmatpush1.bf16.msra.mxu0 %v2482
  %2896 = vmatprep.subr.bf16.mxu0 0
  %2897 = vmatpush1.bf16.msra.mxu0 %v2483
  %2898 = vmatprep.subr.bf16.mxu0 0
  %2899 = vmatpush1.bf16.msra.mxu0 %v2484
  %2900 = vmatprep.subr.bf16.mxu0 0
  %2901 = vmatpush1.bf16.msra.mxu0 %v2485
  %2902 = vmatprep.mubr.bf16.mxu0 %v1271
  %2903 = vmatmul.mubr.bf16.gmra.mrb[0].mxu0 %v1270
  %v2904 = vpop.f32.mrb[0].mxu0
  %v2905 = vadd.f32 0.0, %v2904
  %v2906 = vpop.f32.mrb[0].mxu0
  %v2907 = vpop.f32.mrb[0].mxu0
  %v2908 = vadd.f32 0.0, %v2907
  %v2909 = vpop.f32.mrb[0].mxu0
  %2910 = vmatprep.mubr.bf16.mxu0 %v1296
  %2911 = vmatmul.mubr.bf16.gmra.mrb[0].mxu0 %v1295
  %v2912 = vpop.f32.mrb[0].mxu0
  %v2913 = vadd.f32 0.0, %v2912
  %v2914 = vpop.f32.mrb[0].mxu0
  %v2915 = vpop.f32.mrb[0].mxu0
  %v2916 = vadd.f32 0.0, %v2915
  %v2917 = vpop.f32.mrb[0].mxu0
  %2918 = vmatprep.mubr.bf16.mxu0 %v1321
  %2919 = vmatmul.mubr.bf16.gmra.mrb[0].mxu0 %v1320
  %v2920 = vpop.f32.mrb[0].mxu0
  %v2921 = vadd.f32 0.0, %v2920
  %v2922 = vpop.f32.mrb[0].mxu0
  %v2923 = vpop.f32.mrb[0].mxu0
  %v2924 = vadd.f32 0.0, %v2923
  %v2925 = vpop.f32.mrb[0].mxu0
  %2926 = vmatprep.mubr.bf16.mxu0 %v1346
  %2927 = vmatmul.mubr.bf16.gmra.mrb[0].mxu0 %v1345
  %v2928 = vpop.f32.mrb[0].mxu0
  %v2929 = vadd.f32 0.0, %v2928
  %v2930 = vpop.f32.mrb[0].mxu0
  %v2931 = vpop.f32.mrb[0].mxu0
  %v2932 = vadd.f32 0.0, %v2931
  %v2933 = vpop.f32.mrb[0].mxu0
  %2934 = vmatprep.mubr.bf16.mxu0 %v1371
  %2935 = vmatmul.mubr.bf16.gmra.mrb[0].mxu0 %v1370
  %v2936 = vpop.f32.mrb[0].mxu0
  %v2937 = vadd.f32 0.0, %v2936
  %v2938 = vpop.f32.mrb[0].mxu0
  %v2939 = vpop.f32.mrb[0].mxu0
  %v2940 = vadd.f32 0.0, %v2939
  %v2941 = vpop.f32.mrb[0].mxu0
  %2942 = vmatprep.mubr.bf16.mxu0 %v1396
  %2943 = vmatmul.mubr.bf16.gmra.mrb[0].mxu0 %v1395
  %v2944 = vpop.f32.mrb[0].mxu0
  %v2945 = vadd.f32 0.0, %v2944
  %v2946 = vpop.f32.mrb[0].mxu0
  %v2947 = vpop.f32.mrb[0].mxu0
  %v2948 = vadd.f32 0.0, %v2947
  %v2949 = vpop.f32.mrb[0].mxu0
  %2950 = vmatprep.mubr.bf16.mxu0 %v1421
  %2951 = vmatmul.mubr.bf16.gmra.mrb[0].mxu0 %v1420
  %v2952 = vpop.f32.mrb[0].mxu0
  %v2953 = vadd.f32 0.0, %v2952
  %v2954 = vpop.f32.mrb[0].mxu0
  %v2955 = vpop.f32.mrb[0].mxu0
  %v2956 = vadd.f32 0.0, %v2955
  %v2957 = vpop.f32.mrb[0].mxu0
  %2958 = vmatprep.mubr.bf16.mxu0 %v1446
  %2959 = vmatmul.mubr.bf16.gmra.mrb[0].mxu0 %v1445
  %v2960 = vpop.f32.mrb[0].mxu0
  %v2961 = vadd.f32 0.0, %v2960
  %v2962 = vpop.f32.mrb[0].mxu0
  %v2963 = vpop.f32.mrb[0].mxu0
  %v2964 = vadd.f32 0.0, %v2963
  %v2965 = vpop.f32.mrb[0].mxu0
  %2966 = vdwg.mxu0
  %2967 = vmatprep.subr.bf16.mxu0 0
  %2968 = vmatpush1.bf16.msra.mxu0 %v2486
  %2969 = vmatprep.subr.bf16.mxu0 0
  %2970 = vmatpush1.bf16.msra.mxu0 %v2487
  %2971 = vmatprep.subr.bf16.mxu0 0
  %2972 = vmatpush1.bf16.msra.mxu0 %v2488
  %2973 = vmatprep.subr.bf16.mxu0 0
  %2974 = vmatpush1.bf16.msra.mxu0 %v2489
  %2975 = vmatprep.subr.bf16.mxu0 0
  %2976 = vmatpush1.bf16.msra.mxu0 %v2490
  %2977 = vmatprep.subr.bf16.mxu0 0
  %2978 = vmatpush1.bf16.msra.mxu0 %v2491
  %2979 = vmatprep.subr.bf16.mxu0 0
  %2980 = vmatpush1.bf16.msra.mxu0 %v2492
  %2981 = vmatprep.subr.bf16.mxu0 0
  %2982 = vmatpush1.bf16.msra.mxu0 %v2493
  %2983 = vmatprep.subr.bf16.mxu0 0
  %2984 = vmatpush1.bf16.msra.mxu0 %v2494
  %2985 = vmatprep.subr.bf16.mxu0 0
  %2986 = vmatpush1.bf16.msra.mxu0 %v2495
  %2987 = vmatprep.subr.bf16.mxu0 0
  %2988 = vmatpush1.bf16.msra.mxu0 %v2496
  %2989 = vmatprep.subr.bf16.mxu0 0
  %2990 = vmatpush1.bf16.msra.mxu0 %v2497
  %2991 = vmatprep.subr.bf16.mxu0 0
  %2992 = vmatpush1.bf16.msra.mxu0 %v2498
  %2993 = vmatprep.subr.bf16.mxu0 0
  %2994 = vmatpush1.bf16.msra.mxu0 %v2499
  %2995 = vmatprep.subr.bf16.mxu0 0
  %2996 = vmatpush1.bf16.msra.mxu0 %v2500
  %2997 = vmatprep.subr.bf16.mxu0 0
  %2998 = vmatpush1.bf16.msra.mxu0 %v2501
  %2999 = vmatprep.mubr.bf16.mxu0 %v1273
  %3000 = vmatmul.mubr.bf16.gmra.mrb[0].mxu0 %v1272
  %v3001 = vpop.f32.mrb[0].mxu0
  %v3002 = vadd.f32 %v2905, %v3001
  %v3003 = vpop.f32.mrb[0].mxu0
  %v3004 = vpop.f32.mrb[0].mxu0
  %v3005 = vadd.f32 %v2908, %v3004
  %v3006 = vpop.f32.mrb[0].mxu0
  %3007 = vmatprep.mubr.bf16.mxu0 %v1298
  %3008 = vmatmul.mubr.bf16.gmra.mrb[0].mxu0 %v1297
  %v3009 = vpop.f32.mrb[0].mxu0
  %v3010 = vadd.f32 %v2913, %v3009
  %v3011 = vpop.f32.mrb[0].mxu0
  %v3012 = vpop.f32.mrb[0].mxu0
  %v3013 = vadd.f32 %v2916, %v3012
  %v3014 = vpop.f32.mrb[0].mxu0
  %3015 = vmatprep.mubr.bf16.mxu0 %v1323
  %3016 = vmatmul.mubr.bf16.gmra.mrb[0].mxu0 %v1322
  %v3017 = vpop.f32.mrb[0].mxu0
  %v3018 = vadd.f32 %v2921, %v3017
  %v3019 = vpop.f32.mrb[0].mxu0
  %v3020 = vpop.f32.mrb[0].mxu0
  %v3021 = vadd.f32 %v2924, %v3020
  %v3022 = vpop.f32.mrb[0].mxu0
  %3023 = vmatprep.mubr.bf16.mxu0 %v1348
  %3024 = vmatmul.mubr.bf16.gmra.mrb[0].mxu0 %v1347
  %v3025 = vpop.f32.mrb[0].mxu0
  %v3026 = vadd.f32 %v2929, %v3025
  %v3027 = vpop.f32.mrb[0].mxu0
  %v3028 = vpop.f32.mrb[0].mxu0
  %v3029 = vadd.f32 %v2932, %v3028
  %v3030 = vpop.f32.mrb[0].mxu0
  %3031 = vmatprep.mubr.bf16.mxu0 %v1373
  %3032 = vmatmul.mubr.bf16.gmra.mrb[0].mxu0 %v1372
  %v3033 = vpop.f32.mrb[0].mxu0
  %v3034 = vadd.f32 %v2937, %v3033
  %v3035 = vpop.f32.mrb[0].mxu0
  %v3036 = vpop.f32.mrb[0].mxu0
  %v3037 = vadd.f32 %v2940, %v3036
  %v3038 = vpop.f32.mrb[0].mxu0
  %3039 = vmatprep.mubr.bf16.mxu0 %v1398
  %3040 = vmatmul.mubr.bf16.gmra.mrb[0].mxu0 %v1397
  %v3041 = vpop.f32.mrb[0].mxu0
  %v3042 = vadd.f32 %v2945, %v3041
  %v3043 = vpop.f32.mrb[0].mxu0
  %v3044 = vpop.f32.mrb[0].mxu0
  %v3045 = vadd.f32 %v2948, %v3044
  %v3046 = vpop.f32.mrb[0].mxu0
  %3047 = vmatprep.mubr.bf16.mxu0 %v1423
  %3048 = vmatmul.mubr.bf16.gmra.mrb[0].mxu0 %v1422
  %v3049 = vpop.f32.mrb[0].mxu0
  %v3050 = vadd.f32 %v2953, %v3049
  %v3051 = vpop.f32.mrb[0].mxu0
  %v3052 = vpop.f32.mrb[0].mxu0
  %v3053 = vadd.f32 %v2956, %v3052
  %v3054 = vpop.f32.mrb[0].mxu0
  %3055 = vmatprep.mubr.bf16.mxu0 %v1448
  %3056 = vmatmul.mubr.bf16.gmra.mrb[0].mxu0 %v1447
  %v3057 = vpop.f32.mrb[0].mxu0
  %v3058 = vadd.f32 %v2961, %v3057
  %v3059 = vpop.f32.mrb[0].mxu0
  %v3060 = vpop.f32.mrb[0].mxu0
  %v3061 = vadd.f32 %v2964, %v3060
  %v3062 = vpop.f32.mrb[0].mxu0
  %3063 = vdwg.mxu0
  %3064 = vmatprep.subr.bf16.mxu0 0
  %3065 = vmatpush1.bf16.msra.mxu0 %v2502
  %3066 = vmatprep.subr.bf16.mxu0 0
  %3067 = vmatpush1.bf16.msra.mxu0 %v2503
  %3068 = vmatprep.subr.bf16.mxu0 0
  %3069 = vmatpush1.bf16.msra.mxu0 %v2504
  %3070 = vmatprep.subr.bf16.mxu0 0
  %3071 = vmatpush1.bf16.msra.mxu0 %v2505
  %3072 = vmatprep.subr.bf16.mxu0 0
  %3073 = vmatpush1.bf16.msra.mxu0 %v2506
  %3074 = vmatprep.subr.bf16.mxu0 0
  %3075 = vmatpush1.bf16.msra.mxu0 %v2507
  %3076 = vmatprep.subr.bf16.mxu0 0
  %3077 = vmatpush1.bf16.msra.mxu0 %v2508
  %3078 = vmatprep.subr.bf16.mxu0 0
  %3079 = vmatpush1.bf16.msra.mxu0 %v2509
  %3080 = vmatprep.subr.bf16.mxu0 0
  %3081 = vmatpush1.bf16.msra.mxu0 %v2510
  %3082 = vmatprep.subr.bf16.mxu0 0
  %3083 = vmatpush1.bf16.msra.mxu0 %v2511
  %3084 = vmatprep.subr.bf16.mxu0 0
  %3085 = vmatpush1.bf16.msra.mxu0 %v2512
  %3086 = vmatprep.subr.bf16.mxu0 0
  %3087 = vmatpush1.bf16.msra.mxu0 %v2513
  %3088 = vmatprep.subr.bf16.mxu0 0
  %3089 = vmatpush1.bf16.msra.mxu0 %v2514
  %3090 = vmatprep.subr.bf16.mxu0 0
  %3091 = vmatpush1.bf16.msra.mxu0 %v2515
  %3092 = vmatprep.subr.bf16.mxu0 0
  %3093 = vmatpush1.bf16.msra.mxu0 %v2516
  %3094 = vmatprep.subr.bf16.mxu0 0
  %3095 = vmatpush1.bf16.msra.mxu0 %v2517
  %3096 = vmatprep.mubr.bf16.mxu0 %v1275
  %3097 = vmatmul.mubr.bf16.gmra.mrb[0].mxu0 %v1274
  %v3098 = vpop.f32.mrb[0].mxu0
  %v3099 = vadd.f32 %v3002, %v3098
  %v3100 = vpop.f32.mrb[0].mxu0
  %v3101 = vpop.f32.mrb[0].mxu0
  %v3102 = vadd.f32 %v3005, %v3101
  %v3103 = vpop.f32.mrb[0].mxu0
  %3104 = vmatprep.mubr.bf16.mxu0 %v1300
  %3105 = vmatmul.mubr.bf16.gmra.mrb[0].mxu0 %v1299
  %v3106 = vpop.f32.mrb[0].mxu0
  %v3107 = vadd.f32 %v3010, %v3106
  %v3108 = vpop.f32.mrb[0].mxu0
  %v3109 = vpop.f32.mrb[0].mxu0
  %v3110 = vadd.f32 %v3013, %v3109
  %v3111 = vpop.f32.mrb[0].mxu0
  %3112 = vmatprep.mubr.bf16.mxu0 %v1325
  %3113 = vmatmul.mubr.bf16.gmra.mrb[0].mxu0 %v1324
  %v3114 = vpop.f32.mrb[0].mxu0
  %v3115 = vadd.f32 %v3018, %v3114
  %v3116 = vpop.f32.mrb[0].mxu0
  %v3117 = vpop.f32.mrb[0].mxu0
  %v3118 = vadd.f32 %v3021, %v3117
  %v3119 = vpop.f32.mrb[0].mxu0
  %3120 = vmatprep.mubr.bf16.mxu0 %v1350
  %3121 = vmatmul.mubr.bf16.gmra.mrb[0].mxu0 %v1349
  %v3122 = vpop.f32.mrb[0].mxu0
  %v3123 = vadd.f32 %v3026, %v3122
  %v3124 = vpop.f32.mrb[0].mxu0
  %v3125 = vpop.f32.mrb[0].mxu0
  %v3126 = vadd.f32 %v3029, %v3125
  %v3127 = vpop.f32.mrb[0].mxu0
  %3128 = vmatprep.mubr.bf16.mxu0 %v1375
  %3129 = vmatmul.mubr.bf16.gmra.mrb[0].mxu0 %v1374
  %v3130 = vpop.f32.mrb[0].mxu0
  %v3131 = vadd.f32 %v3034, %v3130
  %v3132 = vpop.f32.mrb[0].mxu0
  %v3133 = vpop.f32.mrb[0].mxu0
  %v3134 = vadd.f32 %v3037, %v3133
  %v3135 = vpop.f32.mrb[0].mxu0
  %3136 = vmatprep.mubr.bf16.mxu0 %v1400
  %3137 = vmatmul.mubr.bf16.gmra.mrb[0].mxu0 %v1399
  %v3138 = vpop.f32.mrb[0].mxu0
  %v3139 = vadd.f32 %v3042, %v3138
  %v3140 = vpop.f32.mrb[0].mxu0
  %v3141 = vpop.f32.mrb[0].mxu0
  %v3142 = vadd.f32 %v3045, %v3141
  %v3143 = vpop.f32.mrb[0].mxu0
  %3144 = vmatprep.mubr.bf16.mxu0 %v1425
  %3145 = vmatmul.mubr.bf16.gmra.mrb[0].mxu0 %v1424
  %v3146 = vpop.f32.mrb[0].mxu0
  %v3147 = vadd.f32 %v3050, %v3146
  %v3148 = vpop.f32.mrb[0].mxu0
  %v3149 = vpop.f32.mrb[0].mxu0
  %v3150 = vadd.f32 %v3053, %v3149
  %v3151 = vpop.f32.mrb[0].mxu0
  %3152 = vmatprep.mubr.bf16.mxu0 %v1450
  %3153 = vmatmul.mubr.bf16.gmra.mrb[0].mxu0 %v1449
  %v3154 = vpop.f32.mrb[0].mxu0
  %v3155 = vadd.f32 %v3058, %v3154
  %v3156 = vpop.f32.mrb[0].mxu0
  %v3157 = vpop.f32.mrb[0].mxu0
  %v3158 = vadd.f32 %v3061, %v3157
  %v3159 = vpop.f32.mrb[0].mxu0
  %3160 = vdwg.mxu0
  %3161 = vmatprep.subr.bf16.mxu0 0
  %3162 = vmatpush1.bf16.msra.mxu0 %v2518
  %3163 = vmatprep.subr.bf16.mxu0 0
  %3164 = vmatpush1.bf16.msra.mxu0 %v2519
  %3165 = vmatprep.subr.bf16.mxu0 0
  %3166 = vmatpush1.bf16.msra.mxu0 %v2520
  %3167 = vmatprep.subr.bf16.mxu0 0
  %3168 = vmatpush1.bf16.msra.mxu0 %v2521
  %3169 = vmatprep.subr.bf16.mxu0 0
  %3170 = vmatpush1.bf16.msra.mxu0 %v2522
  %3171 = vmatprep.subr.bf16.mxu0 0
  %3172 = vmatpush1.bf16.msra.mxu0 %v2523
  %3173 = vmatprep.subr.bf16.mxu0 0
  %3174 = vmatpush1.bf16.msra.mxu0 %v2524
  %3175 = vmatprep.subr.bf16.mxu0 0
  %3176 = vmatpush1.bf16.msra.mxu0 %v2525
  %3177 = vmatprep.subr.bf16.mxu0 0
  %3178 = vmatpush1.bf16.msra.mxu0 %v2526
  %3179 = vmatprep.subr.bf16.mxu0 0
  %3180 = vmatpush1.bf16.msra.mxu0 %v2527
  %3181 = vmatprep.subr.bf16.mxu0 0
  %3182 = vmatpush1.bf16.msra.mxu0 %v2528
  %3183 = vmatprep.subr.bf16.mxu0 0
  %3184 = vmatpush1.bf16.msra.mxu0 %v2529
  %3185 = vmatprep.subr.bf16.mxu0 0
  %3186 = vmatpush1.bf16.msra.mxu0 %v2530
  %3187 = vmatprep.subr.bf16.mxu0 0
  %3188 = vmatpush1.bf16.msra.mxu0 %v2531
  %3189 = vmatprep.subr.bf16.mxu0 0
  %3190 = vmatpush1.bf16.msra.mxu0 %v2532
  %3191 = vmatprep.subr.bf16.mxu0 0
  %3192 = vmatpush1.bf16.msra.mxu0 %v2533
  %3193 = vmatprep.mubr.bf16.mxu0 %v1277
  %3194 = vmatmul.mubr.bf16.gmra.mrb[0].mxu0 %v1276
  %v3195 = vpop.f32.mrb[0].mxu0
  %v3196 = vadd.f32 %v3099, %v3195
  %v3197 = vpop.f32.mrb[0].mxu0
  %v3198 = vpop.f32.mrb[0].mxu0
  %v3199 = vadd.f32 %v3102, %v3198
  %v3200 = vpop.f32.mrb[0].mxu0
  %3201 = vmatprep.mubr.bf16.mxu0 %v1302
  %3202 = vmatmul.mubr.bf16.gmra.mrb[0].mxu0 %v1301
  %v3203 = vpop.f32.mrb[0].mxu0
  %v3204 = vadd.f32 %v3107, %v3203
  %v3205 = vpop.f32.mrb[0].mxu0
  %v3206 = vpop.f32.mrb[0].mxu0
  %v3207 = vadd.f32 %v3110, %v3206
  %v3208 = vpop.f32.mrb[0].mxu0
  %3209 = vmatprep.mubr.bf16.mxu0 %v1327
  %3210 = vmatmul.mubr.bf16.gmra.mrb[0].mxu0 %v1326
  %v3211 = vpop.f32.mrb[0].mxu0
  %v3212 = vadd.f32 %v3115, %v3211
  %v3213 = vpop.f32.mrb[0].mxu0
  %v3214 = vpop.f32.mrb[0].mxu0
  %v3215 = vadd.f32 %v3118, %v3214
  %v3216 = vpop.f32.mrb[0].mxu0
  %3217 = vmatprep.mubr.bf16.mxu0 %v1352
  %3218 = vmatmul.mubr.bf16.gmra.mrb[0].mxu0 %v1351
  %v3219 = vpop.f32.mrb[0].mxu0
  %v3220 = vadd.f32 %v3123, %v3219
  %v3221 = vpop.f32.mrb[0].mxu0
  %v3222 = vpop.f32.mrb[0].mxu0
  %v3223 = vadd.f32 %v3126, %v3222
  %v3224 = vpop.f32.mrb[0].mxu0
  %3225 = vmatprep.mubr.bf16.mxu0 %v1377
  %3226 = vmatmul.mubr.bf16.gmra.mrb[0].mxu0 %v1376
  %v3227 = vpop.f32.mrb[0].mxu0
  %v3228 = vadd.f32 %v3131, %v3227
  %v3229 = vpop.f32.mrb[0].mxu0
  %v3230 = vpop.f32.mrb[0].mxu0
  %v3231 = vadd.f32 %v3134, %v3230
  %v3232 = vpop.f32.mrb[0].mxu0
  %3233 = vmatprep.mubr.bf16.mxu0 %v1402
  %3234 = vmatmul.mubr.bf16.gmra.mrb[0].mxu0 %v1401
  %v3235 = vpop.f32.mrb[0].mxu0
  %v3236 = vadd.f32 %v3139, %v3235
  %v3237 = vpop.f32.mrb[0].mxu0
  %v3238 = vpop.f32.mrb[0].mxu0
  %v3239 = vadd.f32 %v3142, %v3238
  %v3240 = vpop.f32.mrb[0].mxu0
  %3241 = vmatprep.mubr.bf16.mxu0 %v1427
  %3242 = vmatmul.mubr.bf16.gmra.mrb[0].mxu0 %v1426
  %v3243 = vpop.f32.mrb[0].mxu0
  %v3244 = vadd.f32 %v3147, %v3243
  %v3245 = vpop.f32.mrb[0].mxu0
  %v3246 = vpop.f32.mrb[0].mxu0
  %v3247 = vadd.f32 %v3150, %v3246
  %v3248 = vpop.f32.mrb[0].mxu0
  %3249 = vmatprep.mubr.bf16.mxu0 %v1452
  %3250 = vmatmul.mubr.bf16.gmra.mrb[0].mxu0 %v1451
  %v3251 = vpop.f32.mrb[0].mxu0
  %v3252 = vadd.f32 %v3155, %v3251
  %v3253 = vpop.f32.mrb[0].mxu0
  %v3254 = vpop.f32.mrb[0].mxu0
  %v3255 = vadd.f32 %v3158, %v3254
  %v3256 = vpop.f32.mrb[0].mxu0
  %3257 = vdwg.mxu0
  %3258 = vmatprep.subr.bf16.mxu0 0
  %3259 = vmatpush1.bf16.msra.mxu0 %v2534
  %3260 = vmatprep.subr.bf16.mxu0 0
  %3261 = vmatpush1.bf16.msra.mxu0 %v2535
  %3262 = vmatprep.subr.bf16.mxu0 0
  %3263 = vmatpush1.bf16.msra.mxu0 %v2536
  %3264 = vmatprep.subr.bf16.mxu0 0
  %3265 = vmatpush1.bf16.msra.mxu0 %v2537
  %3266 = vmatprep.subr.bf16.mxu0 0
  %3267 = vmatpush1.bf16.msra.mxu0 %v2538
  %3268 = vmatprep.subr.bf16.mxu0 0
  %3269 = vmatpush1.bf16.msra.mxu0 %v2539
  %3270 = vmatprep.subr.bf16.mxu0 0
  %3271 = vmatpush1.bf16.msra.mxu0 %v2540
  %3272 = vmatprep.subr.bf16.mxu0 0
  %3273 = vmatpush1.bf16.msra.mxu0 %v2541
  %3274 = vmatprep.subr.bf16.mxu0 0
  %3275 = vmatpush1.bf16.msra.mxu0 %v2542
  %3276 = vmatprep.subr.bf16.mxu0 0
  %3277 = vmatpush1.bf16.msra.mxu0 %v2543
  %3278 = vmatprep.subr.bf16.mxu0 0
  %3279 = vmatpush1.bf16.msra.mxu0 %v2544
  %3280 = vmatprep.subr.bf16.mxu0 0
  %3281 = vmatpush1.bf16.msra.mxu0 %v2545
  %3282 = vmatprep.subr.bf16.mxu0 0
  %3283 = vmatpush1.bf16.msra.mxu0 %v2546
  %3284 = vmatprep.subr.bf16.mxu0 0
  %3285 = vmatpush1.bf16.msra.mxu0 %v2547
  %3286 = vmatprep.subr.bf16.mxu0 0
  %3287 = vmatpush1.bf16.msra.mxu0 %v2548
  %3288 = vmatprep.subr.bf16.mxu0 0
  %3289 = vmatpush1.bf16.msra.mxu0 %v2549
  %3290 = vmatprep.mubr.bf16.mxu0 %v1279
  %3291 = vmatmul.mubr.bf16.gmra.mrb[0].mxu0 %v1278
  %v3292 = vpop.f32.mrb[0].mxu0
  %v3293 = vadd.f32 %v3196, %v3292
  %v3294 = vpop.f32.mrb[0].mxu0
  %v3295 = vpop.f32.mrb[0].mxu0
  %v3296 = vadd.f32 %v3199, %v3295
  %v3297 = vpop.f32.mrb[0].mxu0
  %3298 = vmatprep.mubr.bf16.mxu0 %v1304
  %3299 = vmatmul.mubr.bf16.gmra.mrb[0].mxu0 %v1303
  %v3300 = vpop.f32.mrb[0].mxu0
  %v3301 = vadd.f32 %v3204, %v3300
  %v3302 = vpop.f32.mrb[0].mxu0
  %v3303 = vpop.f32.mrb[0].mxu0
  %v3304 = vadd.f32 %v3207, %v3303
  %v3305 = vpop.f32.mrb[0].mxu0
  %3306 = vmatprep.mubr.bf16.mxu0 %v1329
  %3307 = vmatmul.mubr.bf16.gmra.mrb[0].mxu0 %v1328
  %v3308 = vpop.f32.mrb[0].mxu0
  %v3309 = vadd.f32 %v3212, %v3308
  %v3310 = vpop.f32.mrb[0].mxu0
  %v3311 = vpop.f32.mrb[0].mxu0
  %v3312 = vadd.f32 %v3215, %v3311
  %v3313 = vpop.f32.mrb[0].mxu0
  %3314 = vmatprep.mubr.bf16.mxu0 %v1354
  %3315 = vmatmul.mubr.bf16.gmra.mrb[0].mxu0 %v1353
  %v3316 = vpop.f32.mrb[0].mxu0
  %v3317 = vadd.f32 %v3220, %v3316
  %v3318 = vpop.f32.mrb[0].mxu0
  %v3319 = vpop.f32.mrb[0].mxu0
  %v3320 = vadd.f32 %v3223, %v3319
  %v3321 = vpop.f32.mrb[0].mxu0
  %3322 = vmatprep.mubr.bf16.mxu0 %v1379
  %3323 = vmatmul.mubr.bf16.gmra.mrb[0].mxu0 %v1378
  %v3324 = vpop.f32.mrb[0].mxu0
  %v3325 = vadd.f32 %v3228, %v3324
  %v3326 = vpop.f32.mrb[0].mxu0
  %v3327 = vpop.f32.mrb[0].mxu0
  %v3328 = vadd.f32 %v3231, %v3327
  %v3329 = vpop.f32.mrb[0].mxu0
  %3330 = vmatprep.mubr.bf16.mxu0 %v1404
  %3331 = vmatmul.mubr.bf16.gmra.mrb[0].mxu0 %v1403
  %v3332 = vpop.f32.mrb[0].mxu0
  %v3333 = vadd.f32 %v3236, %v3332
  %v3334 = vpop.f32.mrb[0].mxu0
  %v3335 = vpop.f32.mrb[0].mxu0
  %v3336 = vadd.f32 %v3239, %v3335
  %v3337 = vpop.f32.mrb[0].mxu0
  %3338 = vmatprep.mubr.bf16.mxu0 %v1429
  %3339 = vmatmul.mubr.bf16.gmra.mrb[0].mxu0 %v1428
  %v3340 = vpop.f32.mrb[0].mxu0
  %v3341 = vadd.f32 %v3244, %v3340
  %v3342 = vpop.f32.mrb[0].mxu0
  %v3343 = vpop.f32.mrb[0].mxu0
  %v3344 = vadd.f32 %v3247, %v3343
  %v3345 = vpop.f32.mrb[0].mxu0
  %3346 = vmatprep.mubr.bf16.mxu0 %v1454
  %3347 = vmatmul.mubr.bf16.gmra.mrb[0].mxu0 %v1453
  %v3348 = vpop.f32.mrb[0].mxu0
  %v3349 = vadd.f32 %v3252, %v3348
  %v3350 = vpop.f32.mrb[0].mxu0
  %v3351 = vpop.f32.mrb[0].mxu0
  %v3352 = vadd.f32 %v3255, %v3351
  %v3353 = vpop.f32.mrb[0].mxu0
  %3354 = vdwg.mxu0
  %3355 = vmatprep.subr.bf16.mxu0 0
  %3356 = vmatpush1.bf16.msra.mxu0 %v2550
  %3357 = vmatprep.subr.bf16.mxu0 0
  %3358 = vmatpush1.bf16.msra.mxu0 %v2551
  %3359 = vmatprep.subr.bf16.mxu0 0
  %3360 = vmatpush1.bf16.msra.mxu0 %v2552
  %3361 = vmatprep.subr.bf16.mxu0 0
  %3362 = vmatpush1.bf16.msra.mxu0 %v2553
  %3363 = vmatprep.subr.bf16.mxu0 0
  %3364 = vmatpush1.bf16.msra.mxu0 %v2554
  %3365 = vmatprep.subr.bf16.mxu0 0
  %3366 = vmatpush1.bf16.msra.mxu0 %v2555
  %3367 = vmatprep.subr.bf16.mxu0 0
  %3368 = vmatpush1.bf16.msra.mxu0 %v2556
  %3369 = vmatprep.subr.bf16.mxu0 0
  %3370 = vmatpush1.bf16.msra.mxu0 %v2557
  %3371 = vmatprep.subr.bf16.mxu0 0
  %3372 = vmatpush1.bf16.msra.mxu0 %v2558
  %3373 = vmatprep.subr.bf16.mxu0 0
  %3374 = vmatpush1.bf16.msra.mxu0 %v2559
  %3375 = vmatprep.subr.bf16.mxu0 0
  %3376 = vmatpush1.bf16.msra.mxu0 %v2560
  %3377 = vmatprep.subr.bf16.mxu0 0
  %3378 = vmatpush1.bf16.msra.mxu0 %v2561
  %3379 = vmatprep.subr.bf16.mxu0 0
  %3380 = vmatpush1.bf16.msra.mxu0 %v2562
  %3381 = vmatprep.subr.bf16.mxu0 0
  %3382 = vmatpush1.bf16.msra.mxu0 %v2563
  %3383 = vmatprep.subr.bf16.mxu0 0
  %3384 = vmatpush1.bf16.msra.mxu0 %v2564
  %3385 = vmatprep.subr.bf16.mxu0 0
  %3386 = vmatpush1.bf16.msra.mxu0 %v2565
  %3387 = vmatprep.mubr.bf16.mxu0 %v1281
  %3388 = vmatmul.mubr.bf16.gmra.mrb[0].mxu0 %v1280
  %v3389 = vpop.f32.mrb[0].mxu0
  %v3390 = vadd.f32 %v3293, %v3389
  %v3391 = vpop.f32.mrb[0].mxu0
  %v3392 = vpop.f32.mrb[0].mxu0
  %v3393 = vadd.f32 %v3296, %v3392
  %v3394 = vpop.f32.mrb[0].mxu0
  %3395 = vmatprep.mubr.bf16.mxu0 %v1306
  %3396 = vmatmul.mubr.bf16.gmra.mrb[0].mxu0 %v1305
  %v3397 = vpop.f32.mrb[0].mxu0
  %v3398 = vadd.f32 %v3301, %v3397
  %v3399 = vpop.f32.mrb[0].mxu0
  %v3400 = vpop.f32.mrb[0].mxu0
  %v3401 = vadd.f32 %v3304, %v3400
  %v3402 = vpop.f32.mrb[0].mxu0
  %3403 = vmatprep.mubr.bf16.mxu0 %v1331
  %3404 = vmatmul.mubr.bf16.gmra.mrb[0].mxu0 %v1330
  %v3405 = vpop.f32.mrb[0].mxu0
  %v3406 = vadd.f32 %v3309, %v3405
  %v3407 = vpop.f32.mrb[0].mxu0
  %v3408 = vpop.f32.mrb[0].mxu0
  %v3409 = vadd.f32 %v3312, %v3408
  %v3410 = vpop.f32.mrb[0].mxu0
  %3411 = vmatprep.mubr.bf16.mxu0 %v1356
  %3412 = vmatmul.mubr.bf16.gmra.mrb[0].mxu0 %v1355
  %v3413 = vpop.f32.mrb[0].mxu0
  %v3414 = vadd.f32 %v3317, %v3413
  %v3415 = vpop.f32.mrb[0].mxu0
  %v3416 = vpop.f32.mrb[0].mxu0
  %v3417 = vadd.f32 %v3320, %v3416
  %v3418 = vpop.f32.mrb[0].mxu0
  %3419 = vmatprep.mubr.bf16.mxu0 %v1381
  %3420 = vmatmul.mubr.bf16.gmra.mrb[0].mxu0 %v1380
  %v3421 = vpop.f32.mrb[0].mxu0
  %v3422 = vadd.f32 %v3325, %v3421
  %v3423 = vpop.f32.mrb[0].mxu0
  %v3424 = vpop.f32.mrb[0].mxu0
  %v3425 = vadd.f32 %v3328, %v3424
  %v3426 = vpop.f32.mrb[0].mxu0
  %3427 = vmatprep.mubr.bf16.mxu0 %v1406
  %3428 = vmatmul.mubr.bf16.gmra.mrb[0].mxu0 %v1405
  %v3429 = vpop.f32.mrb[0].mxu0
  %v3430 = vadd.f32 %v3333, %v3429
  %v3431 = vpop.f32.mrb[0].mxu0
  %v3432 = vpop.f32.mrb[0].mxu0
  %v3433 = vadd.f32 %v3336, %v3432
  %v3434 = vpop.f32.mrb[0].mxu0
  %3435 = vmatprep.mubr.bf16.mxu0 %v1431
  %3436 = vmatmul.mubr.bf16.gmra.mrb[0].mxu0 %v1430
  %v3437 = vpop.f32.mrb[0].mxu0
  %v3438 = vadd.f32 %v3341, %v3437
  %v3439 = vpop.f32.mrb[0].mxu0
  %v3440 = vpop.f32.mrb[0].mxu0
  %v3441 = vadd.f32 %v3344, %v3440
  %v3442 = vpop.f32.mrb[0].mxu0
  %3443 = vmatprep.mubr.bf16.mxu0 %v1456
  %3444 = vmatmul.mubr.bf16.gmra.mrb[0].mxu0 %v1455
  %v3445 = vpop.f32.mrb[0].mxu0
  %v3446 = vadd.f32 %v3349, %v3445
  %v3447 = vpop.f32.mrb[0].mxu0
  %v3448 = vpop.f32.mrb[0].mxu0
  %v3449 = vadd.f32 %v3352, %v3448
  %v3450 = vpop.f32.mrb[0].mxu0
  %3451 = vdwg.mxu0
  %3452 = vmatprep.subr.bf16.mxu0 0
  %3453 = vmatpush1.bf16.msra.mxu0 %v2566
  %3454 = vmatprep.subr.bf16.mxu0 0
  %3455 = vmatpush1.bf16.msra.mxu0 %v2567
  %3456 = vmatprep.subr.bf16.mxu0 0
  %3457 = vmatpush1.bf16.msra.mxu0 %v2568
  %3458 = vmatprep.subr.bf16.mxu0 0
  %3459 = vmatpush1.bf16.msra.mxu0 %v2569
  %3460 = vmatprep.subr.bf16.mxu0 0
  %3461 = vmatpush1.bf16.msra.mxu0 %v2570
  %3462 = vmatprep.subr.bf16.mxu0 0
  %3463 = vmatpush1.bf16.msra.mxu0 %v2571
  %3464 = vmatprep.subr.bf16.mxu0 0
  %3465 = vmatpush1.bf16.msra.mxu0 %v2572
  %3466 = vmatprep.subr.bf16.mxu0 0
  %3467 = vmatpush1.bf16.msra.mxu0 %v2573
  %3468 = vmatprep.subr.bf16.mxu0 0
  %3469 = vmatpush1.bf16.msra.mxu0 %v2574
  %3470 = vmatprep.subr.bf16.mxu0 0
  %3471 = vmatpush1.bf16.msra.mxu0 %v2575
  %3472 = vmatprep.subr.bf16.mxu0 0
  %3473 = vmatpush1.bf16.msra.mxu0 %v2576
  %3474 = vmatprep.subr.bf16.mxu0 0
  %3475 = vmatpush1.bf16.msra.mxu0 %v2577
  %3476 = vmatprep.subr.bf16.mxu0 0
  %3477 = vmatpush1.bf16.msra.mxu0 %v2578
  %3478 = vmatprep.subr.bf16.mxu0 0
  %3479 = vmatpush1.bf16.msra.mxu0 %v2579
  %3480 = vmatprep.subr.bf16.mxu0 0
  %3481 = vmatpush1.bf16.msra.mxu0 %v2580
  %3482 = vmatprep.subr.bf16.mxu0 0
  %3483 = vmatpush1.bf16.msra.mxu0 %v2581
  %3484 = vmatprep.mubr.bf16.mxu0 %v1283
  %3485 = vmatmul.mubr.bf16.gmra.mrb[0].mxu0 %v1282
  %v3486 = vpop.f32.mrb[0].mxu0
  %v3487 = vadd.f32 %v3390, %v3486
  %v3488 = vpop.f32.mrb[0].mxu0
  %v3489 = vpop.f32.mrb[0].mxu0
  %v3490 = vadd.f32 %v3393, %v3489
  %v3491 = vpop.f32.mrb[0].mxu0
  %3492 = vmatprep.mubr.bf16.mxu0 %v1308
  %3493 = vmatmul.mubr.bf16.gmra.mrb[0].mxu0 %v1307
  %v3494 = vpop.f32.mrb[0].mxu0
  %v3495 = vadd.f32 %v3398, %v3494
  %v3496 = vpop.f32.mrb[0].mxu0
  %v3497 = vpop.f32.mrb[0].mxu0
  %v3498 = vadd.f32 %v3401, %v3497
  %v3499 = vpop.f32.mrb[0].mxu0
  %3500 = vmatprep.mubr.bf16.mxu0 %v1333
  %3501 = vmatmul.mubr.bf16.gmra.mrb[0].mxu0 %v1332
  %v3502 = vpop.f32.mrb[0].mxu0
  %v3503 = vadd.f32 %v3406, %v3502
  %v3504 = vpop.f32.mrb[0].mxu0
  %v3505 = vpop.f32.mrb[0].mxu0
  %v3506 = vadd.f32 %v3409, %v3505
  %v3507 = vpop.f32.mrb[0].mxu0
  %3508 = vmatprep.mubr.bf16.mxu0 %v1358
  %3509 = vmatmul.mubr.bf16.gmra.mrb[0].mxu0 %v1357
  %v3510 = vpop.f32.mrb[0].mxu0
  %v3511 = vadd.f32 %v3414, %v3510
  %v3512 = vpop.f32.mrb[0].mxu0
  %v3513 = vpop.f32.mrb[0].mxu0
  %v3514 = vadd.f32 %v3417, %v3513
  %v3515 = vpop.f32.mrb[0].mxu0
  %3516 = vmatprep.mubr.bf16.mxu0 %v1383
  %3517 = vmatmul.mubr.bf16.gmra.mrb[0].mxu0 %v1382
  %v3518 = vpop.f32.mrb[0].mxu0
  %v3519 = vadd.f32 %v3422, %v3518
  %v3520 = vpop.f32.mrb[0].mxu0
  %v3521 = vpop.f32.mrb[0].mxu0
  %v3522 = vadd.f32 %v3425, %v3521
  %v3523 = vpop.f32.mrb[0].mxu0
  %3524 = vmatprep.mubr.bf16.mxu0 %v1408
  %3525 = vmatmul.mubr.bf16.gmra.mrb[0].mxu0 %v1407
  %v3526 = vpop.f32.mrb[0].mxu0
  %v3527 = vadd.f32 %v3430, %v3526
  %v3528 = vpop.f32.mrb[0].mxu0
  %v3529 = vpop.f32.mrb[0].mxu0
  %v3530 = vadd.f32 %v3433, %v3529
  %v3531 = vpop.f32.mrb[0].mxu0
  %3532 = vmatprep.mubr.bf16.mxu0 %v1433
  %3533 = vmatmul.mubr.bf16.gmra.mrb[0].mxu0 %v1432
  %v3534 = vpop.f32.mrb[0].mxu0
  %v3535 = vadd.f32 %v3438, %v3534
  %v3536 = vpop.f32.mrb[0].mxu0
  %v3537 = vpop.f32.mrb[0].mxu0
  %v3538 = vadd.f32 %v3441, %v3537
  %v3539 = vpop.f32.mrb[0].mxu0
  %3540 = vmatprep.mubr.bf16.mxu0 %v1458
  %3541 = vmatmul.mubr.bf16.gmra.mrb[0].mxu0 %v1457
  %v3542 = vpop.f32.mrb[0].mxu0
  %v3543 = vadd.f32 %v3446, %v3542
  %v3544 = vpop.f32.mrb[0].mxu0
  %v3545 = vpop.f32.mrb[0].mxu0
  %v3546 = vadd.f32 %v3449, %v3545
  %v3547 = vpop.f32.mrb[0].mxu0
  %3548 = vdwg.mxu0
  %3549 = vmatprep.subr.bf16.mxu0 0
  %3550 = vmatpush1.bf16.msra.mxu0 %v2582
  %3551 = vmatprep.subr.bf16.mxu0 0
  %3552 = vmatpush1.bf16.msra.mxu0 %v2583
  %3553 = vmatprep.subr.bf16.mxu0 0
  %3554 = vmatpush1.bf16.msra.mxu0 %v2584
  %3555 = vmatprep.subr.bf16.mxu0 0
  %3556 = vmatpush1.bf16.msra.mxu0 %v2585
  %3557 = vmatprep.subr.bf16.mxu0 0
  %3558 = vmatpush1.bf16.msra.mxu0 %v2586
  %3559 = vmatprep.subr.bf16.mxu0 0
  %3560 = vmatpush1.bf16.msra.mxu0 %v2587
  %3561 = vmatprep.subr.bf16.mxu0 0
  %3562 = vmatpush1.bf16.msra.mxu0 %v2588
  %3563 = vmatprep.subr.bf16.mxu0 0
  %3564 = vmatpush1.bf16.msra.mxu0 %v2589
  %3565 = vmatprep.subr.bf16.mxu0 0
  %3566 = vmatpush1.bf16.msra.mxu0 %v2590
  %3567 = vmatprep.subr.bf16.mxu0 0
  %3568 = vmatpush1.bf16.msra.mxu0 %v2591
  %3569 = vmatprep.subr.bf16.mxu0 0
  %3570 = vmatpush1.bf16.msra.mxu0 %v2592
  %3571 = vmatprep.subr.bf16.mxu0 0
  %3572 = vmatpush1.bf16.msra.mxu0 %v2593
  %3573 = vmatprep.subr.bf16.mxu0 0
  %3574 = vmatpush1.bf16.msra.mxu0 %v2594
  %3575 = vmatprep.subr.bf16.mxu0 0
  %3576 = vmatpush1.bf16.msra.mxu0 %v2595
  %3577 = vmatprep.subr.bf16.mxu0 0
  %3578 = vmatpush1.bf16.msra.mxu0 %v2596
  %3579 = vmatprep.subr.bf16.mxu0 0
  %3580 = vmatpush1.bf16.msra.mxu0 %v2597
  %3581 = vmatprep.mubr.bf16.mxu0 %v1285
  %3582 = vmatmul.mubr.bf16.gmra.mrb[0].mxu0 %v1284
  %v3583 = vpop.f32.mrb[0].mxu0
  %v3584 = vadd.f32 %v3487, %v3583
  %v3585 = vpop.f32.mrb[0].mxu0
  %v3586 = vpop.f32.mrb[0].mxu0
  %v3587 = vadd.f32 %v3490, %v3586
  %v3588 = vpop.f32.mrb[0].mxu0
  %3589 = vmatprep.mubr.bf16.mxu0 %v1310
  %3590 = vmatmul.mubr.bf16.gmra.mrb[0].mxu0 %v1309
  %v3591 = vpop.f32.mrb[0].mxu0
  %v3592 = vadd.f32 %v3495, %v3591
  %v3593 = vpop.f32.mrb[0].mxu0
  %v3594 = vpop.f32.mrb[0].mxu0
  %v3595 = vadd.f32 %v3498, %v3594
  %v3596 = vpop.f32.mrb[0].mxu0
  %3597 = vmatprep.mubr.bf16.mxu0 %v1335
  %3598 = vmatmul.mubr.bf16.gmra.mrb[0].mxu0 %v1334
  %v3599 = vpop.f32.mrb[0].mxu0
  %v3600 = vadd.f32 %v3503, %v3599
  %v3601 = vpop.f32.mrb[0].mxu0
  %v3602 = vpop.f32.mrb[0].mxu0
  %v3603 = vadd.f32 %v3506, %v3602
  %v3604 = vpop.f32.mrb[0].mxu0
  %3605 = vmatprep.mubr.bf16.mxu0 %v1360
  %3606 = vmatmul.mubr.bf16.gmra.mrb[0].mxu0 %v1359
  %v3607 = vpop.f32.mrb[0].mxu0
  %v3608 = vadd.f32 %v3511, %v3607
  %v3609 = vpop.f32.mrb[0].mxu0
  %v3610 = vpop.f32.mrb[0].mxu0
  %v3611 = vadd.f32 %v3514, %v3610
  %v3612 = vpop.f32.mrb[0].mxu0
  %3613 = vmatprep.mubr.bf16.mxu0 %v1385
  %3614 = vmatmul.mubr.bf16.gmra.mrb[0].mxu0 %v1384
  %v3615 = vpop.f32.mrb[0].mxu0
  %v3616 = vadd.f32 %v3519, %v3615
  %v3617 = vpop.f32.mrb[0].mxu0
  %v3618 = vpop.f32.mrb[0].mxu0
  %v3619 = vadd.f32 %v3522, %v3618
  %v3620 = vpop.f32.mrb[0].mxu0
  %3621 = vmatprep.mubr.bf16.mxu0 %v1410
  %3622 = vmatmul.mubr.bf16.gmra.mrb[0].mxu0 %v1409
  %v3623 = vpop.f32.mrb[0].mxu0
  %v3624 = vadd.f32 %v3527, %v3623
  %v3625 = vpop.f32.mrb[0].mxu0
  %v3626 = vpop.f32.mrb[0].mxu0
  %v3627 = vadd.f32 %v3530, %v3626
  %v3628 = vpop.f32.mrb[0].mxu0
  %3629 = vmatprep.mubr.bf16.mxu0 %v1435
  %3630 = vmatmul.mubr.bf16.gmra.mrb[0].mxu0 %v1434
  %v3631 = vpop.f32.mrb[0].mxu0
  %v3632 = vadd.f32 %v3535, %v3631
  %v3633 = vpop.f32.mrb[0].mxu0
  %v3634 = vpop.f32.mrb[0].mxu0
  %v3635 = vadd.f32 %v3538, %v3634
  %v3636 = vpop.f32.mrb[0].mxu0
  %3637 = vmatprep.mubr.bf16.mxu0 %v1460
  %3638 = vmatmul.mubr.bf16.gmra.mrb[0].mxu0 %v1459
  %v3639 = vpop.f32.mrb[0].mxu0
  %v3640 = vadd.f32 %v3543, %v3639
  %v3641 = vpop.f32.mrb[0].mxu0
  %v3642 = vpop.f32.mrb[0].mxu0
  %v3643 = vadd.f32 %v3546, %v3642
  %v3644 = vpop.f32.mrb[0].mxu0
  %3645 = vdwg.mxu0
  %3646 = vmatprep.subr.bf16.mxu0 0
  %3647 = vmatpush1.bf16.msra.mxu0 %v2598
  %3648 = vmatprep.subr.bf16.mxu0 0
  %3649 = vmatpush1.bf16.msra.mxu0 %v2599
  %3650 = vmatprep.subr.bf16.mxu0 0
  %3651 = vmatpush1.bf16.msra.mxu0 %v2600
  %3652 = vmatprep.subr.bf16.mxu0 0
  %3653 = vmatpush1.bf16.msra.mxu0 %v2601
  %3654 = vmatprep.subr.bf16.mxu0 0
  %3655 = vmatpush1.bf16.msra.mxu0 %v2602
  %3656 = vmatprep.subr.bf16.mxu0 0
  %3657 = vmatpush1.bf16.msra.mxu0 %v2603
  %3658 = vmatprep.subr.bf16.mxu0 0
  %3659 = vmatpush1.bf16.msra.mxu0 %v2604
  %3660 = vmatprep.subr.bf16.mxu0 0
  %3661 = vmatpush1.bf16.msra.mxu0 %v2605
  %3662 = vmatprep.subr.bf16.mxu0 0
  %3663 = vmatpush1.bf16.msra.mxu0 %v2606
  %3664 = vmatprep.subr.bf16.mxu0 0
  %3665 = vmatpush1.bf16.msra.mxu0 %v2607
  %3666 = vmatprep.subr.bf16.mxu0 0
  %3667 = vmatpush1.bf16.msra.mxu0 %v2608
  %3668 = vmatprep.subr.bf16.mxu0 0
  %3669 = vmatpush1.bf16.msra.mxu0 %v2609
  %3670 = vmatprep.subr.bf16.mxu0 0
  %3671 = vmatpush1.bf16.msra.mxu0 %v2610
  %3672 = vmatprep.subr.bf16.mxu0 0
  %3673 = vmatpush1.bf16.msra.mxu0 %v2611
  %3674 = vmatprep.subr.bf16.mxu0 0
  %3675 = vmatpush1.bf16.msra.mxu0 %v2612
  %3676 = vmatprep.subr.bf16.mxu0 0
  %3677 = vmatpush1.bf16.msra.mxu0 %v2613
  %3678 = vmatprep.mubr.bf16.mxu0 %v1287
  %3679 = vmatmul.mubr.bf16.gmra.mrb[0].mxu0 %v1286
  %v3680 = vpop.f32.mrb[0].mxu0
  %v3681 = vadd.f32 %v3584, %v3680
  %v3682 = vpop.f32.mrb[0].mxu0
  %v3683 = vpop.f32.mrb[0].mxu0
  %v3684 = vadd.f32 %v3587, %v3683
  %v3685 = vpop.f32.mrb[0].mxu0
  %3686 = vmatprep.mubr.bf16.mxu0 %v1312
  %3687 = vmatmul.mubr.bf16.gmra.mrb[0].mxu0 %v1311
  %v3688 = vpop.f32.mrb[0].mxu0
  %v3689 = vadd.f32 %v3592, %v3688
  %v3690 = vpop.f32.mrb[0].mxu0
  %v3691 = vpop.f32.mrb[0].mxu0
  %v3692 = vadd.f32 %v3595, %v3691
  %v3693 = vpop.f32.mrb[0].mxu0
  %3694 = vmatprep.mubr.bf16.mxu0 %v1337
  %3695 = vmatmul.mubr.bf16.gmra.mrb[0].mxu0 %v1336
  %v3696 = vpop.f32.mrb[0].mxu0
  %v3697 = vadd.f32 %v3600, %v3696
  %v3698 = vpop.f32.mrb[0].mxu0
  %v3699 = vpop.f32.mrb[0].mxu0
  %v3700 = vadd.f32 %v3603, %v3699
  %v3701 = vpop.f32.mrb[0].mxu0
  %3702 = vmatprep.mubr.bf16.mxu0 %v1362
  %3703 = vmatmul.mubr.bf16.gmra.mrb[0].mxu0 %v1361
  %v3704 = vpop.f32.mrb[0].mxu0
  %v3705 = vadd.f32 %v3608, %v3704
  %v3706 = vpop.f32.mrb[0].mxu0
  %v3707 = vpop.f32.mrb[0].mxu0
  %v3708 = vadd.f32 %v3611, %v3707
  %v3709 = vpop.f32.mrb[0].mxu0
  %3710 = vmatprep.mubr.bf16.mxu0 %v1387
  %3711 = vmatmul.mubr.bf16.gmra.mrb[0].mxu0 %v1386
  %v3712 = vpop.f32.mrb[0].mxu0
  %v3713 = vadd.f32 %v3616, %v3712
  %v3714 = vpop.f32.mrb[0].mxu0
  %v3715 = vpop.f32.mrb[0].mxu0
  %v3716 = vadd.f32 %v3619, %v3715
  %v3717 = vpop.f32.mrb[0].mxu0
  %3718 = vmatprep.mubr.bf16.mxu0 %v1412
  %3719 = vmatmul.mubr.bf16.gmra.mrb[0].mxu0 %v1411
  %v3720 = vpop.f32.mrb[0].mxu0
  %v3721 = vadd.f32 %v3624, %v3720
  %v3722 = vpop.f32.mrb[0].mxu0
  %v3723 = vpop.f32.mrb[0].mxu0
  %v3724 = vadd.f32 %v3627, %v3723
  %v3725 = vpop.f32.mrb[0].mxu0
  %3726 = vmatprep.mubr.bf16.mxu0 %v1437
  %3727 = vmatmul.mubr.bf16.gmra.mrb[0].mxu0 %v1436
  %v3728 = vpop.f32.mrb[0].mxu0
  %v3729 = vadd.f32 %v3632, %v3728
  %v3730 = vpop.f32.mrb[0].mxu0
  %v3731 = vpop.f32.mrb[0].mxu0
  %v3732 = vadd.f32 %v3635, %v3731
  %v3733 = vpop.f32.mrb[0].mxu0
  %3734 = vmatprep.mubr.bf16.mxu0 %v1462
  %3735 = vmatmul.mubr.bf16.gmra.mrb[0].mxu0 %v1461
  %v3736 = vpop.f32.mrb[0].mxu0
  %v3737 = vadd.f32 %v3640, %v3736
  %v3738 = vpop.f32.mrb[0].mxu0
  %v3739 = vpop.f32.mrb[0].mxu0
  %v3740 = vadd.f32 %v3643, %v3739
  %v3741 = vpop.f32.mrb[0].mxu0
  %3742 = vdwg.mxu0
  %3743 = vmatprep.subr.bf16.mxu0 0
  %3744 = vmatpush1.bf16.msra.mxu0 %v2614
  %3745 = vmatprep.subr.bf16.mxu0 0
  %3746 = vmatpush1.bf16.msra.mxu0 %v2615
  %3747 = vmatprep.subr.bf16.mxu0 0
  %3748 = vmatpush1.bf16.msra.mxu0 %v2616
  %3749 = vmatprep.subr.bf16.mxu0 0
  %3750 = vmatpush1.bf16.msra.mxu0 %v2617
  %3751 = vmatprep.subr.bf16.mxu0 0
  %3752 = vmatpush1.bf16.msra.mxu0 %v2618
  %3753 = vmatprep.subr.bf16.mxu0 0
  %3754 = vmatpush1.bf16.msra.mxu0 %v2619
  %3755 = vmatprep.subr.bf16.mxu0 0
  %3756 = vmatpush1.bf16.msra.mxu0 %v2620
  %3757 = vmatprep.subr.bf16.mxu0 0
  %3758 = vmatpush1.bf16.msra.mxu0 %v2621
  %3759 = vmatprep.subr.bf16.mxu0 0
  %3760 = vmatpush1.bf16.msra.mxu0 %v2622
  %3761 = vmatprep.subr.bf16.mxu0 0
  %3762 = vmatpush1.bf16.msra.mxu0 %v2623
  %3763 = vmatprep.subr.bf16.mxu0 0
  %3764 = vmatpush1.bf16.msra.mxu0 %v2624
  %3765 = vmatprep.subr.bf16.mxu0 0
  %3766 = vmatpush1.bf16.msra.mxu0 %v2625
  %3767 = vmatprep.subr.bf16.mxu0 0
  %3768 = vmatpush1.bf16.msra.mxu0 %v2626
  %3769 = vmatprep.subr.bf16.mxu0 0
  %3770 = vmatpush1.bf16.msra.mxu0 %v2627
  %3771 = vmatprep.subr.bf16.mxu0 0
  %3772 = vmatpush1.bf16.msra.mxu0 %v2628
  %3773 = vmatprep.subr.bf16.mxu0 0
  %3774 = vmatpush1.bf16.msra.mxu0 %v2629
  %3775 = vmatprep.mubr.bf16.mxu0 %v1289
  %3776 = vmatmul.mubr.bf16.gmra.mrb[0].mxu0 %v1288
  %v3777 = vpop.f32.mrb[0].mxu0
  %v3778 = vadd.f32 %v3681, %v3777
  %v3779 = vpop.f32.mrb[0].mxu0
  %v3780 = vpop.f32.mrb[0].mxu0
  %v3781 = vadd.f32 %v3684, %v3780
  %v3782 = vpop.f32.mrb[0].mxu0
  %3783 = vmatprep.mubr.bf16.mxu0 %v1314
  %3784 = vmatmul.mubr.bf16.gmra.mrb[0].mxu0 %v1313
  %v3785 = vpop.f32.mrb[0].mxu0
  %v3786 = vadd.f32 %v3689, %v3785
  %v3787 = vpop.f32.mrb[0].mxu0
  %v3788 = vpop.f32.mrb[0].mxu0
  %v3789 = vadd.f32 %v3692, %v3788
  %v3790 = vpop.f32.mrb[0].mxu0
  %3791 = vmatprep.mubr.bf16.mxu0 %v1339
  %3792 = vmatmul.mubr.bf16.gmra.mrb[0].mxu0 %v1338
  %v3793 = vpop.f32.mrb[0].mxu0
  %v3794 = vadd.f32 %v3697, %v3793
  %v3795 = vpop.f32.mrb[0].mxu0
  %v3796 = vpop.f32.mrb[0].mxu0
  %v3797 = vadd.f32 %v3700, %v3796
  %v3798 = vpop.f32.mrb[0].mxu0
  %3799 = vmatprep.mubr.bf16.mxu0 %v1364
  %3800 = vmatmul.mubr.bf16.gmra.mrb[0].mxu0 %v1363
  %v3801 = vpop.f32.mrb[0].mxu0
  %v3802 = vadd.f32 %v3705, %v3801
  %v3803 = vpop.f32.mrb[0].mxu0
  %v3804 = vpop.f32.mrb[0].mxu0
  %v3805 = vadd.f32 %v3708, %v3804
  %v3806 = vpop.f32.mrb[0].mxu0
  %3807 = vmatprep.mubr.bf16.mxu0 %v1389
  %3808 = vmatmul.mubr.bf16.gmra.mrb[0].mxu0 %v1388
  %v3809 = vpop.f32.mrb[0].mxu0
  %v3810 = vadd.f32 %v3713, %v3809
  %v3811 = vpop.f32.mrb[0].mxu0
  %v3812 = vpop.f32.mrb[0].mxu0
  %v3813 = vadd.f32 %v3716, %v3812
  %v3814 = vpop.f32.mrb[0].mxu0
  %3815 = vmatprep.mubr.bf16.mxu0 %v1414
  %3816 = vmatmul.mubr.bf16.gmra.mrb[0].mxu0 %v1413
  %v3817 = vpop.f32.mrb[0].mxu0
  %v3818 = vadd.f32 %v3721, %v3817
  %v3819 = vpop.f32.mrb[0].mxu0
  %v3820 = vpop.f32.mrb[0].mxu0
  %v3821 = vadd.f32 %v3724, %v3820
  %v3822 = vpop.f32.mrb[0].mxu0
  %3823 = vmatprep.mubr.bf16.mxu0 %v1439
  %3824 = vmatmul.mubr.bf16.gmra.mrb[0].mxu0 %v1438
  %v3825 = vpop.f32.mrb[0].mxu0
  %v3826 = vadd.f32 %v3729, %v3825
  %v3827 = vpop.f32.mrb[0].mxu0
  %v3828 = vpop.f32.mrb[0].mxu0
  %v3829 = vadd.f32 %v3732, %v3828
  %v3830 = vpop.f32.mrb[0].mxu0
  %3831 = vmatprep.mubr.bf16.mxu0 %v1464
  %3832 = vmatmul.mubr.bf16.gmra.mrb[0].mxu0 %v1463
  %v3833 = vpop.f32.mrb[0].mxu0
  %v3834 = vadd.f32 %v3737, %v3833
  %v3835 = vpop.f32.mrb[0].mxu0
  %v3836 = vpop.f32.mrb[0].mxu0
  %v3837 = vadd.f32 %v3740, %v3836
  %v3838 = vpop.f32.mrb[0].mxu0
  %3839 = vdwg.mxu0
  %3840 = vmatprep.subr.bf16.mxu0 0
  %3841 = vmatpush1.bf16.msra.mxu0 %v2630
  %3842 = vmatprep.subr.bf16.mxu0 0
  %3843 = vmatpush1.bf16.msra.mxu0 %v2631
  %3844 = vmatprep.subr.bf16.mxu0 0
  %3845 = vmatpush1.bf16.msra.mxu0 %v2632
  %3846 = vmatprep.subr.bf16.mxu0 0
  %3847 = vmatpush1.bf16.msra.mxu0 %v2633
  %3848 = vmatprep.subr.bf16.mxu0 0
  %3849 = vmatpush1.bf16.msra.mxu0 %v2634
  %3850 = vmatprep.subr.bf16.mxu0 0
  %3851 = vmatpush1.bf16.msra.mxu0 %v2635
  %3852 = vmatprep.subr.bf16.mxu0 0
  %3853 = vmatpush1.bf16.msra.mxu0 %v2636
  %3854 = vmatprep.subr.bf16.mxu0 0
  %3855 = vmatpush1.bf16.msra.mxu0 %v2637
  %3856 = vmatprep.subr.bf16.mxu0 0
  %3857 = vmatpush1.bf16.msra.mxu0 %v2638
  %3858 = vmatprep.subr.bf16.mxu0 0
  %3859 = vmatpush1.bf16.msra.mxu0 %v2639
  %3860 = vmatprep.subr.bf16.mxu0 0
  %3861 = vmatpush1.bf16.msra.mxu0 %v2640
  %3862 = vmatprep.subr.bf16.mxu0 0
  %3863 = vmatpush1.bf16.msra.mxu0 %v2641
  %3864 = vmatprep.subr.bf16.mxu0 0
  %3865 = vmatpush1.bf16.msra.mxu0 %v2642
  %3866 = vmatprep.subr.bf16.mxu0 0
  %3867 = vmatpush1.bf16.msra.mxu0 %v2643
  %3868 = vmatprep.subr.bf16.mxu0 0
  %3869 = vmatpush1.bf16.msra.mxu0 %v2644
  %3870 = vmatprep.subr.bf16.mxu0 0
  %3871 = vmatpush1.bf16.msra.mxu0 %v2645
  %3872 = vmatprep.mubr.bf16.mxu0 %v1291
  %3873 = vmatmul.mubr.bf16.gmra.mrb[0].mxu0 %v1290
  %v3874 = vpop.f32.mrb[0].mxu0
  %v3875 = vadd.f32 %v3778, %v3874
  %v3876 = vpop.f32.mrb[0].mxu0
  %v3877 = vpop.f32.mrb[0].mxu0
  %v3878 = vadd.f32 %v3781, %v3877
  %v3879 = vpop.f32.mrb[0].mxu0
  %3880 = vmatprep.mubr.bf16.mxu0 %v1316
  %3881 = vmatmul.mubr.bf16.gmra.mrb[0].mxu0 %v1315
  %v3882 = vpop.f32.mrb[0].mxu0
  %v3883 = vadd.f32 %v3786, %v3882
  %v3884 = vpop.f32.mrb[0].mxu0
  %v3885 = vpop.f32.mrb[0].mxu0
  %v3886 = vadd.f32 %v3789, %v3885
  %v3887 = vpop.f32.mrb[0].mxu0
  %3888 = vmatprep.mubr.bf16.mxu0 %v1341
  %3889 = vmatmul.mubr.bf16.gmra.mrb[0].mxu0 %v1340
  %v3890 = vpop.f32.mrb[0].mxu0
  %v3891 = vadd.f32 %v3794, %v3890
  %v3892 = vpop.f32.mrb[0].mxu0
  %v3893 = vpop.f32.mrb[0].mxu0
  %v3894 = vadd.f32 %v3797, %v3893
  %v3895 = vpop.f32.mrb[0].mxu0
  %3896 = vmatprep.mubr.bf16.mxu0 %v1366
  %3897 = vmatmul.mubr.bf16.gmra.mrb[0].mxu0 %v1365
  %v3898 = vpop.f32.mrb[0].mxu0
  %v3899 = vadd.f32 %v3802, %v3898
  %v3900 = vpop.f32.mrb[0].mxu0
  %v3901 = vpop.f32.mrb[0].mxu0
  %v3902 = vadd.f32 %v3805, %v3901
  %v3903 = vpop.f32.mrb[0].mxu0
  %3904 = vmatprep.mubr.bf16.mxu0 %v1391
  %3905 = vmatmul.mubr.bf16.gmra.mrb[0].mxu0 %v1390
  %v3906 = vpop.f32.mrb[0].mxu0
  %v3907 = vadd.f32 %v3810, %v3906
  %v3908 = vpop.f32.mrb[0].mxu0
  %v3909 = vpop.f32.mrb[0].mxu0
  %v3910 = vadd.f32 %v3813, %v3909
  %v3911 = vpop.f32.mrb[0].mxu0
  %3912 = vmatprep.mubr.bf16.mxu0 %v1416
  %3913 = vmatmul.mubr.bf16.gmra.mrb[0].mxu0 %v1415
  %v3914 = vpop.f32.mrb[0].mxu0
  %v3915 = vadd.f32 %v3818, %v3914
  %v3916 = vpop.f32.mrb[0].mxu0
  %v3917 = vpop.f32.mrb[0].mxu0
  %v3918 = vadd.f32 %v3821, %v3917
  %v3919 = vpop.f32.mrb[0].mxu0
  %3920 = vmatprep.mubr.bf16.mxu0 %v1441
  %3921 = vmatmul.mubr.bf16.gmra.mrb[0].mxu0 %v1440
  %v3922 = vpop.f32.mrb[0].mxu0
  %v3923 = vadd.f32 %v3826, %v3922
  %v3924 = vpop.f32.mrb[0].mxu0
  %v3925 = vpop.f32.mrb[0].mxu0
  %v3926 = vadd.f32 %v3829, %v3925
  %v3927 = vpop.f32.mrb[0].mxu0
  %3928 = vmatprep.mubr.bf16.mxu0 %v1466
  %3929 = vmatmul.mubr.bf16.gmra.mrb[0].mxu0 %v1465
  %v3930 = vpop.f32.mrb[0].mxu0
  %v3931 = vadd.f32 %v3834, %v3930
  %v3932 = vpop.f32.mrb[0].mxu0
  %v3933 = vpop.f32.mrb[0].mxu0
  %v3934 = vadd.f32 %v3837, %v3933
  %v3935 = vpop.f32.mrb[0].mxu0
  %3936 = vdwg.mxu0
  %3937 = vmatprep.subr.bf16.mxu0 0
  %3938 = vmatpush1.bf16.msra.mxu0 %v2646
  %3939 = vmatprep.subr.bf16.mxu0 0
  %3940 = vmatpush1.bf16.msra.mxu0 %v2647
  %3941 = vmatprep.subr.bf16.mxu0 0
  %3942 = vmatpush1.bf16.msra.mxu0 %v2648
  %3943 = vmatprep.subr.bf16.mxu0 0
  %3944 = vmatpush1.bf16.msra.mxu0 %v2649
  %3945 = vmatprep.subr.bf16.mxu0 0
  %3946 = vmatpush1.bf16.msra.mxu0 %v2650
  %3947 = vmatprep.subr.bf16.mxu0 0
  %3948 = vmatpush1.bf16.msra.mxu0 %v2651
  %3949 = vmatprep.subr.bf16.mxu0 0
  %3950 = vmatpush1.bf16.msra.mxu0 %v2652
  %3951 = vmatprep.subr.bf16.mxu0 0
  %3952 = vmatpush1.bf16.msra.mxu0 %v2653
  %3953 = vmatprep.subr.bf16.mxu0 0
  %3954 = vmatpush1.bf16.msra.mxu0 %v2654
  %3955 = vmatprep.subr.bf16.mxu0 0
  %3956 = vmatpush1.bf16.msra.mxu0 %v2655
  %3957 = vmatprep.subr.bf16.mxu0 0
  %3958 = vmatpush1.bf16.msra.mxu0 %v2656
  %3959 = vmatprep.subr.bf16.mxu0 0
  %3960 = vmatpush1.bf16.msra.mxu0 %v2657
  %3961 = vmatprep.subr.bf16.mxu0 0
  %3962 = vmatpush1.bf16.msra.mxu0 %v2658
  %3963 = vmatprep.subr.bf16.mxu0 0
  %3964 = vmatpush1.bf16.msra.mxu0 %v2659
  %3965 = vmatprep.subr.bf16.mxu0 0
  %3966 = vmatpush1.bf16.msra.mxu0 %v2660
  %3967 = vmatprep.subr.bf16.mxu0 0
  %3968 = vmatpush1.bf16.msra.mxu0 %v2661
  %3969 = vmatprep.mubr.bf16.mxu0 %v1293
  %3970 = vmatmul.mubr.bf16.gmra.mrb[0].mxu0 %v1292
  %v3971 = vpop.f32.mrb[0].mxu0
  %v3972 = vadd.f32 %v3875, %v3971
  %v3973 = vpop.f32.mrb[0].mxu0
  %v3974 = vpop.f32.mrb[0].mxu0
  %v3975 = vadd.f32 %v3878, %v3974
  %v3976 = vpop.f32.mrb[0].mxu0
  %3977 = vmatprep.mubr.bf16.mxu0 %v1318
  %3978 = vmatmul.mubr.bf16.gmra.mrb[0].mxu0 %v1317
  %v3979 = vpop.f32.mrb[0].mxu0
  %v3980 = vadd.f32 %v3883, %v3979
  %v3981 = vpop.f32.mrb[0].mxu0
  %v3982 = vpop.f32.mrb[0].mxu0
  %v3983 = vadd.f32 %v3886, %v3982
  %v3984 = vpop.f32.mrb[0].mxu0
  %3985 = vmatprep.mubr.bf16.mxu0 %v1343
  %3986 = vmatmul.mubr.bf16.gmra.mrb[0].mxu0 %v1342
  %v3987 = vpop.f32.mrb[0].mxu0
  %v3988 = vadd.f32 %v3891, %v3987
  %v3989 = vpop.f32.mrb[0].mxu0
  %v3990 = vpop.f32.mrb[0].mxu0
  %v3991 = vadd.f32 %v3894, %v3990
  %v3992 = vpop.f32.mrb[0].mxu0
  %3993 = vmatprep.mubr.bf16.mxu0 %v1368
  %3994 = vmatmul.mubr.bf16.gmra.mrb[0].mxu0 %v1367
  %v3995 = vpop.f32.mrb[0].mxu0
  %v3996 = vadd.f32 %v3899, %v3995
  %v3997 = vpop.f32.mrb[0].mxu0
  %v3998 = vpop.f32.mrb[0].mxu0
  %v3999 = vadd.f32 %v3902, %v3998
  %v4000 = vpop.f32.mrb[0].mxu0
  %4001 = vmatprep.mubr.bf16.mxu0 %v1393
  %4002 = vmatmul.mubr.bf16.gmra.mrb[0].mxu0 %v1392
  %v4003 = vpop.f32.mrb[0].mxu0
  %v4004 = vadd.f32 %v3907, %v4003
  %v4005 = vpop.f32.mrb[0].mxu0
  %v4006 = vpop.f32.mrb[0].mxu0
  %v4007 = vadd.f32 %v3910, %v4006
  %v4008 = vpop.f32.mrb[0].mxu0
  %4009 = vmatprep.mubr.bf16.mxu0 %v1418
  %4010 = vmatmul.mubr.bf16.gmra.mrb[0].mxu0 %v1417
  %v4011 = vpop.f32.mrb[0].mxu0
  %v4012 = vadd.f32 %v3915, %v4011
  %v4013 = vpop.f32.mrb[0].mxu0
  %v4014 = vpop.f32.mrb[0].mxu0
  %v4015 = vadd.f32 %v3918, %v4014
  %v4016 = vpop.f32.mrb[0].mxu0
  %4017 = vmatprep.mubr.bf16.mxu0 %v1443
  %4018 = vmatmul.mubr.bf16.gmra.mrb[0].mxu0 %v1442
  %v4019 = vpop.f32.mrb[0].mxu0
  %v4020 = vadd.f32 %v3923, %v4019
  %v4021 = vpop.f32.mrb[0].mxu0
  %v4022 = vpop.f32.mrb[0].mxu0
  %v4023 = vadd.f32 %v3926, %v4022
  %v4024 = vpop.f32.mrb[0].mxu0
  %4025 = vmatprep.mubr.bf16.mxu0 %v1468
  %4026 = vmatmul.mubr.bf16.gmra.mrb[0].mxu0 %v1467
  %v4027 = vpop.f32.mrb[0].mxu0
  %v4028 = vadd.f32 %v3931, %v4027
  %v4029 = vpop.f32.mrb[0].mxu0
  %v4030 = vpop.f32.mrb[0].mxu0
  %v4031 = vadd.f32 %v3934, %v4030
  %v4032 = vpop.f32.mrb[0].mxu0
  %4033 = vdwg.mxu0
  %4034 = vmatprep.subr.bf16.mxu0 0
  %4035 = vmatpush1.bf16.msra.mxu0 %v2662
  %4036 = vmatprep.subr.bf16.mxu0 0
  %4037 = vmatpush1.bf16.msra.mxu0 %v2663
  %4038 = vmatprep.subr.bf16.mxu0 0
  %4039 = vmatpush1.bf16.msra.mxu0 %v2664
  %4040 = vmatprep.subr.bf16.mxu0 0
  %4041 = vmatpush1.bf16.msra.mxu0 %v2665
  %4042 = vmatprep.subr.bf16.mxu0 0
  %4043 = vmatpush1.bf16.msra.mxu0 %v2666
  %4044 = vmatprep.subr.bf16.mxu0 0
  %4045 = vmatpush1.bf16.msra.mxu0 %v2667
  %4046 = vmatprep.subr.bf16.mxu0 0
  %4047 = vmatpush1.bf16.msra.mxu0 %v2668
  %4048 = vmatprep.subr.bf16.mxu0 0
  %4049 = vmatpush1.bf16.msra.mxu0 %v2669
  %4050 = vmatprep.subr.bf16.mxu0 0
  %4051 = vmatpush1.bf16.msra.mxu0 0
  %4052 = vmatprep.subr.bf16.mxu0 0
  %4053 = vmatpush1.bf16.msra.mxu0 0
  %4054 = vmatprep.subr.bf16.mxu0 0
  %4055 = vmatpush1.bf16.msra.mxu0 0
  %4056 = vmatprep.subr.bf16.mxu0 0
  %4057 = vmatpush1.bf16.msra.mxu0 0
  %4058 = vmatprep.subr.bf16.mxu0 0
  %4059 = vmatpush1.bf16.msra.mxu0 0
  %4060 = vmatprep.subr.bf16.mxu0 0
  %4061 = vmatpush1.bf16.msra.mxu0 0
  %4062 = vmatprep.subr.bf16.mxu0 0
  %4063 = vmatpush1.bf16.msra.mxu0 0
  %4064 = vmatprep.subr.bf16.mxu0 0
  %4065 = vmatpush1.bf16.msra.mxu0 0
  %4066 = vmatprep.mubr.bf16.mxu0 0
  %4067 = vmatmul.mubr.bf16.gmra.mrb[0].mxu0 %v1294
  %v4068 = vpop.f32.mrb[0].mxu0
  %v4069 = vadd.f32 %v3972, %v4068
  %v4070 = vpop.f32.mrb[0].mxu0
  %v4071 = vpop.f32.mrb[0].mxu0
  %v4072 = vadd.f32 %v3975, %v4071
  %v4073 = vpop.f32.mrb[0].mxu0
  %4074 = vmatprep.mubr.bf16.mxu0 0
  %4075 = vmatmul.mubr.bf16.gmra.mrb[0].mxu0 %v1319
  %v4076 = vpop.f32.mrb[0].mxu0
  %v4077 = vadd.f32 %v3980, %v4076
  %v4078 = vpop.f32.mrb[0].mxu0
  %v4079 = vpop.f32.mrb[0].mxu0
  %v4080 = vadd.f32 %v3983, %v4079
  %v4081 = vpop.f32.mrb[0].mxu0
  %4082 = vmatprep.mubr.bf16.mxu0 0
  %4083 = vmatmul.mubr.bf16.gmra.mrb[0].mxu0 %v1344
  %v4084 = vpop.f32.mrb[0].mxu0
  %v4085 = vadd.f32 %v3988, %v4084
  %v4086 = vpop.f32.mrb[0].mxu0
  %v4087 = vpop.f32.mrb[0].mxu0
  %v4088 = vadd.f32 %v3991, %v4087
  %v4089 = vpop.f32.mrb[0].mxu0
  %4090 = vmatprep.mubr.bf16.mxu0 0
  %4091 = vmatmul.mubr.bf16.gmra.mrb[0].mxu0 %v1369
  %v4092 = vpop.f32.mrb[0].mxu0
  %v4093 = vadd.f32 %v3996, %v4092
  %v4094 = vpop.f32.mrb[0].mxu0
  %v4095 = vpop.f32.mrb[0].mxu0
  %v4096 = vadd.f32 %v3999, %v4095
  %v4097 = vpop.f32.mrb[0].mxu0
  %4098 = vmatprep.mubr.bf16.mxu0 0
  %4099 = vmatmul.mubr.bf16.gmra.mrb[0].mxu0 %v1394
  %v4100 = vpop.f32.mrb[0].mxu0
  %v4101 = vadd.f32 %v4004, %v4100
  %v4102 = vpop.f32.mrb[0].mxu0
  %v4103 = vpop.f32.mrb[0].mxu0
  %v4104 = vadd.f32 %v4007, %v4103
  %v4105 = vpop.f32.mrb[0].mxu0
  %4106 = vmatprep.mubr.bf16.mxu0 0
  %4107 = vmatmul.mubr.bf16.gmra.mrb[0].mxu0 %v1419
  %v4108 = vpop.f32.mrb[0].mxu0
  %v4109 = vadd.f32 %v4012, %v4108
  %v4110 = vpop.f32.mrb[0].mxu0
  %v4111 = vpop.f32.mrb[0].mxu0
  %v4112 = vadd.f32 %v4015, %v4111
  %v4113 = vpop.f32.mrb[0].mxu0
  %4114 = vmatprep.mubr.bf16.mxu0 0
  %4115 = vmatmul.mubr.bf16.gmra.mrb[0].mxu0 %v1444
  %v4116 = vpop.f32.mrb[0].mxu0
  %v4117 = vadd.f32 %v4020, %v4116
  %v4118 = vpop.f32.mrb[0].mxu0
  %v4119 = vpop.f32.mrb[0].mxu0
  %v4120 = vadd.f32 %v4023, %v4119
  %v4121 = vpop.f32.mrb[0].mxu0
  %4122 = vmatprep.mubr.bf16.mxu0 0
  %4123 = vmatmul.mubr.bf16.gmra.mrb[0].mxu0 %v1469
  %v4124 = vpop.f32.mrb[0].mxu0
  %v4125 = vadd.f32 %v4028, %v4124
  %v4126 = vpop.f32.mrb[0].mxu0
  %v4127 = vpop.f32.mrb[0].mxu0
  %v4128 = vadd.f32 %v4031, %v4127
  %v4129 = vpop.f32.mrb[0].mxu0
  %4130 = vdwg.mxu0
  %v4131 = vadd.f32 %v38, %v4069
  %v4132 = vadd.f32 %v39, %v4072
  %v4133 = vadd.f32 %v40, %v4077
  %v4134 = vadd.f32 %v41, %v4080
  %v4135 = vadd.f32 %v42, %v4085
  %v4136 = vadd.f32 %v43, %v4088
  %v4137 = vadd.f32 %v44, %v4093
  %v4138 = vadd.f32 %v45, %v4096
  %v4139 = vadd.f32 %v46, %v4101
  %v4140 = vadd.f32 %v47, %v4104
  %v4141 = vadd.f32 %v48, %v4109
  %v4142 = vadd.f32 %v49, %v4112
  %v4143 = vadd.f32 %v50, %v4117
  %v4144 = vadd.f32 %v51, %v4120
  %v4145 = vadd.f32 %v52, %v4125
  %v4146 = vadd.f32 %v53, %v4128
  %4147 = vst [vmem:[#allocation2] sm:$0xff] %v4131
  %4148 = vst [vmem:[#allocation2 + $0x8] sm:$0xff] %v4132
  %4149 = vst [vmem:[#allocation2 + $0x10] sm:$0xff] %v4133
  %4150 = vst [vmem:[#allocation2 + $0x18] sm:$0xff] %v4134
  %4151 = vst [vmem:[#allocation2 + $0x20] sm:$0xff] %v4135
  %4152 = vst [vmem:[#allocation2 + $0x28] sm:$0xff] %v4136
  %4153 = vst [vmem:[#allocation2 + $0x30] sm:$0xff] %v4137
  %4154 = vst [vmem:[#allocation2 + $0x38] sm:$0xff] %v4138
  %4155 = vst [vmem:[#allocation2 + $0x40] sm:$0xff] %v4139
  %4156 = vst [vmem:[#allocation2 + $0x48] sm:$0xff] %v4140
  %4157 = vst [vmem:[#allocation2 + $0x50] sm:$0xff] %v4141
  %4158 = vst [vmem:[#allocation2 + $0x58] sm:$0xff] %v4142
  %4159 = vst [vmem:[#allocation2 + $0x60] sm:$0xff] %v4143
  %4160 = vst [vmem:[#allocation2 + $0x68] sm:$0xff] %v4144
  %4161 = vst [vmem:[#allocation2 + $0x70] sm:$0xff] %v4145
  %4162 = vst [vmem:[#allocation2 + $0x78] sm:$0xff] %v4146
  // Predicated region
  $region18: #{_lambda_.9} parent=0 // pred_check
    %p4163 = pneg %p18
  $region19: #{_lambda_.9} parent=0 // pred_check_branch
    %4165 = sbr.rel (%p4163) target = $region21
  $region20: #{_lambda_.9} parent=0 // pred_region
    %v4166 = vld [vmem:[#allocation2] sm:$0xff]
    %v4167 = vld [vmem:[#allocation2 + $0x8] sm:$0xff]
    %v4168 = vld [vmem:[#allocation2 + $0x10] sm:$0xff]
    %v4169 = vld [vmem:[#allocation2 + $0x18] sm:$0xff]
    %v4170 = vld [vmem:[#allocation2 + $0x20] sm:$0xff]
    %v4171 = vld [vmem:[#allocation2 + $0x28] sm:$0xff]
    %v4172 = vld [vmem:[#allocation2 + $0x30] sm:$0xff]
    %v4173 = vld [vmem:[#allocation2 + $0x38] sm:$0xff]
    %v4174 = vld [vmem:[#allocation2 + $0x40] sm:$0xff]
    %v4175 = vld [vmem:[#allocation2 + $0x48] sm:$0xff]
    %v4176 = vld [vmem:[#allocation2 + $0x50] sm:$0xff]
    %v4177 = vld [vmem:[#allocation2 + $0x58] sm:$0xff]
    %v4178 = vld [vmem:[#allocation2 + $0x60] sm:$0xff]
    %v4179 = vld [vmem:[#allocation2 + $0x68] sm:$0xff]
    %v4180 = vld [vmem:[#allocation2 + $0x70] sm:$0xff]
    %v4181 = vld [vmem:[#allocation2 + $0x78] sm:$0xff]
    %v4182 = vld [vmem:[%s2] sm:$0x1]
    %v4184 = vlaneseq
    %v4185 = vshrl.u32 %v4184, 7
    %v4186 = vsub.s32 0, %v4185
    %v4187 = vrot.slane %v4182, %v4186
    %v4189 = vadd.f32 %v4166, %v4187
    %v4190 = vadd.f32 %v4167, %v4187
    %v4191 = vadd.f32 %v4168, %v4187
    %v4192 = vadd.f32 %v4169, %v4187
    %v4193 = vadd.f32 %v4170, %v4187
    %v4194 = vadd.f32 %v4171, %v4187
    %v4195 = vadd.f32 %v4172, %v4187
    %v4196 = vadd.f32 %v4173, %v4187
    %v4197 = vadd.f32 %v4174, %v4187
    %v4198 = vadd.f32 %v4175, %v4187
    %v4199 = vadd.f32 %v4176, %v4187
    %v4200 = vadd.f32 %v4177, %v4187
    %v4201 = vadd.f32 %v4178, %v4187
    %v4202 = vadd.f32 %v4179, %v4187
    %v4203 = vadd.f32 %v4180, %v4187
    %v4204 = vadd.f32 %v4181, %v4187
    %4205 = vst [vmem:[%s3] sm:$0xff] %v4189
    %4206 = vst [vmem:[%s3 + $0x8] sm:$0xff] %v4190
    %4207 = vst [vmem:[%s3 + $0x10] sm:$0xff] %v4191
    %4208 = vst [vmem:[%s3 + $0x18] sm:$0xff] %v4192
    %4209 = vst [vmem:[%s3 + $0x20] sm:$0xff] %v4193
    %4210 = vst [vmem:[%s3 + $0x28] sm:$0xff] %v4194
    %4211 = vst [vmem:[%s3 + $0x30] sm:$0xff] %v4195
    %4212 = vst [vmem:[%s3 + $0x38] sm:$0xff] %v4196
    %4213 = vst [vmem:[%s3 + $0x40] sm:$0xff] %v4197
    %4214 = vst [vmem:[%s3 + $0x48] sm:$0xff] %v4198
    %4215 = vst [vmem:[%s3 + $0x50] sm:$0xff] %v4199
    %4216 = vst [vmem:[%s3 + $0x58] sm:$0xff] %v4200
    %4217 = vst [vmem:[%s3 + $0x60] sm:$0xff] %v4201
    %4218 = vst [vmem:[%s3 + $0x68] sm:$0xff] %v4202
    %4219 = vst [vmem:[%s3 + $0x70] sm:$0xff] %v4203
    %4220 = vst [vmem:[%s3 + $0x78] sm:$0xff] %v4204
    %v4221 = vadd.f32 %v4189, %v4190
    %v4222 = vadd.f32 %v4221, %v4191
    %v4223 = vadd.f32 %v4222, %v4192
    %v4224 = vadd.f32 %v4223, %v4193
    %v4225 = vadd.f32 %v4224, %v4194
    %v4226 = vadd.f32 %v4225, %v4195
    %v4227 = vadd.f32 %v4226, %v4196
    %v4228 = vadd.f32 %v4227, %v4197
    %v4229 = vadd.f32 %v4228, %v4198
    %v4230 = vadd.f32 %v4229, %v4199
    %v4231 = vadd.f32 %v4230, %v4200
    %v4232 = vadd.f32 %v4231, %v4201
    %v4233 = vadd.f32 %v4232, %v4202
    %v4234 = vadd.f32 %v4233, %v4203
    %v4235 = vadd.f32 %v4234, %v4204
    %v4236 = vrot.slane %v4235, 4
    %v4237 = vadd.f32 %v4235, %v4236
    %v4238 = vrot.slane %v4237, 2
    %v4239 = vadd.f32 %v4237, %v4238
    %v4240 = vrot.slane %v4239, 1
    %v4241 = vadd.f32 %v4239, %v4240
    %4242 = vst [vmem:[%s4] sm:$0x1] %v4241
    %v4243 = vmul.f32 %v4189, %v4189
    %v4244 = vmul.f32 %v4190, %v4190
    %v4245 = vmul.f32 %v4191, %v4191
    %v4246 = vmul.f32 %v4192, %v4192
    %v4247 = vmul.f32 %v4193, %v4193
    %v4248 = vmul.f32 %v4194, %v4194
    %v4249 = vmul.f32 %v4195, %v4195
    %v4250 = vmul.f32 %v4196, %v4196
    %v4251 = vmul.f32 %v4197, %v4197
    %v4252 = vmul.f32 %v4198, %v4198
    %v4253 = vmul.f32 %v4199, %v4199
    %v4254 = vmul.f32 %v4200, %v4200
    %v4255 = vmul.f32 %v4201, %v4201
    %v4256 = vmul.f32 %v4202, %v4202
    %v4257 = vmul.f32 %v4203, %v4203
    %v4258 = vmul.f32 %v4204, %v4204
    %v4259 = vadd.f32 %v4243, %v4244
    %v4260 = vadd.f32 %v4259, %v4245
    %v4261 = vadd.f32 %v4260, %v4246
    %v4262 = vadd.f32 %v4261, %v4247
    %v4263 = vadd.f32 %v4262, %v4248
    %v4264 = vadd.f32 %v4263, %v4249
    %v4265 = vadd.f32 %v4264, %v4250
    %v4266 = vadd.f32 %v4265, %v4251
    %v4267 = vadd.f32 %v4266, %v4252
    %v4268 = vadd.f32 %v4267, %v4253
    %v4269 = vadd.f32 %v4268, %v4254
    %v4270 = vadd.f32 %v4269, %v4255
    %v4271 = vadd.f32 %v4270, %v4256
    %v4272 = vadd.f32 %v4271, %v4257
    %v4273 = vadd.f32 %v4272, %v4258
    %v4274 = vrot.slane %v4273, 4
    %v4275 = vadd.f32 %v4273, %v4274
    %v4276 = vrot.slane %v4275, 2
    %v4277 = vadd.f32 %v4275, %v4276
    %v4278 = vrot.slane %v4277, 1
    %v4279 = vadd.f32 %v4277, %v4278
    %4280 = vst [vmem:[%s5] sm:$0x1] %v4279
  $region21: #{_lambda_.9} parent=0 // pred_fallthru
    _
  // Predicated region
  $region22: #{_lambda_.9} parent=0 // pred_check
    _
  $region23: #{_lambda_.9} parent=0 // pred_check_branch
    %4282 = sbr.rel (0) target = $region25
  $region24: #{_lambda_.9} parent=0 // pred_region
    _
  $region25: #{_lambda_.9} parent=0 // pred_fallthru
    _
  // Predicated region
  $region26: #{_lambda_.9} parent=0 // pred_check
    _
  $region27: #{_lambda_.9} parent=0 // pred_check_branch
    %4284 = sbr.rel (0) target = $region29
  $region28: #{_lambda_.9} parent=0 // pred_region
    _
  $region29: #{_lambda_.9} parent=0 // pred_fallthru
    _
  // Predicated region
  $region30: #{_lambda_.9} parent=0 // pred_check
    _
  $region31: #{_lambda_.9} parent=0 // pred_check_branch
    %4286 = sbr.rel (0) target = $region33
  $region32: #{_lambda_.9} parent=0 // pred_region
    _
  $region33: #{_lambda_.9} parent=0 // pred_fallthru
    _
  // Predicated region
  $region34: #{_lambda_.9} parent=0 // pred_check
    _
  $region35: #{_lambda_.9} parent=0 // pred_check_branch
    %4288 = sbr.rel (0) target = $region37
  $region36: #{_lambda_.9} parent=0 // pred_region
    _
  $region37: #{_lambda_.9} parent=0 // pred_fallthru
    _
  // Predicated region
  $region38: #{_lambda_.9} parent=0 // pred_check
    _
  $region39: #{_lambda_.9} parent=0 // pred_check_branch
    %4290 = sbr.rel (0) target = $region41
  $region40: #{_lambda_.9} parent=0 // pred_region
    _
  $region41: #{_lambda_.9} parent=0 // pred_fallthru
    _
  // Predicated region
  $region42: #{_lambda_.9} parent=0 // pred_check
    _
  $region43: #{_lambda_.9} parent=0 // pred_check_branch
    %4292 = sbr.rel (0) target = $region45
  $region44: #{_lambda_.9} parent=0 // pred_region
    _
  $region45: #{_lambda_.9} parent=0 // pred_fallthru
    _

// kernel: _lambda_.11
$region0: #{_lambda_.11}
  #allocation0 [shape = 'u32[]', space=smem, size = 0x4, offset = 0x4, fixed_abs, tag = 'smem constant byte address 0x4 - core index']
  #allocation1 [shape = 'u32[144,128]{1,0:T(1,128)}', space=vmem, size = 0x12000, scoped, tag = 'internal scratch']
  #allocation2 [shape = 'f32[32,128]{1,0:T(8,128)}', space=vmem, size = 0x4000, scoped, tag = 'scratch operand']
  %s0 = inlined_call_operand.vmem [shape: bf16[32,3200], index: 0, kind: input, shape index: {}]
  %s1 = inlined_call_operand.vmem [shape: bf16[3200,128], index: 1, kind: input, shape index: {}]
  %s2 = inlined_call_operand.vmem [shape: f32[1,128], index: 2, kind: input, shape index: {}]
  %s3 = inlined_call_operand.vmem [shape: f32[32,128], index: 3, kind: output, shape index: {0}]
  %s4 = inlined_call_operand.vmem [shape: f32[1,1,128], index: 4, kind: output, shape index: {1}]
  %s5 = inlined_call_operand.vmem [shape: f32[1,1,128], index: 5, kind: output, shape index: {2}]
  %6 = xla_tuple %s3, %s4, %s5
  %s7 = sld [smem:[#allocation0]]
  $region46: #{_lambda_.11} parent=0
    _
  %s9 = ssub.s32 1, %s7
  %s10 = scalar_select 0, %s9, %s7
  // Predicated region
  $region2: #{_lambda_.11} parent=0 // pred_check
    _
  $region3: #{_lambda_.11} parent=0 // pred_check_branch
    %12 = sbr.rel (0) target = $region5
  $region4: #{_lambda_.11} parent=0 // pred_region
    _
  $region5: #{_lambda_.11} parent=0 // pred_fallthru
    _
  // Predicated region
  $region6: #{_lambda_.11} parent=0 // pred_check
    _
  $region7: #{_lambda_.11} parent=0 // pred_check_branch
    %14 = sbr.rel (0) target = $region9
  $region8: #{_lambda_.11} parent=0 // pred_region
    _
  $region9: #{_lambda_.11} parent=0 // pred_fallthru
    _
  // Predicated region
  $region10: #{_lambda_.11} parent=0 // pred_check
    _
  $region11: #{_lambda_.11} parent=0 // pred_check_branch
    %16 = sbr.rel (0) target = $region13
  $region12: #{_lambda_.11} parent=0 // pred_region
    _
  $region13: #{_lambda_.11} parent=0 // pred_fallthru
    _
  %p18 = scmp.eq.s32.totalorder 0, 0
  // Predicated region
  $region14: #{_lambda_.11} parent=0 // pred_check
    %p19 = pneg %p18
  $region15: #{_lambda_.11} parent=0 // pred_check_branch
    %21 = sbr.rel (%p19) target = $region17
  $region16: #{_lambda_.11} parent=0 // pred_region
    %22 = vst [vmem:[#allocation2] sm:$0xff] 0.0
    %23 = vst [vmem:[#allocation2 + $0x8] sm:$0xff] 0.0
    %24 = vst [vmem:[#allocation2 + $0x10] sm:$0xff] 0.0
    %25 = vst [vmem:[#allocation2 + $0x18] sm:$0xff] 0.0
  $region17: #{_lambda_.11} parent=0 // pred_fallthru
    _
  %v26 = vld [vmem:[#allocation2] sm:$0xff]
  %v27 = vld [vmem:[#allocation2 + $0x8] sm:$0xff]
  %v28 = vld [vmem:[#allocation2 + $0x10] sm:$0xff]
  %v29 = vld [vmem:[#allocation2 + $0x18] sm:$0xff]
  %v30 = vld [vmem:[%s0] sm:$0xff]
  %v31 = vld [vmem:[%s0 + $0x8] sm:$0xff]
  %v32 = vld [vmem:[%s0 + $0x10] sm:$0xff]
  %v33 = vld [vmem:[%s0 + $0x18] sm:$0xff]
  %v34 = vld [vmem:[%s0 + $0x20] sm:$0xff]
  %v35 = vld [vmem:[%s0 + $0x28] sm:$0xff]
  %v36 = vld [vmem:[%s0 + $0x30] sm:$0xff]
  %v37 = vld [vmem:[%s0 + $0x38] sm:$0xff]
  %v38 = vld [vmem:[%s0 + $0x40] sm:$0xff]
  %v39 = vld [vmem:[%s0 + $0x48] sm:$0xff]
  %v40 = vld [vmem:[%s0 + $0x50] sm:$0xff]
  %v41 = vld [vmem:[%s0 + $0x58] sm:$0xff]
  %v42 = vld [vmem:[%s0 + $0x60] sm:$0xf]
  %v43 = vld [vmem:[%s0 + $0x64] sm:$0xff]
  %v44 = vld [vmem:[%s0 + $0x6c] sm:$0xff]
  %v45 = vld [vmem:[%s0 + $0x74] sm:$0xff]
  %v46 = vld [vmem:[%s0 + $0x7c] sm:$0xff]
  %v47 = vld [vmem:[%s0 + $0x84] sm:$0xff]
  %v48 = vld [vmem:[%s0 + $0x8c] sm:$0xff]
  %v49 = vld [vmem:[%s0 + $0x94] sm:$0xff]
  %v50 = vld [vmem:[%s0 + $0x9c] sm:$0xff]
  %v51 = vld [vmem:[%s0 + $0xa4] sm:$0xff]
  %v52 = vld [vmem:[%s0 + $0xac] sm:$0xff]
  %v53 = vld [vmem:[%s0 + $0xb4] sm:$0xff]
  %v54 = vld [vmem:[%s0 + $0xbc] sm:$0xff]
  %v55 = vld [vmem:[%s0 + $0xc4] sm:$0xf]
  %v56 = vld [vmem:[%s0 + $0xc8] sm:$0xff]
  %v57 = vld [vmem:[%s0 + $0xd0] sm:$0xff]
  %v58 = vld [vmem:[%s0 + $0xd8] sm:$0xff]
  %v59 = vld [vmem:[%s0 + $0xe0] sm:$0xff]
  %v60 = vld [vmem:[%s0 + $0xe8] sm:$0xff]
  %v61 = vld [vmem:[%s0 + $0xf0] sm:$0xff]
  %v62 = vld [vmem:[%s0 + $0xf8] sm:$0xff]
  %v63 = vld [vmem:[%s0 + $0x100] sm:$0xff]
  %v64 = vld [vmem:[%s0 + $0x108] sm:$0xff]
  %v65 = vld [vmem:[%s0 + $0x110] sm:$0xff]
  %v66 = vld [vmem:[%s0 + $0x118] sm:$0xff]
  %v67 = vld [vmem:[%s0 + $0x120] sm:$0xff]
  %v68 = vld [vmem:[%s0 + $0x128] sm:$0xf]
  %v69 = vld [vmem:[%s0 + $0x12c] sm:$0xff]
  %v70 = vld [vmem:[%s0 + $0x134] sm:$0xff]
  %v71 = vld [vmem:[%s0 + $0x13c] sm:$0xff]
  %v72 = vld [vmem:[%s0 + $0x144] sm:$0xff]
  %v73 = vld [vmem:[%s0 + $0x14c] sm:$0xff]
  %v74 = vld [vmem:[%s0 + $0x154] sm:$0xff]
  %v75 = vld [vmem:[%s0 + $0x15c] sm:$0xff]
  %v76 = vld [vmem:[%s0 + $0x164] sm:$0xff]
  %v77 = vld [vmem:[%s0 + $0x16c] sm:$0xff]
  %v78 = vld [vmem:[%s0 + $0x174] sm:$0xff]
  %v79 = vld [vmem:[%s0 + $0x17c] sm:$0xff]
  %v80 = vld [vmem:[%s0 + $0x184] sm:$0xff]
  %v81 = vld [vmem:[%s0 + $0x18c] sm:$0xf]
  %v82 = vld [vmem:[%s1] sm:$0xf]
  %v83 = vld [vmem:[%s1 + $0x4] sm:$0xf]
  %v84 = vld [vmem:[%s1 + $0x8] sm:$0xf]
  %v85 = vld [vmem:[%s1 + $0xc] sm:$0xf]
  %v86 = vld [vmem:[%s1 + $0x10] sm:$0xf]
  %v87 = vld [vmem:[%s1 + $0x14] sm:$0xf]
  %v88 = vld [vmem:[%s1 + $0x18] sm:$0xf]
  %v89 = vld [vmem:[%s1 + $0x1c] sm:$0xf]
  %v90 = vld [vmem:[%s1 + $0x20] sm:$0xf]
  %v91 = vld [vmem:[%s1 + $0x24] sm:$0xf]
  %v92 = vld [vmem:[%s1 + $0x28] sm:$0xf]
  %v93 = vld [vmem:[%s1 + $0x2c] sm:$0xf]
  %v94 = vld [vmem:[%s1 + $0x30] sm:$0xf]
  %v95 = vld [vmem:[%s1 + $0x34] sm:$0xf]
  %v96 = vld [vmem:[%s1 + $0x38] sm:$0xf]
  %v97 = vld [vmem:[%s1 + $0x3c] sm:$0xf]
  %v98 = vld [vmem:[%s1 + $0x40] sm:$0xf]
  %v99 = vld [vmem:[%s1 + $0x44] sm:$0xf]
  %v100 = vld [vmem:[%s1 + $0x48] sm:$0xf]
  %v101 = vld [vmem:[%s1 + $0x4c] sm:$0xf]
  %v102 = vld [vmem:[%s1 + $0x50] sm:$0xf]
  %v103 = vld [vmem:[%s1 + $0x54] sm:$0xf]
  %v104 = vld [vmem:[%s1 + $0x58] sm:$0xf]
  %v105 = vld [vmem:[%s1 + $0x5c] sm:$0xf]
  %v106 = vld [vmem:[%s1 + $0x60] sm:$0xf]
  %v107 = vld [vmem:[%s1 + $0x64] sm:$0xf]
  %v108 = vld [vmem:[%s1 + $0x68] sm:$0xf]
  %v109 = vld [vmem:[%s1 + $0x6c] sm:$0xf]
  %v110 = vld [vmem:[%s1 + $0x70] sm:$0xf]
  %v111 = vld [vmem:[%s1 + $0x74] sm:$0xf]
  %v112 = vld [vmem:[%s1 + $0x78] sm:$0xf]
  %v113 = vld [vmem:[%s1 + $0x7c] sm:$0xf]
  %v114 = vld [vmem:[%s1 + $0x80] sm:$0xf]
  %v115 = vld [vmem:[%s1 + $0x84] sm:$0xf]
  %v116 = vld [vmem:[%s1 + $0x88] sm:$0xf]
  %v117 = vld [vmem:[%s1 + $0x8c] sm:$0xf]
  %v118 = vld [vmem:[%s1 + $0x90] sm:$0xf]
  %v119 = vld [vmem:[%s1 + $0x94] sm:$0xf]
  %v120 = vld [vmem:[%s1 + $0x98] sm:$0xf]
  %v121 = vld [vmem:[%s1 + $0x9c] sm:$0xf]
  %v122 = vld [vmem:[%s1 + $0xa0] sm:$0xf]
  %v123 = vld [vmem:[%s1 + $0xa4] sm:$0xf]
  %v124 = vld [vmem:[%s1 + $0xa8] sm:$0xf]
  %v125 = vld [vmem:[%s1 + $0xac] sm:$0xf]
  %v126 = vld [vmem:[%s1 + $0xb0] sm:$0xf]
  %v127 = vld [vmem:[%s1 + $0xb4] sm:$0xf]
  %v128 = vld [vmem:[%s1 + $0xb8] sm:$0xf]
  %v129 = vld [vmem:[%s1 + $0xbc] sm:$0xf]
  %v130 = vld [vmem:[%s1 + $0xc0] sm:$0xf]
  %v131 = vld [vmem:[%s1 + $0xc4] sm:$0xf]
  %v132 = vld [vmem:[%s1 + $0xc8] sm:$0xf]
  %v133 = vld [vmem:[%s1 + $0xcc] sm:$0xf]
  %v134 = vld [vmem:[%s1 + $0xd0] sm:$0xf]
  %v135 = vld [vmem:[%s1 + $0xd4] sm:$0xf]
  %v136 = vld [vmem:[%s1 + $0xd8] sm:$0xf]
  %v137 = vld [vmem:[%s1 + $0xdc] sm:$0xf]
  %v138 = vld [vmem:[%s1 + $0xe0] sm:$0xf]
  %v139 = vld [vmem:[%s1 + $0xe4] sm:$0xf]
  %v140 = vld [vmem:[%s1 + $0xe8] sm:$0xf]
  %v141 = vld [vmem:[%s1 + $0xec] sm:$0xf]
  %v142 = vld [vmem:[%s1 + $0xf0] sm:$0xf]
  %v143 = vld [vmem:[%s1 + $0xf4] sm:$0xf]
  %v144 = vld [vmem:[%s1 + $0xf8] sm:$0xf]
  %v145 = vld [vmem:[%s1 + $0xfc] sm:$0xf]
  %v146 = vld [vmem:[%s1 + $0x100] sm:$0xf]
  %v147 = vld [vmem:[%s1 + $0x104] sm:$0xf]
  %v148 = vld [vmem:[%s1 + $0x108] sm:$0xf]
  %v149 = vld [vmem:[%s1 + $0x10c] sm:$0xf]
  %v150 = vld [vmem:[%s1 + $0x110] sm:$0xf]
  %v151 = vld [vmem:[%s1 + $0x114] sm:$0xf]
  %v152 = vld [vmem:[%s1 + $0x118] sm:$0xf]
  %v153 = vld [vmem:[%s1 + $0x11c] sm:$0xf]
  %v154 = vld [vmem:[%s1 + $0x120] sm:$0xf]
  %v155 = vld [vmem:[%s1 + $0x124] sm:$0xf]
  %v156 = vld [vmem:[%s1 + $0x128] sm:$0xf]
  %v157 = vld [vmem:[%s1 + $0x12c] sm:$0xf]
  %v158 = vld [vmem:[%s1 + $0x130] sm:$0xf]
  %v159 = vld [vmem:[%s1 + $0x134] sm:$0xf]
  %v160 = vld [vmem:[%s1 + $0x138] sm:$0xf]
  %v161 = vld [vmem:[%s1 + $0x13c] sm:$0xf]
  %v162 = vld [vmem:[%s1 + $0x140] sm:$0xf]
  %v163 = vld [vmem:[%s1 + $0x144] sm:$0xf]
  %v164 = vld [vmem:[%s1 + $0x148] sm:$0xf]
  %v165 = vld [vmem:[%s1 + $0x14c] sm:$0xf]
  %v166 = vld [vmem:[%s1 + $0x150] sm:$0xf]
  %v167 = vld [vmem:[%s1 + $0x154] sm:$0xf]
  %v168 = vld [vmem:[%s1 + $0x158] sm:$0xf]
  %v169 = vld [vmem:[%s1 + $0x15c] sm:$0xf]
  %v170 = vld [vmem:[%s1 + $0x160] sm:$0xf]
  %v171 = vld [vmem:[%s1 + $0x164] sm:$0xf]
  %v172 = vld [vmem:[%s1 + $0x168] sm:$0xf]
  %v173 = vld [vmem:[%s1 + $0x16c] sm:$0xf]
  %v174 = vld [vmem:[%s1 + $0x170] sm:$0xf]
  %v175 = vld [vmem:[%s1 + $0x174] sm:$0xf]
  %v176 = vld [vmem:[%s1 + $0x178] sm:$0xf]
  %v177 = vld [vmem:[%s1 + $0x17c] sm:$0xf]
  %v178 = vld [vmem:[%s1 + $0x180] sm:$0xf]
  %v179 = vld [vmem:[%s1 + $0x184] sm:$0xf]
  %v180 = vld [vmem:[%s1 + $0x188] sm:$0xf]
  %v181 = vld [vmem:[%s1 + $0x18c] sm:$0xf]
  %v182 = vld [vmem:[%s1 + $0x190] sm:$0xf]
  %v183 = vld [vmem:[%s1 + $0x194] sm:$0xf]
  %v184 = vld [vmem:[%s1 + $0x198] sm:$0xf]
  %v185 = vld [vmem:[%s1 + $0x19c] sm:$0xf]
  %v186 = vld [vmem:[%s1 + $0x1a0] sm:$0xf]
  %v187 = vld [vmem:[%s1 + $0x1a4] sm:$0xf]
  %v188 = vld [vmem:[%s1 + $0x1a8] sm:$0xf]
  %v189 = vld [vmem:[%s1 + $0x1ac] sm:$0xf]
  %v190 = vld [vmem:[%s1 + $0x1b0] sm:$0xf]
  %v191 = vld [vmem:[%s1 + $0x1b4] sm:$0xf]
  %v192 = vld [vmem:[%s1 + $0x1b8] sm:$0xf]
  %v193 = vld [vmem:[%s1 + $0x1bc] sm:$0xf]
  %v194 = vld [vmem:[%s1 + $0x1c0] sm:$0xf]
  %v195 = vld [vmem:[%s1 + $0x1c4] sm:$0xf]
  %v196 = vld [vmem:[%s1 + $0x1c8] sm:$0xf]
  %v197 = vld [vmem:[%s1 + $0x1cc] sm:$0xf]
  %v198 = vld [vmem:[%s1 + $0x1d0] sm:$0xf]
  %v199 = vld [vmem:[%s1 + $0x1d4] sm:$0xf]
  %v200 = vld [vmem:[%s1 + $0x1d8] sm:$0xf]
  %v201 = vld [vmem:[%s1 + $0x1dc] sm:$0xf]
  %v202 = vld [vmem:[%s1 + $0x1e0] sm:$0xf]
  %v203 = vld [vmem:[%s1 + $0x1e4] sm:$0xf]
  %v204 = vld [vmem:[%s1 + $0x1e8] sm:$0xf]
  %v205 = vld [vmem:[%s1 + $0x1ec] sm:$0xf]
  %v206 = vld [vmem:[%s1 + $0x1f0] sm:$0xf]
  %v207 = vld [vmem:[%s1 + $0x1f4] sm:$0xf]
  %v208 = vld [vmem:[%s1 + $0x1f8] sm:$0xf]
  %v209 = vld [vmem:[%s1 + $0x1fc] sm:$0xf]
  %v210 = vld [vmem:[%s1 + $0x200] sm:$0xf]
  %v211 = vld [vmem:[%s1 + $0x204] sm:$0xf]
  %v212 = vld [vmem:[%s1 + $0x208] sm:$0xf]
  %v213 = vld [vmem:[%s1 + $0x20c] sm:$0xf]
  %v214 = vld [vmem:[%s1 + $0x210] sm:$0xf]
  %v215 = vld [vmem:[%s1 + $0x214] sm:$0xf]
  %v216 = vld [vmem:[%s1 + $0x218] sm:$0xf]
  %v217 = vld [vmem:[%s1 + $0x21c] sm:$0xf]
  %v218 = vld [vmem:[%s1 + $0x220] sm:$0xf]
  %v219 = vld [vmem:[%s1 + $0x224] sm:$0xf]
  %v220 = vld [vmem:[%s1 + $0x228] sm:$0xf]
  %v221 = vld [vmem:[%s1 + $0x22c] sm:$0xf]
  %v222 = vld [vmem:[%s1 + $0x230] sm:$0xf]
  %v223 = vld [vmem:[%s1 + $0x234] sm:$0xf]
  %v224 = vld [vmem:[%s1 + $0x238] sm:$0xf]
  %v225 = vld [vmem:[%s1 + $0x23c] sm:$0xf]
  %v226 = vld [vmem:[%s1 + $0x240] sm:$0xf]
  %v227 = vld [vmem:[%s1 + $0x244] sm:$0xf]
  %v228 = vld [vmem:[%s1 + $0x248] sm:$0xf]
  %v229 = vld [vmem:[%s1 + $0x24c] sm:$0xf]
  %v230 = vld [vmem:[%s1 + $0x250] sm:$0xf]
  %v231 = vld [vmem:[%s1 + $0x254] sm:$0xf]
  %v232 = vld [vmem:[%s1 + $0x258] sm:$0xf]
  %v233 = vld [vmem:[%s1 + $0x25c] sm:$0xf]
  %v234 = vld [vmem:[%s1 + $0x260] sm:$0xf]
  %v235 = vld [vmem:[%s1 + $0x264] sm:$0xf]
  %v236 = vld [vmem:[%s1 + $0x268] sm:$0xf]
  %v237 = vld [vmem:[%s1 + $0x26c] sm:$0xf]
  %v238 = vld [vmem:[%s1 + $0x270] sm:$0xf]
  %v239 = vld [vmem:[%s1 + $0x274] sm:$0xf]
  %v240 = vld [vmem:[%s1 + $0x278] sm:$0xf]
  %v241 = vld [vmem:[%s1 + $0x27c] sm:$0xf]
  %v242 = vld [vmem:[%s1 + $0x280] sm:$0xf]
  %v243 = vld [vmem:[%s1 + $0x284] sm:$0xf]
  %v244 = vld [vmem:[%s1 + $0x288] sm:$0xf]
  %v245 = vld [vmem:[%s1 + $0x28c] sm:$0xf]
  %v246 = vld [vmem:[%s1 + $0x290] sm:$0xf]
  %v247 = vld [vmem:[%s1 + $0x294] sm:$0xf]
  %v248 = vld [vmem:[%s1 + $0x298] sm:$0xf]
  %v249 = vld [vmem:[%s1 + $0x29c] sm:$0xf]
  %v250 = vld [vmem:[%s1 + $0x2a0] sm:$0xf]
  %v251 = vld [vmem:[%s1 + $0x2a4] sm:$0xf]
  %v252 = vld [vmem:[%s1 + $0x2a8] sm:$0xf]
  %v253 = vld [vmem:[%s1 + $0x2ac] sm:$0xf]
  %v254 = vld [vmem:[%s1 + $0x2b0] sm:$0xf]
  %v255 = vld [vmem:[%s1 + $0x2b4] sm:$0xf]
  %v256 = vld [vmem:[%s1 + $0x2b8] sm:$0xf]
  %v257 = vld [vmem:[%s1 + $0x2bc] sm:$0xf]
  %v258 = vld [vmem:[%s1 + $0x2c0] sm:$0xf]
  %v259 = vld [vmem:[%s1 + $0x2c4] sm:$0xf]
  %v260 = vld [vmem:[%s1 + $0x2c8] sm:$0xf]
  %v261 = vld [vmem:[%s1 + $0x2cc] sm:$0xf]
  %v262 = vld [vmem:[%s1 + $0x2d0] sm:$0xf]
  %v263 = vld [vmem:[%s1 + $0x2d4] sm:$0xf]
  %v264 = vld [vmem:[%s1 + $0x2d8] sm:$0xf]
  %v265 = vld [vmem:[%s1 + $0x2dc] sm:$0xf]
  %v266 = vld [vmem:[%s1 + $0x2e0] sm:$0xf]
  %v267 = vld [vmem:[%s1 + $0x2e4] sm:$0xf]
  %v268 = vld [vmem:[%s1 + $0x2e8] sm:$0xf]
  %v269 = vld [vmem:[%s1 + $0x2ec] sm:$0xf]
  %v270 = vld [vmem:[%s1 + $0x2f0] sm:$0xf]
  %v271 = vld [vmem:[%s1 + $0x2f4] sm:$0xf]
  %v272 = vld [vmem:[%s1 + $0x2f8] sm:$0xf]
  %v273 = vld [vmem:[%s1 + $0x2fc] sm:$0xf]
  %v274 = vld [vmem:[%s1 + $0x300] sm:$0xf]
  %v275 = vld [vmem:[%s1 + $0x304] sm:$0xf]
  %v276 = vld [vmem:[%s1 + $0x308] sm:$0xf]
  %v277 = vld [vmem:[%s1 + $0x30c] sm:$0xf]
  %v278 = vld [vmem:[%s1 + $0x310] sm:$0xf]
  %v279 = vld [vmem:[%s1 + $0x314] sm:$0xf]
  %v280 = vld [vmem:[%s1 + $0x318] sm:$0xf]
  %v281 = vld [vmem:[%s1 + $0x31c] sm:$0xf]
  %v282 = vld [vmem:[%s1 + $0x320] sm:$0xf]
  %v283 = vld [vmem:[%s1 + $0x324] sm:$0xf]
  %v284 = vld [vmem:[%s1 + $0x328] sm:$0xf]
  %v285 = vld [vmem:[%s1 + $0x32c] sm:$0xf]
  %v286 = vld [vmem:[%s1 + $0x330] sm:$0xf]
  %v287 = vld [vmem:[%s1 + $0x334] sm:$0xf]
  %v288 = vld [vmem:[%s1 + $0x338] sm:$0xf]
  %v289 = vld [vmem:[%s1 + $0x33c] sm:$0xf]
  %v290 = vld [vmem:[%s1 + $0x340] sm:$0xf]
  %v291 = vld [vmem:[%s1 + $0x344] sm:$0xf]
  %v292 = vld [vmem:[%s1 + $0x348] sm:$0xf]
  %v293 = vld [vmem:[%s1 + $0x34c] sm:$0xf]
  %v294 = vld [vmem:[%s1 + $0x350] sm:$0xf]
  %v295 = vld [vmem:[%s1 + $0x354] sm:$0xf]
  %v296 = vld [vmem:[%s1 + $0x358] sm:$0xf]
  %v297 = vld [vmem:[%s1 + $0x35c] sm:$0xf]
  %v298 = vld [vmem:[%s1 + $0x360] sm:$0xf]
  %v299 = vld [vmem:[%s1 + $0x364] sm:$0xf]
  %v300 = vld [vmem:[%s1 + $0x368] sm:$0xf]
  %v301 = vld [vmem:[%s1 + $0x36c] sm:$0xf]
  %v302 = vld [vmem:[%s1 + $0x370] sm:$0xf]
  %v303 = vld [vmem:[%s1 + $0x374] sm:$0xf]
  %v304 = vld [vmem:[%s1 + $0x378] sm:$0xf]
  %v305 = vld [vmem:[%s1 + $0x37c] sm:$0xf]
  %v306 = vld [vmem:[%s1 + $0x380] sm:$0xf]
  %v307 = vld [vmem:[%s1 + $0x384] sm:$0xf]
  %v308 = vld [vmem:[%s1 + $0x388] sm:$0xf]
  %v309 = vld [vmem:[%s1 + $0x38c] sm:$0xf]
  %v310 = vld [vmem:[%s1 + $0x390] sm:$0xf]
  %v311 = vld [vmem:[%s1 + $0x394] sm:$0xf]
  %v312 = vld [vmem:[%s1 + $0x398] sm:$0xf]
  %v313 = vld [vmem:[%s1 + $0x39c] sm:$0xf]
  %v314 = vld [vmem:[%s1 + $0x3a0] sm:$0xf]
  %v315 = vld [vmem:[%s1 + $0x3a4] sm:$0xf]
  %v316 = vld [vmem:[%s1 + $0x3a8] sm:$0xf]
  %v317 = vld [vmem:[%s1 + $0x3ac] sm:$0xf]
  %v318 = vld [vmem:[%s1 + $0x3b0] sm:$0xf]
  %v319 = vld [vmem:[%s1 + $0x3b4] sm:$0xf]
  %v320 = vld [vmem:[%s1 + $0x3b8] sm:$0xf]
  %v321 = vld [vmem:[%s1 + $0x3bc] sm:$0xf]
  %v322 = vld [vmem:[%s1 + $0x3c0] sm:$0xf]
  %v323 = vld [vmem:[%s1 + $0x3c4] sm:$0xf]
  %v324 = vld [vmem:[%s1 + $0x3c8] sm:$0xf]
  %v325 = vld [vmem:[%s1 + $0x3cc] sm:$0xf]
  %v326 = vld [vmem:[%s1 + $0x3d0] sm:$0xf]
  %v327 = vld [vmem:[%s1 + $0x3d4] sm:$0xf]
  %v328 = vld [vmem:[%s1 + $0x3d8] sm:$0xf]
  %v329 = vld [vmem:[%s1 + $0x3dc] sm:$0xf]
  %v330 = vld [vmem:[%s1 + $0x3e0] sm:$0xf]
  %v331 = vld [vmem:[%s1 + $0x3e4] sm:$0xf]
  %v332 = vld [vmem:[%s1 + $0x3e8] sm:$0xf]
  %v333 = vld [vmem:[%s1 + $0x3ec] sm:$0xf]
  %v334 = vld [vmem:[%s1 + $0x3f0] sm:$0xf]
  %v335 = vld [vmem:[%s1 + $0x3f4] sm:$0xf]
  %v336 = vld [vmem:[%s1 + $0x3f8] sm:$0xf]
  %v337 = vld [vmem:[%s1 + $0x3fc] sm:$0xf]
  %v338 = vld [vmem:[%s1 + $0x400] sm:$0xf]
  %v339 = vld [vmem:[%s1 + $0x404] sm:$0xf]
  %v340 = vld [vmem:[%s1 + $0x408] sm:$0xf]
  %v341 = vld [vmem:[%s1 + $0x40c] sm:$0xf]
  %v342 = vld [vmem:[%s1 + $0x410] sm:$0xf]
  %v343 = vld [vmem:[%s1 + $0x414] sm:$0xf]
  %v344 = vld [vmem:[%s1 + $0x418] sm:$0xf]
  %v345 = vld [vmem:[%s1 + $0x41c] sm:$0xf]
  %v346 = vld [vmem:[%s1 + $0x420] sm:$0xf]
  %v347 = vld [vmem:[%s1 + $0x424] sm:$0xf]
  %v348 = vld [vmem:[%s1 + $0x428] sm:$0xf]
  %v349 = vld [vmem:[%s1 + $0x42c] sm:$0xf]
  %v350 = vld [vmem:[%s1 + $0x430] sm:$0xf]
  %v351 = vld [vmem:[%s1 + $0x434] sm:$0xf]
  %v352 = vld [vmem:[%s1 + $0x438] sm:$0xf]
  %v353 = vld [vmem:[%s1 + $0x43c] sm:$0xf]
  %v354 = vld [vmem:[%s1 + $0x440] sm:$0xf]
  %v355 = vld [vmem:[%s1 + $0x444] sm:$0xf]
  %v356 = vld [vmem:[%s1 + $0x448] sm:$0xf]
  %v357 = vld [vmem:[%s1 + $0x44c] sm:$0xf]
  %v358 = vld [vmem:[%s1 + $0x450] sm:$0xf]
  %v359 = vld [vmem:[%s1 + $0x454] sm:$0xf]
  %v360 = vld [vmem:[%s1 + $0x458] sm:$0xf]
  %v361 = vld [vmem:[%s1 + $0x45c] sm:$0xf]
  %v362 = vld [vmem:[%s1 + $0x460] sm:$0xf]
  %v363 = vld [vmem:[%s1 + $0x464] sm:$0xf]
  %v364 = vld [vmem:[%s1 + $0x468] sm:$0xf]
  %v365 = vld [vmem:[%s1 + $0x46c] sm:$0xf]
  %v366 = vld [vmem:[%s1 + $0x470] sm:$0xf]
  %v367 = vld [vmem:[%s1 + $0x474] sm:$0xf]
  %v368 = vld [vmem:[%s1 + $0x478] sm:$0xf]
  %v369 = vld [vmem:[%s1 + $0x47c] sm:$0xf]
  %v370 = vld [vmem:[%s1 + $0x480] sm:$0xf]
  %v371 = vld [vmem:[%s1 + $0x484] sm:$0xf]
  %v372 = vld [vmem:[%s1 + $0x488] sm:$0xf]
  %v373 = vld [vmem:[%s1 + $0x48c] sm:$0xf]
  %v374 = vld [vmem:[%s1 + $0x490] sm:$0xf]
  %v375 = vld [vmem:[%s1 + $0x494] sm:$0xf]
  %v376 = vld [vmem:[%s1 + $0x498] sm:$0xf]
  %v377 = vld [vmem:[%s1 + $0x49c] sm:$0xf]
  %v378 = vld [vmem:[%s1 + $0x4a0] sm:$0xf]
  %v379 = vld [vmem:[%s1 + $0x4a4] sm:$0xf]
  %v380 = vld [vmem:[%s1 + $0x4a8] sm:$0xf]
  %v381 = vld [vmem:[%s1 + $0x4ac] sm:$0xf]
  %v382 = vld [vmem:[%s1 + $0x4b0] sm:$0xf]
  %v383 = vld [vmem:[%s1 + $0x4b4] sm:$0xf]
  %v384 = vld [vmem:[%s1 + $0x4b8] sm:$0xf]
  %v385 = vld [vmem:[%s1 + $0x4bc] sm:$0xf]
  %v386 = vld [vmem:[%s1 + $0x4c0] sm:$0xf]
  %v387 = vld [vmem:[%s1 + $0x4c4] sm:$0xf]
  %v388 = vld [vmem:[%s1 + $0x4c8] sm:$0xf]
  %v389 = vld [vmem:[%s1 + $0x4cc] sm:$0xf]
  %v390 = vld [vmem:[%s1 + $0x4d0] sm:$0xf]
  %v391 = vld [vmem:[%s1 + $0x4d4] sm:$0xf]
  %v392 = vld [vmem:[%s1 + $0x4d8] sm:$0xf]
  %v393 = vld [vmem:[%s1 + $0x4dc] sm:$0xf]
  %v394 = vld [vmem:[%s1 + $0x4e0] sm:$0xf]
  %v395 = vld [vmem:[%s1 + $0x4e4] sm:$0xf]
  %v396 = vld [vmem:[%s1 + $0x4e8] sm:$0xf]
  %v397 = vld [vmem:[%s1 + $0x4ec] sm:$0xf]
  %v398 = vld [vmem:[%s1 + $0x4f0] sm:$0xf]
  %v399 = vld [vmem:[%s1 + $0x4f4] sm:$0xf]
  %v400 = vld [vmem:[%s1 + $0x4f8] sm:$0xf]
  %v401 = vld [vmem:[%s1 + $0x4fc] sm:$0xf]
  %v402 = vld [vmem:[%s1 + $0x500] sm:$0xf]
  %v403 = vld [vmem:[%s1 + $0x504] sm:$0xf]
  %v404 = vld [vmem:[%s1 + $0x508] sm:$0xf]
  %v405 = vld [vmem:[%s1 + $0x50c] sm:$0xf]
  %v406 = vld [vmem:[%s1 + $0x510] sm:$0xf]
  %v407 = vld [vmem:[%s1 + $0x514] sm:$0xf]
  %v408 = vld [vmem:[%s1 + $0x518] sm:$0xf]
  %v409 = vld [vmem:[%s1 + $0x51c] sm:$0xf]
  %v410 = vld [vmem:[%s1 + $0x520] sm:$0xf]
  %v411 = vld [vmem:[%s1 + $0x524] sm:$0xf]
  %v412 = vld [vmem:[%s1 + $0x528] sm:$0xf]
  %v413 = vld [vmem:[%s1 + $0x52c] sm:$0xf]
  %v414 = vld [vmem:[%s1 + $0x530] sm:$0xf]
  %v415 = vld [vmem:[%s1 + $0x534] sm:$0xf]
  %v416 = vld [vmem:[%s1 + $0x538] sm:$0xf]
  %v417 = vld [vmem:[%s1 + $0x53c] sm:$0xf]
  %v418 = vld [vmem:[%s1 + $0x540] sm:$0xf]
  %v419 = vld [vmem:[%s1 + $0x544] sm:$0xf]
  %v420 = vld [vmem:[%s1 + $0x548] sm:$0xf]
  %v421 = vld [vmem:[%s1 + $0x54c] sm:$0xf]
  %v422 = vld [vmem:[%s1 + $0x550] sm:$0xf]
  %v423 = vld [vmem:[%s1 + $0x554] sm:$0xf]
  %v424 = vld [vmem:[%s1 + $0x558] sm:$0xf]
  %v425 = vld [vmem:[%s1 + $0x55c] sm:$0xf]
  %v426 = vld [vmem:[%s1 + $0x560] sm:$0xf]
  %v427 = vld [vmem:[%s1 + $0x564] sm:$0xf]
  %v428 = vld [vmem:[%s1 + $0x568] sm:$0xf]
  %v429 = vld [vmem:[%s1 + $0x56c] sm:$0xf]
  %v430 = vld [vmem:[%s1 + $0x570] sm:$0xf]
  %v431 = vld [vmem:[%s1 + $0x574] sm:$0xf]
  %v432 = vld [vmem:[%s1 + $0x578] sm:$0xf]
  %v433 = vld [vmem:[%s1 + $0x57c] sm:$0xf]
  %v434 = vld [vmem:[%s1 + $0x580] sm:$0xf]
  %v435 = vld [vmem:[%s1 + $0x584] sm:$0xf]
  %v436 = vld [vmem:[%s1 + $0x588] sm:$0xf]
  %v437 = vld [vmem:[%s1 + $0x58c] sm:$0xf]
  %v438 = vld [vmem:[%s1 + $0x590] sm:$0xf]
  %v439 = vld [vmem:[%s1 + $0x594] sm:$0xf]
  %v440 = vld [vmem:[%s1 + $0x598] sm:$0xf]
  %v441 = vld [vmem:[%s1 + $0x59c] sm:$0xf]
  %v442 = vld [vmem:[%s1 + $0x5a0] sm:$0xf]
  %v443 = vld [vmem:[%s1 + $0x5a4] sm:$0xf]
  %v444 = vld [vmem:[%s1 + $0x5a8] sm:$0xf]
  %v445 = vld [vmem:[%s1 + $0x5ac] sm:$0xf]
  %v446 = vld [vmem:[%s1 + $0x5b0] sm:$0xf]
  %v447 = vld [vmem:[%s1 + $0x5b4] sm:$0xf]
  %v448 = vld [vmem:[%s1 + $0x5b8] sm:$0xf]
  %v449 = vld [vmem:[%s1 + $0x5bc] sm:$0xf]
  %v450 = vld [vmem:[%s1 + $0x5c0] sm:$0xf]
  %v451 = vld [vmem:[%s1 + $0x5c4] sm:$0xf]
  %v452 = vld [vmem:[%s1 + $0x5c8] sm:$0xf]
  %v453 = vld [vmem:[%s1 + $0x5cc] sm:$0xf]
  %v454 = vld [vmem:[%s1 + $0x5d0] sm:$0xf]
  %v455 = vld [vmem:[%s1 + $0x5d4] sm:$0xf]
  %v456 = vld [vmem:[%s1 + $0x5d8] sm:$0xf]
  %v457 = vld [vmem:[%s1 + $0x5dc] sm:$0xf]
  %v458 = vld [vmem:[%s1 + $0x5e0] sm:$0xf]
  %v459 = vld [vmem:[%s1 + $0x5e4] sm:$0xf]
  %v460 = vld [vmem:[%s1 + $0x5e8] sm:$0xf]
  %v461 = vld [vmem:[%s1 + $0x5ec] sm:$0xf]
  %v462 = vld [vmem:[%s1 + $0x5f0] sm:$0xf]
  %v463 = vld [vmem:[%s1 + $0x5f4] sm:$0xf]
  %v464 = vld [vmem:[%s1 + $0x5f8] sm:$0xf]
  %v465 = vld [vmem:[%s1 + $0x5fc] sm:$0xf]
  %v466 = vld [vmem:[%s1 + $0x600] sm:$0xf]
  %v467 = vld [vmem:[%s1 + $0x604] sm:$0xf]
  %v468 = vld [vmem:[%s1 + $0x608] sm:$0xf]
  %v469 = vld [vmem:[%s1 + $0x60c] sm:$0xf]
  %v470 = vld [vmem:[%s1 + $0x610] sm:$0xf]
  %v471 = vld [vmem:[%s1 + $0x614] sm:$0xf]
  %v472 = vld [vmem:[%s1 + $0x618] sm:$0xf]
  %v473 = vld [vmem:[%s1 + $0x61c] sm:$0xf]
  %v474 = vld [vmem:[%s1 + $0x620] sm:$0xf]
  %v475 = vld [vmem:[%s1 + $0x624] sm:$0xf]
  %v476 = vld [vmem:[%s1 + $0x628] sm:$0xf]
  %v477 = vld [vmem:[%s1 + $0x62c] sm:$0xf]
  %v478 = vld [vmem:[%s1 + $0x630] sm:$0xf]
  %v479 = vld [vmem:[%s1 + $0x634] sm:$0xf]
  %v480 = vld [vmem:[%s1 + $0x638] sm:$0xf]
  %v481 = vld [vmem:[%s1 + $0x63c] sm:$0xf]
  %v534 = vunpack.c.l.b16 %v30
  %v535 = vunpack.c.h.b16 %v30
  %v536 = vunpack.c.l.b16 %v31
  %v537 = vunpack.c.h.b16 %v31
  %v538 = vunpack.c.l.b16 %v32
  %v539 = vunpack.c.h.b16 %v32
  %v540 = vunpack.c.l.b16 %v33
  %v541 = vunpack.c.h.b16 %v33
  %v542 = vunpack.c.l.b16 %v34
  %v543 = vunpack.c.h.b16 %v34
  %v544 = vunpack.c.l.b16 %v35
  %v545 = vunpack.c.h.b16 %v35
  %v546 = vunpack.c.l.b16 %v36
  %v547 = vunpack.c.h.b16 %v36
  %v548 = vunpack.c.l.b16 %v37
  %v549 = vunpack.c.h.b16 %v37
  %v550 = vunpack.c.l.b16 %v38
  %v551 = vunpack.c.h.b16 %v38
  %v552 = vunpack.c.l.b16 %v39
  %v553 = vunpack.c.h.b16 %v39
  %v554 = vunpack.c.l.b16 %v40
  %v555 = vunpack.c.h.b16 %v40
  %v556 = vunpack.c.l.b16 %v41
  %v557 = vunpack.c.h.b16 %v41
  %v558 = vunpack.c.l.b16 %v42
  %v559 = vunpack.c.l.b16 %v43
  %v560 = vunpack.c.h.b16 %v43
  %v561 = vunpack.c.l.b16 %v44
  %v562 = vunpack.c.h.b16 %v44
  %v563 = vunpack.c.l.b16 %v45
  %v564 = vunpack.c.h.b16 %v45
  %v565 = vunpack.c.l.b16 %v46
  %v566 = vunpack.c.h.b16 %v46
  %v567 = vunpack.c.l.b16 %v47
  %v568 = vunpack.c.h.b16 %v47
  %v569 = vunpack.c.l.b16 %v48
  %v570 = vunpack.c.h.b16 %v48
  %v571 = vunpack.c.l.b16 %v49
  %v572 = vunpack.c.h.b16 %v49
  %v573 = vunpack.c.l.b16 %v50
  %v574 = vunpack.c.h.b16 %v50
  %v575 = vunpack.c.l.b16 %v51
  %v576 = vunpack.c.h.b16 %v51
  %v577 = vunpack.c.l.b16 %v52
  %v578 = vunpack.c.h.b16 %v52
  %v579 = vunpack.c.l.b16 %v53
  %v580 = vunpack.c.h.b16 %v53
  %v581 = vunpack.c.l.b16 %v54
  %v582 = vunpack.c.h.b16 %v54
  %v583 = vunpack.c.l.b16 %v55
  %v584 = vunpack.c.l.b16 %v56
  %v585 = vunpack.c.h.b16 %v56
  %v586 = vunpack.c.l.b16 %v57
  %v587 = vunpack.c.h.b16 %v57
  %v588 = vunpack.c.l.b16 %v58
  %v589 = vunpack.c.h.b16 %v58
  %v590 = vunpack.c.l.b16 %v59
  %v591 = vunpack.c.h.b16 %v59
  %v592 = vunpack.c.l.b16 %v60
  %v593 = vunpack.c.h.b16 %v60
  %v594 = vunpack.c.l.b16 %v61
  %v595 = vunpack.c.h.b16 %v61
  %v596 = vunpack.c.l.b16 %v62
  %v597 = vunpack.c.h.b16 %v62
  %v598 = vunpack.c.l.b16 %v63
  %v599 = vunpack.c.h.b16 %v63
  %v600 = vunpack.c.l.b16 %v64
  %v601 = vunpack.c.h.b16 %v64
  %v602 = vunpack.c.l.b16 %v65
  %v603 = vunpack.c.h.b16 %v65
  %v604 = vunpack.c.l.b16 %v66
  %v605 = vunpack.c.h.b16 %v66
  %v606 = vunpack.c.l.b16 %v67
  %v607 = vunpack.c.h.b16 %v67
  %v608 = vunpack.c.l.b16 %v68
  %v609 = vunpack.c.l.b16 %v69
  %v610 = vunpack.c.h.b16 %v69
  %v611 = vunpack.c.l.b16 %v70
  %v612 = vunpack.c.h.b16 %v70
  %v613 = vunpack.c.l.b16 %v71
  %v614 = vunpack.c.h.b16 %v71
  %v615 = vunpack.c.l.b16 %v72
  %v616 = vunpack.c.h.b16 %v72
  %v617 = vunpack.c.l.b16 %v73
  %v618 = vunpack.c.h.b16 %v73
  %v619 = vunpack.c.l.b16 %v74
  %v620 = vunpack.c.h.b16 %v74
  %v621 = vunpack.c.l.b16 %v75
  %v622 = vunpack.c.h.b16 %v75
  %v623 = vunpack.c.l.b16 %v76
  %v624 = vunpack.c.h.b16 %v76
  %v625 = vunpack.c.l.b16 %v77
  %v626 = vunpack.c.h.b16 %v77
  %v627 = vunpack.c.l.b16 %v78
  %v628 = vunpack.c.h.b16 %v78
  %v629 = vunpack.c.l.b16 %v79
  %v630 = vunpack.c.h.b16 %v79
  %v631 = vunpack.c.l.b16 %v80
  %v632 = vunpack.c.h.b16 %v80
  %v633 = vunpack.c.l.b16 %v81
  %v634 = vpack.c.b16 %v559, %v534
  %v635 = vpack.c.b16 %v560, %v535
  %v636 = vpack.c.b16 %v561, %v536
  %v637 = vpack.c.b16 %v562, %v537
  %v638 = vpack.c.b16 %v563, %v538
  %v639 = vpack.c.b16 %v564, %v539
  %v640 = vpack.c.b16 %v565, %v540
  %v641 = vpack.c.b16 %v566, %v541
  %v642 = vpack.c.b16 %v567, %v542
  %v643 = vpack.c.b16 %v568, %v543
  %v644 = vpack.c.b16 %v569, %v544
  %v645 = vpack.c.b16 %v570, %v545
  %v646 = vpack.c.b16 %v571, %v546
  %v647 = vpack.c.b16 %v572, %v547
  %v648 = vpack.c.b16 %v573, %v548
  %v649 = vpack.c.b16 %v574, %v549
  %v650 = vpack.c.b16 %v575, %v550
  %v651 = vpack.c.b16 %v576, %v551
  %v652 = vpack.c.b16 %v577, %v552
  %v653 = vpack.c.b16 %v578, %v553
  %v654 = vpack.c.b16 %v579, %v554
  %v655 = vpack.c.b16 %v580, %v555
  %v656 = vpack.c.b16 %v581, %v556
  %v657 = vpack.c.b16 %v582, %v557
  %v658 = vpack.c.b16 %v583, %v558
  %v659 = vpack.c.b16 %v609, %v584
  %v660 = vpack.c.b16 %v610, %v585
  %v661 = vpack.c.b16 %v611, %v586
  %v662 = vpack.c.b16 %v612, %v587
  %v663 = vpack.c.b16 %v613, %v588
  %v664 = vpack.c.b16 %v614, %v589
  %v665 = vpack.c.b16 %v615, %v590
  %v666 = vpack.c.b16 %v616, %v591
  %v667 = vpack.c.b16 %v617, %v592
  %v668 = vpack.c.b16 %v618, %v593
  %v669 = vpack.c.b16 %v619, %v594
  %v670 = vpack.c.b16 %v620, %v595
  %v671 = vpack.c.b16 %v621, %v596
  %v672 = vpack.c.b16 %v622, %v597
  %v673 = vpack.c.b16 %v623, %v598
  %v674 = vpack.c.b16 %v624, %v599
  %v675 = vpack.c.b16 %v625, %v600
  %v676 = vpack.c.b16 %v626, %v601
  %v677 = vpack.c.b16 %v627, %v602
  %v678 = vpack.c.b16 %v628, %v603
  %v679 = vpack.c.b16 %v629, %v604
  %v680 = vpack.c.b16 %v630, %v605
  %v681 = vpack.c.b16 %v631, %v606
  %v682 = vpack.c.b16 %v632, %v607
  %v683 = vpack.c.b16 %v633, %v608
  %v1134 = vunpack.c.l.b16 %v82
  %v1135 = vunpack.c.l.b16 %v83
  %v1136 = vunpack.c.l.b16 %v84
  %v1137 = vunpack.c.l.b16 %v85
  %v1138 = vunpack.c.l.b16 %v86
  %v1139 = vunpack.c.l.b16 %v87
  %v1140 = vunpack.c.l.b16 %v88
  %v1141 = vunpack.c.l.b16 %v89
  %v1142 = vunpack.c.l.b16 %v90
  %v1143 = vunpack.c.l.b16 %v91
  %v1144 = vunpack.c.l.b16 %v92
  %v1145 = vunpack.c.l.b16 %v93
  %v1146 = vunpack.c.l.b16 %v94
  %v1147 = vunpack.c.l.b16 %v95
  %v1148 = vunpack.c.l.b16 %v96
  %v1149 = vunpack.c.l.b16 %v97
  %v1150 = vunpack.c.l.b16 %v98
  %v1151 = vunpack.c.l.b16 %v99
  %v1152 = vunpack.c.l.b16 %v100
  %v1153 = vunpack.c.l.b16 %v101
  %v1154 = vunpack.c.l.b16 %v102
  %v1155 = vunpack.c.l.b16 %v103
  %v1156 = vunpack.c.l.b16 %v104
  %v1157 = vunpack.c.l.b16 %v105
  %v1158 = vunpack.c.l.b16 %v106
  %v1159 = vunpack.c.l.b16 %v107
  %v1160 = vunpack.c.l.b16 %v108
  %v1161 = vunpack.c.l.b16 %v109
  %v1162 = vunpack.c.l.b16 %v110
  %v1163 = vunpack.c.l.b16 %v111
  %v1164 = vunpack.c.l.b16 %v112
  %v1165 = vunpack.c.l.b16 %v113
  %v1166 = vunpack.c.l.b16 %v114
  %v1167 = vunpack.c.l.b16 %v115
  %v1168 = vunpack.c.l.b16 %v116
  %v1169 = vunpack.c.l.b16 %v117
  %v1170 = vunpack.c.l.b16 %v118
  %v1171 = vunpack.c.l.b16 %v119
  %v1172 = vunpack.c.l.b16 %v120
  %v1173 = vunpack.c.l.b16 %v121
  %v1174 = vunpack.c.l.b16 %v122
  %v1175 = vunpack.c.l.b16 %v123
  %v1176 = vunpack.c.l.b16 %v124
  %v1177 = vunpack.c.l.b16 %v125
  %v1178 = vunpack.c.l.b16 %v126
  %v1179 = vunpack.c.l.b16 %v127
  %v1180 = vunpack.c.l.b16 %v128
  %v1181 = vunpack.c.l.b16 %v129
  %v1182 = vunpack.c.l.b16 %v130
  %v1183 = vunpack.c.l.b16 %v131
  %v1184 = vunpack.c.l.b16 %v132
  %v1185 = vunpack.c.l.b16 %v133
  %v1186 = vunpack.c.l.b16 %v134
  %v1187 = vunpack.c.l.b16 %v135
  %v1188 = vunpack.c.l.b16 %v136
  %v1189 = vunpack.c.l.b16 %v137
  %v1190 = vunpack.c.l.b16 %v138
  %v1191 = vunpack.c.l.b16 %v139
  %v1192 = vunpack.c.l.b16 %v140
  %v1193 = vunpack.c.l.b16 %v141
  %v1194 = vunpack.c.l.b16 %v142
  %v1195 = vunpack.c.l.b16 %v143
  %v1196 = vunpack.c.l.b16 %v144
  %v1197 = vunpack.c.l.b16 %v145
  %v1198 = vunpack.c.l.b16 %v146
  %v1199 = vunpack.c.l.b16 %v147
  %v1200 = vunpack.c.l.b16 %v148
  %v1201 = vunpack.c.l.b16 %v149
  %v1202 = vunpack.c.l.b16 %v150
  %v1203 = vunpack.c.l.b16 %v151
  %v1204 = vunpack.c.l.b16 %v152
  %v1205 = vunpack.c.l.b16 %v153
  %v1206 = vunpack.c.l.b16 %v154
  %v1207 = vunpack.c.l.b16 %v155
  %v1208 = vunpack.c.l.b16 %v156
  %v1209 = vunpack.c.l.b16 %v157
  %v1210 = vunpack.c.l.b16 %v158
  %v1211 = vunpack.c.l.b16 %v159
  %v1212 = vunpack.c.l.b16 %v160
  %v1213 = vunpack.c.l.b16 %v161
  %v1214 = vunpack.c.l.b16 %v162
  %v1215 = vunpack.c.l.b16 %v163
  %v1216 = vunpack.c.l.b16 %v164
  %v1217 = vunpack.c.l.b16 %v165
  %v1218 = vunpack.c.l.b16 %v166
  %v1219 = vunpack.c.l.b16 %v167
  %v1220 = vunpack.c.l.b16 %v168
  %v1221 = vunpack.c.l.b16 %v169
  %v1222 = vunpack.c.l.b16 %v170
  %v1223 = vunpack.c.l.b16 %v171
  %v1224 = vunpack.c.l.b16 %v172
  %v1225 = vunpack.c.l.b16 %v173
  %v1226 = vunpack.c.l.b16 %v174
  %v1227 = vunpack.c.l.b16 %v175
  %v1228 = vunpack.c.l.b16 %v176
  %v1229 = vunpack.c.l.b16 %v177
  %v1230 = vunpack.c.l.b16 %v178
  %v1231 = vunpack.c.l.b16 %v179
  %v1232 = vunpack.c.l.b16 %v180
  %v1233 = vunpack.c.l.b16 %v181
  %v1234 = vunpack.c.l.b16 %v182
  %v1235 = vunpack.c.l.b16 %v183
  %v1236 = vunpack.c.l.b16 %v184
  %v1237 = vunpack.c.l.b16 %v185
  %v1238 = vunpack.c.l.b16 %v186
  %v1239 = vunpack.c.l.b16 %v187
  %v1240 = vunpack.c.l.b16 %v188
  %v1241 = vunpack.c.l.b16 %v189
  %v1242 = vunpack.c.l.b16 %v190
  %v1243 = vunpack.c.l.b16 %v191
  %v1244 = vunpack.c.l.b16 %v192
  %v1245 = vunpack.c.l.b16 %v193
  %v1246 = vunpack.c.l.b16 %v194
  %v1247 = vunpack.c.l.b16 %v195
  %v1248 = vunpack.c.l.b16 %v196
  %v1249 = vunpack.c.l.b16 %v197
  %v1250 = vunpack.c.l.b16 %v198
  %v1251 = vunpack.c.l.b16 %v199
  %v1252 = vunpack.c.l.b16 %v200
  %v1253 = vunpack.c.l.b16 %v201
  %v1254 = vunpack.c.l.b16 %v202
  %v1255 = vunpack.c.l.b16 %v203
  %v1256 = vunpack.c.l.b16 %v204
  %v1257 = vunpack.c.l.b16 %v205
  %v1258 = vunpack.c.l.b16 %v206
  %v1259 = vunpack.c.l.b16 %v207
  %v1260 = vunpack.c.l.b16 %v208
  %v1261 = vunpack.c.l.b16 %v209
  %v1262 = vunpack.c.l.b16 %v210
  %v1263 = vunpack.c.l.b16 %v211
  %v1264 = vunpack.c.l.b16 %v212
  %v1265 = vunpack.c.l.b16 %v213
  %v1266 = vunpack.c.l.b16 %v214
  %v1267 = vunpack.c.l.b16 %v215
  %v1268 = vunpack.c.l.b16 %v216
  %v1269 = vunpack.c.l.b16 %v217
  %v1270 = vunpack.c.l.b16 %v218
  %v1271 = vunpack.c.l.b16 %v219
  %v1272 = vunpack.c.l.b16 %v220
  %v1273 = vunpack.c.l.b16 %v221
  %v1274 = vunpack.c.l.b16 %v222
  %v1275 = vunpack.c.l.b16 %v223
  %v1276 = vunpack.c.l.b16 %v224
  %v1277 = vunpack.c.l.b16 %v225
  %v1278 = vunpack.c.l.b16 %v226
  %v1279 = vunpack.c.l.b16 %v227
  %v1280 = vunpack.c.l.b16 %v228
  %v1281 = vunpack.c.l.b16 %v229
  %v1282 = vunpack.c.l.b16 %v230
  %v1283 = vunpack.c.l.b16 %v231
  %v1284 = vunpack.c.l.b16 %v232
  %v1285 = vunpack.c.l.b16 %v233
  %v1286 = vunpack.c.l.b16 %v234
  %v1287 = vunpack.c.l.b16 %v235
  %v1288 = vunpack.c.l.b16 %v236
  %v1289 = vunpack.c.l.b16 %v237
  %v1290 = vunpack.c.l.b16 %v238
  %v1291 = vunpack.c.l.b16 %v239
  %v1292 = vunpack.c.l.b16 %v240
  %v1293 = vunpack.c.l.b16 %v241
  %v1294 = vunpack.c.l.b16 %v242
  %v1295 = vunpack.c.l.b16 %v243
  %v1296 = vunpack.c.l.b16 %v244
  %v1297 = vunpack.c.l.b16 %v245
  %v1298 = vunpack.c.l.b16 %v246
  %v1299 = vunpack.c.l.b16 %v247
  %v1300 = vunpack.c.l.b16 %v248
  %v1301 = vunpack.c.l.b16 %v249
  %v1302 = vunpack.c.l.b16 %v250
  %v1303 = vunpack.c.l.b16 %v251
  %v1304 = vunpack.c.l.b16 %v252
  %v1305 = vunpack.c.l.b16 %v253
  %v1306 = vunpack.c.l.b16 %v254
  %v1307 = vunpack.c.l.b16 %v255
  %v1308 = vunpack.c.l.b16 %v256
  %v1309 = vunpack.c.l.b16 %v257
  %v1310 = vunpack.c.l.b16 %v258
  %v1311 = vunpack.c.l.b16 %v259
  %v1312 = vunpack.c.l.b16 %v260
  %v1313 = vunpack.c.l.b16 %v261
  %v1314 = vunpack.c.l.b16 %v262
  %v1315 = vunpack.c.l.b16 %v263
  %v1316 = vunpack.c.l.b16 %v264
  %v1317 = vunpack.c.l.b16 %v265
  %v1318 = vunpack.c.l.b16 %v266
  %v1319 = vunpack.c.l.b16 %v267
  %v1320 = vunpack.c.l.b16 %v268
  %v1321 = vunpack.c.l.b16 %v269
  %v1322 = vunpack.c.l.b16 %v270
  %v1323 = vunpack.c.l.b16 %v271
  %v1324 = vunpack.c.l.b16 %v272
  %v1325 = vunpack.c.l.b16 %v273
  %v1326 = vunpack.c.l.b16 %v274
  %v1327 = vunpack.c.l.b16 %v275
  %v1328 = vunpack.c.l.b16 %v276
  %v1329 = vunpack.c.l.b16 %v277
  %v1330 = vunpack.c.l.b16 %v278
  %v1331 = vunpack.c.l.b16 %v279
  %v1332 = vunpack.c.l.b16 %v280
  %v1333 = vunpack.c.l.b16 %v281
  %v1334 = vunpack.c.l.b16 %v282
  %v1335 = vunpack.c.l.b16 %v283
  %v1336 = vunpack.c.l.b16 %v284
  %v1337 = vunpack.c.l.b16 %v285
  %v1338 = vunpack.c.l.b16 %v286
  %v1339 = vunpack.c.l.b16 %v287
  %v1340 = vunpack.c.l.b16 %v288
  %v1341 = vunpack.c.l.b16 %v289
  %v1342 = vunpack.c.l.b16 %v290
  %v1343 = vunpack.c.l.b16 %v291
  %v1344 = vunpack.c.l.b16 %v292
  %v1345 = vunpack.c.l.b16 %v293
  %v1346 = vunpack.c.l.b16 %v294
  %v1347 = vunpack.c.l.b16 %v295
  %v1348 = vunpack.c.l.b16 %v296
  %v1349 = vunpack.c.l.b16 %v297
  %v1350 = vunpack.c.l.b16 %v298
  %v1351 = vunpack.c.l.b16 %v299
  %v1352 = vunpack.c.l.b16 %v300
  %v1353 = vunpack.c.l.b16 %v301
  %v1354 = vunpack.c.l.b16 %v302
  %v1355 = vunpack.c.l.b16 %v303
  %v1356 = vunpack.c.l.b16 %v304
  %v1357 = vunpack.c.l.b16 %v305
  %v1358 = vunpack.c.l.b16 %v306
  %v1359 = vunpack.c.l.b16 %v307
  %v1360 = vunpack.c.l.b16 %v308
  %v1361 = vunpack.c.l.b16 %v309
  %v1362 = vunpack.c.l.b16 %v310
  %v1363 = vunpack.c.l.b16 %v311
  %v1364 = vunpack.c.l.b16 %v312
  %v1365 = vunpack.c.l.b16 %v313
  %v1366 = vunpack.c.l.b16 %v314
  %v1367 = vunpack.c.l.b16 %v315
  %v1368 = vunpack.c.l.b16 %v316
  %v1369 = vunpack.c.l.b16 %v317
  %v1370 = vunpack.c.l.b16 %v318
  %v1371 = vunpack.c.l.b16 %v319
  %v1372 = vunpack.c.l.b16 %v320
  %v1373 = vunpack.c.l.b16 %v321
  %v1374 = vunpack.c.l.b16 %v322
  %v1375 = vunpack.c.l.b16 %v323
  %v1376 = vunpack.c.l.b16 %v324
  %v1377 = vunpack.c.l.b16 %v325
  %v1378 = vunpack.c.l.b16 %v326
  %v1379 = vunpack.c.l.b16 %v327
  %v1380 = vunpack.c.l.b16 %v328
  %v1381 = vunpack.c.l.b16 %v329
  %v1382 = vunpack.c.l.b16 %v330
  %v1383 = vunpack.c.l.b16 %v331
  %v1384 = vunpack.c.l.b16 %v332
  %v1385 = vunpack.c.l.b16 %v333
  %v1386 = vunpack.c.l.b16 %v334
  %v1387 = vunpack.c.l.b16 %v335
  %v1388 = vunpack.c.l.b16 %v336
  %v1389 = vunpack.c.l.b16 %v337
  %v1390 = vunpack.c.l.b16 %v338
  %v1391 = vunpack.c.l.b16 %v339
  %v1392 = vunpack.c.l.b16 %v340
  %v1393 = vunpack.c.l.b16 %v341
  %v1394 = vunpack.c.l.b16 %v342
  %v1395 = vunpack.c.l.b16 %v343
  %v1396 = vunpack.c.l.b16 %v344
  %v1397 = vunpack.c.l.b16 %v345
  %v1398 = vunpack.c.l.b16 %v346
  %v1399 = vunpack.c.l.b16 %v347
  %v1400 = vunpack.c.l.b16 %v348
  %v1401 = vunpack.c.l.b16 %v349
  %v1402 = vunpack.c.l.b16 %v350
  %v1403 = vunpack.c.l.b16 %v351
  %v1404 = vunpack.c.l.b16 %v352
  %v1405 = vunpack.c.l.b16 %v353
  %v1406 = vunpack.c.l.b16 %v354
  %v1407 = vunpack.c.l.b16 %v355
  %v1408 = vunpack.c.l.b16 %v356
  %v1409 = vunpack.c.l.b16 %v357
  %v1410 = vunpack.c.l.b16 %v358
  %v1411 = vunpack.c.l.b16 %v359
  %v1412 = vunpack.c.l.b16 %v360
  %v1413 = vunpack.c.l.b16 %v361
  %v1414 = vunpack.c.l.b16 %v362
  %v1415 = vunpack.c.l.b16 %v363
  %v1416 = vunpack.c.l.b16 %v364
  %v1417 = vunpack.c.l.b16 %v365
  %v1418 = vunpack.c.l.b16 %v366
  %v1419 = vunpack.c.l.b16 %v367
  %v1420 = vunpack.c.l.b16 %v368
  %v1421 = vunpack.c.l.b16 %v369
  %v1422 = vunpack.c.l.b16 %v370
  %v1423 = vunpack.c.l.b16 %v371
  %v1424 = vunpack.c.l.b16 %v372
  %v1425 = vunpack.c.l.b16 %v373
  %v1426 = vunpack.c.l.b16 %v374
  %v1427 = vunpack.c.l.b16 %v375
  %v1428 = vunpack.c.l.b16 %v376
  %v1429 = vunpack.c.l.b16 %v377
  %v1430 = vunpack.c.l.b16 %v378
  %v1431 = vunpack.c.l.b16 %v379
  %v1432 = vunpack.c.l.b16 %v380
  %v1433 = vunpack.c.l.b16 %v381
  %v1434 = vunpack.c.l.b16 %v382
  %v1435 = vunpack.c.l.b16 %v383
  %v1436 = vunpack.c.l.b16 %v384
  %v1437 = vunpack.c.l.b16 %v385
  %v1438 = vunpack.c.l.b16 %v386
  %v1439 = vunpack.c.l.b16 %v387
  %v1440 = vunpack.c.l.b16 %v388
  %v1441 = vunpack.c.l.b16 %v389
  %v1442 = vunpack.c.l.b16 %v390
  %v1443 = vunpack.c.l.b16 %v391
  %v1444 = vunpack.c.l.b16 %v392
  %v1445 = vunpack.c.l.b16 %v393
  %v1446 = vunpack.c.l.b16 %v394
  %v1447 = vunpack.c.l.b16 %v395
  %v1448 = vunpack.c.l.b16 %v396
  %v1449 = vunpack.c.l.b16 %v397
  %v1450 = vunpack.c.l.b16 %v398
  %v1451 = vunpack.c.l.b16 %v399
  %v1452 = vunpack.c.l.b16 %v400
  %v1453 = vunpack.c.l.b16 %v401
  %v1454 = vunpack.c.l.b16 %v402
  %v1455 = vunpack.c.l.b16 %v403
  %v1456 = vunpack.c.l.b16 %v404
  %v1457 = vunpack.c.l.b16 %v405
  %v1458 = vunpack.c.l.b16 %v406
  %v1459 = vunpack.c.l.b16 %v407
  %v1460 = vunpack.c.l.b16 %v408
  %v1461 = vunpack.c.l.b16 %v409
  %v1462 = vunpack.c.l.b16 %v410
  %v1463 = vunpack.c.l.b16 %v411
  %v1464 = vunpack.c.l.b16 %v412
  %v1465 = vunpack.c.l.b16 %v413
  %v1466 = vunpack.c.l.b16 %v414
  %v1467 = vunpack.c.l.b16 %v415
  %v1468 = vunpack.c.l.b16 %v416
  %v1469 = vunpack.c.l.b16 %v417
  %v1470 = vunpack.c.l.b16 %v418
  %v1471 = vunpack.c.l.b16 %v419
  %v1472 = vunpack.c.l.b16 %v420
  %v1473 = vunpack.c.l.b16 %v421
  %v1474 = vunpack.c.l.b16 %v422
  %v1475 = vunpack.c.l.b16 %v423
  %v1476 = vunpack.c.l.b16 %v424
  %v1477 = vunpack.c.l.b16 %v425
  %v1478 = vunpack.c.l.b16 %v426
  %v1479 = vunpack.c.l.b16 %v427
  %v1480 = vunpack.c.l.b16 %v428
  %v1481 = vunpack.c.l.b16 %v429
  %v1482 = vunpack.c.l.b16 %v430
  %v1483 = vunpack.c.l.b16 %v431
  %v1484 = vunpack.c.l.b16 %v432
  %v1485 = vunpack.c.l.b16 %v433
  %v1486 = vunpack.c.l.b16 %v434
  %v1487 = vunpack.c.l.b16 %v435
  %v1488 = vunpack.c.l.b16 %v436
  %v1489 = vunpack.c.l.b16 %v437
  %v1490 = vunpack.c.l.b16 %v438
  %v1491 = vunpack.c.l.b16 %v439
  %v1492 = vunpack.c.l.b16 %v440
  %v1493 = vunpack.c.l.b16 %v441
  %v1494 = vunpack.c.l.b16 %v442
  %v1495 = vunpack.c.l.b16 %v443
  %v1496 = vunpack.c.l.b16 %v444
  %v1497 = vunpack.c.l.b16 %v445
  %v1498 = vunpack.c.l.b16 %v446
  %v1499 = vunpack.c.l.b16 %v447
  %v1500 = vunpack.c.l.b16 %v448
  %v1501 = vunpack.c.l.b16 %v449
  %v1502 = vunpack.c.l.b16 %v450
  %v1503 = vunpack.c.l.b16 %v451
  %v1504 = vunpack.c.l.b16 %v452
  %v1505 = vunpack.c.l.b16 %v453
  %v1506 = vunpack.c.l.b16 %v454
  %v1507 = vunpack.c.l.b16 %v455
  %v1508 = vunpack.c.l.b16 %v456
  %v1509 = vunpack.c.l.b16 %v457
  %v1510 = vunpack.c.l.b16 %v458
  %v1511 = vunpack.c.l.b16 %v459
  %v1512 = vunpack.c.l.b16 %v460
  %v1513 = vunpack.c.l.b16 %v461
  %v1514 = vunpack.c.l.b16 %v462
  %v1515 = vunpack.c.l.b16 %v463
  %v1516 = vunpack.c.l.b16 %v464
  %v1517 = vunpack.c.l.b16 %v465
  %v1518 = vunpack.c.l.b16 %v466
  %v1519 = vunpack.c.l.b16 %v467
  %v1520 = vunpack.c.l.b16 %v468
  %v1521 = vunpack.c.l.b16 %v469
  %v1522 = vunpack.c.l.b16 %v470
  %v1523 = vunpack.c.l.b16 %v471
  %v1524 = vunpack.c.l.b16 %v472
  %v1525 = vunpack.c.l.b16 %v473
  %v1526 = vunpack.c.l.b16 %v474
  %v1527 = vunpack.c.l.b16 %v475
  %v1528 = vunpack.c.l.b16 %v476
  %v1529 = vunpack.c.l.b16 %v477
  %v1530 = vunpack.c.l.b16 %v478
  %v1531 = vunpack.c.l.b16 %v479
  %v1532 = vunpack.c.l.b16 %v480
  %v1533 = vunpack.c.l.b16 %v481
  %v1534 = vpack.c.b16 %v1135, %v1134
  %v1535 = vpack.c.b16 %v1137, %v1136
  %v1536 = vpack.c.b16 %v1139, %v1138
  %v1537 = vpack.c.b16 %v1141, %v1140
  %v1538 = vpack.c.b16 %v1143, %v1142
  %v1539 = vpack.c.b16 %v1145, %v1144
  %v1540 = vpack.c.b16 %v1147, %v1146
  %v1541 = vpack.c.b16 %v1149, %v1148
  %v1542 = vpack.c.b16 %v1151, %v1150
  %v1543 = vpack.c.b16 %v1153, %v1152
  %v1544 = vpack.c.b16 %v1155, %v1154
  %v1545 = vpack.c.b16 %v1157, %v1156
  %v1546 = vpack.c.b16 %v1159, %v1158
  %v1547 = vpack.c.b16 %v1161, %v1160
  %v1548 = vpack.c.b16 %v1163, %v1162
  %v1549 = vpack.c.b16 %v1165, %v1164
  %v1550 = vpack.c.b16 %v1167, %v1166
  %v1551 = vpack.c.b16 %v1169, %v1168
  %v1552 = vpack.c.b16 %v1171, %v1170
  %v1553 = vpack.c.b16 %v1173, %v1172
  %v1554 = vpack.c.b16 %v1175, %v1174
  %v1555 = vpack.c.b16 %v1177, %v1176
  %v1556 = vpack.c.b16 %v1179, %v1178
  %v1557 = vpack.c.b16 %v1181, %v1180
  %v1558 = vpack.c.b16 %v1183, %v1182
  %v1559 = vpack.c.b16 %v1185, %v1184
  %v1560 = vpack.c.b16 %v1187, %v1186
  %v1561 = vpack.c.b16 %v1189, %v1188
  %v1562 = vpack.c.b16 %v1191, %v1190
  %v1563 = vpack.c.b16 %v1193, %v1192
  %v1564 = vpack.c.b16 %v1195, %v1194
  %v1565 = vpack.c.b16 %v1197, %v1196
  %v1566 = vpack.c.b16 %v1199, %v1198
  %v1567 = vpack.c.b16 %v1201, %v1200
  %v1568 = vpack.c.b16 %v1203, %v1202
  %v1569 = vpack.c.b16 %v1205, %v1204
  %v1570 = vpack.c.b16 %v1207, %v1206
  %v1571 = vpack.c.b16 %v1209, %v1208
  %v1572 = vpack.c.b16 %v1211, %v1210
  %v1573 = vpack.c.b16 %v1213, %v1212
  %v1574 = vpack.c.b16 %v1215, %v1214
  %v1575 = vpack.c.b16 %v1217, %v1216
  %v1576 = vpack.c.b16 %v1219, %v1218
  %v1577 = vpack.c.b16 %v1221, %v1220
  %v1578 = vpack.c.b16 %v1223, %v1222
  %v1579 = vpack.c.b16 %v1225, %v1224
  %v1580 = vpack.c.b16 %v1227, %v1226
  %v1581 = vpack.c.b16 %v1229, %v1228
  %v1582 = vpack.c.b16 %v1231, %v1230
  %v1583 = vpack.c.b16 %v1233, %v1232
  %v1584 = vpack.c.b16 %v1235, %v1234
  %v1585 = vpack.c.b16 %v1237, %v1236
  %v1586 = vpack.c.b16 %v1239, %v1238
  %v1587 = vpack.c.b16 %v1241, %v1240
  %v1588 = vpack.c.b16 %v1243, %v1242
  %v1589 = vpack.c.b16 %v1245, %v1244
  %v1590 = vpack.c.b16 %v1247, %v1246
  %v1591 = vpack.c.b16 %v1249, %v1248
  %v1592 = vpack.c.b16 %v1251, %v1250
  %v1593 = vpack.c.b16 %v1253, %v1252
  %v1594 = vpack.c.b16 %v1255, %v1254
  %v1595 = vpack.c.b16 %v1257, %v1256
  %v1596 = vpack.c.b16 %v1259, %v1258
  %v1597 = vpack.c.b16 %v1261, %v1260
  %v1598 = vpack.c.b16 %v1263, %v1262
  %v1599 = vpack.c.b16 %v1265, %v1264
  %v1600 = vpack.c.b16 %v1267, %v1266
  %v1601 = vpack.c.b16 %v1269, %v1268
  %v1602 = vpack.c.b16 %v1271, %v1270
  %v1603 = vpack.c.b16 %v1273, %v1272
  %v1604 = vpack.c.b16 %v1275, %v1274
  %v1605 = vpack.c.b16 %v1277, %v1276
  %v1606 = vpack.c.b16 %v1279, %v1278
  %v1607 = vpack.c.b16 %v1281, %v1280
  %v1608 = vpack.c.b16 %v1283, %v1282
  %v1609 = vpack.c.b16 %v1285, %v1284
  %v1610 = vpack.c.b16 %v1287, %v1286
  %v1611 = vpack.c.b16 %v1289, %v1288
  %v1612 = vpack.c.b16 %v1291, %v1290
  %v1613 = vpack.c.b16 %v1293, %v1292
  %v1614 = vpack.c.b16 %v1295, %v1294
  %v1615 = vpack.c.b16 %v1297, %v1296
  %v1616 = vpack.c.b16 %v1299, %v1298
  %v1617 = vpack.c.b16 %v1301, %v1300
  %v1618 = vpack.c.b16 %v1303, %v1302
  %v1619 = vpack.c.b16 %v1305, %v1304
  %v1620 = vpack.c.b16 %v1307, %v1306
  %v1621 = vpack.c.b16 %v1309, %v1308
  %v1622 = vpack.c.b16 %v1311, %v1310
  %v1623 = vpack.c.b16 %v1313, %v1312
  %v1624 = vpack.c.b16 %v1315, %v1314
  %v1625 = vpack.c.b16 %v1317, %v1316
  %v1626 = vpack.c.b16 %v1319, %v1318
  %v1627 = vpack.c.b16 %v1321, %v1320
  %v1628 = vpack.c.b16 %v1323, %v1322
  %v1629 = vpack.c.b16 %v1325, %v1324
  %v1630 = vpack.c.b16 %v1327, %v1326
  %v1631 = vpack.c.b16 %v1329, %v1328
  %v1632 = vpack.c.b16 %v1331, %v1330
  %v1633 = vpack.c.b16 %v1333, %v1332
  %v1634 = vpack.c.b16 %v1335, %v1334
  %v1635 = vpack.c.b16 %v1337, %v1336
  %v1636 = vpack.c.b16 %v1339, %v1338
  %v1637 = vpack.c.b16 %v1341, %v1340
  %v1638 = vpack.c.b16 %v1343, %v1342
  %v1639 = vpack.c.b16 %v1345, %v1344
  %v1640 = vpack.c.b16 %v1347, %v1346
  %v1641 = vpack.c.b16 %v1349, %v1348
  %v1642 = vpack.c.b16 %v1351, %v1350
  %v1643 = vpack.c.b16 %v1353, %v1352
  %v1644 = vpack.c.b16 %v1355, %v1354
  %v1645 = vpack.c.b16 %v1357, %v1356
  %v1646 = vpack.c.b16 %v1359, %v1358
  %v1647 = vpack.c.b16 %v1361, %v1360
  %v1648 = vpack.c.b16 %v1363, %v1362
  %v1649 = vpack.c.b16 %v1365, %v1364
  %v1650 = vpack.c.b16 %v1367, %v1366
  %v1651 = vpack.c.b16 %v1369, %v1368
  %v1652 = vpack.c.b16 %v1371, %v1370
  %v1653 = vpack.c.b16 %v1373, %v1372
  %v1654 = vpack.c.b16 %v1375, %v1374
  %v1655 = vpack.c.b16 %v1377, %v1376
  %v1656 = vpack.c.b16 %v1379, %v1378
  %v1657 = vpack.c.b16 %v1381, %v1380
  %v1658 = vpack.c.b16 %v1383, %v1382
  %v1659 = vpack.c.b16 %v1385, %v1384
  %v1660 = vpack.c.b16 %v1387, %v1386
  %v1661 = vpack.c.b16 %v1389, %v1388
  %v1662 = vpack.c.b16 %v1391, %v1390
  %v1663 = vpack.c.b16 %v1393, %v1392
  %v1664 = vpack.c.b16 %v1395, %v1394
  %v1665 = vpack.c.b16 %v1397, %v1396
  %v1666 = vpack.c.b16 %v1399, %v1398
  %v1667 = vpack.c.b16 %v1401, %v1400
  %v1668 = vpack.c.b16 %v1403, %v1402
  %v1669 = vpack.c.b16 %v1405, %v1404
  %v1670 = vpack.c.b16 %v1407, %v1406
  %v1671 = vpack.c.b16 %v1409, %v1408
  %v1672 = vpack.c.b16 %v1411, %v1410
  %v1673 = vpack.c.b16 %v1413, %v1412
  %v1674 = vpack.c.b16 %v1415, %v1414
  %v1675 = vpack.c.b16 %v1417, %v1416
  %v1676 = vpack.c.b16 %v1419, %v1418
  %v1677 = vpack.c.b16 %v1421, %v1420
  %v1678 = vpack.c.b16 %v1423, %v1422
  %v1679 = vpack.c.b16 %v1425, %v1424
  %v1680 = vpack.c.b16 %v1427, %v1426
  %v1681 = vpack.c.b16 %v1429, %v1428
  %v1682 = vpack.c.b16 %v1431, %v1430
  %v1683 = vpack.c.b16 %v1433, %v1432
  %v1684 = vpack.c.b16 %v1435, %v1434
  %v1685 = vpack.c.b16 %v1437, %v1436
  %v1686 = vpack.c.b16 %v1439, %v1438
  %v1687 = vpack.c.b16 %v1441, %v1440
  %v1688 = vpack.c.b16 %v1443, %v1442
  %v1689 = vpack.c.b16 %v1445, %v1444
  %v1690 = vpack.c.b16 %v1447, %v1446
  %v1691 = vpack.c.b16 %v1449, %v1448
  %v1692 = vpack.c.b16 %v1451, %v1450
  %v1693 = vpack.c.b16 %v1453, %v1452
  %v1694 = vpack.c.b16 %v1455, %v1454
  %v1695 = vpack.c.b16 %v1457, %v1456
  %v1696 = vpack.c.b16 %v1459, %v1458
  %v1697 = vpack.c.b16 %v1461, %v1460
  %v1698 = vpack.c.b16 %v1463, %v1462
  %v1699 = vpack.c.b16 %v1465, %v1464
  %v1700 = vpack.c.b16 %v1467, %v1466
  %v1701 = vpack.c.b16 %v1469, %v1468
  %v1702 = vpack.c.b16 %v1471, %v1470
  %v1703 = vpack.c.b16 %v1473, %v1472
  %v1704 = vpack.c.b16 %v1475, %v1474
  %v1705 = vpack.c.b16 %v1477, %v1476
  %v1706 = vpack.c.b16 %v1479, %v1478
  %v1707 = vpack.c.b16 %v1481, %v1480
  %v1708 = vpack.c.b16 %v1483, %v1482
  %v1709 = vpack.c.b16 %v1485, %v1484
  %v1710 = vpack.c.b16 %v1487, %v1486
  %v1711 = vpack.c.b16 %v1489, %v1488
  %v1712 = vpack.c.b16 %v1491, %v1490
  %v1713 = vpack.c.b16 %v1493, %v1492
  %v1714 = vpack.c.b16 %v1495, %v1494
  %v1715 = vpack.c.b16 %v1497, %v1496
  %v1716 = vpack.c.b16 %v1499, %v1498
  %v1717 = vpack.c.b16 %v1501, %v1500
  %v1718 = vpack.c.b16 %v1503, %v1502
  %v1719 = vpack.c.b16 %v1505, %v1504
  %v1720 = vpack.c.b16 %v1507, %v1506
  %v1721 = vpack.c.b16 %v1509, %v1508
  %v1722 = vpack.c.b16 %v1511, %v1510
  %v1723 = vpack.c.b16 %v1513, %v1512
  %v1724 = vpack.c.b16 %v1515, %v1514
  %v1725 = vpack.c.b16 %v1517, %v1516
  %v1726 = vpack.c.b16 %v1519, %v1518
  %v1727 = vpack.c.b16 %v1521, %v1520
  %v1728 = vpack.c.b16 %v1523, %v1522
  %v1729 = vpack.c.b16 %v1525, %v1524
  %v1730 = vpack.c.b16 %v1527, %v1526
  %v1731 = vpack.c.b16 %v1529, %v1528
  %v1732 = vpack.c.b16 %v1531, %v1530
  %v1733 = vpack.c.b16 %v1533, %v1532
  %1934 = vmatprep.subr.bf16.mxu0 0
  %1935 = vmatpush1.bf16.msra.mxu0 %v1534
  %1936 = vmatprep.subr.bf16.mxu0 0
  %1937 = vmatpush1.bf16.msra.mxu0 %v1535
  %1938 = vmatprep.subr.bf16.mxu0 0
  %1939 = vmatpush1.bf16.msra.mxu0 %v1536
  %1940 = vmatprep.subr.bf16.mxu0 0
  %1941 = vmatpush1.bf16.msra.mxu0 %v1537
  %1942 = vmatprep.subr.bf16.mxu0 0
  %1943 = vmatpush1.bf16.msra.mxu0 %v1538
  %1944 = vmatprep.subr.bf16.mxu0 0
  %1945 = vmatpush1.bf16.msra.mxu0 %v1539
  %1946 = vmatprep.subr.bf16.mxu0 0
  %1947 = vmatpush1.bf16.msra.mxu0 %v1540
  %1948 = vmatprep.subr.bf16.mxu0 0
  %1949 = vmatpush1.bf16.msra.mxu0 %v1541
  %1950 = vmatprep.subr.bf16.mxu0 0
  %1951 = vmatpush1.bf16.msra.mxu0 %v1542
  %1952 = vmatprep.subr.bf16.mxu0 0
  %1953 = vmatpush1.bf16.msra.mxu0 %v1543
  %1954 = vmatprep.subr.bf16.mxu0 0
  %1955 = vmatpush1.bf16.msra.mxu0 %v1544
  %1956 = vmatprep.subr.bf16.mxu0 0
  %1957 = vmatpush1.bf16.msra.mxu0 %v1545
  %1958 = vmatprep.subr.bf16.mxu0 0
  %1959 = vmatpush1.bf16.msra.mxu0 %v1546
  %1960 = vmatprep.subr.bf16.mxu0 0
  %1961 = vmatpush1.bf16.msra.mxu0 %v1547
  %1962 = vmatprep.subr.bf16.mxu0 0
  %1963 = vmatpush1.bf16.msra.mxu0 %v1548
  %1964 = vmatprep.subr.bf16.mxu0 0
  %1965 = vmatpush1.bf16.msra.mxu0 %v1549
  %1966 = vmatprep.mubr.bf16.mxu0 %v635
  %1967 = vmatmul.mubr.bf16.gmra.mrb[0].mxu0 %v634
  %v1968 = vpop.f32.mrb[0].mxu0
  %v1969 = vadd.f32 0.0, %v1968
  %v1970 = vpop.f32.mrb[0].mxu0
  %v1971 = vpop.f32.mrb[0].mxu0
  %v1972 = vadd.f32 0.0, %v1971
  %v1973 = vpop.f32.mrb[0].mxu0
  %1974 = vmatprep.mubr.bf16.mxu0 %v660
  %1975 = vmatmul.mubr.bf16.gmra.mrb[0].mxu0 %v659
  %v1976 = vpop.f32.mrb[0].mxu0
  %v1977 = vadd.f32 0.0, %v1976
  %v1978 = vpop.f32.mrb[0].mxu0
  %v1979 = vpop.f32.mrb[0].mxu0
  %v1980 = vadd.f32 0.0, %v1979
  %v1981 = vpop.f32.mrb[0].mxu0
  %1982 = vdwg.mxu0
  %1983 = vmatprep.subr.bf16.mxu0 0
  %1984 = vmatpush1.bf16.msra.mxu0 %v1550
  %1985 = vmatprep.subr.bf16.mxu0 0
  %1986 = vmatpush1.bf16.msra.mxu0 %v1551
  %1987 = vmatprep.subr.bf16.mxu0 0
  %1988 = vmatpush1.bf16.msra.mxu0 %v1552
  %1989 = vmatprep.subr.bf16.mxu0 0
  %1990 = vmatpush1.bf16.msra.mxu0 %v1553
  %1991 = vmatprep.subr.bf16.mxu0 0
  %1992 = vmatpush1.bf16.msra.mxu0 %v1554
  %1993 = vmatprep.subr.bf16.mxu0 0
  %1994 = vmatpush1.bf16.msra.mxu0 %v1555
  %1995 = vmatprep.subr.bf16.mxu0 0
  %1996 = vmatpush1.bf16.msra.mxu0 %v1556
  %1997 = vmatprep.subr.bf16.mxu0 0
  %1998 = vmatpush1.bf16.msra.mxu0 %v1557
  %1999 = vmatprep.subr.bf16.mxu0 0
  %2000 = vmatpush1.bf16.msra.mxu0 %v1558
  %2001 = vmatprep.subr.bf16.mxu0 0
  %2002 = vmatpush1.bf16.msra.mxu0 %v1559
  %2003 = vmatprep.subr.bf16.mxu0 0
  %2004 = vmatpush1.bf16.msra.mxu0 %v1560
  %2005 = vmatprep.subr.bf16.mxu0 0
  %2006 = vmatpush1.bf16.msra.mxu0 %v1561
  %2007 = vmatprep.subr.bf16.mxu0 0
  %2008 = vmatpush1.bf16.msra.mxu0 %v1562
  %2009 = vmatprep.subr.bf16.mxu0 0
  %2010 = vmatpush1.bf16.msra.mxu0 %v1563
  %2011 = vmatprep.subr.bf16.mxu0 0
  %2012 = vmatpush1.bf16.msra.mxu0 %v1564
  %2013 = vmatprep.subr.bf16.mxu0 0
  %2014 = vmatpush1.bf16.msra.mxu0 %v1565
  %2015 = vmatprep.mubr.bf16.mxu0 %v637
  %2016 = vmatmul.mubr.bf16.gmra.mrb[0].mxu0 %v636
  %v2017 = vpop.f32.mrb[0].mxu0
  %v2018 = vadd.f32 %v1969, %v2017
  %v2019 = vpop.f32.mrb[0].mxu0
  %v2020 = vpop.f32.mrb[0].mxu0
  %v2021 = vadd.f32 %v1972, %v2020
  %v2022 = vpop.f32.mrb[0].mxu0
  %2023 = vmatprep.mubr.bf16.mxu0 %v662
  %2024 = vmatmul.mubr.bf16.gmra.mrb[0].mxu0 %v661
  %v2025 = vpop.f32.mrb[0].mxu0
  %v2026 = vadd.f32 %v1977, %v2025
  %v2027 = vpop.f32.mrb[0].mxu0
  %v2028 = vpop.f32.mrb[0].mxu0
  %v2029 = vadd.f32 %v1980, %v2028
  %v2030 = vpop.f32.mrb[0].mxu0
  %2031 = vdwg.mxu0
  %2032 = vmatprep.subr.bf16.mxu0 0
  %2033 = vmatpush1.bf16.msra.mxu0 %v1566
  %2034 = vmatprep.subr.bf16.mxu0 0
  %2035 = vmatpush1.bf16.msra.mxu0 %v1567
  %2036 = vmatprep.subr.bf16.mxu0 0
  %2037 = vmatpush1.bf16.msra.mxu0 %v1568
  %2038 = vmatprep.subr.bf16.mxu0 0
  %2039 = vmatpush1.bf16.msra.mxu0 %v1569
  %2040 = vmatprep.subr.bf16.mxu0 0
  %2041 = vmatpush1.bf16.msra.mxu0 %v1570
  %2042 = vmatprep.subr.bf16.mxu0 0
  %2043 = vmatpush1.bf16.msra.mxu0 %v1571
  %2044 = vmatprep.subr.bf16.mxu0 0
  %2045 = vmatpush1.bf16.msra.mxu0 %v1572
  %2046 = vmatprep.subr.bf16.mxu0 0
  %2047 = vmatpush1.bf16.msra.mxu0 %v1573
  %2048 = vmatprep.subr.bf16.mxu0 0
  %2049 = vmatpush1.bf16.msra.mxu0 %v1574
  %2050 = vmatprep.subr.bf16.mxu0 0
  %2051 = vmatpush1.bf16.msra.mxu0 %v1575
  %2052 = vmatprep.subr.bf16.mxu0 0
  %2053 = vmatpush1.bf16.msra.mxu0 %v1576
  %2054 = vmatprep.subr.bf16.mxu0 0
  %2055 = vmatpush1.bf16.msra.mxu0 %v1577
  %2056 = vmatprep.subr.bf16.mxu0 0
  %2057 = vmatpush1.bf16.msra.mxu0 %v1578
  %2058 = vmatprep.subr.bf16.mxu0 0
  %2059 = vmatpush1.bf16.msra.mxu0 %v1579
  %2060 = vmatprep.subr.bf16.mxu0 0
  %2061 = vmatpush1.bf16.msra.mxu0 %v1580
  %2062 = vmatprep.subr.bf16.mxu0 0
  %2063 = vmatpush1.bf16.msra.mxu0 %v1581
  %2064 = vmatprep.mubr.bf16.mxu0 %v639
  %2065 = vmatmul.mubr.bf16.gmra.mrb[0].mxu0 %v638
  %v2066 = vpop.f32.mrb[0].mxu0
  %v2067 = vadd.f32 %v2018, %v2066
  %v2068 = vpop.f32.mrb[0].mxu0
  %v2069 = vpop.f32.mrb[0].mxu0
  %v2070 = vadd.f32 %v2021, %v2069
  %v2071 = vpop.f32.mrb[0].mxu0
  %2072 = vmatprep.mubr.bf16.mxu0 %v664
  %2073 = vmatmul.mubr.bf16.gmra.mrb[0].mxu0 %v663
  %v2074 = vpop.f32.mrb[0].mxu0
  %v2075 = vadd.f32 %v2026, %v2074
  %v2076 = vpop.f32.mrb[0].mxu0
  %v2077 = vpop.f32.mrb[0].mxu0
  %v2078 = vadd.f32 %v2029, %v2077
  %v2079 = vpop.f32.mrb[0].mxu0
  %2080 = vdwg.mxu0
  %2081 = vmatprep.subr.bf16.mxu0 0
  %2082 = vmatpush1.bf16.msra.mxu0 %v1582
  %2083 = vmatprep.subr.bf16.mxu0 0
  %2084 = vmatpush1.bf16.msra.mxu0 %v1583
  %2085 = vmatprep.subr.bf16.mxu0 0
  %2086 = vmatpush1.bf16.msra.mxu0 %v1584
  %2087 = vmatprep.subr.bf16.mxu0 0
  %2088 = vmatpush1.bf16.msra.mxu0 %v1585
  %2089 = vmatprep.subr.bf16.mxu0 0
  %2090 = vmatpush1.bf16.msra.mxu0 %v1586
  %2091 = vmatprep.subr.bf16.mxu0 0
  %2092 = vmatpush1.bf16.msra.mxu0 %v1587
  %2093 = vmatprep.subr.bf16.mxu0 0
  %2094 = vmatpush1.bf16.msra.mxu0 %v1588
  %2095 = vmatprep.subr.bf16.mxu0 0
  %2096 = vmatpush1.bf16.msra.mxu0 %v1589
  %2097 = vmatprep.subr.bf16.mxu0 0
  %2098 = vmatpush1.bf16.msra.mxu0 %v1590
  %2099 = vmatprep.subr.bf16.mxu0 0
  %2100 = vmatpush1.bf16.msra.mxu0 %v1591
  %2101 = vmatprep.subr.bf16.mxu0 0
  %2102 = vmatpush1.bf16.msra.mxu0 %v1592
  %2103 = vmatprep.subr.bf16.mxu0 0
  %2104 = vmatpush1.bf16.msra.mxu0 %v1593
  %2105 = vmatprep.subr.bf16.mxu0 0
  %2106 = vmatpush1.bf16.msra.mxu0 %v1594
  %2107 = vmatprep.subr.bf16.mxu0 0
  %2108 = vmatpush1.bf16.msra.mxu0 %v1595
  %2109 = vmatprep.subr.bf16.mxu0 0
  %2110 = vmatpush1.bf16.msra.mxu0 %v1596
  %2111 = vmatprep.subr.bf16.mxu0 0
  %2112 = vmatpush1.bf16.msra.mxu0 %v1597
  %2113 = vmatprep.mubr.bf16.mxu0 %v641
  %2114 = vmatmul.mubr.bf16.gmra.mrb[0].mxu0 %v640
  %v2115 = vpop.f32.mrb[0].mxu0
  %v2116 = vadd.f32 %v2067, %v2115
  %v2117 = vpop.f32.mrb[0].mxu0
  %v2118 = vpop.f32.mrb[0].mxu0
  %v2119 = vadd.f32 %v2070, %v2118
  %v2120 = vpop.f32.mrb[0].mxu0
  %2121 = vmatprep.mubr.bf16.mxu0 %v666
  %2122 = vmatmul.mubr.bf16.gmra.mrb[0].mxu0 %v665
  %v2123 = vpop.f32.mrb[0].mxu0
  %v2124 = vadd.f32 %v2075, %v2123
  %v2125 = vpop.f32.mrb[0].mxu0
  %v2126 = vpop.f32.mrb[0].mxu0
  %v2127 = vadd.f32 %v2078, %v2126
  %v2128 = vpop.f32.mrb[0].mxu0
  %2129 = vdwg.mxu0
  %2130 = vmatprep.subr.bf16.mxu0 0
  %2131 = vmatpush1.bf16.msra.mxu0 %v1598
  %2132 = vmatprep.subr.bf16.mxu0 0
  %2133 = vmatpush1.bf16.msra.mxu0 %v1599
  %2134 = vmatprep.subr.bf16.mxu0 0
  %2135 = vmatpush1.bf16.msra.mxu0 %v1600
  %2136 = vmatprep.subr.bf16.mxu0 0
  %2137 = vmatpush1.bf16.msra.mxu0 %v1601
  %2138 = vmatprep.subr.bf16.mxu0 0
  %2139 = vmatpush1.bf16.msra.mxu0 %v1602
  %2140 = vmatprep.subr.bf16.mxu0 0
  %2141 = vmatpush1.bf16.msra.mxu0 %v1603
  %2142 = vmatprep.subr.bf16.mxu0 0
  %2143 = vmatpush1.bf16.msra.mxu0 %v1604
  %2144 = vmatprep.subr.bf16.mxu0 0
  %2145 = vmatpush1.bf16.msra.mxu0 %v1605
  %2146 = vmatprep.subr.bf16.mxu0 0
  %2147 = vmatpush1.bf16.msra.mxu0 %v1606
  %2148 = vmatprep.subr.bf16.mxu0 0
  %2149 = vmatpush1.bf16.msra.mxu0 %v1607
  %2150 = vmatprep.subr.bf16.mxu0 0
  %2151 = vmatpush1.bf16.msra.mxu0 %v1608
  %2152 = vmatprep.subr.bf16.mxu0 0
  %2153 = vmatpush1.bf16.msra.mxu0 %v1609
  %2154 = vmatprep.subr.bf16.mxu0 0
  %2155 = vmatpush1.bf16.msra.mxu0 %v1610
  %2156 = vmatprep.subr.bf16.mxu0 0
  %2157 = vmatpush1.bf16.msra.mxu0 %v1611
  %2158 = vmatprep.subr.bf16.mxu0 0
  %2159 = vmatpush1.bf16.msra.mxu0 %v1612
  %2160 = vmatprep.subr.bf16.mxu0 0
  %2161 = vmatpush1.bf16.msra.mxu0 %v1613
  %2162 = vmatprep.mubr.bf16.mxu0 %v643
  %2163 = vmatmul.mubr.bf16.gmra.mrb[0].mxu0 %v642
  %v2164 = vpop.f32.mrb[0].mxu0
  %v2165 = vadd.f32 %v2116, %v2164
  %v2166 = vpop.f32.mrb[0].mxu0
  %v2167 = vpop.f32.mrb[0].mxu0
  %v2168 = vadd.f32 %v2119, %v2167
  %v2169 = vpop.f32.mrb[0].mxu0
  %2170 = vmatprep.mubr.bf16.mxu0 %v668
  %2171 = vmatmul.mubr.bf16.gmra.mrb[0].mxu0 %v667
  %v2172 = vpop.f32.mrb[0].mxu0
  %v2173 = vadd.f32 %v2124, %v2172
  %v2174 = vpop.f32.mrb[0].mxu0
  %v2175 = vpop.f32.mrb[0].mxu0
  %v2176 = vadd.f32 %v2127, %v2175
  %v2177 = vpop.f32.mrb[0].mxu0
  %2178 = vdwg.mxu0
  %2179 = vmatprep.subr.bf16.mxu0 0
  %2180 = vmatpush1.bf16.msra.mxu0 %v1614
  %2181 = vmatprep.subr.bf16.mxu0 0
  %2182 = vmatpush1.bf16.msra.mxu0 %v1615
  %2183 = vmatprep.subr.bf16.mxu0 0
  %2184 = vmatpush1.bf16.msra.mxu0 %v1616
  %2185 = vmatprep.subr.bf16.mxu0 0
  %2186 = vmatpush1.bf16.msra.mxu0 %v1617
  %2187 = vmatprep.subr.bf16.mxu0 0
  %2188 = vmatpush1.bf16.msra.mxu0 %v1618
  %2189 = vmatprep.subr.bf16.mxu0 0
  %2190 = vmatpush1.bf16.msra.mxu0 %v1619
  %2191 = vmatprep.subr.bf16.mxu0 0
  %2192 = vmatpush1.bf16.msra.mxu0 %v1620
  %2193 = vmatprep.subr.bf16.mxu0 0
  %2194 = vmatpush1.bf16.msra.mxu0 %v1621
  %2195 = vmatprep.subr.bf16.mxu0 0
  %2196 = vmatpush1.bf16.msra.mxu0 %v1622
  %2197 = vmatprep.subr.bf16.mxu0 0
  %2198 = vmatpush1.bf16.msra.mxu0 %v1623
  %2199 = vmatprep.subr.bf16.mxu0 0
  %2200 = vmatpush1.bf16.msra.mxu0 %v1624
  %2201 = vmatprep.subr.bf16.mxu0 0
  %2202 = vmatpush1.bf16.msra.mxu0 %v1625
  %2203 = vmatprep.subr.bf16.mxu0 0
  %2204 = vmatpush1.bf16.msra.mxu0 %v1626
  %2205 = vmatprep.subr.bf16.mxu0 0
  %2206 = vmatpush1.bf16.msra.mxu0 %v1627
  %2207 = vmatprep.subr.bf16.mxu0 0
  %2208 = vmatpush1.bf16.msra.mxu0 %v1628
  %2209 = vmatprep.subr.bf16.mxu0 0
  %2210 = vmatpush1.bf16.msra.mxu0 %v1629
  %2211 = vmatprep.mubr.bf16.mxu0 %v645
  %2212 = vmatmul.mubr.bf16.gmra.mrb[0].mxu0 %v644
  %v2213 = vpop.f32.mrb[0].mxu0
  %v2214 = vadd.f32 %v2165, %v2213
  %v2215 = vpop.f32.mrb[0].mxu0
  %v2216 = vpop.f32.mrb[0].mxu0
  %v2217 = vadd.f32 %v2168, %v2216
  %v2218 = vpop.f32.mrb[0].mxu0
  %2219 = vmatprep.mubr.bf16.mxu0 %v670
  %2220 = vmatmul.mubr.bf16.gmra.mrb[0].mxu0 %v669
  %v2221 = vpop.f32.mrb[0].mxu0
  %v2222 = vadd.f32 %v2173, %v2221
  %v2223 = vpop.f32.mrb[0].mxu0
  %v2224 = vpop.f32.mrb[0].mxu0
  %v2225 = vadd.f32 %v2176, %v2224
  %v2226 = vpop.f32.mrb[0].mxu0
  %2227 = vdwg.mxu0
  %2228 = vmatprep.subr.bf16.mxu0 0
  %2229 = vmatpush1.bf16.msra.mxu0 %v1630
  %2230 = vmatprep.subr.bf16.mxu0 0
  %2231 = vmatpush1.bf16.msra.mxu0 %v1631
  %2232 = vmatprep.subr.bf16.mxu0 0
  %2233 = vmatpush1.bf16.msra.mxu0 %v1632
  %2234 = vmatprep.subr.bf16.mxu0 0
  %2235 = vmatpush1.bf16.msra.mxu0 %v1633
  %2236 = vmatprep.subr.bf16.mxu0 0
  %2237 = vmatpush1.bf16.msra.mxu0 %v1634
  %2238 = vmatprep.subr.bf16.mxu0 0
  %2239 = vmatpush1.bf16.msra.mxu0 %v1635
  %2240 = vmatprep.subr.bf16.mxu0 0
  %2241 = vmatpush1.bf16.msra.mxu0 %v1636
  %2242 = vmatprep.subr.bf16.mxu0 0
  %2243 = vmatpush1.bf16.msra.mxu0 %v1637
  %2244 = vmatprep.subr.bf16.mxu0 0
  %2245 = vmatpush1.bf16.msra.mxu0 %v1638
  %2246 = vmatprep.subr.bf16.mxu0 0
  %2247 = vmatpush1.bf16.msra.mxu0 %v1639
  %2248 = vmatprep.subr.bf16.mxu0 0
  %2249 = vmatpush1.bf16.msra.mxu0 %v1640
  %2250 = vmatprep.subr.bf16.mxu0 0
  %2251 = vmatpush1.bf16.msra.mxu0 %v1641
  %2252 = vmatprep.subr.bf16.mxu0 0
  %2253 = vmatpush1.bf16.msra.mxu0 %v1642
  %2254 = vmatprep.subr.bf16.mxu0 0
  %2255 = vmatpush1.bf16.msra.mxu0 %v1643
  %2256 = vmatprep.subr.bf16.mxu0 0
  %2257 = vmatpush1.bf16.msra.mxu0 %v1644
  %2258 = vmatprep.subr.bf16.mxu0 0
  %2259 = vmatpush1.bf16.msra.mxu0 %v1645
  %2260 = vmatprep.mubr.bf16.mxu0 %v647
  %2261 = vmatmul.mubr.bf16.gmra.mrb[0].mxu0 %v646
  %v2262 = vpop.f32.mrb[0].mxu0
  %v2263 = vadd.f32 %v2214, %v2262
  %v2264 = vpop.f32.mrb[0].mxu0
  %v2265 = vpop.f32.mrb[0].mxu0
  %v2266 = vadd.f32 %v2217, %v2265
  %v2267 = vpop.f32.mrb[0].mxu0
  %2268 = vmatprep.mubr.bf16.mxu0 %v672
  %2269 = vmatmul.mubr.bf16.gmra.mrb[0].mxu0 %v671
  %v2270 = vpop.f32.mrb[0].mxu0
  %v2271 = vadd.f32 %v2222, %v2270
  %v2272 = vpop.f32.mrb[0].mxu0
  %v2273 = vpop.f32.mrb[0].mxu0
  %v2274 = vadd.f32 %v2225, %v2273
  %v2275 = vpop.f32.mrb[0].mxu0
  %2276 = vdwg.mxu0
  %2277 = vmatprep.subr.bf16.mxu0 0
  %2278 = vmatpush1.bf16.msra.mxu0 %v1646
  %2279 = vmatprep.subr.bf16.mxu0 0
  %2280 = vmatpush1.bf16.msra.mxu0 %v1647
  %2281 = vmatprep.subr.bf16.mxu0 0
  %2282 = vmatpush1.bf16.msra.mxu0 %v1648
  %2283 = vmatprep.subr.bf16.mxu0 0
  %2284 = vmatpush1.bf16.msra.mxu0 %v1649
  %2285 = vmatprep.subr.bf16.mxu0 0
  %2286 = vmatpush1.bf16.msra.mxu0 %v1650
  %2287 = vmatprep.subr.bf16.mxu0 0
  %2288 = vmatpush1.bf16.msra.mxu0 %v1651
  %2289 = vmatprep.subr.bf16.mxu0 0
  %2290 = vmatpush1.bf16.msra.mxu0 %v1652
  %2291 = vmatprep.subr.bf16.mxu0 0
  %2292 = vmatpush1.bf16.msra.mxu0 %v1653
  %2293 = vmatprep.subr.bf16.mxu0 0
  %2294 = vmatpush1.bf16.msra.mxu0 %v1654
  %2295 = vmatprep.subr.bf16.mxu0 0
  %2296 = vmatpush1.bf16.msra.mxu0 %v1655
  %2297 = vmatprep.subr.bf16.mxu0 0
  %2298 = vmatpush1.bf16.msra.mxu0 %v1656
  %2299 = vmatprep.subr.bf16.mxu0 0
  %2300 = vmatpush1.bf16.msra.mxu0 %v1657
  %2301 = vmatprep.subr.bf16.mxu0 0
  %2302 = vmatpush1.bf16.msra.mxu0 %v1658
  %2303 = vmatprep.subr.bf16.mxu0 0
  %2304 = vmatpush1.bf16.msra.mxu0 %v1659
  %2305 = vmatprep.subr.bf16.mxu0 0
  %2306 = vmatpush1.bf16.msra.mxu0 %v1660
  %2307 = vmatprep.subr.bf16.mxu0 0
  %2308 = vmatpush1.bf16.msra.mxu0 %v1661
  %2309 = vmatprep.mubr.bf16.mxu0 %v649
  %2310 = vmatmul.mubr.bf16.gmra.mrb[0].mxu0 %v648
  %v2311 = vpop.f32.mrb[0].mxu0
  %v2312 = vadd.f32 %v2263, %v2311
  %v2313 = vpop.f32.mrb[0].mxu0
  %v2314 = vpop.f32.mrb[0].mxu0
  %v2315 = vadd.f32 %v2266, %v2314
  %v2316 = vpop.f32.mrb[0].mxu0
  %2317 = vmatprep.mubr.bf16.mxu0 %v674
  %2318 = vmatmul.mubr.bf16.gmra.mrb[0].mxu0 %v673
  %v2319 = vpop.f32.mrb[0].mxu0
  %v2320 = vadd.f32 %v2271, %v2319
  %v2321 = vpop.f32.mrb[0].mxu0
  %v2322 = vpop.f32.mrb[0].mxu0
  %v2323 = vadd.f32 %v2274, %v2322
  %v2324 = vpop.f32.mrb[0].mxu0
  %2325 = vdwg.mxu0
  %2326 = vmatprep.subr.bf16.mxu0 0
  %2327 = vmatpush1.bf16.msra.mxu0 %v1662
  %2328 = vmatprep.subr.bf16.mxu0 0
  %2329 = vmatpush1.bf16.msra.mxu0 %v1663
  %2330 = vmatprep.subr.bf16.mxu0 0
  %2331 = vmatpush1.bf16.msra.mxu0 %v1664
  %2332 = vmatprep.subr.bf16.mxu0 0
  %2333 = vmatpush1.bf16.msra.mxu0 %v1665
  %2334 = vmatprep.subr.bf16.mxu0 0
  %2335 = vmatpush1.bf16.msra.mxu0 %v1666
  %2336 = vmatprep.subr.bf16.mxu0 0
  %2337 = vmatpush1.bf16.msra.mxu0 %v1667
  %2338 = vmatprep.subr.bf16.mxu0 0
  %2339 = vmatpush1.bf16.msra.mxu0 %v1668
  %2340 = vmatprep.subr.bf16.mxu0 0
  %2341 = vmatpush1.bf16.msra.mxu0 %v1669
  %2342 = vmatprep.subr.bf16.mxu0 0
  %2343 = vmatpush1.bf16.msra.mxu0 %v1670
  %2344 = vmatprep.subr.bf16.mxu0 0
  %2345 = vmatpush1.bf16.msra.mxu0 %v1671
  %2346 = vmatprep.subr.bf16.mxu0 0
  %2347 = vmatpush1.bf16.msra.mxu0 %v1672
  %2348 = vmatprep.subr.bf16.mxu0 0
  %2349 = vmatpush1.bf16.msra.mxu0 %v1673
  %2350 = vmatprep.subr.bf16.mxu0 0
  %2351 = vmatpush1.bf16.msra.mxu0 %v1674
  %2352 = vmatprep.subr.bf16.mxu0 0
  %2353 = vmatpush1.bf16.msra.mxu0 %v1675
  %2354 = vmatprep.subr.bf16.mxu0 0
  %2355 = vmatpush1.bf16.msra.mxu0 %v1676
  %2356 = vmatprep.subr.bf16.mxu0 0
  %2357 = vmatpush1.bf16.msra.mxu0 %v1677
  %2358 = vmatprep.mubr.bf16.mxu0 %v651
  %2359 = vmatmul.mubr.bf16.gmra.mrb[0].mxu0 %v650
  %v2360 = vpop.f32.mrb[0].mxu0
  %v2361 = vadd.f32 %v2312, %v2360
  %v2362 = vpop.f32.mrb[0].mxu0
  %v2363 = vpop.f32.mrb[0].mxu0
  %v2364 = vadd.f32 %v2315, %v2363
  %v2365 = vpop.f32.mrb[0].mxu0
  %2366 = vmatprep.mubr.bf16.mxu0 %v676
  %2367 = vmatmul.mubr.bf16.gmra.mrb[0].mxu0 %v675
  %v2368 = vpop.f32.mrb[0].mxu0
  %v2369 = vadd.f32 %v2320, %v2368
  %v2370 = vpop.f32.mrb[0].mxu0
  %v2371 = vpop.f32.mrb[0].mxu0
  %v2372 = vadd.f32 %v2323, %v2371
  %v2373 = vpop.f32.mrb[0].mxu0
  %2374 = vdwg.mxu0
  %2375 = vmatprep.subr.bf16.mxu0 0
  %2376 = vmatpush1.bf16.msra.mxu0 %v1678
  %2377 = vmatprep.subr.bf16.mxu0 0
  %2378 = vmatpush1.bf16.msra.mxu0 %v1679
  %2379 = vmatprep.subr.bf16.mxu0 0
  %2380 = vmatpush1.bf16.msra.mxu0 %v1680
  %2381 = vmatprep.subr.bf16.mxu0 0
  %2382 = vmatpush1.bf16.msra.mxu0 %v1681
  %2383 = vmatprep.subr.bf16.mxu0 0
  %2384 = vmatpush1.bf16.msra.mxu0 %v1682
  %2385 = vmatprep.subr.bf16.mxu0 0
  %2386 = vmatpush1.bf16.msra.mxu0 %v1683
  %2387 = vmatprep.subr.bf16.mxu0 0
  %2388 = vmatpush1.bf16.msra.mxu0 %v1684
  %2389 = vmatprep.subr.bf16.mxu0 0
  %2390 = vmatpush1.bf16.msra.mxu0 %v1685
  %2391 = vmatprep.subr.bf16.mxu0 0
  %2392 = vmatpush1.bf16.msra.mxu0 %v1686
  %2393 = vmatprep.subr.bf16.mxu0 0
  %2394 = vmatpush1.bf16.msra.mxu0 %v1687
  %2395 = vmatprep.subr.bf16.mxu0 0
  %2396 = vmatpush1.bf16.msra.mxu0 %v1688
  %2397 = vmatprep.subr.bf16.mxu0 0
  %2398 = vmatpush1.bf16.msra.mxu0 %v1689
  %2399 = vmatprep.subr.bf16.mxu0 0
  %2400 = vmatpush1.bf16.msra.mxu0 %v1690
  %2401 = vmatprep.subr.bf16.mxu0 0
  %2402 = vmatpush1.bf16.msra.mxu0 %v1691
  %2403 = vmatprep.subr.bf16.mxu0 0
  %2404 = vmatpush1.bf16.msra.mxu0 %v1692
  %2405 = vmatprep.subr.bf16.mxu0 0
  %2406 = vmatpush1.bf16.msra.mxu0 %v1693
  %2407 = vmatprep.mubr.bf16.mxu0 %v653
  %2408 = vmatmul.mubr.bf16.gmra.mrb[0].mxu0 %v652
  %v2409 = vpop.f32.mrb[0].mxu0
  %v2410 = vadd.f32 %v2361, %v2409
  %v2411 = vpop.f32.mrb[0].mxu0
  %v2412 = vpop.f32.mrb[0].mxu0
  %v2413 = vadd.f32 %v2364, %v2412
  %v2414 = vpop.f32.mrb[0].mxu0
  %2415 = vmatprep.mubr.bf16.mxu0 %v678
  %2416 = vmatmul.mubr.bf16.gmra.mrb[0].mxu0 %v677
  %v2417 = vpop.f32.mrb[0].mxu0
  %v2418 = vadd.f32 %v2369, %v2417
  %v2419 = vpop.f32.mrb[0].mxu0
  %v2420 = vpop.f32.mrb[0].mxu0
  %v2421 = vadd.f32 %v2372, %v2420
  %v2422 = vpop.f32.mrb[0].mxu0
  %2423 = vdwg.mxu0
  %2424 = vmatprep.subr.bf16.mxu0 0
  %2425 = vmatpush1.bf16.msra.mxu0 %v1694
  %2426 = vmatprep.subr.bf16.mxu0 0
  %2427 = vmatpush1.bf16.msra.mxu0 %v1695
  %2428 = vmatprep.subr.bf16.mxu0 0
  %2429 = vmatpush1.bf16.msra.mxu0 %v1696
  %2430 = vmatprep.subr.bf16.mxu0 0
  %2431 = vmatpush1.bf16.msra.mxu0 %v1697
  %2432 = vmatprep.subr.bf16.mxu0 0
  %2433 = vmatpush1.bf16.msra.mxu0 %v1698
  %2434 = vmatprep.subr.bf16.mxu0 0
  %2435 = vmatpush1.bf16.msra.mxu0 %v1699
  %2436 = vmatprep.subr.bf16.mxu0 0
  %2437 = vmatpush1.bf16.msra.mxu0 %v1700
  %2438 = vmatprep.subr.bf16.mxu0 0
  %2439 = vmatpush1.bf16.msra.mxu0 %v1701
  %2440 = vmatprep.subr.bf16.mxu0 0
  %2441 = vmatpush1.bf16.msra.mxu0 %v1702
  %2442 = vmatprep.subr.bf16.mxu0 0
  %2443 = vmatpush1.bf16.msra.mxu0 %v1703
  %2444 = vmatprep.subr.bf16.mxu0 0
  %2445 = vmatpush1.bf16.msra.mxu0 %v1704
  %2446 = vmatprep.subr.bf16.mxu0 0
  %2447 = vmatpush1.bf16.msra.mxu0 %v1705
  %2448 = vmatprep.subr.bf16.mxu0 0
  %2449 = vmatpush1.bf16.msra.mxu0 %v1706
  %2450 = vmatprep.subr.bf16.mxu0 0
  %2451 = vmatpush1.bf16.msra.mxu0 %v1707
  %2452 = vmatprep.subr.bf16.mxu0 0
  %2453 = vmatpush1.bf16.msra.mxu0 %v1708
  %2454 = vmatprep.subr.bf16.mxu0 0
  %2455 = vmatpush1.bf16.msra.mxu0 %v1709
  %2456 = vmatprep.mubr.bf16.mxu0 %v655
  %2457 = vmatmul.mubr.bf16.gmra.mrb[0].mxu0 %v654
  %v2458 = vpop.f32.mrb[0].mxu0
  %v2459 = vadd.f32 %v2410, %v2458
  %v2460 = vpop.f32.mrb[0].mxu0
  %v2461 = vpop.f32.mrb[0].mxu0
  %v2462 = vadd.f32 %v2413, %v2461
  %v2463 = vpop.f32.mrb[0].mxu0
  %2464 = vmatprep.mubr.bf16.mxu0 %v680
  %2465 = vmatmul.mubr.bf16.gmra.mrb[0].mxu0 %v679
  %v2466 = vpop.f32.mrb[0].mxu0
  %v2467 = vadd.f32 %v2418, %v2466
  %v2468 = vpop.f32.mrb[0].mxu0
  %v2469 = vpop.f32.mrb[0].mxu0
  %v2470 = vadd.f32 %v2421, %v2469
  %v2471 = vpop.f32.mrb[0].mxu0
  %2472 = vdwg.mxu0
  %2473 = vmatprep.subr.bf16.mxu0 0
  %2474 = vmatpush1.bf16.msra.mxu0 %v1710
  %2475 = vmatprep.subr.bf16.mxu0 0
  %2476 = vmatpush1.bf16.msra.mxu0 %v1711
  %2477 = vmatprep.subr.bf16.mxu0 0
  %2478 = vmatpush1.bf16.msra.mxu0 %v1712
  %2479 = vmatprep.subr.bf16.mxu0 0
  %2480 = vmatpush1.bf16.msra.mxu0 %v1713
  %2481 = vmatprep.subr.bf16.mxu0 0
  %2482 = vmatpush1.bf16.msra.mxu0 %v1714
  %2483 = vmatprep.subr.bf16.mxu0 0
  %2484 = vmatpush1.bf16.msra.mxu0 %v1715
  %2485 = vmatprep.subr.bf16.mxu0 0
  %2486 = vmatpush1.bf16.msra.mxu0 %v1716
  %2487 = vmatprep.subr.bf16.mxu0 0
  %2488 = vmatpush1.bf16.msra.mxu0 %v1717
  %2489 = vmatprep.subr.bf16.mxu0 0
  %2490 = vmatpush1.bf16.msra.mxu0 %v1718
  %2491 = vmatprep.subr.bf16.mxu0 0
  %2492 = vmatpush1.bf16.msra.mxu0 %v1719
  %2493 = vmatprep.subr.bf16.mxu0 0
  %2494 = vmatpush1.bf16.msra.mxu0 %v1720
  %2495 = vmatprep.subr.bf16.mxu0 0
  %2496 = vmatpush1.bf16.msra.mxu0 %v1721
  %2497 = vmatprep.subr.bf16.mxu0 0
  %2498 = vmatpush1.bf16.msra.mxu0 %v1722
  %2499 = vmatprep.subr.bf16.mxu0 0
  %2500 = vmatpush1.bf16.msra.mxu0 %v1723
  %2501 = vmatprep.subr.bf16.mxu0 0
  %2502 = vmatpush1.bf16.msra.mxu0 %v1724
  %2503 = vmatprep.subr.bf16.mxu0 0
  %2504 = vmatpush1.bf16.msra.mxu0 %v1725
  %2505 = vmatprep.mubr.bf16.mxu0 %v657
  %2506 = vmatmul.mubr.bf16.gmra.mrb[0].mxu0 %v656
  %v2507 = vpop.f32.mrb[0].mxu0
  %v2508 = vadd.f32 %v2459, %v2507
  %v2509 = vpop.f32.mrb[0].mxu0
  %v2510 = vpop.f32.mrb[0].mxu0
  %v2511 = vadd.f32 %v2462, %v2510
  %v2512 = vpop.f32.mrb[0].mxu0
  %2513 = vmatprep.mubr.bf16.mxu0 %v682
  %2514 = vmatmul.mubr.bf16.gmra.mrb[0].mxu0 %v681
  %v2515 = vpop.f32.mrb[0].mxu0
  %v2516 = vadd.f32 %v2467, %v2515
  %v2517 = vpop.f32.mrb[0].mxu0
  %v2518 = vpop.f32.mrb[0].mxu0
  %v2519 = vadd.f32 %v2470, %v2518
  %v2520 = vpop.f32.mrb[0].mxu0
  %2521 = vdwg.mxu0
  %2522 = vmatprep.subr.bf16.mxu0 0
  %2523 = vmatpush1.bf16.msra.mxu0 %v1726
  %2524 = vmatprep.subr.bf16.mxu0 0
  %2525 = vmatpush1.bf16.msra.mxu0 %v1727
  %2526 = vmatprep.subr.bf16.mxu0 0
  %2527 = vmatpush1.bf16.msra.mxu0 %v1728
  %2528 = vmatprep.subr.bf16.mxu0 0
  %2529 = vmatpush1.bf16.msra.mxu0 %v1729
  %2530 = vmatprep.subr.bf16.mxu0 0
  %2531 = vmatpush1.bf16.msra.mxu0 %v1730
  %2532 = vmatprep.subr.bf16.mxu0 0
  %2533 = vmatpush1.bf16.msra.mxu0 %v1731
  %2534 = vmatprep.subr.bf16.mxu0 0
  %2535 = vmatpush1.bf16.msra.mxu0 %v1732
  %2536 = vmatprep.subr.bf16.mxu0 0
  %2537 = vmatpush1.bf16.msra.mxu0 %v1733
  %2538 = vmatprep.subr.bf16.mxu0 0
  %2539 = vmatpush1.bf16.msra.mxu0 0
  %2540 = vmatprep.subr.bf16.mxu0 0
  %2541 = vmatpush1.bf16.msra.mxu0 0
  %2542 = vmatprep.subr.bf16.mxu0 0
  %2543 = vmatpush1.bf16.msra.mxu0 0
  %2544 = vmatprep.subr.bf16.mxu0 0
  %2545 = vmatpush1.bf16.msra.mxu0 0
  %2546 = vmatprep.subr.bf16.mxu0 0
  %2547 = vmatpush1.bf16.msra.mxu0 0
  %2548 = vmatprep.subr.bf16.mxu0 0
  %2549 = vmatpush1.bf16.msra.mxu0 0
  %2550 = vmatprep.subr.bf16.mxu0 0
  %2551 = vmatpush1.bf16.msra.mxu0 0
  %2552 = vmatprep.subr.bf16.mxu0 0
  %2553 = vmatpush1.bf16.msra.mxu0 0
  %2554 = vmatprep.mubr.bf16.mxu0 0
  %2555 = vmatmul.mubr.bf16.gmra.mrb[0].mxu0 %v658
  %v2556 = vpop.f32.mrb[0].mxu0
  %v2557 = vadd.f32 %v2508, %v2556
  %v2558 = vpop.f32.mrb[0].mxu0
  %v2559 = vpop.f32.mrb[0].mxu0
  %v2560 = vadd.f32 %v2511, %v2559
  %v2561 = vpop.f32.mrb[0].mxu0
  %2562 = vmatprep.mubr.bf16.mxu0 0
  %2563 = vmatmul.mubr.bf16.gmra.mrb[0].mxu0 %v683
  %v2564 = vpop.f32.mrb[0].mxu0
  %v2565 = vadd.f32 %v2516, %v2564
  %v2566 = vpop.f32.mrb[0].mxu0
  %v2567 = vpop.f32.mrb[0].mxu0
  %v2568 = vadd.f32 %v2519, %v2567
  %v2569 = vpop.f32.mrb[0].mxu0
  %2570 = vdwg.mxu0
  %v2571 = vadd.f32 %v26, %v2557
  %v2572 = vadd.f32 %v27, %v2560
  %v2573 = vadd.f32 %v28, %v2565
  %v2574 = vadd.f32 %v29, %v2568
  %2575 = vst [vmem:[#allocation2] sm:$0xff] %v2571
  %2576 = vst [vmem:[#allocation2 + $0x8] sm:$0xff] %v2572
  %2577 = vst [vmem:[#allocation2 + $0x10] sm:$0xff] %v2573
  %2578 = vst [vmem:[#allocation2 + $0x18] sm:$0xff] %v2574
  // Predicated region
  $region18: #{_lambda_.11} parent=0 // pred_check
    %p2579 = pneg %p18
  $region19: #{_lambda_.11} parent=0 // pred_check_branch
    %2581 = sbr.rel (%p2579) target = $region21
  $region20: #{_lambda_.11} parent=0 // pred_region
    %v2582 = vld [vmem:[#allocation2] sm:$0xff]
    %v2583 = vld [vmem:[#allocation2 + $0x8] sm:$0xff]
    %v2584 = vld [vmem:[#allocation2 + $0x10] sm:$0xff]
    %v2585 = vld [vmem:[#allocation2 + $0x18] sm:$0xff]
    %v2586 = vld [vmem:[%s2] sm:$0x1]
    %v2588 = vlaneseq
    %v2589 = vshrl.u32 %v2588, 7
    %v2590 = vsub.s32 0, %v2589
    %v2591 = vrot.slane %v2586, %v2590
    %v2593 = vadd.f32 %v2582, %v2591
    %v2594 = vadd.f32 %v2583, %v2591
    %v2595 = vadd.f32 %v2584, %v2591
    %v2596 = vadd.f32 %v2585, %v2591
    %2597 = vst [vmem:[%s3] sm:$0xff] %v2593
    %2598 = vst [vmem:[%s3 + $0x8] sm:$0xff] %v2594
    %2599 = vst [vmem:[%s3 + $0x10] sm:$0xff] %v2595
    %2600 = vst [vmem:[%s3 + $0x18] sm:$0xff] %v2596
    %v2601 = vadd.f32 %v2593, %v2594
    %v2602 = vadd.f32 %v2601, %v2595
    %v2603 = vadd.f32 %v2602, %v2596
    %v2604 = vrot.slane %v2603, 4
    %v2605 = vadd.f32 %v2603, %v2604
    %v2606 = vrot.slane %v2605, 2
    %v2607 = vadd.f32 %v2605, %v2606
    %v2608 = vrot.slane %v2607, 1
    %v2609 = vadd.f32 %v2607, %v2608
    %2610 = vst [vmem:[%s4] sm:$0x1] %v2609
    %v2611 = vmul.f32 %v2593, %v2593
    %v2612 = vmul.f32 %v2594, %v2594
    %v2613 = vmul.f32 %v2595, %v2595
    %v2614 = vmul.f32 %v2596, %v2596
    %v2615 = vadd.f32 %v2611, %v2612
    %v2616 = vadd.f32 %v2615, %v2613
    %v2617 = vadd.f32 %v2616, %v2614
    %v2618 = vrot.slane %v2617, 4
    %v2619 = vadd.f32 %v2617, %v2618
    %v2620 = vrot.slane %v2619, 2
    %v2621 = vadd.f32 %v2619, %v2620
    %v2622 = vrot.slane %v2621, 1
    %v2623 = vadd.f32 %v2621, %v2622
    %2624 = vst [vmem:[%s5] sm:$0x1] %v2623
  $region21: #{_lambda_.11} parent=0 // pred_fallthru
    _
  // Predicated region
  $region22: #{_lambda_.11} parent=0 // pred_check
    _
  $region23: #{_lambda_.11} parent=0 // pred_check_branch
    %2626 = sbr.rel (0) target = $region25
  $region24: #{_lambda_.11} parent=0 // pred_region
    _
  $region25: #{_lambda_.11} parent=0 // pred_fallthru
    _
  // Predicated region
  $region26: #{_lambda_.11} parent=0 // pred_check
    _
  $region27: #{_lambda_.11} parent=0 // pred_check_branch
    %2628 = sbr.rel (0) target = $region29
  $region28: #{_lambda_.11} parent=0 // pred_region
    _
  $region29: #{_lambda_.11} parent=0 // pred_fallthru
    _
  // Predicated region
  $region30: #{_lambda_.11} parent=0 // pred_check
    _
  $region31: #{_lambda_.11} parent=0 // pred_check_branch
    %2630 = sbr.rel (0) target = $region33
  $region32: #{_lambda_.11} parent=0 // pred_region
    _
  $region33: #{_lambda_.11} parent=0 // pred_fallthru
    _
  // Predicated region
  $region34: #{_lambda_.11} parent=0 // pred_check
    _
  $region35: #{_lambda_.11} parent=0 // pred_check_branch
    %2632 = sbr.rel (0) target = $region37
  $region36: #{_lambda_.11} parent=0 // pred_region
    _
  $region37: #{_lambda_.11} parent=0 // pred_fallthru
    _
  // Predicated region
  $region38: #{_lambda_.11} parent=0 // pred_check
    _
  $region39: #{_lambda_.11} parent=0 // pred_check_branch
    %2634 = sbr.rel (0) target = $region41
  $region40: #{_lambda_.11} parent=0 // pred_region
    _
  $region41: #{_lambda_.11} parent=0 // pred_fallthru
    _
  // Predicated region
  $region42: #{_lambda_.11} parent=0 // pred_check
    _
  $region43: #{_lambda_.11} parent=0 // pred_check_branch
    %2636 = sbr.rel (0) target = $region45
  $region44: #{_lambda_.11} parent=0 // pred_region
    _
  $region45: #{_lambda_.11} parent=0 // pred_fallthru
    _

// kernel: _lambda_.14
$region0: #{_lambda_.14}
  #allocation0 [shape = 'u32[]', space=smem, size = 0x4, offset = 0x4, fixed_abs, tag = 'smem constant byte address 0x4 - core index']
  #allocation1 [shape = 'u32[144,128]{1,0:T(1,128)}', space=vmem, size = 0x12000, scoped, tag = 'internal scratch']
  %s0 = inlined_call_operand.vmem [shape: f32[8,128], index: 0, kind: input, shape index: {}]
  %s1 = inlined_call_operand.vmem [shape: f32[1,128], index: 1, kind: input, shape index: {}]
  %s2 = inlined_call_operand.vmem [shape: f32[1,128], index: 2, kind: input, shape index: {}]
  %s3 = inlined_call_operand.vmem [shape: bf16[8,128], index: 3, kind: output, shape index: {}]
  %s4 = sld [smem:[#allocation0]]
  $region22: #{_lambda_.14} parent=0
    _
  %s6 = ssub.s32 1, %s4
  %s7 = scalar_select 0, %s6, %s4
  // Predicated region
  $region2: #{_lambda_.14} parent=0 // pred_check
    _
  $region3: #{_lambda_.14} parent=0 // pred_check_branch
    %9 = sbr.rel (0) target = $region5
  $region4: #{_lambda_.14} parent=0 // pred_region
    _
  $region5: #{_lambda_.14} parent=0 // pred_fallthru
    _
  // Predicated region
  $region6: #{_lambda_.14} parent=0 // pred_check
    _
  $region7: #{_lambda_.14} parent=0 // pred_check_branch
    %11 = sbr.rel (0) target = $region9
  $region8: #{_lambda_.14} parent=0 // pred_region
    _
  $region9: #{_lambda_.14} parent=0 // pred_fallthru
    _
  // Predicated region
  $region10: #{_lambda_.14} parent=0 // pred_check
    _
  $region11: #{_lambda_.14} parent=0 // pred_check_branch
    %13 = sbr.rel (0) target = $region13
  $region12: #{_lambda_.14} parent=0 // pred_region
    _
  $region13: #{_lambda_.14} parent=0 // pred_fallthru
    _
  %v14 = vld [vmem:[%s0] sm:$0xff]
  %v15 = vld [vmem:[%s1] sm:$0x1]
  %v17 = vlaneseq
  %v18 = vshrl.u32 %v17, 7
  %v19 = vsub.s32 0, %v18
  %v20 = vrot.slane %v15, %v19
  %v22 = vmul.f32 %v14, %v20
  %v23 = vld [vmem:[%s2] sm:$0x1]
  %v25 = vlaneseq
  %v26 = vshrl.u32 %v25, 7
  %v27 = vsub.s32 0, %v26
  %v28 = vrot.slane %v23, %v27
  %v30 = vadd.f32 %v22, %v28
  %vm31 = vcmp.gt.f32.partialorder %v30, 0.0
  %v32 = vmul.f32 %v30, 0.2
  %v33 = vsel %vm31, %v30, %v32
  %v34 = vpack.c.bf16 %v33, %v33
  %35 = vst [vmem:[%s3] sm:$0xf] %v34
  // Predicated region
  $region14: #{_lambda_.14} parent=0 // pred_check
    _
  $region15: #{_lambda_.14} parent=0 // pred_check_branch
    %37 = sbr.rel (0) target = $region17
  $region16: #{_lambda_.14} parent=0 // pred_region
    _
  $region17: #{_lambda_.14} parent=0 // pred_fallthru
    _
  // Predicated region
  $region18: #{_lambda_.14} parent=0 // pred_check
    _
  $region19: #{_lambda_.14} parent=0 // pred_check_branch
    %39 = sbr.rel (0) target = $region21
  $region20: #{_lambda_.14} parent=0 // pred_region
    _
  $region21: #{_lambda_.14} parent=0 // pred_fallthru
    _

// kernel: _lambda_.15
$region0: #{_lambda_.15}
  #allocation0 [shape = 'u32[]', space=smem, size = 0x4, offset = 0x4, fixed_abs, tag = 'smem constant byte address 0x4 - core index']
  #allocation1 [shape = 'u32[144,128]{1,0:T(1,128)}', space=vmem, size = 0x12000, scoped, tag = 'internal scratch']
  #allocation2 [shape = 'f32[2,256]{1,0:T(2,128)}', space=vmem, size = 0x800, scoped, tag = 'scratch operand']
  %s0 = inlined_call_operand.vmem [shape: bf16[2,512], index: 0, kind: input, shape index: {}]
  %s1 = inlined_call_operand.vmem [shape: bf16[512,256], index: 1, kind: input, shape index: {}]
  %s2 = inlined_call_operand.vmem [shape: f32[1,256], index: 2, kind: input, shape index: {}]
  %s3 = inlined_call_operand.hbm [shape: f32[2,128], index: 3, kind: output, shape index: {0}]
  %s4 = inlined_call_operand.hbm [shape: f32[2,128], index: 4, kind: output, shape index: {1}]
  %5 = xla_tuple %s3, %s4
  %s6 = sld [smem:[#allocation0]]
  $region38: #{_lambda_.15} parent=0
    _
  %s8 = ssub.s32 1, %s6
  %s9 = scalar_select 0, %s8, %s6
  $region1: #{_lambda_.15} parent=0
    #allocation3 [shape = 'u8[1024]{0}', space=vmem, size = 0x400, scoped, tag = 'output window, operand 0, single buffered']
    #allocation4 [shape = 's32[1]{0}', space=sflag, size = 0x4, scoped, tag = 'scoped memory for _lambda_.15']
    #allocation5 [shape = 'u8[1024]{0}', space=vmem, size = 0x400, scoped, tag = 'output window, operand 1, single buffered']
    #allocation6 [shape = 's32[1]{0}', space=sflag, size = 0x4, scoped, tag = 'scoped memory for _lambda_.15']
    %10 = vsyncpa [#allocation4], 0
    %11 = vsyncpa [#allocation6], 0
    // Predicated region
    $region2: #{_lambda_.15} parent=1 // pred_check
      _
    $region3: #{_lambda_.15} parent=1 // pred_check_branch
      %13 = sbr.rel (0) target = $region5
    $region4: #{_lambda_.15} parent=1 // pred_region
      _
    $region5: #{_lambda_.15} parent=1 // pred_fallthru
      _
    // Predicated region
    $region6: #{_lambda_.15} parent=1 // pred_check
      _
    $region7: #{_lambda_.15} parent=1 // pred_check_branch
      %15 = sbr.rel (0) target = $region9
    $region8: #{_lambda_.15} parent=1 // pred_region
      _
    $region9: #{_lambda_.15} parent=1 // pred_fallthru
      _
    // Predicated region
    $region10: #{_lambda_.15} parent=1 // pred_check
      _
    $region11: #{_lambda_.15} parent=1 // pred_check_branch
      %17 = sbr.rel (0) target = $region13
    $region12: #{_lambda_.15} parent=1 // pred_region
      _
    $region13: #{_lambda_.15} parent=1 // pred_fallthru
      _
    %p18 = scmp.eq.s32.totalorder 0, 0
    // Predicated region
    $region14: #{_lambda_.15} parent=1 // pred_check
      %p19 = pneg %p18
    $region15: #{_lambda_.15} parent=1 // pred_check_branch
      %21 = sbr.rel (%p19) target = $region17
    $region16: #{_lambda_.15} parent=1 // pred_region
      %22 = vst [vmem:[#allocation2] sm:$0xf] 0.0
    $region17: #{_lambda_.15} parent=1 // pred_fallthru
      _
    %v23 = vld [vmem:[#allocation2] sm:$0xf]
    %v24 = vld [vmem:[%s0] sm:$0xf]
    %v25 = vld [vmem:[%s1] sm:$0xff]
    %v26 = vld [vmem:[%s1 + $0x8] sm:$0xff]
    %v27 = vld [vmem:[%s1 + $0x10] sm:$0xff]
    %v28 = vld [vmem:[%s1 + $0x18] sm:$0xff]
    %v29 = vld [vmem:[%s1 + $0x20] sm:$0xff]
    %v30 = vld [vmem:[%s1 + $0x28] sm:$0xff]
    %v31 = vld [vmem:[%s1 + $0x30] sm:$0xff]
    %v32 = vld [vmem:[%s1 + $0x38] sm:$0xff]
    %v33 = vld [vmem:[%s1 + $0x40] sm:$0xff]
    %v34 = vld [vmem:[%s1 + $0x48] sm:$0xff]
    %v35 = vld [vmem:[%s1 + $0x50] sm:$0xff]
    %v36 = vld [vmem:[%s1 + $0x58] sm:$0xff]
    %v37 = vld [vmem:[%s1 + $0x60] sm:$0xff]
    %v38 = vld [vmem:[%s1 + $0x68] sm:$0xff]
    %v39 = vld [vmem:[%s1 + $0x70] sm:$0xff]
    %v40 = vld [vmem:[%s1 + $0x78] sm:$0xff]
    %v41 = vld [vmem:[%s1 + $0x80] sm:$0xff]
    %v42 = vld [vmem:[%s1 + $0x88] sm:$0xff]
    %v43 = vld [vmem:[%s1 + $0x90] sm:$0xff]
    %v44 = vld [vmem:[%s1 + $0x98] sm:$0xff]
    %v45 = vld [vmem:[%s1 + $0xa0] sm:$0xff]
    %v46 = vld [vmem:[%s1 + $0xa8] sm:$0xff]
    %v47 = vld [vmem:[%s1 + $0xb0] sm:$0xff]
    %v48 = vld [vmem:[%s1 + $0xb8] sm:$0xff]
    %v49 = vld [vmem:[%s1 + $0xc0] sm:$0xff]
    %v50 = vld [vmem:[%s1 + $0xc8] sm:$0xff]
    %v51 = vld [vmem:[%s1 + $0xd0] sm:$0xff]
    %v52 = vld [vmem:[%s1 + $0xd8] sm:$0xff]
    %v53 = vld [vmem:[%s1 + $0xe0] sm:$0xff]
    %v54 = vld [vmem:[%s1 + $0xe8] sm:$0xff]
    %v55 = vld [vmem:[%s1 + $0xf0] sm:$0xff]
    %v56 = vld [vmem:[%s1 + $0xf8] sm:$0xff]
    %v57 = vld [vmem:[%s1 + $0x100] sm:$0xff]
    %v58 = vld [vmem:[%s1 + $0x108] sm:$0xff]
    %v59 = vld [vmem:[%s1 + $0x110] sm:$0xff]
    %v60 = vld [vmem:[%s1 + $0x118] sm:$0xff]
    %v61 = vld [vmem:[%s1 + $0x120] sm:$0xff]
    %v62 = vld [vmem:[%s1 + $0x128] sm:$0xff]
    %v63 = vld [vmem:[%s1 + $0x130] sm:$0xff]
    %v64 = vld [vmem:[%s1 + $0x138] sm:$0xff]
    %v65 = vld [vmem:[%s1 + $0x140] sm:$0xff]
    %v66 = vld [vmem:[%s1 + $0x148] sm:$0xff]
    %v67 = vld [vmem:[%s1 + $0x150] sm:$0xff]
    %v68 = vld [vmem:[%s1 + $0x158] sm:$0xff]
    %v69 = vld [vmem:[%s1 + $0x160] sm:$0xff]
    %v70 = vld [vmem:[%s1 + $0x168] sm:$0xff]
    %v71 = vld [vmem:[%s1 + $0x170] sm:$0xff]
    %v72 = vld [vmem:[%s1 + $0x178] sm:$0xff]
    %v73 = vld [vmem:[%s1 + $0x180] sm:$0xff]
    %v74 = vld [vmem:[%s1 + $0x188] sm:$0xff]
    %v75 = vld [vmem:[%s1 + $0x190] sm:$0xff]
    %v76 = vld [vmem:[%s1 + $0x198] sm:$0xff]
    %v77 = vld [vmem:[%s1 + $0x1a0] sm:$0xff]
    %v78 = vld [vmem:[%s1 + $0x1a8] sm:$0xff]
    %v79 = vld [vmem:[%s1 + $0x1b0] sm:$0xff]
    %v80 = vld [vmem:[%s1 + $0x1b8] sm:$0xff]
    %v81 = vld [vmem:[%s1 + $0x1c0] sm:$0xff]
    %v82 = vld [vmem:[%s1 + $0x1c8] sm:$0xff]
    %v83 = vld [vmem:[%s1 + $0x1d0] sm:$0xff]
    %v84 = vld [vmem:[%s1 + $0x1d8] sm:$0xff]
    %v85 = vld [vmem:[%s1 + $0x1e0] sm:$0xff]
    %v86 = vld [vmem:[%s1 + $0x1e8] sm:$0xff]
    %v87 = vld [vmem:[%s1 + $0x1f0] sm:$0xff]
    %v88 = vld [vmem:[%s1 + $0x1f8] sm:$0xff]
    %v91 = vunpack.c.l.s4 1966171168
    %v92 = vunpack.c.0.s8 %v91
    %v93 = vlaneseq
    %v94 = vshrl.u32 %v93, 7
    %v95 = vsub.s32 %v92, %v94
    %v96 = vrot.slane %v24, %v95
    %v97 = vcombine.high %v96, %v96
    %v99 = vunpack.c.l.s4 1966171168
    %v100 = vunpack.c.0.s8 %v99
    %v101 = vlaneseq
    %v102 = vshrl.u32 %v101, 7
    %v103 = vsub.s32 %v100, %v102
    %v104 = vrot.slane %v96, %v103
    %v106 = vunpack.c.l.s4 1966171168
    %v107 = vunpack.c.0.s8 %v106
    %v108 = vlaneseq
    %v109 = vshrl.u32 %v108, 7
    %v110 = vsub.s32 %v107, %v109
    %v111 = vrot.slane %v97, %v110
    %v112 = vcombine.high %v104, %v104
    %v113 = vcombine.high %v111, %v111
    %v182 = vunpack.c.l.b16 %v25
    %v183 = vunpack.c.h.b16 %v25
    %v184 = vunpack.c.l.b16 %v26
    %v185 = vunpack.c.h.b16 %v26
    %v186 = vunpack.c.l.b16 %v27
    %v187 = vunpack.c.h.b16 %v27
    %v188 = vunpack.c.l.b16 %v28
    %v189 = vunpack.c.h.b16 %v28
    %v190 = vunpack.c.l.b16 %v29
    %v191 = vunpack.c.h.b16 %v29
    %v192 = vunpack.c.l.b16 %v30
    %v193 = vunpack.c.h.b16 %v30
    %v194 = vunpack.c.l.b16 %v31
    %v195 = vunpack.c.h.b16 %v31
    %v196 = vunpack.c.l.b16 %v32
    %v197 = vunpack.c.h.b16 %v32
    %v198 = vunpack.c.l.b16 %v33
    %v199 = vunpack.c.h.b16 %v33
    %v200 = vunpack.c.l.b16 %v34
    %v201 = vunpack.c.h.b16 %v34
    %v202 = vunpack.c.l.b16 %v35
    %v203 = vunpack.c.h.b16 %v35
    %v204 = vunpack.c.l.b16 %v36
    %v205 = vunpack.c.h.b16 %v36
    %v206 = vunpack.c.l.b16 %v37
    %v207 = vunpack.c.h.b16 %v37
    %v208 = vunpack.c.l.b16 %v38
    %v209 = vunpack.c.h.b16 %v38
    %v210 = vunpack.c.l.b16 %v39
    %v211 = vunpack.c.h.b16 %v39
    %v212 = vunpack.c.l.b16 %v40
    %v213 = vunpack.c.h.b16 %v40
    %v214 = vunpack.c.l.b16 %v41
    %v215 = vunpack.c.h.b16 %v41
    %v216 = vunpack.c.l.b16 %v42
    %v217 = vunpack.c.h.b16 %v42
    %v218 = vunpack.c.l.b16 %v43
    %v219 = vunpack.c.h.b16 %v43
    %v220 = vunpack.c.l.b16 %v44
    %v221 = vunpack.c.h.b16 %v44
    %v222 = vunpack.c.l.b16 %v45
    %v223 = vunpack.c.h.b16 %v45
    %v224 = vunpack.c.l.b16 %v46
    %v225 = vunpack.c.h.b16 %v46
    %v226 = vunpack.c.l.b16 %v47
    %v227 = vunpack.c.h.b16 %v47
    %v228 = vunpack.c.l.b16 %v48
    %v229 = vunpack.c.h.b16 %v48
    %v230 = vunpack.c.l.b16 %v49
    %v231 = vunpack.c.h.b16 %v49
    %v232 = vunpack.c.l.b16 %v50
    %v233 = vunpack.c.h.b16 %v50
    %v234 = vunpack.c.l.b16 %v51
    %v235 = vunpack.c.h.b16 %v51
    %v236 = vunpack.c.l.b16 %v52
    %v237 = vunpack.c.h.b16 %v52
    %v238 = vunpack.c.l.b16 %v53
    %v239 = vunpack.c.h.b16 %v53
    %v240 = vunpack.c.l.b16 %v54
    %v241 = vunpack.c.h.b16 %v54
    %v242 = vunpack.c.l.b16 %v55
    %v243 = vunpack.c.h.b16 %v55
    %v244 = vunpack.c.l.b16 %v56
    %v245 = vunpack.c.h.b16 %v56
    %v246 = vunpack.c.l.b16 %v57
    %v247 = vunpack.c.h.b16 %v57
    %v248 = vunpack.c.l.b16 %v58
    %v249 = vunpack.c.h.b16 %v58
    %v250 = vunpack.c.l.b16 %v59
    %v251 = vunpack.c.h.b16 %v59
    %v252 = vunpack.c.l.b16 %v60
    %v253 = vunpack.c.h.b16 %v60
    %v254 = vunpack.c.l.b16 %v61
    %v255 = vunpack.c.h.b16 %v61
    %v256 = vunpack.c.l.b16 %v62
    %v257 = vunpack.c.h.b16 %v62
    %v258 = vunpack.c.l.b16 %v63
    %v259 = vunpack.c.h.b16 %v63
    %v260 = vunpack.c.l.b16 %v64
    %v261 = vunpack.c.h.b16 %v64
    %v262 = vunpack.c.l.b16 %v65
    %v263 = vunpack.c.h.b16 %v65
    %v264 = vunpack.c.l.b16 %v66
    %v265 = vunpack.c.h.b16 %v66
    %v266 = vunpack.c.l.b16 %v67
    %v267 = vunpack.c.h.b16 %v67
    %v268 = vunpack.c.l.b16 %v68
    %v269 = vunpack.c.h.b16 %v68
    %v270 = vunpack.c.l.b16 %v69
    %v271 = vunpack.c.h.b16 %v69
    %v272 = vunpack.c.l.b16 %v70
    %v273 = vunpack.c.h.b16 %v70
    %v274 = vunpack.c.l.b16 %v71
    %v275 = vunpack.c.h.b16 %v71
    %v276 = vunpack.c.l.b16 %v72
    %v277 = vunpack.c.h.b16 %v72
    %v278 = vunpack.c.l.b16 %v73
    %v279 = vunpack.c.h.b16 %v73
    %v280 = vunpack.c.l.b16 %v74
    %v281 = vunpack.c.h.b16 %v74
    %v282 = vunpack.c.l.b16 %v75
    %v283 = vunpack.c.h.b16 %v75
    %v284 = vunpack.c.l.b16 %v76
    %v285 = vunpack.c.h.b16 %v76
    %v286 = vunpack.c.l.b16 %v77
    %v287 = vunpack.c.h.b16 %v77
    %v288 = vunpack.c.l.b16 %v78
    %v289 = vunpack.c.h.b16 %v78
    %v290 = vunpack.c.l.b16 %v79
    %v291 = vunpack.c.h.b16 %v79
    %v292 = vunpack.c.l.b16 %v80
    %v293 = vunpack.c.h.b16 %v80
    %v294 = vunpack.c.l.b16 %v81
    %v295 = vunpack.c.h.b16 %v81
    %v296 = vunpack.c.l.b16 %v82
    %v297 = vunpack.c.h.b16 %v82
    %v298 = vunpack.c.l.b16 %v83
    %v299 = vunpack.c.h.b16 %v83
    %v300 = vunpack.c.l.b16 %v84
    %v301 = vunpack.c.h.b16 %v84
    %v302 = vunpack.c.l.b16 %v85
    %v303 = vunpack.c.h.b16 %v85
    %v304 = vunpack.c.l.b16 %v86
    %v305 = vunpack.c.h.b16 %v86
    %v306 = vunpack.c.l.b16 %v87
    %v307 = vunpack.c.h.b16 %v87
    %v308 = vunpack.c.l.b16 %v88
    %v309 = vunpack.c.h.b16 %v88
    %v310 = vpack.c.b16 %v184, %v182
    %v311 = vpack.c.b16 %v185, %v183
    %v312 = vpack.c.b16 %v188, %v186
    %v313 = vpack.c.b16 %v189, %v187
    %v314 = vpack.c.b16 %v192, %v190
    %v315 = vpack.c.b16 %v193, %v191
    %v316 = vpack.c.b16 %v196, %v194
    %v317 = vpack.c.b16 %v197, %v195
    %v318 = vpack.c.b16 %v200, %v198
    %v319 = vpack.c.b16 %v201, %v199
    %v320 = vpack.c.b16 %v204, %v202
    %v321 = vpack.c.b16 %v205, %v203
    %v322 = vpack.c.b16 %v208, %v206
    %v323 = vpack.c.b16 %v209, %v207
    %v324 = vpack.c.b16 %v212, %v210
    %v325 = vpack.c.b16 %v213, %v211
    %v326 = vpack.c.b16 %v216, %v214
    %v327 = vpack.c.b16 %v217, %v215
    %v328 = vpack.c.b16 %v220, %v218
    %v329 = vpack.c.b16 %v221, %v219
    %v330 = vpack.c.b16 %v224, %v222
    %v331 = vpack.c.b16 %v225, %v223
    %v332 = vpack.c.b16 %v228, %v226
    %v333 = vpack.c.b16 %v229, %v227
    %v334 = vpack.c.b16 %v232, %v230
    %v335 = vpack.c.b16 %v233, %v231
    %v336 = vpack.c.b16 %v236, %v234
    %v337 = vpack.c.b16 %v237, %v235
    %v338 = vpack.c.b16 %v240, %v238
    %v339 = vpack.c.b16 %v241, %v239
    %v340 = vpack.c.b16 %v244, %v242
    %v341 = vpack.c.b16 %v245, %v243
    %v342 = vpack.c.b16 %v248, %v246
    %v343 = vpack.c.b16 %v249, %v247
    %v344 = vpack.c.b16 %v252, %v250
    %v345 = vpack.c.b16 %v253, %v251
    %v346 = vpack.c.b16 %v256, %v254
    %v347 = vpack.c.b16 %v257, %v255
    %v348 = vpack.c.b16 %v260, %v258
    %v349 = vpack.c.b16 %v261, %v259
    %v350 = vpack.c.b16 %v264, %v262
    %v351 = vpack.c.b16 %v265, %v263
    %v352 = vpack.c.b16 %v268, %v266
    %v353 = vpack.c.b16 %v269, %v267
    %v354 = vpack.c.b16 %v272, %v270
    %v355 = vpack.c.b16 %v273, %v271
    %v356 = vpack.c.b16 %v276, %v274
    %v357 = vpack.c.b16 %v277, %v275
    %v358 = vpack.c.b16 %v280, %v278
    %v359 = vpack.c.b16 %v281, %v279
    %v360 = vpack.c.b16 %v284, %v282
    %v361 = vpack.c.b16 %v285, %v283
    %v362 = vpack.c.b16 %v288, %v286
    %v363 = vpack.c.b16 %v289, %v287
    %v364 = vpack.c.b16 %v292, %v290
    %v365 = vpack.c.b16 %v293, %v291
    %v366 = vpack.c.b16 %v296, %v294
    %v367 = vpack.c.b16 %v297, %v295
    %v368 = vpack.c.b16 %v300, %v298
    %v369 = vpack.c.b16 %v301, %v299
    %v370 = vpack.c.b16 %v304, %v302
    %v371 = vpack.c.b16 %v305, %v303
    %v372 = vpack.c.b16 %v308, %v306
    %v373 = vpack.c.b16 %v309, %v307
    %438 = vmatprep.subr.bf16.mxu0 %v311
    %439 = vmatpush1.bf16.msra.mxu0 %v310
    %440 = vmatprep.subr.bf16.mxu0 %v313
    %441 = vmatpush1.bf16.msra.mxu0 %v312
    %442 = vmatprep.subr.bf16.mxu0 %v315
    %443 = vmatpush1.bf16.msra.mxu0 %v314
    %444 = vmatprep.subr.bf16.mxu0 %v317
    %445 = vmatpush1.bf16.msra.mxu0 %v316
    %446 = vmatprep.subr.bf16.mxu0 %v319
    %447 = vmatpush1.bf16.msra.mxu0 %v318
    %448 = vmatprep.subr.bf16.mxu0 %v321
    %449 = vmatpush1.bf16.msra.mxu0 %v320
    %450 = vmatprep.subr.bf16.mxu0 %v323
    %451 = vmatpush1.bf16.msra.mxu0 %v322
    %452 = vmatprep.subr.bf16.mxu0 %v325
    %453 = vmatpush1.bf16.msra.mxu0 %v324
    %454 = vmatprep.subr.bf16.mxu0 %v327
    %455 = vmatpush1.bf16.msra.mxu0 %v326
    %456 = vmatprep.subr.bf16.mxu0 %v329
    %457 = vmatpush1.bf16.msra.mxu0 %v328
    %458 = vmatprep.subr.bf16.mxu0 %v331
    %459 = vmatpush1.bf16.msra.mxu0 %v330
    %460 = vmatprep.subr.bf16.mxu0 %v333
    %461 = vmatpush1.bf16.msra.mxu0 %v332
    %462 = vmatprep.subr.bf16.mxu0 %v335
    %463 = vmatpush1.bf16.msra.mxu0 %v334
    %464 = vmatprep.subr.bf16.mxu0 %v337
    %465 = vmatpush1.bf16.msra.mxu0 %v336
    %466 = vmatprep.subr.bf16.mxu0 %v339
    %467 = vmatpush1.bf16.msra.mxu0 %v338
    %468 = vmatprep.subr.bf16.mxu0 %v341
    %469 = vmatpush1.bf16.msra.mxu0 %v340
    %470 = vmatprep.mubr.bf16.mxu0 %v111
    %471 = vmatmul.mubr.bf16.gmra.mrb[0].mxu0 %v104
    %v472 = vpop.f32.mrb[0].mxu0
    %v473 = vadd.f32 0.0, %v472
    %v474 = vpop.f32.mrb[0].mxu0
    %v475 = vadd.f32 0.0, %v474
    %v476 = vpop.f32.mrb[0].mxu0
    %v477 = vpop.f32.mrb[0].mxu0
    %478 = vdwg.mxu0
    %479 = vmatprep.subr.bf16.mxu0 %v343
    %480 = vmatpush1.bf16.msra.mxu0 %v342
    %481 = vmatprep.subr.bf16.mxu0 %v345
    %482 = vmatpush1.bf16.msra.mxu0 %v344
    %483 = vmatprep.subr.bf16.mxu0 %v347
    %484 = vmatpush1.bf16.msra.mxu0 %v346
    %485 = vmatprep.subr.bf16.mxu0 %v349
    %486 = vmatpush1.bf16.msra.mxu0 %v348
    %487 = vmatprep.subr.bf16.mxu0 %v351
    %488 = vmatpush1.bf16.msra.mxu0 %v350
    %489 = vmatprep.subr.bf16.mxu0 %v353
    %490 = vmatpush1.bf16.msra.mxu0 %v352
    %491 = vmatprep.subr.bf16.mxu0 %v355
    %492 = vmatpush1.bf16.msra.mxu0 %v354
    %493 = vmatprep.subr.bf16.mxu0 %v357
    %494 = vmatpush1.bf16.msra.mxu0 %v356
    %495 = vmatprep.subr.bf16.mxu0 %v359
    %496 = vmatpush1.bf16.msra.mxu0 %v358
    %497 = vmatprep.subr.bf16.mxu0 %v361
    %498 = vmatpush1.bf16.msra.mxu0 %v360
    %499 = vmatprep.subr.bf16.mxu0 %v363
    %500 = vmatpush1.bf16.msra.mxu0 %v362
    %501 = vmatprep.subr.bf16.mxu0 %v365
    %502 = vmatpush1.bf16.msra.mxu0 %v364
    %503 = vmatprep.subr.bf16.mxu0 %v367
    %504 = vmatpush1.bf16.msra.mxu0 %v366
    %505 = vmatprep.subr.bf16.mxu0 %v369
    %506 = vmatpush1.bf16.msra.mxu0 %v368
    %507 = vmatprep.subr.bf16.mxu0 %v371
    %508 = vmatpush1.bf16.msra.mxu0 %v370
    %509 = vmatprep.subr.bf16.mxu0 %v373
    %510 = vmatpush1.bf16.msra.mxu0 %v372
    %511 = vmatprep.mubr.bf16.mxu0 %v113
    %512 = vmatmul.mubr.bf16.gmra.mrb[0].mxu0 %v112
    %v513 = vpop.f32.mrb[0].mxu0
    %v514 = vadd.f32 %v473, %v513
    %v515 = vpop.f32.mrb[0].mxu0
    %v516 = vadd.f32 %v475, %v515
    %v517 = vpop.f32.mrb[0].mxu0
    %v518 = vpop.f32.mrb[0].mxu0
    %519 = vdwg.mxu0
    %v522 = vcombine.low %v514, %v516
    %v524 = vunpack.c.l.s4 1983009808
    %v525 = vunpack.c.0.s8 %v524
    %v526 = vlaneseq
    %v527 = vshrl.u32 %v526, 7
    %v528 = vsub.s32 %v525, %v527
    %v529 = vrot.slane %v522, %v528
    %v531 = vadd.f32 %v23, %v529
    %532 = vst [vmem:[#allocation2] sm:$0xf] %v531
    // Predicated region
    $region18: #{_lambda_.15} parent=1 // pred_check
      %p533 = pneg %p18
    $region19: #{_lambda_.15} parent=1 // pred_check_branch
      %535 = sbr.rel (%p533) target = $region21
    $region20: #{_lambda_.15} parent=1 // pred_region
      %v536 = vld [vmem:[#allocation2] sm:$0xf]
      %v537 = vld [vmem:[%s2] sm:$0x3]
      %v539 = vlaneseq
      %v540 = vshrl.u32 %v539, 7
      %v541 = vsub.s32 0, %v540
      %v542 = vrot.slane %v537, %v541
      %v543 = vlaneseq
      %v544 = vshrl.u32 %v543, 7
      %v545 = vsub.s32 1, %v544
      %v546 = vrot.slane %v537, %v545
      %v547 = vcombine.low %v542, %v546
      %v549 = vunpack.c.l.s4 1983009808
      %v550 = vunpack.c.0.s8 %v549
      %v551 = vlaneseq
      %v552 = vshrl.u32 %v551, 7
      %v553 = vsub.s32 %v550, %v552
      %v554 = vrot.slane %v547, %v553
      %v556 = vadd.f32 %v536, %v554
      %557 = vst [vmem:[#allocation3] sm:$0x3] %v556
      %v559 = vrot.slane %v556, 2
      %v561 = vtanh.pop %v559
      %562 = vst [vmem:[#allocation5] sm:$0x3] %v561
    $region21: #{_lambda_.15} parent=1 // pred_fallthru
      _
    // Predicated region
    $region22: #{_lambda_.15} parent=1 // pred_check
      _
    $region23: #{_lambda_.15} parent=1 // pred_check_branch
      %564 = sbr.rel (0) target = $region25
    $region24: #{_lambda_.15} parent=1 // pred_region
      %s566 = ssub.s32 32, 32
      %567 = vsyncadd [#allocation4], %s566
      %s569 = sshll.u32 [#allocation3], 4
      %s570 = int_to_ptr.vmem [resolvable:$true] %s569
      %572 = dma.vmem_to_hbm [thread:$0]  %s570, 32, %s3, [#allocation4]
    $region25: #{_lambda_.15} parent=1 // pred_fallthru
      _
    // Predicated region
    $region26: #{_lambda_.15} parent=1 // pred_check
      _
    $region27: #{_lambda_.15} parent=1 // pred_check_branch
      %574 = sbr.rel (0) target = $region29
    $region28: #{_lambda_.15} parent=1 // pred_region
      %s576 = ssub.s32 32, 32
      %577 = vsyncadd [#allocation6], %s576
      %s579 = sshll.u32 [#allocation5], 4
      %s580 = int_to_ptr.vmem [resolvable:$true] %s579
      %582 = dma.vmem_to_hbm [thread:$0]  %s580, 32, %s4, [#allocation6]
    $region29: #{_lambda_.15} parent=1 // pred_fallthru
      _
    // Predicated region
    $region30: #{_lambda_.15} parent=1 // pred_check
      _
    $region31: #{_lambda_.15} parent=1 // pred_check_branch
      %584 = sbr.rel (0) target = $region33
    $region32: #{_lambda_.15} parent=1 // pred_region
      %585 = dma.done [#allocation4], 32
    $region33: #{_lambda_.15} parent=1 // pred_fallthru
      _
    // Predicated region
    $region34: #{_lambda_.15} parent=1 // pred_check
      _
    $region35: #{_lambda_.15} parent=1 // pred_check_branch
      %587 = sbr.rel (0) target = $region37
    $region36: #{_lambda_.15} parent=1 // pred_region
      %588 = dma.done [#allocation6], 32
    $region37: #{_lambda_.15} parent=1 // pred_fallthru
      _
    %589 = vsyncpa [#allocation4], 1
    %590 = vsyncpa [#allocation6], 1

// kernel: _lambda_.13
$region0: #{_lambda_.13}
  #allocation0 [shape = 'u32[]', space=smem, size = 0x4, offset = 0x4, fixed_abs, tag = 'smem constant byte address 0x4 - core index']
  #allocation1 [shape = 'u32[144,128]{1,0:T(1,128)}', space=vmem, size = 0x12000, scoped, tag = 'internal scratch']
  #allocation2 [shape = 'f32[8,128]{1,0:T(8,128)}', space=vmem, size = 0x1000, scoped, tag = 'scratch operand']
  %s0 = inlined_call_operand.vmem [shape: bf16[8,3200], index: 0, kind: input, shape index: {}]
  %s1 = inlined_call_operand.vmem [shape: bf16[3200,128], index: 1, kind: input, shape index: {}]
  %s2 = inlined_call_operand.vmem [shape: f32[1,128], index: 2, kind: input, shape index: {}]
  %s3 = inlined_call_operand.vmem [shape: f32[8,128], index: 3, kind: output, shape index: {0}]
  %s4 = inlined_call_operand.vmem [shape: f32[1,1,128], index: 4, kind: output, shape index: {1}]
  %s5 = inlined_call_operand.vmem [shape: f32[1,1,128], index: 5, kind: output, shape index: {2}]
  %6 = xla_tuple %s3, %s4, %s5
  %s7 = sld [smem:[#allocation0]]
  $region46: #{_lambda_.13} parent=0
    _
  %s9 = ssub.s32 1, %s7
  %s10 = scalar_select 0, %s9, %s7
  // Predicated region
  $region2: #{_lambda_.13} parent=0 // pred_check
    _
  $region3: #{_lambda_.13} parent=0 // pred_check_branch
    %12 = sbr.rel (0) target = $region5
  $region4: #{_lambda_.13} parent=0 // pred_region
    _
  $region5: #{_lambda_.13} parent=0 // pred_fallthru
    _
  // Predicated region
  $region6: #{_lambda_.13} parent=0 // pred_check
    _
  $region7: #{_lambda_.13} parent=0 // pred_check_branch
    %14 = sbr.rel (0) target = $region9
  $region8: #{_lambda_.13} parent=0 // pred_region
    _
  $region9: #{_lambda_.13} parent=0 // pred_fallthru
    _
  // Predicated region
  $region10: #{_lambda_.13} parent=0 // pred_check
    _
  $region11: #{_lambda_.13} parent=0 // pred_check_branch
    %16 = sbr.rel (0) target = $region13
  $region12: #{_lambda_.13} parent=0 // pred_region
    _
  $region13: #{_lambda_.13} parent=0 // pred_fallthru
    _
  %p18 = scmp.eq.s32.totalorder 0, 0
  // Predicated region
  $region14: #{_lambda_.13} parent=0 // pred_check
    %p19 = pneg %p18
  $region15: #{_lambda_.13} parent=0 // pred_check_branch
    %21 = sbr.rel (%p19) target = $region17
  $region16: #{_lambda_.13} parent=0 // pred_region
    %22 = vst [vmem:[#allocation2] sm:$0xff] 0.0
  $region17: #{_lambda_.13} parent=0 // pred_fallthru
    _
  %v23 = vld [vmem:[#allocation2] sm:$0xff]
  %v24 = vld [vmem:[%s0] sm:$0xff]
  %v25 = vld [vmem:[%s0 + $0x8] sm:$0xff]
  %v26 = vld [vmem:[%s0 + $0x10] sm:$0xff]
  %v27 = vld [vmem:[%s0 + $0x18] sm:$0xff]
  %v28 = vld [vmem:[%s0 + $0x20] sm:$0xff]
  %v29 = vld [vmem:[%s0 + $0x28] sm:$0xff]
  %v30 = vld [vmem:[%s0 + $0x30] sm:$0xff]
  %v31 = vld [vmem:[%s0 + $0x38] sm:$0xff]
  %v32 = vld [vmem:[%s0 + $0x40] sm:$0xff]
  %v33 = vld [vmem:[%s0 + $0x48] sm:$0xff]
  %v34 = vld [vmem:[%s0 + $0x50] sm:$0xff]
  %v35 = vld [vmem:[%s0 + $0x58] sm:$0xff]
  %v36 = vld [vmem:[%s0 + $0x60] sm:$0xf]
  %v37 = vld [vmem:[%s1] sm:$0xf]
  %v38 = vld [vmem:[%s1 + $0x4] sm:$0xf]
  %v39 = vld [vmem:[%s1 + $0x8] sm:$0xf]
  %v40 = vld [vmem:[%s1 + $0xc] sm:$0xf]
  %v41 = vld [vmem:[%s1 + $0x10] sm:$0xf]
  %v42 = vld [vmem:[%s1 + $0x14] sm:$0xf]
  %v43 = vld [vmem:[%s1 + $0x18] sm:$0xf]
  %v44 = vld [vmem:[%s1 + $0x1c] sm:$0xf]
  %v45 = vld [vmem:[%s1 + $0x20] sm:$0xf]
  %v46 = vld [vmem:[%s1 + $0x24] sm:$0xf]
  %v47 = vld [vmem:[%s1 + $0x28] sm:$0xf]
  %v48 = vld [vmem:[%s1 + $0x2c] sm:$0xf]
  %v49 = vld [vmem:[%s1 + $0x30] sm:$0xf]
  %v50 = vld [vmem:[%s1 + $0x34] sm:$0xf]
  %v51 = vld [vmem:[%s1 + $0x38] sm:$0xf]
  %v52 = vld [vmem:[%s1 + $0x3c] sm:$0xf]
  %v53 = vld [vmem:[%s1 + $0x40] sm:$0xf]
  %v54 = vld [vmem:[%s1 + $0x44] sm:$0xf]
  %v55 = vld [vmem:[%s1 + $0x48] sm:$0xf]
  %v56 = vld [vmem:[%s1 + $0x4c] sm:$0xf]
  %v57 = vld [vmem:[%s1 + $0x50] sm:$0xf]
  %v58 = vld [vmem:[%s1 + $0x54] sm:$0xf]
  %v59 = vld [vmem:[%s1 + $0x58] sm:$0xf]
  %v60 = vld [vmem:[%s1 + $0x5c] sm:$0xf]
  %v61 = vld [vmem:[%s1 + $0x60] sm:$0xf]
  %v62 = vld [vmem:[%s1 + $0x64] sm:$0xf]
  %v63 = vld [vmem:[%s1 + $0x68] sm:$0xf]
  %v64 = vld [vmem:[%s1 + $0x6c] sm:$0xf]
  %v65 = vld [vmem:[%s1 + $0x70] sm:$0xf]
  %v66 = vld [vmem:[%s1 + $0x74] sm:$0xf]
  %v67 = vld [vmem:[%s1 + $0x78] sm:$0xf]
  %v68 = vld [vmem:[%s1 + $0x7c] sm:$0xf]
  %v69 = vld [vmem:[%s1 + $0x80] sm:$0xf]
  %v70 = vld [vmem:[%s1 + $0x84] sm:$0xf]
  %v71 = vld [vmem:[%s1 + $0x88] sm:$0xf]
  %v72 = vld [vmem:[%s1 + $0x8c] sm:$0xf]
  %v73 = vld [vmem:[%s1 + $0x90] sm:$0xf]
  %v74 = vld [vmem:[%s1 + $0x94] sm:$0xf]
  %v75 = vld [vmem:[%s1 + $0x98] sm:$0xf]
  %v76 = vld [vmem:[%s1 + $0x9c] sm:$0xf]
  %v77 = vld [vmem:[%s1 + $0xa0] sm:$0xf]
  %v78 = vld [vmem:[%s1 + $0xa4] sm:$0xf]
  %v79 = vld [vmem:[%s1 + $0xa8] sm:$0xf]
  %v80 = vld [vmem:[%s1 + $0xac] sm:$0xf]
  %v81 = vld [vmem:[%s1 + $0xb0] sm:$0xf]
  %v82 = vld [vmem:[%s1 + $0xb4] sm:$0xf]
  %v83 = vld [vmem:[%s1 + $0xb8] sm:$0xf]
  %v84 = vld [vmem:[%s1 + $0xbc] sm:$0xf]
  %v85 = vld [vmem:[%s1 + $0xc0] sm:$0xf]
  %v86 = vld [vmem:[%s1 + $0xc4] sm:$0xf]
  %v87 = vld [vmem:[%s1 + $0xc8] sm:$0xf]
  %v88 = vld [vmem:[%s1 + $0xcc] sm:$0xf]
  %v89 = vld [vmem:[%s1 + $0xd0] sm:$0xf]
  %v90 = vld [vmem:[%s1 + $0xd4] sm:$0xf]
  %v91 = vld [vmem:[%s1 + $0xd8] sm:$0xf]
  %v92 = vld [vmem:[%s1 + $0xdc] sm:$0xf]
  %v93 = vld [vmem:[%s1 + $0xe0] sm:$0xf]
  %v94 = vld [vmem:[%s1 + $0xe4] sm:$0xf]
  %v95 = vld [vmem:[%s1 + $0xe8] sm:$0xf]
  %v96 = vld [vmem:[%s1 + $0xec] sm:$0xf]
  %v97 = vld [vmem:[%s1 + $0xf0] sm:$0xf]
  %v98 = vld [vmem:[%s1 + $0xf4] sm:$0xf]
  %v99 = vld [vmem:[%s1 + $0xf8] sm:$0xf]
  %v100 = vld [vmem:[%s1 + $0xfc] sm:$0xf]
  %v101 = vld [vmem:[%s1 + $0x100] sm:$0xf]
  %v102 = vld [vmem:[%s1 + $0x104] sm:$0xf]
  %v103 = vld [vmem:[%s1 + $0x108] sm:$0xf]
  %v104 = vld [vmem:[%s1 + $0x10c] sm:$0xf]
  %v105 = vld [vmem:[%s1 + $0x110] sm:$0xf]
  %v106 = vld [vmem:[%s1 + $0x114] sm:$0xf]
  %v107 = vld [vmem:[%s1 + $0x118] sm:$0xf]
  %v108 = vld [vmem:[%s1 + $0x11c] sm:$0xf]
  %v109 = vld [vmem:[%s1 + $0x120] sm:$0xf]
  %v110 = vld [vmem:[%s1 + $0x124] sm:$0xf]
  %v111 = vld [vmem:[%s1 + $0x128] sm:$0xf]
  %v112 = vld [vmem:[%s1 + $0x12c] sm:$0xf]
  %v113 = vld [vmem:[%s1 + $0x130] sm:$0xf]
  %v114 = vld [vmem:[%s1 + $0x134] sm:$0xf]
  %v115 = vld [vmem:[%s1 + $0x138] sm:$0xf]
  %v116 = vld [vmem:[%s1 + $0x13c] sm:$0xf]
  %v117 = vld [vmem:[%s1 + $0x140] sm:$0xf]
  %v118 = vld [vmem:[%s1 + $0x144] sm:$0xf]
  %v119 = vld [vmem:[%s1 + $0x148] sm:$0xf]
  %v120 = vld [vmem:[%s1 + $0x14c] sm:$0xf]
  %v121 = vld [vmem:[%s1 + $0x150] sm:$0xf]
  %v122 = vld [vmem:[%s1 + $0x154] sm:$0xf]
  %v123 = vld [vmem:[%s1 + $0x158] sm:$0xf]
  %v124 = vld [vmem:[%s1 + $0x15c] sm:$0xf]
  %v125 = vld [vmem:[%s1 + $0x160] sm:$0xf]
  %v126 = vld [vmem:[%s1 + $0x164] sm:$0xf]
  %v127 = vld [vmem:[%s1 + $0x168] sm:$0xf]
  %v128 = vld [vmem:[%s1 + $0x16c] sm:$0xf]
  %v129 = vld [vmem:[%s1 + $0x170] sm:$0xf]
  %v130 = vld [vmem:[%s1 + $0x174] sm:$0xf]
  %v131 = vld [vmem:[%s1 + $0x178] sm:$0xf]
  %v132 = vld [vmem:[%s1 + $0x17c] sm:$0xf]
  %v133 = vld [vmem:[%s1 + $0x180] sm:$0xf]
  %v134 = vld [vmem:[%s1 + $0x184] sm:$0xf]
  %v135 = vld [vmem:[%s1 + $0x188] sm:$0xf]
  %v136 = vld [vmem:[%s1 + $0x18c] sm:$0xf]
  %v137 = vld [vmem:[%s1 + $0x190] sm:$0xf]
  %v138 = vld [vmem:[%s1 + $0x194] sm:$0xf]
  %v139 = vld [vmem:[%s1 + $0x198] sm:$0xf]
  %v140 = vld [vmem:[%s1 + $0x19c] sm:$0xf]
  %v141 = vld [vmem:[%s1 + $0x1a0] sm:$0xf]
  %v142 = vld [vmem:[%s1 + $0x1a4] sm:$0xf]
  %v143 = vld [vmem:[%s1 + $0x1a8] sm:$0xf]
  %v144 = vld [vmem:[%s1 + $0x1ac] sm:$0xf]
  %v145 = vld [vmem:[%s1 + $0x1b0] sm:$0xf]
  %v146 = vld [vmem:[%s1 + $0x1b4] sm:$0xf]
  %v147 = vld [vmem:[%s1 + $0x1b8] sm:$0xf]
  %v148 = vld [vmem:[%s1 + $0x1bc] sm:$0xf]
  %v149 = vld [vmem:[%s1 + $0x1c0] sm:$0xf]
  %v150 = vld [vmem:[%s1 + $0x1c4] sm:$0xf]
  %v151 = vld [vmem:[%s1 + $0x1c8] sm:$0xf]
  %v152 = vld [vmem:[%s1 + $0x1cc] sm:$0xf]
  %v153 = vld [vmem:[%s1 + $0x1d0] sm:$0xf]
  %v154 = vld [vmem:[%s1 + $0x1d4] sm:$0xf]
  %v155 = vld [vmem:[%s1 + $0x1d8] sm:$0xf]
  %v156 = vld [vmem:[%s1 + $0x1dc] sm:$0xf]
  %v157 = vld [vmem:[%s1 + $0x1e0] sm:$0xf]
  %v158 = vld [vmem:[%s1 + $0x1e4] sm:$0xf]
  %v159 = vld [vmem:[%s1 + $0x1e8] sm:$0xf]
  %v160 = vld [vmem:[%s1 + $0x1ec] sm:$0xf]
  %v161 = vld [vmem:[%s1 + $0x1f0] sm:$0xf]
  %v162 = vld [vmem:[%s1 + $0x1f4] sm:$0xf]
  %v163 = vld [vmem:[%s1 + $0x1f8] sm:$0xf]
  %v164 = vld [vmem:[%s1 + $0x1fc] sm:$0xf]
  %v165 = vld [vmem:[%s1 + $0x200] sm:$0xf]
  %v166 = vld [vmem:[%s1 + $0x204] sm:$0xf]
  %v167 = vld [vmem:[%s1 + $0x208] sm:$0xf]
  %v168 = vld [vmem:[%s1 + $0x20c] sm:$0xf]
  %v169 = vld [vmem:[%s1 + $0x210] sm:$0xf]
  %v170 = vld [vmem:[%s1 + $0x214] sm:$0xf]
  %v171 = vld [vmem:[%s1 + $0x218] sm:$0xf]
  %v172 = vld [vmem:[%s1 + $0x21c] sm:$0xf]
  %v173 = vld [vmem:[%s1 + $0x220] sm:$0xf]
  %v174 = vld [vmem:[%s1 + $0x224] sm:$0xf]
  %v175 = vld [vmem:[%s1 + $0x228] sm:$0xf]
  %v176 = vld [vmem:[%s1 + $0x22c] sm:$0xf]
  %v177 = vld [vmem:[%s1 + $0x230] sm:$0xf]
  %v178 = vld [vmem:[%s1 + $0x234] sm:$0xf]
  %v179 = vld [vmem:[%s1 + $0x238] sm:$0xf]
  %v180 = vld [vmem:[%s1 + $0x23c] sm:$0xf]
  %v181 = vld [vmem:[%s1 + $0x240] sm:$0xf]
  %v182 = vld [vmem:[%s1 + $0x244] sm:$0xf]
  %v183 = vld [vmem:[%s1 + $0x248] sm:$0xf]
  %v184 = vld [vmem:[%s1 + $0x24c] sm:$0xf]
  %v185 = vld [vmem:[%s1 + $0x250] sm:$0xf]
  %v186 = vld [vmem:[%s1 + $0x254] sm:$0xf]
  %v187 = vld [vmem:[%s1 + $0x258] sm:$0xf]
  %v188 = vld [vmem:[%s1 + $0x25c] sm:$0xf]
  %v189 = vld [vmem:[%s1 + $0x260] sm:$0xf]
  %v190 = vld [vmem:[%s1 + $0x264] sm:$0xf]
  %v191 = vld [vmem:[%s1 + $0x268] sm:$0xf]
  %v192 = vld [vmem:[%s1 + $0x26c] sm:$0xf]
  %v193 = vld [vmem:[%s1 + $0x270] sm:$0xf]
  %v194 = vld [vmem:[%s1 + $0x274] sm:$0xf]
  %v195 = vld [vmem:[%s1 + $0x278] sm:$0xf]
  %v196 = vld [vmem:[%s1 + $0x27c] sm:$0xf]
  %v197 = vld [vmem:[%s1 + $0x280] sm:$0xf]
  %v198 = vld [vmem:[%s1 + $0x284] sm:$0xf]
  %v199 = vld [vmem:[%s1 + $0x288] sm:$0xf]
  %v200 = vld [vmem:[%s1 + $0x28c] sm:$0xf]
  %v201 = vld [vmem:[%s1 + $0x290] sm:$0xf]
  %v202 = vld [vmem:[%s1 + $0x294] sm:$0xf]
  %v203 = vld [vmem:[%s1 + $0x298] sm:$0xf]
  %v204 = vld [vmem:[%s1 + $0x29c] sm:$0xf]
  %v205 = vld [vmem:[%s1 + $0x2a0] sm:$0xf]
  %v206 = vld [vmem:[%s1 + $0x2a4] sm:$0xf]
  %v207 = vld [vmem:[%s1 + $0x2a8] sm:$0xf]
  %v208 = vld [vmem:[%s1 + $0x2ac] sm:$0xf]
  %v209 = vld [vmem:[%s1 + $0x2b0] sm:$0xf]
  %v210 = vld [vmem:[%s1 + $0x2b4] sm:$0xf]
  %v211 = vld [vmem:[%s1 + $0x2b8] sm:$0xf]
  %v212 = vld [vmem:[%s1 + $0x2bc] sm:$0xf]
  %v213 = vld [vmem:[%s1 + $0x2c0] sm:$0xf]
  %v214 = vld [vmem:[%s1 + $0x2c4] sm:$0xf]
  %v215 = vld [vmem:[%s1 + $0x2c8] sm:$0xf]
  %v216 = vld [vmem:[%s1 + $0x2cc] sm:$0xf]
  %v217 = vld [vmem:[%s1 + $0x2d0] sm:$0xf]
  %v218 = vld [vmem:[%s1 + $0x2d4] sm:$0xf]
  %v219 = vld [vmem:[%s1 + $0x2d8] sm:$0xf]
  %v220 = vld [vmem:[%s1 + $0x2dc] sm:$0xf]
  %v221 = vld [vmem:[%s1 + $0x2e0] sm:$0xf]
  %v222 = vld [vmem:[%s1 + $0x2e4] sm:$0xf]
  %v223 = vld [vmem:[%s1 + $0x2e8] sm:$0xf]
  %v224 = vld [vmem:[%s1 + $0x2ec] sm:$0xf]
  %v225 = vld [vmem:[%s1 + $0x2f0] sm:$0xf]
  %v226 = vld [vmem:[%s1 + $0x2f4] sm:$0xf]
  %v227 = vld [vmem:[%s1 + $0x2f8] sm:$0xf]
  %v228 = vld [vmem:[%s1 + $0x2fc] sm:$0xf]
  %v229 = vld [vmem:[%s1 + $0x300] sm:$0xf]
  %v230 = vld [vmem:[%s1 + $0x304] sm:$0xf]
  %v231 = vld [vmem:[%s1 + $0x308] sm:$0xf]
  %v232 = vld [vmem:[%s1 + $0x30c] sm:$0xf]
  %v233 = vld [vmem:[%s1 + $0x310] sm:$0xf]
  %v234 = vld [vmem:[%s1 + $0x314] sm:$0xf]
  %v235 = vld [vmem:[%s1 + $0x318] sm:$0xf]
  %v236 = vld [vmem:[%s1 + $0x31c] sm:$0xf]
  %v237 = vld [vmem:[%s1 + $0x320] sm:$0xf]
  %v238 = vld [vmem:[%s1 + $0x324] sm:$0xf]
  %v239 = vld [vmem:[%s1 + $0x328] sm:$0xf]
  %v240 = vld [vmem:[%s1 + $0x32c] sm:$0xf]
  %v241 = vld [vmem:[%s1 + $0x330] sm:$0xf]
  %v242 = vld [vmem:[%s1 + $0x334] sm:$0xf]
  %v243 = vld [vmem:[%s1 + $0x338] sm:$0xf]
  %v244 = vld [vmem:[%s1 + $0x33c] sm:$0xf]
  %v245 = vld [vmem:[%s1 + $0x340] sm:$0xf]
  %v246 = vld [vmem:[%s1 + $0x344] sm:$0xf]
  %v247 = vld [vmem:[%s1 + $0x348] sm:$0xf]
  %v248 = vld [vmem:[%s1 + $0x34c] sm:$0xf]
  %v249 = vld [vmem:[%s1 + $0x350] sm:$0xf]
  %v250 = vld [vmem:[%s1 + $0x354] sm:$0xf]
  %v251 = vld [vmem:[%s1 + $0x358] sm:$0xf]
  %v252 = vld [vmem:[%s1 + $0x35c] sm:$0xf]
  %v253 = vld [vmem:[%s1 + $0x360] sm:$0xf]
  %v254 = vld [vmem:[%s1 + $0x364] sm:$0xf]
  %v255 = vld [vmem:[%s1 + $0x368] sm:$0xf]
  %v256 = vld [vmem:[%s1 + $0x36c] sm:$0xf]
  %v257 = vld [vmem:[%s1 + $0x370] sm:$0xf]
  %v258 = vld [vmem:[%s1 + $0x374] sm:$0xf]
  %v259 = vld [vmem:[%s1 + $0x378] sm:$0xf]
  %v260 = vld [vmem:[%s1 + $0x37c] sm:$0xf]
  %v261 = vld [vmem:[%s1 + $0x380] sm:$0xf]
  %v262 = vld [vmem:[%s1 + $0x384] sm:$0xf]
  %v263 = vld [vmem:[%s1 + $0x388] sm:$0xf]
  %v264 = vld [vmem:[%s1 + $0x38c] sm:$0xf]
  %v265 = vld [vmem:[%s1 + $0x390] sm:$0xf]
  %v266 = vld [vmem:[%s1 + $0x394] sm:$0xf]
  %v267 = vld [vmem:[%s1 + $0x398] sm:$0xf]
  %v268 = vld [vmem:[%s1 + $0x39c] sm:$0xf]
  %v269 = vld [vmem:[%s1 + $0x3a0] sm:$0xf]
  %v270 = vld [vmem:[%s1 + $0x3a4] sm:$0xf]
  %v271 = vld [vmem:[%s1 + $0x3a8] sm:$0xf]
  %v272 = vld [vmem:[%s1 + $0x3ac] sm:$0xf]
  %v273 = vld [vmem:[%s1 + $0x3b0] sm:$0xf]
  %v274 = vld [vmem:[%s1 + $0x3b4] sm:$0xf]
  %v275 = vld [vmem:[%s1 + $0x3b8] sm:$0xf]
  %v276 = vld [vmem:[%s1 + $0x3bc] sm:$0xf]
  %v277 = vld [vmem:[%s1 + $0x3c0] sm:$0xf]
  %v278 = vld [vmem:[%s1 + $0x3c4] sm:$0xf]
  %v279 = vld [vmem:[%s1 + $0x3c8] sm:$0xf]
  %v280 = vld [vmem:[%s1 + $0x3cc] sm:$0xf]
  %v281 = vld [vmem:[%s1 + $0x3d0] sm:$0xf]
  %v282 = vld [vmem:[%s1 + $0x3d4] sm:$0xf]
  %v283 = vld [vmem:[%s1 + $0x3d8] sm:$0xf]
  %v284 = vld [vmem:[%s1 + $0x3dc] sm:$0xf]
  %v285 = vld [vmem:[%s1 + $0x3e0] sm:$0xf]
  %v286 = vld [vmem:[%s1 + $0x3e4] sm:$0xf]
  %v287 = vld [vmem:[%s1 + $0x3e8] sm:$0xf]
  %v288 = vld [vmem:[%s1 + $0x3ec] sm:$0xf]
  %v289 = vld [vmem:[%s1 + $0x3f0] sm:$0xf]
  %v290 = vld [vmem:[%s1 + $0x3f4] sm:$0xf]
  %v291 = vld [vmem:[%s1 + $0x3f8] sm:$0xf]
  %v292 = vld [vmem:[%s1 + $0x3fc] sm:$0xf]
  %v293 = vld [vmem:[%s1 + $0x400] sm:$0xf]
  %v294 = vld [vmem:[%s1 + $0x404] sm:$0xf]
  %v295 = vld [vmem:[%s1 + $0x408] sm:$0xf]
  %v296 = vld [vmem:[%s1 + $0x40c] sm:$0xf]
  %v297 = vld [vmem:[%s1 + $0x410] sm:$0xf]
  %v298 = vld [vmem:[%s1 + $0x414] sm:$0xf]
  %v299 = vld [vmem:[%s1 + $0x418] sm:$0xf]
  %v300 = vld [vmem:[%s1 + $0x41c] sm:$0xf]
  %v301 = vld [vmem:[%s1 + $0x420] sm:$0xf]
  %v302 = vld [vmem:[%s1 + $0x424] sm:$0xf]
  %v303 = vld [vmem:[%s1 + $0x428] sm:$0xf]
  %v304 = vld [vmem:[%s1 + $0x42c] sm:$0xf]
  %v305 = vld [vmem:[%s1 + $0x430] sm:$0xf]
  %v306 = vld [vmem:[%s1 + $0x434] sm:$0xf]
  %v307 = vld [vmem:[%s1 + $0x438] sm:$0xf]
  %v308 = vld [vmem:[%s1 + $0x43c] sm:$0xf]
  %v309 = vld [vmem:[%s1 + $0x440] sm:$0xf]
  %v310 = vld [vmem:[%s1 + $0x444] sm:$0xf]
  %v311 = vld [vmem:[%s1 + $0x448] sm:$0xf]
  %v312 = vld [vmem:[%s1 + $0x44c] sm:$0xf]
  %v313 = vld [vmem:[%s1 + $0x450] sm:$0xf]
  %v314 = vld [vmem:[%s1 + $0x454] sm:$0xf]
  %v315 = vld [vmem:[%s1 + $0x458] sm:$0xf]
  %v316 = vld [vmem:[%s1 + $0x45c] sm:$0xf]
  %v317 = vld [vmem:[%s1 + $0x460] sm:$0xf]
  %v318 = vld [vmem:[%s1 + $0x464] sm:$0xf]
  %v319 = vld [vmem:[%s1 + $0x468] sm:$0xf]
  %v320 = vld [vmem:[%s1 + $0x46c] sm:$0xf]
  %v321 = vld [vmem:[%s1 + $0x470] sm:$0xf]
  %v322 = vld [vmem:[%s1 + $0x474] sm:$0xf]
  %v323 = vld [vmem:[%s1 + $0x478] sm:$0xf]
  %v324 = vld [vmem:[%s1 + $0x47c] sm:$0xf]
  %v325 = vld [vmem:[%s1 + $0x480] sm:$0xf]
  %v326 = vld [vmem:[%s1 + $0x484] sm:$0xf]
  %v327 = vld [vmem:[%s1 + $0x488] sm:$0xf]
  %v328 = vld [vmem:[%s1 + $0x48c] sm:$0xf]
  %v329 = vld [vmem:[%s1 + $0x490] sm:$0xf]
  %v330 = vld [vmem:[%s1 + $0x494] sm:$0xf]
  %v331 = vld [vmem:[%s1 + $0x498] sm:$0xf]
  %v332 = vld [vmem:[%s1 + $0x49c] sm:$0xf]
  %v333 = vld [vmem:[%s1 + $0x4a0] sm:$0xf]
  %v334 = vld [vmem:[%s1 + $0x4a4] sm:$0xf]
  %v335 = vld [vmem:[%s1 + $0x4a8] sm:$0xf]
  %v336 = vld [vmem:[%s1 + $0x4ac] sm:$0xf]
  %v337 = vld [vmem:[%s1 + $0x4b0] sm:$0xf]
  %v338 = vld [vmem:[%s1 + $0x4b4] sm:$0xf]
  %v339 = vld [vmem:[%s1 + $0x4b8] sm:$0xf]
  %v340 = vld [vmem:[%s1 + $0x4bc] sm:$0xf]
  %v341 = vld [vmem:[%s1 + $0x4c0] sm:$0xf]
  %v342 = vld [vmem:[%s1 + $0x4c4] sm:$0xf]
  %v343 = vld [vmem:[%s1 + $0x4c8] sm:$0xf]
  %v344 = vld [vmem:[%s1 + $0x4cc] sm:$0xf]
  %v345 = vld [vmem:[%s1 + $0x4d0] sm:$0xf]
  %v346 = vld [vmem:[%s1 + $0x4d4] sm:$0xf]
  %v347 = vld [vmem:[%s1 + $0x4d8] sm:$0xf]
  %v348 = vld [vmem:[%s1 + $0x4dc] sm:$0xf]
  %v349 = vld [vmem:[%s1 + $0x4e0] sm:$0xf]
  %v350 = vld [vmem:[%s1 + $0x4e4] sm:$0xf]
  %v351 = vld [vmem:[%s1 + $0x4e8] sm:$0xf]
  %v352 = vld [vmem:[%s1 + $0x4ec] sm:$0xf]
  %v353 = vld [vmem:[%s1 + $0x4f0] sm:$0xf]
  %v354 = vld [vmem:[%s1 + $0x4f4] sm:$0xf]
  %v355 = vld [vmem:[%s1 + $0x4f8] sm:$0xf]
  %v356 = vld [vmem:[%s1 + $0x4fc] sm:$0xf]
  %v357 = vld [vmem:[%s1 + $0x500] sm:$0xf]
  %v358 = vld [vmem:[%s1 + $0x504] sm:$0xf]
  %v359 = vld [vmem:[%s1 + $0x508] sm:$0xf]
  %v360 = vld [vmem:[%s1 + $0x50c] sm:$0xf]
  %v361 = vld [vmem:[%s1 + $0x510] sm:$0xf]
  %v362 = vld [vmem:[%s1 + $0x514] sm:$0xf]
  %v363 = vld [vmem:[%s1 + $0x518] sm:$0xf]
  %v364 = vld [vmem:[%s1 + $0x51c] sm:$0xf]
  %v365 = vld [vmem:[%s1 + $0x520] sm:$0xf]
  %v366 = vld [vmem:[%s1 + $0x524] sm:$0xf]
  %v367 = vld [vmem:[%s1 + $0x528] sm:$0xf]
  %v368 = vld [vmem:[%s1 + $0x52c] sm:$0xf]
  %v369 = vld [vmem:[%s1 + $0x530] sm:$0xf]
  %v370 = vld [vmem:[%s1 + $0x534] sm:$0xf]
  %v371 = vld [vmem:[%s1 + $0x538] sm:$0xf]
  %v372 = vld [vmem:[%s1 + $0x53c] sm:$0xf]
  %v373 = vld [vmem:[%s1 + $0x540] sm:$0xf]
  %v374 = vld [vmem:[%s1 + $0x544] sm:$0xf]
  %v375 = vld [vmem:[%s1 + $0x548] sm:$0xf]
  %v376 = vld [vmem:[%s1 + $0x54c] sm:$0xf]
  %v377 = vld [vmem:[%s1 + $0x550] sm:$0xf]
  %v378 = vld [vmem:[%s1 + $0x554] sm:$0xf]
  %v379 = vld [vmem:[%s1 + $0x558] sm:$0xf]
  %v380 = vld [vmem:[%s1 + $0x55c] sm:$0xf]
  %v381 = vld [vmem:[%s1 + $0x560] sm:$0xf]
  %v382 = vld [vmem:[%s1 + $0x564] sm:$0xf]
  %v383 = vld [vmem:[%s1 + $0x568] sm:$0xf]
  %v384 = vld [vmem:[%s1 + $0x56c] sm:$0xf]
  %v385 = vld [vmem:[%s1 + $0x570] sm:$0xf]
  %v386 = vld [vmem:[%s1 + $0x574] sm:$0xf]
  %v387 = vld [vmem:[%s1 + $0x578] sm:$0xf]
  %v388 = vld [vmem:[%s1 + $0x57c] sm:$0xf]
  %v389 = vld [vmem:[%s1 + $0x580] sm:$0xf]
  %v390 = vld [vmem:[%s1 + $0x584] sm:$0xf]
  %v391 = vld [vmem:[%s1 + $0x588] sm:$0xf]
  %v392 = vld [vmem:[%s1 + $0x58c] sm:$0xf]
  %v393 = vld [vmem:[%s1 + $0x590] sm:$0xf]
  %v394 = vld [vmem:[%s1 + $0x594] sm:$0xf]
  %v395 = vld [vmem:[%s1 + $0x598] sm:$0xf]
  %v396 = vld [vmem:[%s1 + $0x59c] sm:$0xf]
  %v397 = vld [vmem:[%s1 + $0x5a0] sm:$0xf]
  %v398 = vld [vmem:[%s1 + $0x5a4] sm:$0xf]
  %v399 = vld [vmem:[%s1 + $0x5a8] sm:$0xf]
  %v400 = vld [vmem:[%s1 + $0x5ac] sm:$0xf]
  %v401 = vld [vmem:[%s1 + $0x5b0] sm:$0xf]
  %v402 = vld [vmem:[%s1 + $0x5b4] sm:$0xf]
  %v403 = vld [vmem:[%s1 + $0x5b8] sm:$0xf]
  %v404 = vld [vmem:[%s1 + $0x5bc] sm:$0xf]
  %v405 = vld [vmem:[%s1 + $0x5c0] sm:$0xf]
  %v406 = vld [vmem:[%s1 + $0x5c4] sm:$0xf]
  %v407 = vld [vmem:[%s1 + $0x5c8] sm:$0xf]
  %v408 = vld [vmem:[%s1 + $0x5cc] sm:$0xf]
  %v409 = vld [vmem:[%s1 + $0x5d0] sm:$0xf]
  %v410 = vld [vmem:[%s1 + $0x5d4] sm:$0xf]
  %v411 = vld [vmem:[%s1 + $0x5d8] sm:$0xf]
  %v412 = vld [vmem:[%s1 + $0x5dc] sm:$0xf]
  %v413 = vld [vmem:[%s1 + $0x5e0] sm:$0xf]
  %v414 = vld [vmem:[%s1 + $0x5e4] sm:$0xf]
  %v415 = vld [vmem:[%s1 + $0x5e8] sm:$0xf]
  %v416 = vld [vmem:[%s1 + $0x5ec] sm:$0xf]
  %v417 = vld [vmem:[%s1 + $0x5f0] sm:$0xf]
  %v418 = vld [vmem:[%s1 + $0x5f4] sm:$0xf]
  %v419 = vld [vmem:[%s1 + $0x5f8] sm:$0xf]
  %v420 = vld [vmem:[%s1 + $0x5fc] sm:$0xf]
  %v421 = vld [vmem:[%s1 + $0x600] sm:$0xf]
  %v422 = vld [vmem:[%s1 + $0x604] sm:$0xf]
  %v423 = vld [vmem:[%s1 + $0x608] sm:$0xf]
  %v424 = vld [vmem:[%s1 + $0x60c] sm:$0xf]
  %v425 = vld [vmem:[%s1 + $0x610] sm:$0xf]
  %v426 = vld [vmem:[%s1 + $0x614] sm:$0xf]
  %v427 = vld [vmem:[%s1 + $0x618] sm:$0xf]
  %v428 = vld [vmem:[%s1 + $0x61c] sm:$0xf]
  %v429 = vld [vmem:[%s1 + $0x620] sm:$0xf]
  %v430 = vld [vmem:[%s1 + $0x624] sm:$0xf]
  %v431 = vld [vmem:[%s1 + $0x628] sm:$0xf]
  %v432 = vld [vmem:[%s1 + $0x62c] sm:$0xf]
  %v433 = vld [vmem:[%s1 + $0x630] sm:$0xf]
  %v434 = vld [vmem:[%s1 + $0x634] sm:$0xf]
  %v435 = vld [vmem:[%s1 + $0x638] sm:$0xf]
  %v436 = vld [vmem:[%s1 + $0x63c] sm:$0xf]
  %v450 = vunpack.c.l.b16 %v24
  %v451 = vunpack.c.h.b16 %v24
  %v452 = vunpack.c.l.b16 %v25
  %v453 = vunpack.c.h.b16 %v25
  %v454 = vunpack.c.l.b16 %v26
  %v455 = vunpack.c.h.b16 %v26
  %v456 = vunpack.c.l.b16 %v27
  %v457 = vunpack.c.h.b16 %v27
  %v458 = vunpack.c.l.b16 %v28
  %v459 = vunpack.c.h.b16 %v28
  %v460 = vunpack.c.l.b16 %v29
  %v461 = vunpack.c.h.b16 %v29
  %v462 = vunpack.c.l.b16 %v30
  %v463 = vunpack.c.h.b16 %v30
  %v464 = vunpack.c.l.b16 %v31
  %v465 = vunpack.c.h.b16 %v31
  %v466 = vunpack.c.l.b16 %v32
  %v467 = vunpack.c.h.b16 %v32
  %v468 = vunpack.c.l.b16 %v33
  %v469 = vunpack.c.h.b16 %v33
  %v470 = vunpack.c.l.b16 %v34
  %v471 = vunpack.c.h.b16 %v34
  %v472 = vunpack.c.l.b16 %v35
  %v473 = vunpack.c.h.b16 %v35
  %v474 = vunpack.c.l.b16 %v36
  %v475 = vpack.c.b16 %v450, %v450
  %v476 = vpack.c.b16 %v451, %v451
  %v477 = vpack.c.b16 %v452, %v452
  %v478 = vpack.c.b16 %v453, %v453
  %v479 = vpack.c.b16 %v454, %v454
  %v480 = vpack.c.b16 %v455, %v455
  %v481 = vpack.c.b16 %v456, %v456
  %v482 = vpack.c.b16 %v457, %v457
  %v483 = vpack.c.b16 %v458, %v458
  %v484 = vpack.c.b16 %v459, %v459
  %v485 = vpack.c.b16 %v460, %v460
  %v486 = vpack.c.b16 %v461, %v461
  %v487 = vpack.c.b16 %v462, %v462
  %v488 = vpack.c.b16 %v463, %v463
  %v489 = vpack.c.b16 %v464, %v464
  %v490 = vpack.c.b16 %v465, %v465
  %v491 = vpack.c.b16 %v466, %v466
  %v492 = vpack.c.b16 %v467, %v467
  %v493 = vpack.c.b16 %v468, %v468
  %v494 = vpack.c.b16 %v469, %v469
  %v495 = vpack.c.b16 %v470, %v470
  %v496 = vpack.c.b16 %v471, %v471
  %v497 = vpack.c.b16 %v472, %v472
  %v498 = vpack.c.b16 %v473, %v473
  %v499 = vpack.c.b16 %v474, %v474
  %v925 = vunpack.c.l.b16 %v37
  %v926 = vunpack.c.l.b16 %v38
  %v927 = vunpack.c.l.b16 %v39
  %v928 = vunpack.c.l.b16 %v40
  %v929 = vunpack.c.l.b16 %v41
  %v930 = vunpack.c.l.b16 %v42
  %v931 = vunpack.c.l.b16 %v43
  %v932 = vunpack.c.l.b16 %v44
  %v933 = vunpack.c.l.b16 %v45
  %v934 = vunpack.c.l.b16 %v46
  %v935 = vunpack.c.l.b16 %v47
  %v936 = vunpack.c.l.b16 %v48
  %v937 = vunpack.c.l.b16 %v49
  %v938 = vunpack.c.l.b16 %v50
  %v939 = vunpack.c.l.b16 %v51
  %v940 = vunpack.c.l.b16 %v52
  %v941 = vunpack.c.l.b16 %v53
  %v942 = vunpack.c.l.b16 %v54
  %v943 = vunpack.c.l.b16 %v55
  %v944 = vunpack.c.l.b16 %v56
  %v945 = vunpack.c.l.b16 %v57
  %v946 = vunpack.c.l.b16 %v58
  %v947 = vunpack.c.l.b16 %v59
  %v948 = vunpack.c.l.b16 %v60
  %v949 = vunpack.c.l.b16 %v61
  %v950 = vunpack.c.l.b16 %v62
  %v951 = vunpack.c.l.b16 %v63
  %v952 = vunpack.c.l.b16 %v64
  %v953 = vunpack.c.l.b16 %v65
  %v954 = vunpack.c.l.b16 %v66
  %v955 = vunpack.c.l.b16 %v67
  %v956 = vunpack.c.l.b16 %v68
  %v957 = vunpack.c.l.b16 %v69
  %v958 = vunpack.c.l.b16 %v70
  %v959 = vunpack.c.l.b16 %v71
  %v960 = vunpack.c.l.b16 %v72
  %v961 = vunpack.c.l.b16 %v73
  %v962 = vunpack.c.l.b16 %v74
  %v963 = vunpack.c.l.b16 %v75
  %v964 = vunpack.c.l.b16 %v76
  %v965 = vunpack.c.l.b16 %v77
  %v966 = vunpack.c.l.b16 %v78
  %v967 = vunpack.c.l.b16 %v79
  %v968 = vunpack.c.l.b16 %v80
  %v969 = vunpack.c.l.b16 %v81
  %v970 = vunpack.c.l.b16 %v82
  %v971 = vunpack.c.l.b16 %v83
  %v972 = vunpack.c.l.b16 %v84
  %v973 = vunpack.c.l.b16 %v85
  %v974 = vunpack.c.l.b16 %v86
  %v975 = vunpack.c.l.b16 %v87
  %v976 = vunpack.c.l.b16 %v88
  %v977 = vunpack.c.l.b16 %v89
  %v978 = vunpack.c.l.b16 %v90
  %v979 = vunpack.c.l.b16 %v91
  %v980 = vunpack.c.l.b16 %v92
  %v981 = vunpack.c.l.b16 %v93
  %v982 = vunpack.c.l.b16 %v94
  %v983 = vunpack.c.l.b16 %v95
  %v984 = vunpack.c.l.b16 %v96
  %v985 = vunpack.c.l.b16 %v97
  %v986 = vunpack.c.l.b16 %v98
  %v987 = vunpack.c.l.b16 %v99
  %v988 = vunpack.c.l.b16 %v100
  %v989 = vunpack.c.l.b16 %v101
  %v990 = vunpack.c.l.b16 %v102
  %v991 = vunpack.c.l.b16 %v103
  %v992 = vunpack.c.l.b16 %v104
  %v993 = vunpack.c.l.b16 %v105
  %v994 = vunpack.c.l.b16 %v106
  %v995 = vunpack.c.l.b16 %v107
  %v996 = vunpack.c.l.b16 %v108
  %v997 = vunpack.c.l.b16 %v109
  %v998 = vunpack.c.l.b16 %v110
  %v999 = vunpack.c.l.b16 %v111
  %v1000 = vunpack.c.l.b16 %v112
  %v1001 = vunpack.c.l.b16 %v113
  %v1002 = vunpack.c.l.b16 %v114
  %v1003 = vunpack.c.l.b16 %v115
  %v1004 = vunpack.c.l.b16 %v116
  %v1005 = vunpack.c.l.b16 %v117
  %v1006 = vunpack.c.l.b16 %v118
  %v1007 = vunpack.c.l.b16 %v119
  %v1008 = vunpack.c.l.b16 %v120
  %v1009 = vunpack.c.l.b16 %v121
  %v1010 = vunpack.c.l.b16 %v122
  %v1011 = vunpack.c.l.b16 %v123
  %v1012 = vunpack.c.l.b16 %v124
  %v1013 = vunpack.c.l.b16 %v125
  %v1014 = vunpack.c.l.b16 %v126
  %v1015 = vunpack.c.l.b16 %v127
  %v1016 = vunpack.c.l.b16 %v128
  %v1017 = vunpack.c.l.b16 %v129
  %v1018 = vunpack.c.l.b16 %v130
  %v1019 = vunpack.c.l.b16 %v131
  %v1020 = vunpack.c.l.b16 %v132
  %v1021 = vunpack.c.l.b16 %v133
  %v1022 = vunpack.c.l.b16 %v134
  %v1023 = vunpack.c.l.b16 %v135
  %v1024 = vunpack.c.l.b16 %v136
  %v1025 = vunpack.c.l.b16 %v137
  %v1026 = vunpack.c.l.b16 %v138
  %v1027 = vunpack.c.l.b16 %v139
  %v1028 = vunpack.c.l.b16 %v140
  %v1029 = vunpack.c.l.b16 %v141
  %v1030 = vunpack.c.l.b16 %v142
  %v1031 = vunpack.c.l.b16 %v143
  %v1032 = vunpack.c.l.b16 %v144
  %v1033 = vunpack.c.l.b16 %v145
  %v1034 = vunpack.c.l.b16 %v146
  %v1035 = vunpack.c.l.b16 %v147
  %v1036 = vunpack.c.l.b16 %v148
  %v1037 = vunpack.c.l.b16 %v149
  %v1038 = vunpack.c.l.b16 %v150
  %v1039 = vunpack.c.l.b16 %v151
  %v1040 = vunpack.c.l.b16 %v152
  %v1041 = vunpack.c.l.b16 %v153
  %v1042 = vunpack.c.l.b16 %v154
  %v1043 = vunpack.c.l.b16 %v155
  %v1044 = vunpack.c.l.b16 %v156
  %v1045 = vunpack.c.l.b16 %v157
  %v1046 = vunpack.c.l.b16 %v158
  %v1047 = vunpack.c.l.b16 %v159
  %v1048 = vunpack.c.l.b16 %v160
  %v1049 = vunpack.c.l.b16 %v161
  %v1050 = vunpack.c.l.b16 %v162
  %v1051 = vunpack.c.l.b16 %v163
  %v1052 = vunpack.c.l.b16 %v164
  %v1053 = vunpack.c.l.b16 %v165
  %v1054 = vunpack.c.l.b16 %v166
  %v1055 = vunpack.c.l.b16 %v167
  %v1056 = vunpack.c.l.b16 %v168
  %v1057 = vunpack.c.l.b16 %v169
  %v1058 = vunpack.c.l.b16 %v170
  %v1059 = vunpack.c.l.b16 %v171
  %v1060 = vunpack.c.l.b16 %v172
  %v1061 = vunpack.c.l.b16 %v173
  %v1062 = vunpack.c.l.b16 %v174
  %v1063 = vunpack.c.l.b16 %v175
  %v1064 = vunpack.c.l.b16 %v176
  %v1065 = vunpack.c.l.b16 %v177
  %v1066 = vunpack.c.l.b16 %v178
  %v1067 = vunpack.c.l.b16 %v179
  %v1068 = vunpack.c.l.b16 %v180
  %v1069 = vunpack.c.l.b16 %v181
  %v1070 = vunpack.c.l.b16 %v182
  %v1071 = vunpack.c.l.b16 %v183
  %v1072 = vunpack.c.l.b16 %v184
  %v1073 = vunpack.c.l.b16 %v185
  %v1074 = vunpack.c.l.b16 %v186
  %v1075 = vunpack.c.l.b16 %v187
  %v1076 = vunpack.c.l.b16 %v188
  %v1077 = vunpack.c.l.b16 %v189
  %v1078 = vunpack.c.l.b16 %v190
  %v1079 = vunpack.c.l.b16 %v191
  %v1080 = vunpack.c.l.b16 %v192
  %v1081 = vunpack.c.l.b16 %v193
  %v1082 = vunpack.c.l.b16 %v194
  %v1083 = vunpack.c.l.b16 %v195
  %v1084 = vunpack.c.l.b16 %v196
  %v1085 = vunpack.c.l.b16 %v197
  %v1086 = vunpack.c.l.b16 %v198
  %v1087 = vunpack.c.l.b16 %v199
  %v1088 = vunpack.c.l.b16 %v200
  %v1089 = vunpack.c.l.b16 %v201
  %v1090 = vunpack.c.l.b16 %v202
  %v1091 = vunpack.c.l.b16 %v203
  %v1092 = vunpack.c.l.b16 %v204
  %v1093 = vunpack.c.l.b16 %v205
  %v1094 = vunpack.c.l.b16 %v206
  %v1095 = vunpack.c.l.b16 %v207
  %v1096 = vunpack.c.l.b16 %v208
  %v1097 = vunpack.c.l.b16 %v209
  %v1098 = vunpack.c.l.b16 %v210
  %v1099 = vunpack.c.l.b16 %v211
  %v1100 = vunpack.c.l.b16 %v212
  %v1101 = vunpack.c.l.b16 %v213
  %v1102 = vunpack.c.l.b16 %v214
  %v1103 = vunpack.c.l.b16 %v215
  %v1104 = vunpack.c.l.b16 %v216
  %v1105 = vunpack.c.l.b16 %v217
  %v1106 = vunpack.c.l.b16 %v218
  %v1107 = vunpack.c.l.b16 %v219
  %v1108 = vunpack.c.l.b16 %v220
  %v1109 = vunpack.c.l.b16 %v221
  %v1110 = vunpack.c.l.b16 %v222
  %v1111 = vunpack.c.l.b16 %v223
  %v1112 = vunpack.c.l.b16 %v224
  %v1113 = vunpack.c.l.b16 %v225
  %v1114 = vunpack.c.l.b16 %v226
  %v1115 = vunpack.c.l.b16 %v227
  %v1116 = vunpack.c.l.b16 %v228
  %v1117 = vunpack.c.l.b16 %v229
  %v1118 = vunpack.c.l.b16 %v230
  %v1119 = vunpack.c.l.b16 %v231
  %v1120 = vunpack.c.l.b16 %v232
  %v1121 = vunpack.c.l.b16 %v233
  %v1122 = vunpack.c.l.b16 %v234
  %v1123 = vunpack.c.l.b16 %v235
  %v1124 = vunpack.c.l.b16 %v236
  %v1125 = vunpack.c.l.b16 %v237
  %v1126 = vunpack.c.l.b16 %v238
  %v1127 = vunpack.c.l.b16 %v239
  %v1128 = vunpack.c.l.b16 %v240
  %v1129 = vunpack.c.l.b16 %v241
  %v1130 = vunpack.c.l.b16 %v242
  %v1131 = vunpack.c.l.b16 %v243
  %v1132 = vunpack.c.l.b16 %v244
  %v1133 = vunpack.c.l.b16 %v245
  %v1134 = vunpack.c.l.b16 %v246
  %v1135 = vunpack.c.l.b16 %v247
  %v1136 = vunpack.c.l.b16 %v248
  %v1137 = vunpack.c.l.b16 %v249
  %v1138 = vunpack.c.l.b16 %v250
  %v1139 = vunpack.c.l.b16 %v251
  %v1140 = vunpack.c.l.b16 %v252
  %v1141 = vunpack.c.l.b16 %v253
  %v1142 = vunpack.c.l.b16 %v254
  %v1143 = vunpack.c.l.b16 %v255
  %v1144 = vunpack.c.l.b16 %v256
  %v1145 = vunpack.c.l.b16 %v257
  %v1146 = vunpack.c.l.b16 %v258
  %v1147 = vunpack.c.l.b16 %v259
  %v1148 = vunpack.c.l.b16 %v260
  %v1149 = vunpack.c.l.b16 %v261
  %v1150 = vunpack.c.l.b16 %v262
  %v1151 = vunpack.c.l.b16 %v263
  %v1152 = vunpack.c.l.b16 %v264
  %v1153 = vunpack.c.l.b16 %v265
  %v1154 = vunpack.c.l.b16 %v266
  %v1155 = vunpack.c.l.b16 %v267
  %v1156 = vunpack.c.l.b16 %v268
  %v1157 = vunpack.c.l.b16 %v269
  %v1158 = vunpack.c.l.b16 %v270
  %v1159 = vunpack.c.l.b16 %v271
  %v1160 = vunpack.c.l.b16 %v272
  %v1161 = vunpack.c.l.b16 %v273
  %v1162 = vunpack.c.l.b16 %v274
  %v1163 = vunpack.c.l.b16 %v275
  %v1164 = vunpack.c.l.b16 %v276
  %v1165 = vunpack.c.l.b16 %v277
  %v1166 = vunpack.c.l.b16 %v278
  %v1167 = vunpack.c.l.b16 %v279
  %v1168 = vunpack.c.l.b16 %v280
  %v1169 = vunpack.c.l.b16 %v281
  %v1170 = vunpack.c.l.b16 %v282
  %v1171 = vunpack.c.l.b16 %v283
  %v1172 = vunpack.c.l.b16 %v284
  %v1173 = vunpack.c.l.b16 %v285
  %v1174 = vunpack.c.l.b16 %v286
  %v1175 = vunpack.c.l.b16 %v287
  %v1176 = vunpack.c.l.b16 %v288
  %v1177 = vunpack.c.l.b16 %v289
  %v1178 = vunpack.c.l.b16 %v290
  %v1179 = vunpack.c.l.b16 %v291
  %v1180 = vunpack.c.l.b16 %v292
  %v1181 = vunpack.c.l.b16 %v293
  %v1182 = vunpack.c.l.b16 %v294
  %v1183 = vunpack.c.l.b16 %v295
  %v1184 = vunpack.c.l.b16 %v296
  %v1185 = vunpack.c.l.b16 %v297
  %v1186 = vunpack.c.l.b16 %v298
  %v1187 = vunpack.c.l.b16 %v299
  %v1188 = vunpack.c.l.b16 %v300
  %v1189 = vunpack.c.l.b16 %v301
  %v1190 = vunpack.c.l.b16 %v302
  %v1191 = vunpack.c.l.b16 %v303
  %v1192 = vunpack.c.l.b16 %v304
  %v1193 = vunpack.c.l.b16 %v305
  %v1194 = vunpack.c.l.b16 %v306
  %v1195 = vunpack.c.l.b16 %v307
  %v1196 = vunpack.c.l.b16 %v308
  %v1197 = vunpack.c.l.b16 %v309
  %v1198 = vunpack.c.l.b16 %v310
  %v1199 = vunpack.c.l.b16 %v311
  %v1200 = vunpack.c.l.b16 %v312
  %v1201 = vunpack.c.l.b16 %v313
  %v1202 = vunpack.c.l.b16 %v314
  %v1203 = vunpack.c.l.b16 %v315
  %v1204 = vunpack.c.l.b16 %v316
  %v1205 = vunpack.c.l.b16 %v317
  %v1206 = vunpack.c.l.b16 %v318
  %v1207 = vunpack.c.l.b16 %v319
  %v1208 = vunpack.c.l.b16 %v320
  %v1209 = vunpack.c.l.b16 %v321
  %v1210 = vunpack.c.l.b16 %v322
  %v1211 = vunpack.c.l.b16 %v323
  %v1212 = vunpack.c.l.b16 %v324
  %v1213 = vunpack.c.l.b16 %v325
  %v1214 = vunpack.c.l.b16 %v326
  %v1215 = vunpack.c.l.b16 %v327
  %v1216 = vunpack.c.l.b16 %v328
  %v1217 = vunpack.c.l.b16 %v329
  %v1218 = vunpack.c.l.b16 %v330
  %v1219 = vunpack.c.l.b16 %v331
  %v1220 = vunpack.c.l.b16 %v332
  %v1221 = vunpack.c.l.b16 %v333
  %v1222 = vunpack.c.l.b16 %v334
  %v1223 = vunpack.c.l.b16 %v335
  %v1224 = vunpack.c.l.b16 %v336
  %v1225 = vunpack.c.l.b16 %v337
  %v1226 = vunpack.c.l.b16 %v338
  %v1227 = vunpack.c.l.b16 %v339
  %v1228 = vunpack.c.l.b16 %v340
  %v1229 = vunpack.c.l.b16 %v341
  %v1230 = vunpack.c.l.b16 %v342
  %v1231 = vunpack.c.l.b16 %v343
  %v1232 = vunpack.c.l.b16 %v344
  %v1233 = vunpack.c.l.b16 %v345
  %v1234 = vunpack.c.l.b16 %v346
  %v1235 = vunpack.c.l.b16 %v347
  %v1236 = vunpack.c.l.b16 %v348
  %v1237 = vunpack.c.l.b16 %v349
  %v1238 = vunpack.c.l.b16 %v350
  %v1239 = vunpack.c.l.b16 %v351
  %v1240 = vunpack.c.l.b16 %v352
  %v1241 = vunpack.c.l.b16 %v353
  %v1242 = vunpack.c.l.b16 %v354
  %v1243 = vunpack.c.l.b16 %v355
  %v1244 = vunpack.c.l.b16 %v356
  %v1245 = vunpack.c.l.b16 %v357
  %v1246 = vunpack.c.l.b16 %v358
  %v1247 = vunpack.c.l.b16 %v359
  %v1248 = vunpack.c.l.b16 %v360
  %v1249 = vunpack.c.l.b16 %v361
  %v1250 = vunpack.c.l.b16 %v362
  %v1251 = vunpack.c.l.b16 %v363
  %v1252 = vunpack.c.l.b16 %v364
  %v1253 = vunpack.c.l.b16 %v365
  %v1254 = vunpack.c.l.b16 %v366
  %v1255 = vunpack.c.l.b16 %v367
  %v1256 = vunpack.c.l.b16 %v368
  %v1257 = vunpack.c.l.b16 %v369
  %v1258 = vunpack.c.l.b16 %v370
  %v1259 = vunpack.c.l.b16 %v371
  %v1260 = vunpack.c.l.b16 %v372
  %v1261 = vunpack.c.l.b16 %v373
  %v1262 = vunpack.c.l.b16 %v374
  %v1263 = vunpack.c.l.b16 %v375
  %v1264 = vunpack.c.l.b16 %v376
  %v1265 = vunpack.c.l.b16 %v377
  %v1266 = vunpack.c.l.b16 %v378
  %v1267 = vunpack.c.l.b16 %v379
  %v1268 = vunpack.c.l.b16 %v380
  %v1269 = vunpack.c.l.b16 %v381
  %v1270 = vunpack.c.l.b16 %v382
  %v1271 = vunpack.c.l.b16 %v383
  %v1272 = vunpack.c.l.b16 %v384
  %v1273 = vunpack.c.l.b16 %v385
  %v1274 = vunpack.c.l.b16 %v386
  %v1275 = vunpack.c.l.b16 %v387
  %v1276 = vunpack.c.l.b16 %v388
  %v1277 = vunpack.c.l.b16 %v389
  %v1278 = vunpack.c.l.b16 %v390
  %v1279 = vunpack.c.l.b16 %v391
  %v1280 = vunpack.c.l.b16 %v392
  %v1281 = vunpack.c.l.b16 %v393
  %v1282 = vunpack.c.l.b16 %v394
  %v1283 = vunpack.c.l.b16 %v395
  %v1284 = vunpack.c.l.b16 %v396
  %v1285 = vunpack.c.l.b16 %v397
  %v1286 = vunpack.c.l.b16 %v398
  %v1287 = vunpack.c.l.b16 %v399
  %v1288 = vunpack.c.l.b16 %v400
  %v1289 = vunpack.c.l.b16 %v401
  %v1290 = vunpack.c.l.b16 %v402
  %v1291 = vunpack.c.l.b16 %v403
  %v1292 = vunpack.c.l.b16 %v404
  %v1293 = vunpack.c.l.b16 %v405
  %v1294 = vunpack.c.l.b16 %v406
  %v1295 = vunpack.c.l.b16 %v407
  %v1296 = vunpack.c.l.b16 %v408
  %v1297 = vunpack.c.l.b16 %v409
  %v1298 = vunpack.c.l.b16 %v410
  %v1299 = vunpack.c.l.b16 %v411
  %v1300 = vunpack.c.l.b16 %v412
  %v1301 = vunpack.c.l.b16 %v413
  %v1302 = vunpack.c.l.b16 %v414
  %v1303 = vunpack.c.l.b16 %v415
  %v1304 = vunpack.c.l.b16 %v416
  %v1305 = vunpack.c.l.b16 %v417
  %v1306 = vunpack.c.l.b16 %v418
  %v1307 = vunpack.c.l.b16 %v419
  %v1308 = vunpack.c.l.b16 %v420
  %v1309 = vunpack.c.l.b16 %v421
  %v1310 = vunpack.c.l.b16 %v422
  %v1311 = vunpack.c.l.b16 %v423
  %v1312 = vunpack.c.l.b16 %v424
  %v1313 = vunpack.c.l.b16 %v425
  %v1314 = vunpack.c.l.b16 %v426
  %v1315 = vunpack.c.l.b16 %v427
  %v1316 = vunpack.c.l.b16 %v428
  %v1317 = vunpack.c.l.b16 %v429
  %v1318 = vunpack.c.l.b16 %v430
  %v1319 = vunpack.c.l.b16 %v431
  %v1320 = vunpack.c.l.b16 %v432
  %v1321 = vunpack.c.l.b16 %v433
  %v1322 = vunpack.c.l.b16 %v434
  %v1323 = vunpack.c.l.b16 %v435
  %v1324 = vunpack.c.l.b16 %v436
  %v1325 = vpack.c.b16 %v926, %v925
  %v1326 = vpack.c.b16 %v928, %v927
  %v1327 = vpack.c.b16 %v930, %v929
  %v1328 = vpack.c.b16 %v932, %v931
  %v1329 = vpack.c.b16 %v934, %v933
  %v1330 = vpack.c.b16 %v936, %v935
  %v1331 = vpack.c.b16 %v938, %v937
  %v1332 = vpack.c.b16 %v940, %v939
  %v1333 = vpack.c.b16 %v942, %v941
  %v1334 = vpack.c.b16 %v944, %v943
  %v1335 = vpack.c.b16 %v946, %v945
  %v1336 = vpack.c.b16 %v948, %v947
  %v1337 = vpack.c.b16 %v950, %v949
  %v1338 = vpack.c.b16 %v952, %v951
  %v1339 = vpack.c.b16 %v954, %v953
  %v1340 = vpack.c.b16 %v956, %v955
  %v1341 = vpack.c.b16 %v958, %v957
  %v1342 = vpack.c.b16 %v960, %v959
  %v1343 = vpack.c.b16 %v962, %v961
  %v1344 = vpack.c.b16 %v964, %v963
  %v1345 = vpack.c.b16 %v966, %v965
  %v1346 = vpack.c.b16 %v968, %v967
  %v1347 = vpack.c.b16 %v970, %v969
  %v1348 = vpack.c.b16 %v972, %v971
  %v1349 = vpack.c.b16 %v974, %v973
  %v1350 = vpack.c.b16 %v976, %v975
  %v1351 = vpack.c.b16 %v978, %v977
  %v1352 = vpack.c.b16 %v980, %v979
  %v1353 = vpack.c.b16 %v982, %v981
  %v1354 = vpack.c.b16 %v984, %v983
  %v1355 = vpack.c.b16 %v986, %v985
  %v1356 = vpack.c.b16 %v988, %v987
  %v1357 = vpack.c.b16 %v990, %v989
  %v1358 = vpack.c.b16 %v992, %v991
  %v1359 = vpack.c.b16 %v994, %v993
  %v1360 = vpack.c.b16 %v996, %v995
  %v1361 = vpack.c.b16 %v998, %v997
  %v1362 = vpack.c.b16 %v1000, %v999
  %v1363 = vpack.c.b16 %v1002, %v1001
  %v1364 = vpack.c.b16 %v1004, %v1003
  %v1365 = vpack.c.b16 %v1006, %v1005
  %v1366 = vpack.c.b16 %v1008, %v1007
  %v1367 = vpack.c.b16 %v1010, %v1009
  %v1368 = vpack.c.b16 %v1012, %v1011
  %v1369 = vpack.c.b16 %v1014, %v1013
  %v1370 = vpack.c.b16 %v1016, %v1015
  %v1371 = vpack.c.b16 %v1018, %v1017
  %v1372 = vpack.c.b16 %v1020, %v1019
  %v1373 = vpack.c.b16 %v1022, %v1021
  %v1374 = vpack.c.b16 %v1024, %v1023
  %v1375 = vpack.c.b16 %v1026, %v1025
  %v1376 = vpack.c.b16 %v1028, %v1027
  %v1377 = vpack.c.b16 %v1030, %v1029
  %v1378 = vpack.c.b16 %v1032, %v1031
  %v1379 = vpack.c.b16 %v1034, %v1033
  %v1380 = vpack.c.b16 %v1036, %v1035
  %v1381 = vpack.c.b16 %v1038, %v1037
  %v1382 = vpack.c.b16 %v1040, %v1039
  %v1383 = vpack.c.b16 %v1042, %v1041
  %v1384 = vpack.c.b16 %v1044, %v1043
  %v1385 = vpack.c.b16 %v1046, %v1045
  %v1386 = vpack.c.b16 %v1048, %v1047
  %v1387 = vpack.c.b16 %v1050, %v1049
  %v1388 = vpack.c.b16 %v1052, %v1051
  %v1389 = vpack.c.b16 %v1054, %v1053
  %v1390 = vpack.c.b16 %v1056, %v1055
  %v1391 = vpack.c.b16 %v1058, %v1057
  %v1392 = vpack.c.b16 %v1060, %v1059
  %v1393 = vpack.c.b16 %v1062, %v1061
  %v1394 = vpack.c.b16 %v1064, %v1063
  %v1395 = vpack.c.b16 %v1066, %v1065
  %v1396 = vpack.c.b16 %v1068, %v1067
  %v1397 = vpack.c.b16 %v1070, %v1069
  %v1398 = vpack.c.b16 %v1072, %v1071
  %v1399 = vpack.c.b16 %v1074, %v1073
  %v1400 = vpack.c.b16 %v1076, %v1075
  %v1401 = vpack.c.b16 %v1078, %v1077
  %v1402 = vpack.c.b16 %v1080, %v1079
  %v1403 = vpack.c.b16 %v1082, %v1081
  %v1404 = vpack.c.b16 %v1084, %v1083
  %v1405 = vpack.c.b16 %v1086, %v1085
  %v1406 = vpack.c.b16 %v1088, %v1087
  %v1407 = vpack.c.b16 %v1090, %v1089
  %v1408 = vpack.c.b16 %v1092, %v1091
  %v1409 = vpack.c.b16 %v1094, %v1093
  %v1410 = vpack.c.b16 %v1096, %v1095
  %v1411 = vpack.c.b16 %v1098, %v1097
  %v1412 = vpack.c.b16 %v1100, %v1099
  %v1413 = vpack.c.b16 %v1102, %v1101
  %v1414 = vpack.c.b16 %v1104, %v1103
  %v1415 = vpack.c.b16 %v1106, %v1105
  %v1416 = vpack.c.b16 %v1108, %v1107
  %v1417 = vpack.c.b16 %v1110, %v1109
  %v1418 = vpack.c.b16 %v1112, %v1111
  %v1419 = vpack.c.b16 %v1114, %v1113
  %v1420 = vpack.c.b16 %v1116, %v1115
  %v1421 = vpack.c.b16 %v1118, %v1117
  %v1422 = vpack.c.b16 %v1120, %v1119
  %v1423 = vpack.c.b16 %v1122, %v1121
  %v1424 = vpack.c.b16 %v1124, %v1123
  %v1425 = vpack.c.b16 %v1126, %v1125
  %v1426 = vpack.c.b16 %v1128, %v1127
  %v1427 = vpack.c.b16 %v1130, %v1129
  %v1428 = vpack.c.b16 %v1132, %v1131
  %v1429 = vpack.c.b16 %v1134, %v1133
  %v1430 = vpack.c.b16 %v1136, %v1135
  %v1431 = vpack.c.b16 %v1138, %v1137
  %v1432 = vpack.c.b16 %v1140, %v1139
  %v1433 = vpack.c.b16 %v1142, %v1141
  %v1434 = vpack.c.b16 %v1144, %v1143
  %v1435 = vpack.c.b16 %v1146, %v1145
  %v1436 = vpack.c.b16 %v1148, %v1147
  %v1437 = vpack.c.b16 %v1150, %v1149
  %v1438 = vpack.c.b16 %v1152, %v1151
  %v1439 = vpack.c.b16 %v1154, %v1153
  %v1440 = vpack.c.b16 %v1156, %v1155
  %v1441 = vpack.c.b16 %v1158, %v1157
  %v1442 = vpack.c.b16 %v1160, %v1159
  %v1443 = vpack.c.b16 %v1162, %v1161
  %v1444 = vpack.c.b16 %v1164, %v1163
  %v1445 = vpack.c.b16 %v1166, %v1165
  %v1446 = vpack.c.b16 %v1168, %v1167
  %v1447 = vpack.c.b16 %v1170, %v1169
  %v1448 = vpack.c.b16 %v1172, %v1171
  %v1449 = vpack.c.b16 %v1174, %v1173
  %v1450 = vpack.c.b16 %v1176, %v1175
  %v1451 = vpack.c.b16 %v1178, %v1177
  %v1452 = vpack.c.b16 %v1180, %v1179
  %v1453 = vpack.c.b16 %v1182, %v1181
  %v1454 = vpack.c.b16 %v1184, %v1183
  %v1455 = vpack.c.b16 %v1186, %v1185
  %v1456 = vpack.c.b16 %v1188, %v1187
  %v1457 = vpack.c.b16 %v1190, %v1189
  %v1458 = vpack.c.b16 %v1192, %v1191
  %v1459 = vpack.c.b16 %v1194, %v1193
  %v1460 = vpack.c.b16 %v1196, %v1195
  %v1461 = vpack.c.b16 %v1198, %v1197
  %v1462 = vpack.c.b16 %v1200, %v1199
  %v1463 = vpack.c.b16 %v1202, %v1201
  %v1464 = vpack.c.b16 %v1204, %v1203
  %v1465 = vpack.c.b16 %v1206, %v1205
  %v1466 = vpack.c.b16 %v1208, %v1207
  %v1467 = vpack.c.b16 %v1210, %v1209
  %v1468 = vpack.c.b16 %v1212, %v1211
  %v1469 = vpack.c.b16 %v1214, %v1213
  %v1470 = vpack.c.b16 %v1216, %v1215
  %v1471 = vpack.c.b16 %v1218, %v1217
  %v1472 = vpack.c.b16 %v1220, %v1219
  %v1473 = vpack.c.b16 %v1222, %v1221
  %v1474 = vpack.c.b16 %v1224, %v1223
  %v1475 = vpack.c.b16 %v1226, %v1225
  %v1476 = vpack.c.b16 %v1228, %v1227
  %v1477 = vpack.c.b16 %v1230, %v1229
  %v1478 = vpack.c.b16 %v1232, %v1231
  %v1479 = vpack.c.b16 %v1234, %v1233
  %v1480 = vpack.c.b16 %v1236, %v1235
  %v1481 = vpack.c.b16 %v1238, %v1237
  %v1482 = vpack.c.b16 %v1240, %v1239
  %v1483 = vpack.c.b16 %v1242, %v1241
  %v1484 = vpack.c.b16 %v1244, %v1243
  %v1485 = vpack.c.b16 %v1246, %v1245
  %v1486 = vpack.c.b16 %v1248, %v1247
  %v1487 = vpack.c.b16 %v1250, %v1249
  %v1488 = vpack.c.b16 %v1252, %v1251
  %v1489 = vpack.c.b16 %v1254, %v1253
  %v1490 = vpack.c.b16 %v1256, %v1255
  %v1491 = vpack.c.b16 %v1258, %v1257
  %v1492 = vpack.c.b16 %v1260, %v1259
  %v1493 = vpack.c.b16 %v1262, %v1261
  %v1494 = vpack.c.b16 %v1264, %v1263
  %v1495 = vpack.c.b16 %v1266, %v1265
  %v1496 = vpack.c.b16 %v1268, %v1267
  %v1497 = vpack.c.b16 %v1270, %v1269
  %v1498 = vpack.c.b16 %v1272, %v1271
  %v1499 = vpack.c.b16 %v1274, %v1273
  %v1500 = vpack.c.b16 %v1276, %v1275
  %v1501 = vpack.c.b16 %v1278, %v1277
  %v1502 = vpack.c.b16 %v1280, %v1279
  %v1503 = vpack.c.b16 %v1282, %v1281
  %v1504 = vpack.c.b16 %v1284, %v1283
  %v1505 = vpack.c.b16 %v1286, %v1285
  %v1506 = vpack.c.b16 %v1288, %v1287
  %v1507 = vpack.c.b16 %v1290, %v1289
  %v1508 = vpack.c.b16 %v1292, %v1291
  %v1509 = vpack.c.b16 %v1294, %v1293
  %v1510 = vpack.c.b16 %v1296, %v1295
  %v1511 = vpack.c.b16 %v1298, %v1297
  %v1512 = vpack.c.b16 %v1300, %v1299
  %v1513 = vpack.c.b16 %v1302, %v1301
  %v1514 = vpack.c.b16 %v1304, %v1303
  %v1515 = vpack.c.b16 %v1306, %v1305
  %v1516 = vpack.c.b16 %v1308, %v1307
  %v1517 = vpack.c.b16 %v1310, %v1309
  %v1518 = vpack.c.b16 %v1312, %v1311
  %v1519 = vpack.c.b16 %v1314, %v1313
  %v1520 = vpack.c.b16 %v1316, %v1315
  %v1521 = vpack.c.b16 %v1318, %v1317
  %v1522 = vpack.c.b16 %v1320, %v1319
  %v1523 = vpack.c.b16 %v1322, %v1321
  %v1524 = vpack.c.b16 %v1324, %v1323
  %1725 = vmatprep.subr.bf16.mxu0 0
  %1726 = vmatpush1.bf16.msra.mxu0 %v1325
  %1727 = vmatprep.subr.bf16.mxu0 0
  %1728 = vmatpush1.bf16.msra.mxu0 %v1326
  %1729 = vmatprep.subr.bf16.mxu0 0
  %1730 = vmatpush1.bf16.msra.mxu0 %v1327
  %1731 = vmatprep.subr.bf16.mxu0 0
  %1732 = vmatpush1.bf16.msra.mxu0 %v1328
  %1733 = vmatprep.subr.bf16.mxu0 0
  %1734 = vmatpush1.bf16.msra.mxu0 %v1329
  %1735 = vmatprep.subr.bf16.mxu0 0
  %1736 = vmatpush1.bf16.msra.mxu0 %v1330
  %1737 = vmatprep.subr.bf16.mxu0 0
  %1738 = vmatpush1.bf16.msra.mxu0 %v1331
  %1739 = vmatprep.subr.bf16.mxu0 0
  %1740 = vmatpush1.bf16.msra.mxu0 %v1332
  %1741 = vmatprep.subr.bf16.mxu0 0
  %1742 = vmatpush1.bf16.msra.mxu0 %v1333
  %1743 = vmatprep.subr.bf16.mxu0 0
  %1744 = vmatpush1.bf16.msra.mxu0 %v1334
  %1745 = vmatprep.subr.bf16.mxu0 0
  %1746 = vmatpush1.bf16.msra.mxu0 %v1335
  %1747 = vmatprep.subr.bf16.mxu0 0
  %1748 = vmatpush1.bf16.msra.mxu0 %v1336
  %1749 = vmatprep.subr.bf16.mxu0 0
  %1750 = vmatpush1.bf16.msra.mxu0 %v1337
  %1751 = vmatprep.subr.bf16.mxu0 0
  %1752 = vmatpush1.bf16.msra.mxu0 %v1338
  %1753 = vmatprep.subr.bf16.mxu0 0
  %1754 = vmatpush1.bf16.msra.mxu0 %v1339
  %1755 = vmatprep.subr.bf16.mxu0 0
  %1756 = vmatpush1.bf16.msra.mxu0 %v1340
  %1757 = vmatprep.mubr.bf16.mxu0 %v476
  %1758 = vmatmul.mubr.bf16.gmra.mrb[0].mxu0 %v475
  %v1759 = vpop.f32.mrb[0].mxu0
  %v1760 = vadd.f32 0.0, %v1759
  %v1761 = vpop.f32.mrb[0].mxu0
  %v1762 = vpop.f32.mrb[0].mxu0
  %v1763 = vpop.f32.mrb[0].mxu0
  %1764 = vdwg.mxu0
  %1765 = vmatprep.subr.bf16.mxu0 0
  %1766 = vmatpush1.bf16.msra.mxu0 %v1341
  %1767 = vmatprep.subr.bf16.mxu0 0
  %1768 = vmatpush1.bf16.msra.mxu0 %v1342
  %1769 = vmatprep.subr.bf16.mxu0 0
  %1770 = vmatpush1.bf16.msra.mxu0 %v1343
  %1771 = vmatprep.subr.bf16.mxu0 0
  %1772 = vmatpush1.bf16.msra.mxu0 %v1344
  %1773 = vmatprep.subr.bf16.mxu0 0
  %1774 = vmatpush1.bf16.msra.mxu0 %v1345
  %1775 = vmatprep.subr.bf16.mxu0 0
  %1776 = vmatpush1.bf16.msra.mxu0 %v1346
  %1777 = vmatprep.subr.bf16.mxu0 0
  %1778 = vmatpush1.bf16.msra.mxu0 %v1347
  %1779 = vmatprep.subr.bf16.mxu0 0
  %1780 = vmatpush1.bf16.msra.mxu0 %v1348
  %1781 = vmatprep.subr.bf16.mxu0 0
  %1782 = vmatpush1.bf16.msra.mxu0 %v1349
  %1783 = vmatprep.subr.bf16.mxu0 0
  %1784 = vmatpush1.bf16.msra.mxu0 %v1350
  %1785 = vmatprep.subr.bf16.mxu0 0
  %1786 = vmatpush1.bf16.msra.mxu0 %v1351
  %1787 = vmatprep.subr.bf16.mxu0 0
  %1788 = vmatpush1.bf16.msra.mxu0 %v1352
  %1789 = vmatprep.subr.bf16.mxu0 0
  %1790 = vmatpush1.bf16.msra.mxu0 %v1353
  %1791 = vmatprep.subr.bf16.mxu0 0
  %1792 = vmatpush1.bf16.msra.mxu0 %v1354
  %1793 = vmatprep.subr.bf16.mxu0 0
  %1794 = vmatpush1.bf16.msra.mxu0 %v1355
  %1795 = vmatprep.subr.bf16.mxu0 0
  %1796 = vmatpush1.bf16.msra.mxu0 %v1356
  %1797 = vmatprep.mubr.bf16.mxu0 %v478
  %1798 = vmatmul.mubr.bf16.gmra.mrb[0].mxu0 %v477
  %v1799 = vpop.f32.mrb[0].mxu0
  %v1800 = vadd.f32 %v1760, %v1799
  %v1801 = vpop.f32.mrb[0].mxu0
  %v1802 = vpop.f32.mrb[0].mxu0
  %v1803 = vpop.f32.mrb[0].mxu0
  %1804 = vdwg.mxu0
  %1805 = vmatprep.subr.bf16.mxu0 0
  %1806 = vmatpush1.bf16.msra.mxu0 %v1357
  %1807 = vmatprep.subr.bf16.mxu0 0
  %1808 = vmatpush1.bf16.msra.mxu0 %v1358
  %1809 = vmatprep.subr.bf16.mxu0 0
  %1810 = vmatpush1.bf16.msra.mxu0 %v1359
  %1811 = vmatprep.subr.bf16.mxu0 0
  %1812 = vmatpush1.bf16.msra.mxu0 %v1360
  %1813 = vmatprep.subr.bf16.mxu0 0
  %1814 = vmatpush1.bf16.msra.mxu0 %v1361
  %1815 = vmatprep.subr.bf16.mxu0 0
  %1816 = vmatpush1.bf16.msra.mxu0 %v1362
  %1817 = vmatprep.subr.bf16.mxu0 0
  %1818 = vmatpush1.bf16.msra.mxu0 %v1363
  %1819 = vmatprep.subr.bf16.mxu0 0
  %1820 = vmatpush1.bf16.msra.mxu0 %v1364
  %1821 = vmatprep.subr.bf16.mxu0 0
  %1822 = vmatpush1.bf16.msra.mxu0 %v1365
  %1823 = vmatprep.subr.bf16.mxu0 0
  %1824 = vmatpush1.bf16.msra.mxu0 %v1366
  %1825 = vmatprep.subr.bf16.mxu0 0
  %1826 = vmatpush1.bf16.msra.mxu0 %v1367
  %1827 = vmatprep.subr.bf16.mxu0 0
  %1828 = vmatpush1.bf16.msra.mxu0 %v1368
  %1829 = vmatprep.subr.bf16.mxu0 0
  %1830 = vmatpush1.bf16.msra.mxu0 %v1369
  %1831 = vmatprep.subr.bf16.mxu0 0
  %1832 = vmatpush1.bf16.msra.mxu0 %v1370
  %1833 = vmatprep.subr.bf16.mxu0 0
  %1834 = vmatpush1.bf16.msra.mxu0 %v1371
  %1835 = vmatprep.subr.bf16.mxu0 0
  %1836 = vmatpush1.bf16.msra.mxu0 %v1372
  %1837 = vmatprep.mubr.bf16.mxu0 %v480
  %1838 = vmatmul.mubr.bf16.gmra.mrb[0].mxu0 %v479
  %v1839 = vpop.f32.mrb[0].mxu0
  %v1840 = vadd.f32 %v1800, %v1839
  %v1841 = vpop.f32.mrb[0].mxu0
  %v1842 = vpop.f32.mrb[0].mxu0
  %v1843 = vpop.f32.mrb[0].mxu0
  %1844 = vdwg.mxu0
  %1845 = vmatprep.subr.bf16.mxu0 0
  %1846 = vmatpush1.bf16.msra.mxu0 %v1373
  %1847 = vmatprep.subr.bf16.mxu0 0
  %1848 = vmatpush1.bf16.msra.mxu0 %v1374
  %1849 = vmatprep.subr.bf16.mxu0 0
  %1850 = vmatpush1.bf16.msra.mxu0 %v1375
  %1851 = vmatprep.subr.bf16.mxu0 0
  %1852 = vmatpush1.bf16.msra.mxu0 %v1376
  %1853 = vmatprep.subr.bf16.mxu0 0
  %1854 = vmatpush1.bf16.msra.mxu0 %v1377
  %1855 = vmatprep.subr.bf16.mxu0 0
  %1856 = vmatpush1.bf16.msra.mxu0 %v1378
  %1857 = vmatprep.subr.bf16.mxu0 0
  %1858 = vmatpush1.bf16.msra.mxu0 %v1379
  %1859 = vmatprep.subr.bf16.mxu0 0
  %1860 = vmatpush1.bf16.msra.mxu0 %v1380
  %1861 = vmatprep.subr.bf16.mxu0 0
  %1862 = vmatpush1.bf16.msra.mxu0 %v1381
  %1863 = vmatprep.subr.bf16.mxu0 0
  %1864 = vmatpush1.bf16.msra.mxu0 %v1382
  %1865 = vmatprep.subr.bf16.mxu0 0
  %1866 = vmatpush1.bf16.msra.mxu0 %v1383
  %1867 = vmatprep.subr.bf16.mxu0 0
  %1868 = vmatpush1.bf16.msra.mxu0 %v1384
  %1869 = vmatprep.subr.bf16.mxu0 0
  %1870 = vmatpush1.bf16.msra.mxu0 %v1385
  %1871 = vmatprep.subr.bf16.mxu0 0
  %1872 = vmatpush1.bf16.msra.mxu0 %v1386
  %1873 = vmatprep.subr.bf16.mxu0 0
  %1874 = vmatpush1.bf16.msra.mxu0 %v1387
  %1875 = vmatprep.subr.bf16.mxu0 0
  %1876 = vmatpush1.bf16.msra.mxu0 %v1388
  %1877 = vmatprep.mubr.bf16.mxu0 %v482
  %1878 = vmatmul.mubr.bf16.gmra.mrb[0].mxu0 %v481
  %v1879 = vpop.f32.mrb[0].mxu0
  %v1880 = vadd.f32 %v1840, %v1879
  %v1881 = vpop.f32.mrb[0].mxu0
  %v1882 = vpop.f32.mrb[0].mxu0
  %v1883 = vpop.f32.mrb[0].mxu0
  %1884 = vdwg.mxu0
  %1885 = vmatprep.subr.bf16.mxu0 0
  %1886 = vmatpush1.bf16.msra.mxu0 %v1389
  %1887 = vmatprep.subr.bf16.mxu0 0
  %1888 = vmatpush1.bf16.msra.mxu0 %v1390
  %1889 = vmatprep.subr.bf16.mxu0 0
  %1890 = vmatpush1.bf16.msra.mxu0 %v1391
  %1891 = vmatprep.subr.bf16.mxu0 0
  %1892 = vmatpush1.bf16.msra.mxu0 %v1392
  %1893 = vmatprep.subr.bf16.mxu0 0
  %1894 = vmatpush1.bf16.msra.mxu0 %v1393
  %1895 = vmatprep.subr.bf16.mxu0 0
  %1896 = vmatpush1.bf16.msra.mxu0 %v1394
  %1897 = vmatprep.subr.bf16.mxu0 0
  %1898 = vmatpush1.bf16.msra.mxu0 %v1395
  %1899 = vmatprep.subr.bf16.mxu0 0
  %1900 = vmatpush1.bf16.msra.mxu0 %v1396
  %1901 = vmatprep.subr.bf16.mxu0 0
  %1902 = vmatpush1.bf16.msra.mxu0 %v1397
  %1903 = vmatprep.subr.bf16.mxu0 0
  %1904 = vmatpush1.bf16.msra.mxu0 %v1398
  %1905 = vmatprep.subr.bf16.mxu0 0
  %1906 = vmatpush1.bf16.msra.mxu0 %v1399
  %1907 = vmatprep.subr.bf16.mxu0 0
  %1908 = vmatpush1.bf16.msra.mxu0 %v1400
  %1909 = vmatprep.subr.bf16.mxu0 0
  %1910 = vmatpush1.bf16.msra.mxu0 %v1401
  %1911 = vmatprep.subr.bf16.mxu0 0
  %1912 = vmatpush1.bf16.msra.mxu0 %v1402
  %1913 = vmatprep.subr.bf16.mxu0 0
  %1914 = vmatpush1.bf16.msra.mxu0 %v1403
  %1915 = vmatprep.subr.bf16.mxu0 0
  %1916 = vmatpush1.bf16.msra.mxu0 %v1404
  %1917 = vmatprep.mubr.bf16.mxu0 %v484
  %1918 = vmatmul.mubr.bf16.gmra.mrb[0].mxu0 %v483
  %v1919 = vpop.f32.mrb[0].mxu0
  %v1920 = vadd.f32 %v1880, %v1919
  %v1921 = vpop.f32.mrb[0].mxu0
  %v1922 = vpop.f32.mrb[0].mxu0
  %v1923 = vpop.f32.mrb[0].mxu0
  %1924 = vdwg.mxu0
  %1925 = vmatprep.subr.bf16.mxu0 0
  %1926 = vmatpush1.bf16.msra.mxu0 %v1405
  %1927 = vmatprep.subr.bf16.mxu0 0
  %1928 = vmatpush1.bf16.msra.mxu0 %v1406
  %1929 = vmatprep.subr.bf16.mxu0 0
  %1930 = vmatpush1.bf16.msra.mxu0 %v1407
  %1931 = vmatprep.subr.bf16.mxu0 0
  %1932 = vmatpush1.bf16.msra.mxu0 %v1408
  %1933 = vmatprep.subr.bf16.mxu0 0
  %1934 = vmatpush1.bf16.msra.mxu0 %v1409
  %1935 = vmatprep.subr.bf16.mxu0 0
  %1936 = vmatpush1.bf16.msra.mxu0 %v1410
  %1937 = vmatprep.subr.bf16.mxu0 0
  %1938 = vmatpush1.bf16.msra.mxu0 %v1411
  %1939 = vmatprep.subr.bf16.mxu0 0
  %1940 = vmatpush1.bf16.msra.mxu0 %v1412
  %1941 = vmatprep.subr.bf16.mxu0 0
  %1942 = vmatpush1.bf16.msra.mxu0 %v1413
  %1943 = vmatprep.subr.bf16.mxu0 0
  %1944 = vmatpush1.bf16.msra.mxu0 %v1414
  %1945 = vmatprep.subr.bf16.mxu0 0
  %1946 = vmatpush1.bf16.msra.mxu0 %v1415
  %1947 = vmatprep.subr.bf16.mxu0 0
  %1948 = vmatpush1.bf16.msra.mxu0 %v1416
  %1949 = vmatprep.subr.bf16.mxu0 0
  %1950 = vmatpush1.bf16.msra.mxu0 %v1417
  %1951 = vmatprep.subr.bf16.mxu0 0
  %1952 = vmatpush1.bf16.msra.mxu0 %v1418
  %1953 = vmatprep.subr.bf16.mxu0 0
  %1954 = vmatpush1.bf16.msra.mxu0 %v1419
  %1955 = vmatprep.subr.bf16.mxu0 0
  %1956 = vmatpush1.bf16.msra.mxu0 %v1420
  %1957 = vmatprep.mubr.bf16.mxu0 %v486
  %1958 = vmatmul.mubr.bf16.gmra.mrb[0].mxu0 %v485
  %v1959 = vpop.f32.mrb[0].mxu0
  %v1960 = vadd.f32 %v1920, %v1959
  %v1961 = vpop.f32.mrb[0].mxu0
  %v1962 = vpop.f32.mrb[0].mxu0
  %v1963 = vpop.f32.mrb[0].mxu0
  %1964 = vdwg.mxu0
  %1965 = vmatprep.subr.bf16.mxu0 0
  %1966 = vmatpush1.bf16.msra.mxu0 %v1421
  %1967 = vmatprep.subr.bf16.mxu0 0
  %1968 = vmatpush1.bf16.msra.mxu0 %v1422
  %1969 = vmatprep.subr.bf16.mxu0 0
  %1970 = vmatpush1.bf16.msra.mxu0 %v1423
  %1971 = vmatprep.subr.bf16.mxu0 0
  %1972 = vmatpush1.bf16.msra.mxu0 %v1424
  %1973 = vmatprep.subr.bf16.mxu0 0
  %1974 = vmatpush1.bf16.msra.mxu0 %v1425
  %1975 = vmatprep.subr.bf16.mxu0 0
  %1976 = vmatpush1.bf16.msra.mxu0 %v1426
  %1977 = vmatprep.subr.bf16.mxu0 0
  %1978 = vmatpush1.bf16.msra.mxu0 %v1427
  %1979 = vmatprep.subr.bf16.mxu0 0
  %1980 = vmatpush1.bf16.msra.mxu0 %v1428
  %1981 = vmatprep.subr.bf16.mxu0 0
  %1982 = vmatpush1.bf16.msra.mxu0 %v1429
  %1983 = vmatprep.subr.bf16.mxu0 0
  %1984 = vmatpush1.bf16.msra.mxu0 %v1430
  %1985 = vmatprep.subr.bf16.mxu0 0
  %1986 = vmatpush1.bf16.msra.mxu0 %v1431
  %1987 = vmatprep.subr.bf16.mxu0 0
  %1988 = vmatpush1.bf16.msra.mxu0 %v1432
  %1989 = vmatprep.subr.bf16.mxu0 0
  %1990 = vmatpush1.bf16.msra.mxu0 %v1433
  %1991 = vmatprep.subr.bf16.mxu0 0
  %1992 = vmatpush1.bf16.msra.mxu0 %v1434
  %1993 = vmatprep.subr.bf16.mxu0 0
  %1994 = vmatpush1.bf16.msra.mxu0 %v1435
  %1995 = vmatprep.subr.bf16.mxu0 0
  %1996 = vmatpush1.bf16.msra.mxu0 %v1436
  %1997 = vmatprep.mubr.bf16.mxu0 %v488
  %1998 = vmatmul.mubr.bf16.gmra.mrb[0].mxu0 %v487
  %v1999 = vpop.f32.mrb[0].mxu0
  %v2000 = vadd.f32 %v1960, %v1999
  %v2001 = vpop.f32.mrb[0].mxu0
  %v2002 = vpop.f32.mrb[0].mxu0
  %v2003 = vpop.f32.mrb[0].mxu0
  %2004 = vdwg.mxu0
  %2005 = vmatprep.subr.bf16.mxu0 0
  %2006 = vmatpush1.bf16.msra.mxu0 %v1437
  %2007 = vmatprep.subr.bf16.mxu0 0
  %2008 = vmatpush1.bf16.msra.mxu0 %v1438
  %2009 = vmatprep.subr.bf16.mxu0 0
  %2010 = vmatpush1.bf16.msra.mxu0 %v1439
  %2011 = vmatprep.subr.bf16.mxu0 0
  %2012 = vmatpush1.bf16.msra.mxu0 %v1440
  %2013 = vmatprep.subr.bf16.mxu0 0
  %2014 = vmatpush1.bf16.msra.mxu0 %v1441
  %2015 = vmatprep.subr.bf16.mxu0 0
  %2016 = vmatpush1.bf16.msra.mxu0 %v1442
  %2017 = vmatprep.subr.bf16.mxu0 0
  %2018 = vmatpush1.bf16.msra.mxu0 %v1443
  %2019 = vmatprep.subr.bf16.mxu0 0
  %2020 = vmatpush1.bf16.msra.mxu0 %v1444
  %2021 = vmatprep.subr.bf16.mxu0 0
  %2022 = vmatpush1.bf16.msra.mxu0 %v1445
  %2023 = vmatprep.subr.bf16.mxu0 0
  %2024 = vmatpush1.bf16.msra.mxu0 %v1446
  %2025 = vmatprep.subr.bf16.mxu0 0
  %2026 = vmatpush1.bf16.msra.mxu0 %v1447
  %2027 = vmatprep.subr.bf16.mxu0 0
  %2028 = vmatpush1.bf16.msra.mxu0 %v1448
  %2029 = vmatprep.subr.bf16.mxu0 0
  %2030 = vmatpush1.bf16.msra.mxu0 %v1449
  %2031 = vmatprep.subr.bf16.mxu0 0
  %2032 = vmatpush1.bf16.msra.mxu0 %v1450
  %2033 = vmatprep.subr.bf16.mxu0 0
  %2034 = vmatpush1.bf16.msra.mxu0 %v1451
  %2035 = vmatprep.subr.bf16.mxu0 0
  %2036 = vmatpush1.bf16.msra.mxu0 %v1452
  %2037 = vmatprep.mubr.bf16.mxu0 %v490
  %2038 = vmatmul.mubr.bf16.gmra.mrb[0].mxu0 %v489
  %v2039 = vpop.f32.mrb[0].mxu0
  %v2040 = vadd.f32 %v2000, %v2039
  %v2041 = vpop.f32.mrb[0].mxu0
  %v2042 = vpop.f32.mrb[0].mxu0
  %v2043 = vpop.f32.mrb[0].mxu0
  %2044 = vdwg.mxu0
  %2045 = vmatprep.subr.bf16.mxu0 0
  %2046 = vmatpush1.bf16.msra.mxu0 %v1453
  %2047 = vmatprep.subr.bf16.mxu0 0
  %2048 = vmatpush1.bf16.msra.mxu0 %v1454
  %2049 = vmatprep.subr.bf16.mxu0 0
  %2050 = vmatpush1.bf16.msra.mxu0 %v1455
  %2051 = vmatprep.subr.bf16.mxu0 0
  %2052 = vmatpush1.bf16.msra.mxu0 %v1456
  %2053 = vmatprep.subr.bf16.mxu0 0
  %2054 = vmatpush1.bf16.msra.mxu0 %v1457
  %2055 = vmatprep.subr.bf16.mxu0 0
  %2056 = vmatpush1.bf16.msra.mxu0 %v1458
  %2057 = vmatprep.subr.bf16.mxu0 0
  %2058 = vmatpush1.bf16.msra.mxu0 %v1459
  %2059 = vmatprep.subr.bf16.mxu0 0
  %2060 = vmatpush1.bf16.msra.mxu0 %v1460
  %2061 = vmatprep.subr.bf16.mxu0 0
  %2062 = vmatpush1.bf16.msra.mxu0 %v1461
  %2063 = vmatprep.subr.bf16.mxu0 0
  %2064 = vmatpush1.bf16.msra.mxu0 %v1462
  %2065 = vmatprep.subr.bf16.mxu0 0
  %2066 = vmatpush1.bf16.msra.mxu0 %v1463
  %2067 = vmatprep.subr.bf16.mxu0 0
  %2068 = vmatpush1.bf16.msra.mxu0 %v1464
  %2069 = vmatprep.subr.bf16.mxu0 0
  %2070 = vmatpush1.bf16.msra.mxu0 %v1465
  %2071 = vmatprep.subr.bf16.mxu0 0
  %2072 = vmatpush1.bf16.msra.mxu0 %v1466
  %2073 = vmatprep.subr.bf16.mxu0 0
  %2074 = vmatpush1.bf16.msra.mxu0 %v1467
  %2075 = vmatprep.subr.bf16.mxu0 0
  %2076 = vmatpush1.bf16.msra.mxu0 %v1468
  %2077 = vmatprep.mubr.bf16.mxu0 %v492
  %2078 = vmatmul.mubr.bf16.gmra.mrb[0].mxu0 %v491
  %v2079 = vpop.f32.mrb[0].mxu0
  %v2080 = vadd.f32 %v2040, %v2079
  %v2081 = vpop.f32.mrb[0].mxu0
  %v2082 = vpop.f32.mrb[0].mxu0
  %v2083 = vpop.f32.mrb[0].mxu0
  %2084 = vdwg.mxu0
  %2085 = vmatprep.subr.bf16.mxu0 0
  %2086 = vmatpush1.bf16.msra.mxu0 %v1469
  %2087 = vmatprep.subr.bf16.mxu0 0
  %2088 = vmatpush1.bf16.msra.mxu0 %v1470
  %2089 = vmatprep.subr.bf16.mxu0 0
  %2090 = vmatpush1.bf16.msra.mxu0 %v1471
  %2091 = vmatprep.subr.bf16.mxu0 0
  %2092 = vmatpush1.bf16.msra.mxu0 %v1472
  %2093 = vmatprep.subr.bf16.mxu0 0
  %2094 = vmatpush1.bf16.msra.mxu0 %v1473
  %2095 = vmatprep.subr.bf16.mxu0 0
  %2096 = vmatpush1.bf16.msra.mxu0 %v1474
  %2097 = vmatprep.subr.bf16.mxu0 0
  %2098 = vmatpush1.bf16.msra.mxu0 %v1475
  %2099 = vmatprep.subr.bf16.mxu0 0
  %2100 = vmatpush1.bf16.msra.mxu0 %v1476
  %2101 = vmatprep.subr.bf16.mxu0 0
  %2102 = vmatpush1.bf16.msra.mxu0 %v1477
  %2103 = vmatprep.subr.bf16.mxu0 0
  %2104 = vmatpush1.bf16.msra.mxu0 %v1478
  %2105 = vmatprep.subr.bf16.mxu0 0
  %2106 = vmatpush1.bf16.msra.mxu0 %v1479
  %2107 = vmatprep.subr.bf16.mxu0 0
  %2108 = vmatpush1.bf16.msra.mxu0 %v1480
  %2109 = vmatprep.subr.bf16.mxu0 0
  %2110 = vmatpush1.bf16.msra.mxu0 %v1481
  %2111 = vmatprep.subr.bf16.mxu0 0
  %2112 = vmatpush1.bf16.msra.mxu0 %v1482
  %2113 = vmatprep.subr.bf16.mxu0 0
  %2114 = vmatpush1.bf16.msra.mxu0 %v1483
  %2115 = vmatprep.subr.bf16.mxu0 0
  %2116 = vmatpush1.bf16.msra.mxu0 %v1484
  %2117 = vmatprep.mubr.bf16.mxu0 %v494
  %2118 = vmatmul.mubr.bf16.gmra.mrb[0].mxu0 %v493
  %v2119 = vpop.f32.mrb[0].mxu0
  %v2120 = vadd.f32 %v2080, %v2119
  %v2121 = vpop.f32.mrb[0].mxu0
  %v2122 = vpop.f32.mrb[0].mxu0
  %v2123 = vpop.f32.mrb[0].mxu0
  %2124 = vdwg.mxu0
  %2125 = vmatprep.subr.bf16.mxu0 0
  %2126 = vmatpush1.bf16.msra.mxu0 %v1485
  %2127 = vmatprep.subr.bf16.mxu0 0
  %2128 = vmatpush1.bf16.msra.mxu0 %v1486
  %2129 = vmatprep.subr.bf16.mxu0 0
  %2130 = vmatpush1.bf16.msra.mxu0 %v1487
  %2131 = vmatprep.subr.bf16.mxu0 0
  %2132 = vmatpush1.bf16.msra.mxu0 %v1488
  %2133 = vmatprep.subr.bf16.mxu0 0
  %2134 = vmatpush1.bf16.msra.mxu0 %v1489
  %2135 = vmatprep.subr.bf16.mxu0 0
  %2136 = vmatpush1.bf16.msra.mxu0 %v1490
  %2137 = vmatprep.subr.bf16.mxu0 0
  %2138 = vmatpush1.bf16.msra.mxu0 %v1491
  %2139 = vmatprep.subr.bf16.mxu0 0
  %2140 = vmatpush1.bf16.msra.mxu0 %v1492
  %2141 = vmatprep.subr.bf16.mxu0 0
  %2142 = vmatpush1.bf16.msra.mxu0 %v1493
  %2143 = vmatprep.subr.bf16.mxu0 0
  %2144 = vmatpush1.bf16.msra.mxu0 %v1494
  %2145 = vmatprep.subr.bf16.mxu0 0
  %2146 = vmatpush1.bf16.msra.mxu0 %v1495
  %2147 = vmatprep.subr.bf16.mxu0 0
  %2148 = vmatpush1.bf16.msra.mxu0 %v1496
  %2149 = vmatprep.subr.bf16.mxu0 0
  %2150 = vmatpush1.bf16.msra.mxu0 %v1497
  %2151 = vmatprep.subr.bf16.mxu0 0
  %2152 = vmatpush1.bf16.msra.mxu0 %v1498
  %2153 = vmatprep.subr.bf16.mxu0 0
  %2154 = vmatpush1.bf16.msra.mxu0 %v1499
  %2155 = vmatprep.subr.bf16.mxu0 0
  %2156 = vmatpush1.bf16.msra.mxu0 %v1500
  %2157 = vmatprep.mubr.bf16.mxu0 %v496
  %2158 = vmatmul.mubr.bf16.gmra.mrb[0].mxu0 %v495
  %v2159 = vpop.f32.mrb[0].mxu0
  %v2160 = vadd.f32 %v2120, %v2159
  %v2161 = vpop.f32.mrb[0].mxu0
  %v2162 = vpop.f32.mrb[0].mxu0
  %v2163 = vpop.f32.mrb[0].mxu0
  %2164 = vdwg.mxu0
  %2165 = vmatprep.subr.bf16.mxu0 0
  %2166 = vmatpush1.bf16.msra.mxu0 %v1501
  %2167 = vmatprep.subr.bf16.mxu0 0
  %2168 = vmatpush1.bf16.msra.mxu0 %v1502
  %2169 = vmatprep.subr.bf16.mxu0 0
  %2170 = vmatpush1.bf16.msra.mxu0 %v1503
  %2171 = vmatprep.subr.bf16.mxu0 0
  %2172 = vmatpush1.bf16.msra.mxu0 %v1504
  %2173 = vmatprep.subr.bf16.mxu0 0
  %2174 = vmatpush1.bf16.msra.mxu0 %v1505
  %2175 = vmatprep.subr.bf16.mxu0 0
  %2176 = vmatpush1.bf16.msra.mxu0 %v1506
  %2177 = vmatprep.subr.bf16.mxu0 0
  %2178 = vmatpush1.bf16.msra.mxu0 %v1507
  %2179 = vmatprep.subr.bf16.mxu0 0
  %2180 = vmatpush1.bf16.msra.mxu0 %v1508
  %2181 = vmatprep.subr.bf16.mxu0 0
  %2182 = vmatpush1.bf16.msra.mxu0 %v1509
  %2183 = vmatprep.subr.bf16.mxu0 0
  %2184 = vmatpush1.bf16.msra.mxu0 %v1510
  %2185 = vmatprep.subr.bf16.mxu0 0
  %2186 = vmatpush1.bf16.msra.mxu0 %v1511
  %2187 = vmatprep.subr.bf16.mxu0 0
  %2188 = vmatpush1.bf16.msra.mxu0 %v1512
  %2189 = vmatprep.subr.bf16.mxu0 0
  %2190 = vmatpush1.bf16.msra.mxu0 %v1513
  %2191 = vmatprep.subr.bf16.mxu0 0
  %2192 = vmatpush1.bf16.msra.mxu0 %v1514
  %2193 = vmatprep.subr.bf16.mxu0 0
  %2194 = vmatpush1.bf16.msra.mxu0 %v1515
  %2195 = vmatprep.subr.bf16.mxu0 0
  %2196 = vmatpush1.bf16.msra.mxu0 %v1516
  %2197 = vmatprep.mubr.bf16.mxu0 %v498
  %2198 = vmatmul.mubr.bf16.gmra.mrb[0].mxu0 %v497
  %v2199 = vpop.f32.mrb[0].mxu0
  %v2200 = vadd.f32 %v2160, %v2199
  %v2201 = vpop.f32.mrb[0].mxu0
  %v2202 = vpop.f32.mrb[0].mxu0
  %v2203 = vpop.f32.mrb[0].mxu0
  %2204 = vdwg.mxu0
  %2205 = vmatprep.subr.bf16.mxu0 0
  %2206 = vmatpush1.bf16.msra.mxu0 %v1517
  %2207 = vmatprep.subr.bf16.mxu0 0
  %2208 = vmatpush1.bf16.msra.mxu0 %v1518
  %2209 = vmatprep.subr.bf16.mxu0 0
  %2210 = vmatpush1.bf16.msra.mxu0 %v1519
  %2211 = vmatprep.subr.bf16.mxu0 0
  %2212 = vmatpush1.bf16.msra.mxu0 %v1520
  %2213 = vmatprep.subr.bf16.mxu0 0
  %2214 = vmatpush1.bf16.msra.mxu0 %v1521
  %2215 = vmatprep.subr.bf16.mxu0 0
  %2216 = vmatpush1.bf16.msra.mxu0 %v1522
  %2217 = vmatprep.subr.bf16.mxu0 0
  %2218 = vmatpush1.bf16.msra.mxu0 %v1523
  %2219 = vmatprep.subr.bf16.mxu0 0
  %2220 = vmatpush1.bf16.msra.mxu0 %v1524
  %2221 = vmatprep.subr.bf16.mxu0 0
  %2222 = vmatpush1.bf16.msra.mxu0 0
  %2223 = vmatprep.subr.bf16.mxu0 0
  %2224 = vmatpush1.bf16.msra.mxu0 0
  %2225 = vmatprep.subr.bf16.mxu0 0
  %2226 = vmatpush1.bf16.msra.mxu0 0
  %2227 = vmatprep.subr.bf16.mxu0 0
  %2228 = vmatpush1.bf16.msra.mxu0 0
  %2229 = vmatprep.subr.bf16.mxu0 0
  %2230 = vmatpush1.bf16.msra.mxu0 0
  %2231 = vmatprep.subr.bf16.mxu0 0
  %2232 = vmatpush1.bf16.msra.mxu0 0
  %2233 = vmatprep.subr.bf16.mxu0 0
  %2234 = vmatpush1.bf16.msra.mxu0 0
  %2235 = vmatprep.subr.bf16.mxu0 0
  %2236 = vmatpush1.bf16.msra.mxu0 0
  %2237 = vmatprep.mubr.bf16.mxu0 0
  %2238 = vmatmul.mubr.bf16.gmra.mrb[0].mxu0 %v499
  %v2239 = vpop.f32.mrb[0].mxu0
  %v2240 = vadd.f32 %v2200, %v2239
  %v2241 = vpop.f32.mrb[0].mxu0
  %v2242 = vpop.f32.mrb[0].mxu0
  %v2243 = vpop.f32.mrb[0].mxu0
  %2244 = vdwg.mxu0
  %v2245 = vadd.f32 %v23, %v2240
  %2246 = vst [vmem:[#allocation2] sm:$0xff] %v2245
  // Predicated region
  $region18: #{_lambda_.13} parent=0 // pred_check
    %p2247 = pneg %p18
  $region19: #{_lambda_.13} parent=0 // pred_check_branch
    %2249 = sbr.rel (%p2247) target = $region21
  $region20: #{_lambda_.13} parent=0 // pred_region
    %v2250 = vld [vmem:[#allocation2] sm:$0xff]
    %v2251 = vld [vmem:[%s2] sm:$0x1]
    %v2253 = vlaneseq
    %v2254 = vshrl.u32 %v2253, 7
    %v2255 = vsub.s32 0, %v2254
    %v2256 = vrot.slane %v2251, %v2255
    %v2258 = vadd.f32 %v2250, %v2256
    %2259 = vst [vmem:[%s3] sm:$0xff] %v2258
    %v2260 = vrot.slane %v2258, 4
    %v2261 = vadd.f32 %v2258, %v2260
    %v2262 = vrot.slane %v2261, 2
    %v2263 = vadd.f32 %v2261, %v2262
    %v2264 = vrot.slane %v2263, 1
    %v2265 = vadd.f32 %v2263, %v2264
    %2266 = vst [vmem:[%s4] sm:$0x1] %v2265
    %v2267 = vmul.f32 %v2258, %v2258
    %v2268 = vrot.slane %v2267, 4
    %v2269 = vadd.f32 %v2267, %v2268
    %v2270 = vrot.slane %v2269, 2
    %v2271 = vadd.f32 %v2269, %v2270
    %v2272 = vrot.slane %v2271, 1
    %v2273 = vadd.f32 %v2271, %v2272
    %2274 = vst [vmem:[%s5] sm:$0x1] %v2273
  $region21: #{_lambda_.13} parent=0 // pred_fallthru
    _
  // Predicated region
  $region22: #{_lambda_.13} parent=0 // pred_check
    _
  $region23: #{_lambda_.13} parent=0 // pred_check_branch
    %2276 = sbr.rel (0) target = $region25
  $region24: #{_lambda_.13} parent=0 // pred_region
    _
  $region25: #{_lambda_.13} parent=0 // pred_fallthru
    _
  // Predicated region
  $region26: #{_lambda_.13} parent=0 // pred_check
    _
  $region27: #{_lambda_.13} parent=0 // pred_check_branch
    %2278 = sbr.rel (0) target = $region29
  $region28: #{_lambda_.13} parent=0 // pred_region
    _
  $region29: #{_lambda_.13} parent=0 // pred_fallthru
    _
  // Predicated region
  $region30: #{_lambda_.13} parent=0 // pred_check
    _
  $region31: #{_lambda_.13} parent=0 // pred_check_branch
    %2280 = sbr.rel (0) target = $region33
  $region32: #{_lambda_.13} parent=0 // pred_region
    _
  $region33: #{_lambda_.13} parent=0 // pred_fallthru
    _
  // Predicated region
  $region34: #{_lambda_.13} parent=0 // pred_check
    _
  $region35: #{_lambda_.13} parent=0 // pred_check_branch
    %2282 = sbr.rel (0) target = $region37
  $region36: #{_lambda_.13} parent=0 // pred_region
    _
  $region37: #{_lambda_.13} parent=0 // pred_fallthru
    _
  // Predicated region
  $region38: #{_lambda_.13} parent=0 // pred_check
    _
  $region39: #{_lambda_.13} parent=0 // pred_check_branch
    %2284 = sbr.rel (0) target = $region41
  $region40: #{_lambda_.13} parent=0 // pred_region
    _
  $region41: #{_lambda_.13} parent=0 // pred_fallthru
    _
  // Predicated region
  $region42: #{_lambda_.13} parent=0 // pred_check
    _
  $region43: #{_lambda_.13} parent=0 // pred_check_branch
    %2286 = sbr.rel (0) target = $region45
  $region44: #{_lambda_.13} parent=0 // pred_region
    _
  $region45: #{_lambda_.13} parent=0 // pred_fallthru
    _

</llo_original>
